<compile_context>
chip_gen: v6e
topology: v6e:2x2x1
jax: 0.10.0
libtpu: 0.0.40
codegen_flags: <defaults>
</compile_context>

<pallas_src>
import jax
import jax.numpy as jnp
from jax.experimental import pallas as pl
from jax.experimental.pallas import tpu as pltpu

PADW = 8        # left/right halo width of the padded conv input (keeps interior store sublane-aligned)
K_ALIGN = 128   # contraction-dim padding multiple (use 256 to fully fill v6e/v7x 2x256 MXU)


def _round_up(x, m):
    return ((x + m - 1) // m) * m


def _fold_conv_weight(w_hwio, kpad):
    """(3,3,Cin,Cout) f32 -> (kpad, Cout) bf16 with dense rows: row t*Cin + ci = w[dy,dx,ci,:]."""
    _, _, cin, cout = w_hwio.shape
    wf = jnp.zeros((kpad, cout), jnp.float32)
    wf = wf.at[:9 * cin, :].set(w_hwio.reshape(9 * cin, cout))   # (dy,dx,ci) row-major == t*cin+ci
    return wf.astype(jnp.bfloat16)


def _fold_flatten_weight(w_rows_nchw, c, h, w, kpad):
    """First dense weight with rows in torch NCHW-flatten order -> (kpad, Dout) bf16 with rows
    reordered to the kernel's dense NHWC flatten: row (hi*w + wi)*c + ci <- torch row ci*h*w + hi*w + wi."""
    dout = w_rows_nchw.shape[1]
    w4 = w_rows_nchw.reshape(c, h, w, dout).transpose(1, 2, 0, 3)      # (h, w, c, dout)
    wd = w4.reshape(h * w * c, dout)
    wf = jnp.zeros((kpad, dout), jnp.float32).at[:h * w * c, :].set(wd)
    return wf.astype(jnp.bfloat16)


class AccidentCNNPallas:
    """Mirrors AccidentCNN.__init__/forward with synthetic deterministic params.

    NOTE: spatial size scaled from 224 -> `in_hw` to keep the demo small; flat_dim is
    derived the same way the torch module derives it (shape propagation through the conv stack).
    """

    def __init__(self, conv_layers, linear_layers, dropout_rate, hidden_units,
                 in_hw=(16, 16), num_classes=2, key=jax.random.PRNGKey(42)):
        self.num_classes = num_classes
        self.dropout_rate = dropout_rate          # inference mode: identity
        H, W = in_hw
        cin = 3
        self.conv_cfg = []                        # (H, W, Cin, Cout, Kpad) per conv stage
        self.conv_w, self.conv_b = [], []
        for i in range(conv_layers):
            cout = 32 * (i + 1)
            assert H % 2 == 0 and W % 2 == 0, "MaxPool2d(2) floor-mode edge not handled here"
            key, kw, kb = jax.random.split(key, 3)
            w = jax.random.normal(kw, (3, 3, cin, cout), jnp.float32) / jnp.sqrt(9 * cin)
            b = jax.random.normal(kb, (cout,), jnp.float32) * 0.01
            kpad = _round_up(9 * cin, K_ALIGN)
            self.conv_cfg.append((H, W, cin, cout, kpad))
            self.conv_w.append(_fold_conv_weight(w, kpad))
            self.conv_b.append(b.reshape(1, cout))
            H, W, cin = H // 2, W // 2, cout
        self.Hf, self.Wf, self.Cf = H, W, cin
        assert self.Cf <= 128, "per-spatial-position channel chunk must fit one 128-lane tile"
        self.flat_dim = self.Cf * self.Hf * self.Wf            # torch NCHW flatten size (same count)
        self.Kfc = _round_up(self.flat_dim, K_ALIGN)           # dense FC1 contraction dim (padded)

        def dense(k, din, dout):
            k, kw, kb = jax.random.split(k, 3)
            w = jax.random.normal(kw, (din, dout), jnp.float32) / jnp.sqrt(din)
            b = jax.random.normal(kb, (dout,), jnp.float32) * 0.01
            return k, w, b

        # First dense op consumes the flattened conv output (fc1 if linear_layers>0,
        # otherwise the output head); generated in torch row order then permuted/padded.
        self.rest_w, self.rest_b, self.rest_relu = [], [], []
        if linear_layers > 0:
            key, w, b = dense(key, self.flat_dim, hidden_units)
            self.first_w = _fold_flatten_weight(w, self.Cf, self.Hf, self.Wf, self.Kfc)
            self.first_b = b.reshape(1, hidden_units)
            self.first_relu = True
            for _ in range(1, linear_layers):
                key, w, b = dense(key, hidden_units, hidden_units)
                self.rest_w.append(w.astype(jnp.bfloat16))
                self.rest_b.append(b.reshape(1, hidden_units))
                self.rest_relu.append(True)
            key, w, b = dense(key, hidden_units, num_classes)
            self.rest_w.append(w.astype(jnp.bfloat16))
            self.rest_b.append(b.reshape(1, num_classes))
            self.rest_relu.append(False)
        else:
            key, w, b = dense(key, self.flat_dim, num_classes)
            self.first_w = _fold_flatten_weight(w, self.Cf, self.Hf, self.Wf, self.Kfc)
            self.first_b = b.reshape(1, num_classes)
            self.first_relu = False

    # ------------------------------------------------------------------ forward
    def __call__(self, x_nchw):
        x = jnp.transpose(x_nchw, (0, 2, 3, 1)).astype(jnp.float32)   # NCHW -> NHWC (tiny)
        N, H0, W0, C0 = x.shape
        conv_cfg = self.conv_cfg
        Hf, Wf, Cf, Kfc = self.Hf, self.Wf, self.Cf, self.Kfc
        flat_nhwc = Hf * Wf * Cf
        first_relu, rest_relu = self.first_relu, tuple(self.rest_relu)
        n_conv, n_rest = len(conv_cfg), len(rest_relu)
        num_classes = self.num_classes

        def kernel(*refs):
            idx = 0
            x_ref = refs[idx]; idx += 1
            cw, cb = [], []
            for _ in range(n_conv):
                cw.append(refs[idx]); cb.append(refs[idx + 1]); idx += 2
            fw_ref, fb_ref = refs[idx], refs[idx + 1]; idx += 2
            rw, rb = [], []
            for _ in range(n_rest):
                rw.append(refs[idx]); rb.append(refs[idx + 1]); idx += 2
            o_ref = refs[idx]; idx += 1
            xpad, patch = [], []
            for _ in range(n_conv):
                xpad.append(refs[idx]); patch.append(refs[idx + 1]); idx += 2
            fcin_ref = refs[idx]

            cur = x_ref[0]                                            # (H, W, Cin) f32
            for i, (H, W, cin, cout, kpad) in enumerate(conv_cfg):
                M = H * W
                xp = xpad[i]
                # halo-only zeroing (top/bottom rows + left/right strips), then interior store
                xp[0:1, :, :] = jnp.zeros((1, W + 2 * PADW, cin), jnp.float32)
                xp[H + 1:H + 2, :, :] = jnp.zeros((1, W + 2 * PADW, cin), jnp.float32)
                xp[1:H + 1, 0:PADW, :] = jnp.zeros((H, PADW, cin), jnp.float32)
                xp[1:H + 1, PADW + W:, :] = jnp.zeros((H, PADW, cin), jnp.float32)
                xp[1:H + 1, PADW:PADW + W, :] = cur
                # dense im2col patch: tap t=dy*3+dx -> columns [t*cin, (t+1)*cin)
                for dy in range(3):
                    for dx in range(3):
                        t = dy * 3 + dx
                        tap = xp[dy:dy + H, PADW - 1 + dx:PADW - 1 + dx + W, :].reshape(M, cin)
                        patch[i][:, t * cin:(t + 1) * cin] = tap.astype(jnp.bfloat16)
                if kpad > 9 * cin:   # K-pad tail must be zero (weight pad rows are zero, but 0*NaN=NaN)
                    patch[i][:, 9 * cin:] = jnp.zeros((M, kpad - 9 * cin), jnp.bfloat16)
                # ONE MXU matmul per conv layer (bf16 in, f32 accumulate)
                acc = jnp.dot(patch[i][...], cw[i][...],
                              preferred_element_type=jnp.float32)     # (M, cout) f32
                acc = jnp.maximum(acc + cb[i][...], 0.0)              # bias + ReLU (f32)
                # 2x2 max pool, stride 2: reshape + max over size-2 axes (no strided slices)
                aw = jnp.max(acc.reshape(H, W // 2, 2, cout), axis=2)        # (H, W//2, cout)
                cur = jnp.max(aw.reshape(H // 2, 2, W // 2, cout), axis=1)   # (H//2, W//2, cout)

            # dense NHWC flatten: feature (h, w, c) -> column (h*Wf + w)*Cf + c
            if Kfc > flat_nhwc:
                fcin_ref[:, flat_nhwc:] = jnp.zeros((1, Kfc - flat_nhwc), jnp.bfloat16)
            for h in range(Hf):
                for w in range(Wf):
                    s = h * Wf + w
                    fcin_ref[:, s * Cf:(s + 1) * Cf] = cur[h:h + 1, w, :].astype(jnp.bfloat16)

            # dropout is eval-mode identity
            y = jnp.dot(fcin_ref[...], fw_ref[...],
                        preferred_element_type=jnp.float32) + fb_ref[...]
            if first_relu:
                y = jnp.maximum(y, 0.0)
            for j in range(n_rest):
                y = jnp.dot(y.astype(jnp.bfloat16), rw[j][...],
                            preferred_element_type=jnp.float32) + rb[j][...]
                if rest_relu[j]:
                    y = jnp.maximum(y, 0.0)
            o_ref[0] = y.astype(o_ref.dtype)

        # -------------------- single fused pallas_call, batch-parallel grid --------------------
        in_arrays = [x]
        for i in range(n_conv):
            in_arrays += [self.conv_w[i], self.conv_b[i]]
        in_arrays += [self.first_w, self.first_b]
        for j in range(n_rest):
            in_arrays += [self.rest_w[j], self.rest_b[j]]

        def resident_spec(a):
            # constant block index -> weight stays VMEM-resident across the batch grid
            nd = a.ndim
            return pl.BlockSpec(a.shape, lambda n, _nd=nd: (0,) * _nd)

        in_specs = [pl.BlockSpec((1, H0, W0, C0), lambda n: (n, 0, 0, 0))]
        in_specs += [resident_spec(a) for a in in_arrays[1:]]

        scratch_shapes = []
        for (H, W, cin, cout, kpad) in conv_cfg:
            scratch_shapes.append(pltpu.VMEM((H + 2, W + 2 * PADW, cin), jnp.float32))  # padded input
            scratch_shapes.append(pltpu.VMEM((H * W, kpad), jnp.bfloat16))              # dense im2col patch
        scratch_shapes.append(pltpu.VMEM((1, Kfc), jnp.bfloat16))                       # dense FC input

        out = pl.pallas_call(
            kernel,
            out_shape=jax.ShapeDtypeStruct((N, 1, num_classes), jnp.float32),
            grid_spec=pltpu.PrefetchScalarGridSpec(
                num_scalar_prefetch=0,
                grid=(N,),
                in_specs=in_specs,
                out_specs=pl.BlockSpec((1, 1, num_classes), lambda n: (n, 0, 0)),
                scratch_shapes=scratch_shapes),
            compiler_params=pltpu.CompilerParams(
                dimension_semantics=("parallel",)),     # v7x: batch images split across both TCs
        )(*in_arrays)
        return out.reshape(N, num_classes)


# ------------------------------------ main -------------------------------------
if __name__ == "__main__":
    model = AccidentCNNPallas(conv_layers=2, linear_layers=1,
                              dropout_rate=0.5, hidden_units=32,
                              in_hw=(16, 16), key=jax.random.PRNGKey(42))
    x = jax.random.normal(jax.random.PRNGKey(0), (2, 3, 16, 16), jnp.float32)
    out = jax.block_until_ready(model(x))
    assert out.shape == (2, 2), out.shape
    print("KERNEL_OK")
</pallas_src>

<mosaic_0001>
module attributes {stable_mosaic.version = 11 : i64} {
  func.func @kernel(%arg0: i32, %arg1: memref<1x16x16x3xf32, #tpu.memory_space<vmem>>, %arg2: memref<128x32xbf16, #tpu.memory_space<vmem>>, %arg3: memref<1x32xf32, #tpu.memory_space<vmem>>, %arg4: memref<384x64xbf16, #tpu.memory_space<vmem>>, %arg5: memref<1x64xf32, #tpu.memory_space<vmem>>, %arg6: memref<1024x32xbf16, #tpu.memory_space<vmem>>, %arg7: memref<1x32xf32, #tpu.memory_space<vmem>>, %arg8: memref<32x2xbf16, #tpu.memory_space<vmem>>, %arg9: memref<1x2xf32, #tpu.memory_space<vmem>>, %arg10: memref<1x1x2xf32, #tpu.memory_space<vmem>>, %arg11: memref<18x32x3xf32, #tpu.memory_space<vmem>>, %arg12: memref<256x128xbf16, #tpu.memory_space<vmem>>, %arg13: memref<10x24x32xf32, #tpu.memory_space<vmem>>, %arg14: memref<64x384xbf16, #tpu.memory_space<vmem>>, %arg15: memref<1x1024xbf16, #tpu.memory_space<vmem>>) attributes {dimension_semantics = [#tpu.dimension_semantics<parallel>], iteration_bounds = array<i64: 2>, scalar_prefetch = 0 : i64, scratch_operands = 5 : i64, tpu.core_type = #tpu.core_type<tc>, window_params = [{transform_indices = @transform_0, window_bounds = array<i64: 1, 16, 16, 3>}, {pipeline_mode = #tpu.pipeline_mode<synchronous>, transform_indices = @transform_1, window_bounds = array<i64: 128, 32>}, {pipeline_mode = #tpu.pipeline_mode<synchronous>, transform_indices = @transform_2, window_bounds = array<i64: 1, 32>}, {pipeline_mode = #tpu.pipeline_mode<synchronous>, transform_indices = @transform_3, window_bounds = array<i64: 384, 64>}, {pipeline_mode = #tpu.pipeline_mode<synchronous>, transform_indices = @transform_4, window_bounds = array<i64: 1, 64>}, {pipeline_mode = #tpu.pipeline_mode<synchronous>, transform_indices = @transform_5, window_bounds = array<i64: 1024, 32>}, {pipeline_mode = #tpu.pipeline_mode<synchronous>, transform_indices = @transform_6, window_bounds = array<i64: 1, 32>}, {pipeline_mode = #tpu.pipeline_mode<synchronous>, transform_indices = @transform_7, window_bounds = array<i64: 32, 2>}, {pipeline_mode = #tpu.pipeline_mode<synchronous>, transform_indices = @transform_8, window_bounds = array<i64: 1, 2>}, {transform_indices = @transform_9, window_bounds = array<i64: 1, 1, 2>}]} {
    %c0 = arith.constant 0 : index
    %c0_0 = arith.constant 0 : index
    %c0_1 = arith.constant 0 : index
    %c0_2 = arith.constant 0 : index
    %0 = vector.load %arg1[%c0, %c0_0, %c0_1, %c0_2] : memref<1x16x16x3xf32, #tpu.memory_space<vmem>>, vector<1x16x16x3xf32>
    %1 = vector.shape_cast %0 : vector<1x16x16x3xf32> to vector<16x16x3xf32>
    %cst = arith.constant 0.000000e+00 : f32
    %2 = vector.broadcast %cst : f32 to vector<1x32x3xf32>
    %c0_3 = arith.constant 0 : index
    %c0_4 = arith.constant 0 : index
    %c0_5 = arith.constant 0 : index
    %3 = vector.load %arg11[%c0_3, %c0_4, %c0_5] : memref<18x32x3xf32, #tpu.memory_space<vmem>>, vector<1x32x3xf32>
    tpu.vector_store %arg11[%c0_3, %c0_4, %c0_5], %2 {strides = array<i32>} : memref<18x32x3xf32, #tpu.memory_space<vmem>>, vector<1x32x3xf32>,
    %cst_6 = arith.constant 0.000000e+00 : f32
    %4 = vector.broadcast %cst_6 : f32 to vector<1x32x3xf32>
    %c17 = arith.constant 17 : index
    %c0_7 = arith.constant 0 : index
    %c0_8 = arith.constant 0 : index
    %5 = vector.load %arg11[%c17, %c0_7, %c0_8] : memref<18x32x3xf32, #tpu.memory_space<vmem>>, vector<1x32x3xf32>
    tpu.vector_store %arg11[%c17, %c0_7, %c0_8], %4 {strides = array<i32>} : memref<18x32x3xf32, #tpu.memory_space<vmem>>, vector<1x32x3xf32>,
    %cst_9 = arith.constant 0.000000e+00 : f32
    %6 = vector.broadcast %cst_9 : f32 to vector<16x8x3xf32>
    %c1 = arith.constant 1 : index
    %c0_10 = arith.constant 0 : index
    %c0_11 = arith.constant 0 : index
    %7 = vector.load %arg11[%c1, %c0_10, %c0_11] : memref<18x32x3xf32, #tpu.memory_space<vmem>>, vector<16x8x3xf32>
    tpu.vector_store %arg11[%c1, %c0_10, %c0_11], %6 {strides = array<i32>} : memref<18x32x3xf32, #tpu.memory_space<vmem>>, vector<16x8x3xf32>,
    %cst_12 = arith.constant 0.000000e+00 : f32
    %8 = vector.broadcast %cst_12 : f32 to vector<16x8x3xf32>
    %c1_13 = arith.constant 1 : index
    %c24 = arith.constant 24 : index
    %c0_14 = arith.constant 0 : index
    %9 = vector.load %arg11[%c1_13, %c24, %c0_14] : memref<18x32x3xf32, #tpu.memory_space<vmem>>, vector<16x8x3xf32>
    tpu.vector_store %arg11[%c1_13, %c24, %c0_14], %8 {strides = array<i32>} : memref<18x32x3xf32, #tpu.memory_space<vmem>>, vector<16x8x3xf32>,
    %c1_15 = arith.constant 1 : index
    %c8 = arith.constant 8 : index
    %c0_16 = arith.constant 0 : index
    %10 = vector.load %arg11[%c1_15, %c8, %c0_16] : memref<18x32x3xf32, #tpu.memory_space<vmem>>, vector<16x16x3xf32>
    tpu.vector_store %arg11[%c1_15, %c8, %c0_16], %1 {strides = array<i32>} : memref<18x32x3xf32, #tpu.memory_space<vmem>>, vector<16x16x3xf32>,
    %c0_17 = arith.constant 0 : index
    %c7 = arith.constant 7 : index
    %c0_18 = arith.constant 0 : index
    %11 = vector.load %arg11[%c0_17, %c7, %c0_18] : memref<18x32x3xf32, #tpu.memory_space<vmem>>, vector<16x16x3xf32>
    %12 = vector.shape_cast %11 : vector<16x16x3xf32> to vector<256x3xf32>
    %13 = arith.truncf %12 : vector<256x3xf32> to vector<256x3xbf16>
    %c0_19 = arith.constant 0 : index
    %c0_20 = arith.constant 0 : index
    %14 = vector.load %arg12[%c0_19, %c0_20] : memref<256x128xbf16, #tpu.memory_space<vmem>>, vector<256x3xbf16>
    tpu.vector_store %arg12[%c0_19, %c0_20], %13 {strides = array<i32>} : memref<256x128xbf16, #tpu.memory_space<vmem>>, vector<256x3xbf16>,
    %c0_21 = arith.constant 0 : index
    %c8_22 = arith.constant 8 : index
    %c0_23 = arith.constant 0 : index
    %15 = vector.load %arg11[%c0_21, %c8_22, %c0_23] : memref<18x32x3xf32, #tpu.memory_space<vmem>>, vector<16x16x3xf32>
    %16 = vector.shape_cast %15 : vector<16x16x3xf32> to vector<256x3xf32>
    %17 = arith.truncf %16 : vector<256x3xf32> to vector<256x3xbf16>
    %c0_24 = arith.constant 0 : index
    %c3 = arith.constant 3 : index
    %18 = vector.load %arg12[%c0_24, %c3] : memref<256x128xbf16, #tpu.memory_space<vmem>>, vector<256x3xbf16>
    tpu.vector_store %arg12[%c0_24, %c3], %17 {strides = array<i32>} : memref<256x128xbf16, #tpu.memory_space<vmem>>, vector<256x3xbf16>,
    %c0_25 = arith.constant 0 : index
    %c9 = arith.constant 9 : index
    %c0_26 = arith.constant 0 : index
    %19 = vector.load %arg11[%c0_25, %c9, %c0_26] : memref<18x32x3xf32, #tpu.memory_space<vmem>>, vector<16x16x3xf32>
    %20 = vector.shape_cast %19 : vector<16x16x3xf32> to vector<256x3xf32>
    %21 = arith.truncf %20 : vector<256x3xf32> to vector<256x3xbf16>
    %c0_27 = arith.constant 0 : index
    %c6 = arith.constant 6 : index
    %22 = vector.load %arg12[%c0_27, %c6] : memref<256x128xbf16, #tpu.memory_space<vmem>>, vector<256x3xbf16>
    tpu.vector_store %arg12[%c0_27, %c6], %21 {strides = array<i32>} : memref<256x128xbf16, #tpu.memory_space<vmem>>, vector<256x3xbf16>,
    %c1_28 = arith.constant 1 : index
    %c7_29 = arith.constant 7 : index
    %c0_30 = arith.constant 0 : index
    %23 = vector.load %arg11[%c1_28, %c7_29, %c0_30] : memref<18x32x3xf32, #tpu.memory_space<vmem>>, vector<16x16x3xf32>
    %24 = vector.shape_cast %23 : vector<16x16x3xf32> to vector<256x3xf32>
    %25 = arith.truncf %24 : vector<256x3xf32> to vector<256x3xbf16>
    %c0_31 = arith.constant 0 : index
    %c9_32 = arith.constant 9 : index
    %26 = vector.load %arg12[%c0_31, %c9_32] : memref<256x128xbf16, #tpu.memory_space<vmem>>, vector<256x3xbf16>
    tpu.vector_store %arg12[%c0_31, %c9_32], %25 {strides = array<i32>} : memref<256x128xbf16, #tpu.memory_space<vmem>>, vector<256x3xbf16>,
    %c1_33 = arith.constant 1 : index
    %c8_34 = arith.constant 8 : index
    %c0_35 = arith.constant 0 : index
    %27 = vector.load %arg11[%c1_33, %c8_34, %c0_35] : memref<18x32x3xf32, #tpu.memory_space<vmem>>, vector<16x16x3xf32>
    %28 = vector.shape_cast %27 : vector<16x16x3xf32> to vector<256x3xf32>
    %29 = arith.truncf %28 : vector<256x3xf32> to vector<256x3xbf16>
    %c0_36 = arith.constant 0 : index
    %c12 = arith.constant 12 : index
    %30 = vector.load %arg12[%c0_36, %c12] : memref<256x128xbf16, #tpu.memory_space<vmem>>, vector<256x3xbf16>
    tpu.vector_store %arg12[%c0_36, %c12], %29 {strides = array<i32>} : memref<256x128xbf16, #tpu.memory_space<vmem>>, vector<256x3xbf16>,
    %c1_37 = arith.constant 1 : index
    %c9_38 = arith.constant 9 : index
    %c0_39 = arith.constant 0 : index
    %31 = vector.load %arg11[%c1_37, %c9_38, %c0_39] : memref<18x32x3xf32, #tpu.memory_space<vmem>>, vector<16x16x3xf32>
    %32 = vector.shape_cast %31 : vector<16x16x3xf32> to vector<256x3xf32>
    %33 = arith.truncf %32 : vector<256x3xf32> to vector<256x3xbf16>
    %c0_40 = arith.constant 0 : index
    %c15 = arith.constant 15 : index
    %34 = vector.load %arg12[%c0_40, %c15] : memref<256x128xbf16, #tpu.memory_space<vmem>>, vector<256x3xbf16>
    tpu.vector_store %arg12[%c0_40, %c15], %33 {strides = array<i32>} : memref<256x128xbf16, #tpu.memory_space<vmem>>, vector<256x3xbf16>,
    %c2 = arith.constant 2 : index
    %c7_41 = arith.constant 7 : index
    %c0_42 = arith.constant 0 : index
    %35 = vector.load %arg11[%c2, %c7_41, %c0_42] : memref<18x32x3xf32, #tpu.memory_space<vmem>>, vector<16x16x3xf32>
    %36 = vector.shape_cast %35 : vector<16x16x3xf32> to vector<256x3xf32>
    %37 = arith.truncf %36 : vector<256x3xf32> to vector<256x3xbf16>
    %c0_43 = arith.constant 0 : index
    %c18 = arith.constant 18 : index
    %38 = vector.load %arg12[%c0_43, %c18] : memref<256x128xbf16, #tpu.memory_space<vmem>>, vector<256x3xbf16>
    tpu.vector_store %arg12[%c0_43, %c18], %37 {strides = array<i32>} : memref<256x128xbf16, #tpu.memory_space<vmem>>, vector<256x3xbf16>,
    %c2_44 = arith.constant 2 : index
    %c8_45 = arith.constant 8 : index
    %c0_46 = arith.constant 0 : index
    %39 = vector.load %arg11[%c2_44, %c8_45, %c0_46] : memref<18x32x3xf32, #tpu.memory_space<vmem>>, vector<16x16x3xf32>
    %40 = vector.shape_cast %39 : vector<16x16x3xf32> to vector<256x3xf32>
    %41 = arith.truncf %40 : vector<256x3xf32> to vector<256x3xbf16>
    %c0_47 = arith.constant 0 : index
    %c21 = arith.constant 21 : index
    %42 = vector.load %arg12[%c0_47, %c21] : memref<256x128xbf16, #tpu.memory_space<vmem>>, vector<256x3xbf16>
    tpu.vector_store %arg12[%c0_47, %c21], %41 {strides = array<i32>} : memref<256x128xbf16, #tpu.memory_space<vmem>>, vector<256x3xbf16>,
    %c2_48 = arith.constant 2 : index
    %c9_49 = arith.constant 9 : index
    %c0_50 = arith.constant 0 : index
    %43 = vector.load %arg11[%c2_48, %c9_49, %c0_50] : memref<18x32x3xf32, #tpu.memory_space<vmem>>, vector<16x16x3xf32>
    %44 = vector.shape_cast %43 : vector<16x16x3xf32> to vector<256x3xf32>
    %45 = arith.truncf %44 : vector<256x3xf32> to vector<256x3xbf16>
    %c0_51 = arith.constant 0 : index
    %c24_52 = arith.constant 24 : index
    %46 = vector.load %arg12[%c0_51, %c24_52] : memref<256x128xbf16, #tpu.memory_space<vmem>>, vector<256x3xbf16>
    tpu.vector_store %arg12[%c0_51, %c24_52], %45 {strides = array<i32>} : memref<256x128xbf16, #tpu.memory_space<vmem>>, vector<256x3xbf16>,
    %cst_53 = arith.constant 0.000000e+00 : bf16
    %47 = vector.broadcast %cst_53 : bf16 to vector<256x101xbf16>
    %c0_54 = arith.constant 0 : index
    %c27 = arith.constant 27 : index
    %48 = vector.load %arg12[%c0_54, %c27] : memref<256x128xbf16, #tpu.memory_space<vmem>>, vector<256x101xbf16>
    tpu.vector_store %arg12[%c0_54, %c27], %47 {strides = array<i32>} : memref<256x128xbf16, #tpu.memory_space<vmem>>, vector<256x101xbf16>,
    %c0_55 = arith.constant 0 : index
    %c0_56 = arith.constant 0 : index
    %49 = vector.load %arg12[%c0_55, %c0_56] : memref<256x128xbf16, #tpu.memory_space<vmem>>, vector<256x128xbf16>
    %c0_57 = arith.constant 0 : index
    %c0_58 = arith.constant 0 : index
    %50 = vector.load %arg2[%c0_57, %c0_58] : memref<128x32xbf16, #tpu.memory_space<vmem>>, vector<128x32xbf16>
    %cst_59 = arith.constant dense<0.000000e+00> : vector<256x32xf32>
    %51 = tpu.matmul %49, %50, %cst_59 {dimension_numbers = #tpu.dot_dimension_numbers<[1], [0], [0], [1], [0, 0, 1, 1], [], []>} : vector<256x128xbf16>, vector<128x32xbf16>, vector<256x32xf32> -> vector<256x32xf32>
    %c0_60 = arith.constant 0 : index
    %c0_61 = arith.constant 0 : index
    %52 = vector.load %arg3[%c0_60, %c0_61] : memref<1x32xf32, #tpu.memory_space<vmem>>, vector<1x32xf32>
    %53 = vector.broadcast %52 : vector<1x32xf32> to vector<256x32xf32>
    %54 = arith.addf %51, %53 : vector<256x32xf32>
    %cst_62 = arith.constant 0.000000e+00 : f32
    %55 = vector.broadcast %cst_62 : f32 to vector<256x32xf32>
    %56 = arith.maximumf %54, %55 : vector<256x32xf32>
    %57 = vector.shape_cast %56 : vector<256x32xf32> to vector<16x8x2x32xf32>
    %cst_63 = arith.constant dense<0xFF800000> : vector<16x8x32xf32>
    %58 = vector.multi_reduction <maximumf>, %57, %cst_63 [2] : vector<16x8x2x32xf32> to vector<16x8x32xf32>
    %59 = vector.shape_cast %58 : vector<16x8x32xf32> to vector<8x2x8x32xf32>
    %cst_64 = arith.constant dense<0xFF800000> : vector<8x8x32xf32>
    %60 = vector.multi_reduction <maximumf>, %59, %cst_64 [1] : vector<8x2x8x32xf32> to vector<8x8x32xf32>
    %cst_65 = arith.constant 0.000000e+00 : f32
    %61 = vector.broadcast %cst_65 : f32 to vector<1x24x32xf32>
    %c0_66 = arith.constant 0 : index
    %c0_67 = arith.constant 0 : index
    %c0_68 = arith.constant 0 : index
    %62 = vector.load %arg13[%c0_66, %c0_67, %c0_68] : memref<10x24x32xf32, #tpu.memory_space<vmem>>, vector<1x24x32xf32>
    tpu.vector_store %arg13[%c0_66, %c0_67, %c0_68], %61 {strides = array<i32>} : memref<10x24x32xf32, #tpu.memory_space<vmem>>, vector<1x24x32xf32>,
    %cst_69 = arith.constant 0.000000e+00 : f32
    %63 = vector.broadcast %cst_69 : f32 to vector<1x24x32xf32>
    %c9_70 = arith.constant 9 : index
    %c0_71 = arith.constant 0 : index
    %c0_72 = arith.constant 0 : index
    %64 = vector.load %arg13[%c9_70, %c0_71, %c0_72] : memref<10x24x32xf32, #tpu.memory_space<vmem>>, vector<1x24x32xf32>
    tpu.vector_store %arg13[%c9_70, %c0_71, %c0_72], %63 {strides = array<i32>} : memref<10x24x32xf32, #tpu.memory_space<vmem>>, vector<1x24x32xf32>,
    %cst_73 = arith.constant 0.000000e+00 : f32
    %65 = vector.broadcast %cst_73 : f32 to vector<8x8x32xf32>
    %c1_74 = arith.constant 1 : index
    %c0_75 = arith.constant 0 : index
    %c0_76 = arith.constant 0 : index
    %66 = vector.load %arg13[%c1_74, %c0_75, %c0_76] : memref<10x24x32xf32, #tpu.memory_space<vmem>>, vector<8x8x32xf32>
    tpu.vector_store %arg13[%c1_74, %c0_75, %c0_76], %65 {strides = array<i32>} : memref<10x24x32xf32, #tpu.memory_space<vmem>>, vector<8x8x32xf32>,
    %cst_77 = arith.constant 0.000000e+00 : f32
    %67 = vector.broadcast %cst_77 : f32 to vector<8x8x32xf32>
    %c1_78 = arith.constant 1 : index
    %c16 = arith.constant 16 : index
    %c0_79 = arith.constant 0 : index
    %68 = vector.load %arg13[%c1_78, %c16, %c0_79] : memref<10x24x32xf32, #tpu.memory_space<vmem>>, vector<8x8x32xf32>
    tpu.vector_store %arg13[%c1_78, %c16, %c0_79], %67 {strides = array<i32>} : memref<10x24x32xf32, #tpu.memory_space<vmem>>, vector<8x8x32xf32>,
    %c1_80 = arith.constant 1 : index
    %c8_81 = arith.constant 8 : index
    %c0_82 = arith.constant 0 : index
    %69 = vector.load %arg13[%c1_80, %c8_81, %c0_82] : memref<10x24x32xf32, #tpu.memory_space<vmem>>, vector<8x8x32xf32>
    tpu.vector_store %arg13[%c1_80, %c8_81, %c0_82], %60 {strides = array<i32>} : memref<10x24x32xf32, #tpu.memory_space<vmem>>, vector<8x8x32xf32>,
    %c0_83 = arith.constant 0 : index
    %c7_84 = arith.constant 7 : index
    %c0_85 = arith.constant 0 : index
    %70 = vector.load %arg13[%c0_83, %c7_84, %c0_85] : memref<10x24x32xf32, #tpu.memory_space<vmem>>, vector<8x8x32xf32>
    %71 = vector.shape_cast %70 : vector<8x8x32xf32> to vector<64x32xf32>
    %72 = arith.truncf %71 : vector<64x32xf32> to vector<64x32xbf16>
    %c0_86 = arith.constant 0 : index
    %c0_87 = arith.constant 0 : index
    %73 = vector.load %arg14[%c0_86, %c0_87] : memref<64x384xbf16, #tpu.memory_space<vmem>>, vector<64x32xbf16>
    tpu.vector_store %arg14[%c0_86, %c0_87], %72 {strides = array<i32>} : memref<64x384xbf16, #tpu.memory_space<vmem>>, vector<64x32xbf16>,
    %c0_88 = arith.constant 0 : index
    %c8_89 = arith.constant 8 : index
    %c0_90 = arith.constant 0 : index
    %74 = vector.load %arg13[%c0_88, %c8_89, %c0_90] : memref<10x24x32xf32, #tpu.memory_space<vmem>>, vector<8x8x32xf32>
    %75 = vector.shape_cast %74 : vector<8x8x32xf32> to vector<64x32xf32>
    %76 = arith.truncf %75 : vector<64x32xf32> to vector<64x32xbf16>
    %c0_91 = arith.constant 0 : index
    %c32 = arith.constant 32 : index
    %77 = vector.load %arg14[%c0_91, %c32] : memref<64x384xbf16, #tpu.memory_space<vmem>>, vector<64x32xbf16>
    tpu.vector_store %arg14[%c0_91, %c32], %76 {strides = array<i32>} : memref<64x384xbf16, #tpu.memory_space<vmem>>, vector<64x32xbf16>,
    %c0_92 = arith.constant 0 : index
    %c9_93 = arith.constant 9 : index
    %c0_94 = arith.constant 0 : index
    %78 = vector.load %arg13[%c0_92, %c9_93, %c0_94] : memref<10x24x32xf32, #tpu.memory_space<vmem>>, vector<8x8x32xf32>
    %79 = vector.shape_cast %78 : vector<8x8x32xf32> to vector<64x32xf32>
    %80 = arith.truncf %79 : vector<64x32xf32> to vector<64x32xbf16>
    %c0_95 = arith.constant 0 : index
    %c64 = arith.constant 64 : index
    %81 = vector.load %arg14[%c0_95, %c64] : memref<64x384xbf16, #tpu.memory_space<vmem>>, vector<64x32xbf16>
    tpu.vector_store %arg14[%c0_95, %c64], %80 {strides = array<i32>} : memref<64x384xbf16, #tpu.memory_space<vmem>>, vector<64x32xbf16>,
    %c1_96 = arith.constant 1 : index
    %c7_97 = arith.constant 7 : index
    %c0_98 = arith.constant 0 : index
    %82 = vector.load %arg13[%c1_96, %c7_97, %c0_98] : memref<10x24x32xf32, #tpu.memory_space<vmem>>, vector<8x8x32xf32>
    %83 = vector.shape_cast %82 : vector<8x8x32xf32> to vector<64x32xf32>
    %84 = arith.truncf %83 : vector<64x32xf32> to vector<64x32xbf16>
    %c0_99 = arith.constant 0 : index
    %c96 = arith.constant 96 : index
    %85 = vector.load %arg14[%c0_99, %c96] : memref<64x384xbf16, #tpu.memory_space<vmem>>, vector<64x32xbf16>
    tpu.vector_store %arg14[%c0_99, %c96], %84 {strides = array<i32>} : memref<64x384xbf16, #tpu.memory_space<vmem>>, vector<64x32xbf16>,
    %c1_100 = arith.constant 1 : index
    %c8_101 = arith.constant 8 : index
    %c0_102 = arith.constant 0 : index
    %86 = vector.load %arg13[%c1_100, %c8_101, %c0_102] : memref<10x24x32xf32, #tpu.memory_space<vmem>>, vector<8x8x32xf32>
    %87 = vector.shape_cast %86 : vector<8x8x32xf32> to vector<64x32xf32>
    %88 = arith.truncf %87 : vector<64x32xf32> to vector<64x32xbf16>
    %c0_103 = arith.constant 0 : index
    %c128 = arith.constant 128 : index
    %89 = vector.load %arg14[%c0_103, %c128] : memref<64x384xbf16, #tpu.memory_space<vmem>>, vector<64x32xbf16>
    tpu.vector_store %arg14[%c0_103, %c128], %88 {strides = array<i32>} : memref<64x384xbf16, #tpu.memory_space<vmem>>, vector<64x32xbf16>,
    %c1_104 = arith.constant 1 : index
    %c9_105 = arith.constant 9 : index
    %c0_106 = arith.constant 0 : index
    %90 = vector.load %arg13[%c1_104, %c9_105, %c0_106] : memref<10x24x32xf32, #tpu.memory_space<vmem>>, vector<8x8x32xf32>
    %91 = vector.shape_cast %90 : vector<8x8x32xf32> to vector<64x32xf32>
    %92 = arith.truncf %91 : vector<64x32xf32> to vector<64x32xbf16>
    %c0_107 = arith.constant 0 : index
    %c160 = arith.constant 160 : index
    %93 = vector.load %arg14[%c0_107, %c160] : memref<64x384xbf16, #tpu.memory_space<vmem>>, vector<64x32xbf16>
    tpu.vector_store %arg14[%c0_107, %c160], %92 {strides = array<i32>} : memref<64x384xbf16, #tpu.memory_space<vmem>>, vector<64x32xbf16>,
    %c2_108 = arith.constant 2 : index
    %c7_109 = arith.constant 7 : index
    %c0_110 = arith.constant 0 : index
    %94 = vector.load %arg13[%c2_108, %c7_109, %c0_110] : memref<10x24x32xf32, #tpu.memory_space<vmem>>, vector<8x8x32xf32>
    %95 = vector.shape_cast %94 : vector<8x8x32xf32> to vector<64x32xf32>
    %96 = arith.truncf %95 : vector<64x32xf32> to vector<64x32xbf16>
    %c0_111 = arith.constant 0 : index
    %c192 = arith.constant 192 : index
    %97 = vector.load %arg14[%c0_111, %c192] : memref<64x384xbf16, #tpu.memory_space<vmem>>, vector<64x32xbf16>
    tpu.vector_store %arg14[%c0_111, %c192], %96 {strides = array<i32>} : memref<64x384xbf16, #tpu.memory_space<vmem>>, vector<64x32xbf16>,
    %c2_112 = arith.constant 2 : index
    %c8_113 = arith.constant 8 : index
    %c0_114 = arith.constant 0 : index
    %98 = vector.load %arg13[%c2_112, %c8_113, %c0_114] : memref<10x24x32xf32, #tpu.memory_space<vmem>>, vector<8x8x32xf32>
    %99 = vector.shape_cast %98 : vector<8x8x32xf32> to vector<64x32xf32>
    %100 = arith.truncf %99 : vector<64x32xf32> to vector<64x32xbf16>
    %c0_115 = arith.constant 0 : index
    %c224 = arith.constant 224 : index
    %101 = vector.load %arg14[%c0_115, %c224] : memref<64x384xbf16, #tpu.memory_space<vmem>>, vector<64x32xbf16>
    tpu.vector_store %arg14[%c0_115, %c224], %100 {strides = array<i32>} : memref<64x384xbf16, #tpu.memory_space<vmem>>, vector<64x32xbf16>,
    %c2_116 = arith.constant 2 : index
    %c9_117 = arith.constant 9 : index
    %c0_118 = arith.constant 0 : index
    %102 = vector.load %arg13[%c2_116, %c9_117, %c0_118] : memref<10x24x32xf32, #tpu.memory_space<vmem>>, vector<8x8x32xf32>
    %103 = vector.shape_cast %102 : vector<8x8x32xf32> to vector<64x32xf32>
    %104 = arith.truncf %103 : vector<64x32xf32> to vector<64x32xbf16>
    %c0_119 = arith.constant 0 : index
    %c256 = arith.constant 256 : index
    %105 = vector.load %arg14[%c0_119, %c256] : memref<64x384xbf16, #tpu.memory_space<vmem>>, vector<64x32xbf16>
    tpu.vector_store %arg14[%c0_119, %c256], %104 {strides = array<i32>} : memref<64x384xbf16, #tpu.memory_space<vmem>>, vector<64x32xbf16>,
    %cst_120 = arith.constant 0.000000e+00 : bf16
    %106 = vector.broadcast %cst_120 : bf16 to vector<64x96xbf16>
    %c0_121 = arith.constant 0 : index
    %c288 = arith.constant 288 : index
    %107 = vector.load %arg14[%c0_121, %c288] : memref<64x384xbf16, #tpu.memory_space<vmem>>, vector<64x96xbf16>
    tpu.vector_store %arg14[%c0_121, %c288], %106 {strides = array<i32>} : memref<64x384xbf16, #tpu.memory_space<vmem>>, vector<64x96xbf16>,
    %c0_122 = arith.constant 0 : index
    %c0_123 = arith.constant 0 : index
    %108 = vector.load %arg14[%c0_122, %c0_123] : memref<64x384xbf16, #tpu.memory_space<vmem>>, vector<64x384xbf16>
    %c0_124 = arith.constant 0 : index
    %c0_125 = arith.constant 0 : index
    %109 = vector.load %arg4[%c0_124, %c0_125] : memref<384x64xbf16, #tpu.memory_space<vmem>>, vector<384x64xbf16>
    %cst_126 = arith.constant dense<0.000000e+00> : vector<64x64xf32>
    %110 = tpu.matmul %108, %109, %cst_126 {dimension_numbers = #tpu.dot_dimension_numbers<[1], [0], [0], [1], [0, 0, 1, 1], [], []>} : vector<64x384xbf16>, vector<384x64xbf16>, vector<64x64xf32> -> vector<64x64xf32>
    %c0_127 = arith.constant 0 : index
    %c0_128 = arith.constant 0 : index
    %111 = vector.load %arg5[%c0_127, %c0_128] : memref<1x64xf32, #tpu.memory_space<vmem>>, vector<1x64xf32>
    %112 = vector.broadcast %111 : vector<1x64xf32> to vector<64x64xf32>
    %113 = arith.addf %110, %112 : vector<64x64xf32>
    %cst_129 = arith.constant 0.000000e+00 : f32
    %114 = vector.broadcast %cst_129 : f32 to vector<64x64xf32>
    %115 = arith.maximumf %113, %114 : vector<64x64xf32>
    %116 = vector.shape_cast %115 : vector<64x64xf32> to vector<8x4x2x64xf32>
    %cst_130 = arith.constant dense<0xFF800000> : vector<8x4x64xf32>
    %117 = vector.multi_reduction <maximumf>, %116, %cst_130 [2] : vector<8x4x2x64xf32> to vector<8x4x64xf32>
    %118 = vector.shape_cast %117 : vector<8x4x64xf32> to vector<4x2x4x64xf32>
    %cst_131 = arith.constant dense<0xFF800000> : vector<4x4x64xf32>
    %119 = vector.multi_reduction <maximumf>, %118, %cst_131 [1] : vector<4x2x4x64xf32> to vector<4x4x64xf32>
    %120 = vector.extract_strided_slice %119 {offsets = [0, 0, 0], sizes = [1, 1, 64], strides = [1, 1, 1]} : vector<4x4x64xf32> to vector<1x1x64xf32>
    %121 = vector.shape_cast %120 : vector<1x1x64xf32> to vector<1x64xf32>
    %122 = arith.truncf %121 : vector<1x64xf32> to vector<1x64xbf16>
    %c0_132 = arith.constant 0 : index
    %c0_133 = arith.constant 0 : index
    %123 = vector.load %arg15[%c0_132, %c0_133] : memref<1x1024xbf16, #tpu.memory_space<vmem>>, vector<1x64xbf16>
    tpu.vector_store %arg15[%c0_132, %c0_133], %122 {strides = array<i32>} : memref<1x1024xbf16, #tpu.memory_space<vmem>>, vector<1x64xbf16>,
    %124 = vector.extract_strided_slice %119 {offsets = [0, 1, 0], sizes = [1, 1, 64], strides = [1, 1, 1]} : vector<4x4x64xf32> to vector<1x1x64xf32>
    %125 = vector.shape_cast %124 : vector<1x1x64xf32> to vector<1x64xf32>
    %126 = arith.truncf %125 : vector<1x64xf32> to vector<1x64xbf16>
    %c0_134 = arith.constant 0 : index
    %c64_135 = arith.constant 64 : index
    %127 = vector.load %arg15[%c0_134, %c64_135] : memref<1x1024xbf16, #tpu.memory_space<vmem>>, vector<1x64xbf16>
    tpu.vector_store %arg15[%c0_134, %c64_135], %126 {strides = array<i32>} : memref<1x1024xbf16, #tpu.memory_space<vmem>>, vector<1x64xbf16>,
    %128 = vector.extract_strided_slice %119 {offsets = [0, 2, 0], sizes = [1, 1, 64], strides = [1, 1, 1]} : vector<4x4x64xf32> to vector<1x1x64xf32>
    %129 = vector.shape_cast %128 : vector<1x1x64xf32> to vector<1x64xf32>
    %130 = arith.truncf %129 : vector<1x64xf32> to vector<1x64xbf16>
    %c0_136 = arith.constant 0 : index
    %c128_137 = arith.constant 128 : index
    %131 = vector.load %arg15[%c0_136, %c128_137] : memref<1x1024xbf16, #tpu.memory_space<vmem>>, vector<1x64xbf16>
    tpu.vector_store %arg15[%c0_136, %c128_137], %130 {strides = array<i32>} : memref<1x1024xbf16, #tpu.memory_space<vmem>>, vector<1x64xbf16>,
    %132 = vector.extract_strided_slice %119 {offsets = [0, 3, 0], sizes = [1, 1, 64], strides = [1, 1, 1]} : vector<4x4x64xf32> to vector<1x1x64xf32>
    %133 = vector.shape_cast %132 : vector<1x1x64xf32> to vector<1x64xf32>
    %134 = arith.truncf %133 : vector<1x64xf32> to vector<1x64xbf16>
    %c0_138 = arith.constant 0 : index
    %c192_139 = arith.constant 192 : index
    %135 = vector.load %arg15[%c0_138, %c192_139] : memref<1x1024xbf16, #tpu.memory_space<vmem>>, vector<1x64xbf16>
    tpu.vector_store %arg15[%c0_138, %c192_139], %134 {strides = array<i32>} : memref<1x1024xbf16, #tpu.memory_space<vmem>>, vector<1x64xbf16>,
    %136 = vector.extract_strided_slice %119 {offsets = [1, 0, 0], sizes = [1, 1, 64], strides = [1, 1, 1]} : vector<4x4x64xf32> to vector<1x1x64xf32>
    %137 = vector.shape_cast %136 : vector<1x1x64xf32> to vector<1x64xf32>
    %138 = arith.truncf %137 : vector<1x64xf32> to vector<1x64xbf16>
    %c0_140 = arith.constant 0 : index
    %c256_141 = arith.constant 256 : index
    %139 = vector.load %arg15[%c0_140, %c256_141] : memref<1x1024xbf16, #tpu.memory_space<vmem>>, vector<1x64xbf16>
    tpu.vector_store %arg15[%c0_140, %c256_141], %138 {strides = array<i32>} : memref<1x1024xbf16, #tpu.memory_space<vmem>>, vector<1x64xbf16>,
    %140 = vector.extract_strided_slice %119 {offsets = [1, 1, 0], sizes = [1, 1, 64], strides = [1, 1, 1]} : vector<4x4x64xf32> to vector<1x1x64xf32>
    %141 = vector.shape_cast %140 : vector<1x1x64xf32> to vector<1x64xf32>
    %142 = arith.truncf %141 : vector<1x64xf32> to vector<1x64xbf16>
    %c0_142 = arith.constant 0 : index
    %c320 = arith.constant 320 : index
    %143 = vector.load %arg15[%c0_142, %c320] : memref<1x1024xbf16, #tpu.memory_space<vmem>>, vector<1x64xbf16>
    tpu.vector_store %arg15[%c0_142, %c320], %142 {strides = array<i32>} : memref<1x1024xbf16, #tpu.memory_space<vmem>>, vector<1x64xbf16>,
    %144 = vector.extract_strided_slice %119 {offsets = [1, 2, 0], sizes = [1, 1, 64], strides = [1, 1, 1]} : vector<4x4x64xf32> to vector<1x1x64xf32>
    %145 = vector.shape_cast %144 : vector<1x1x64xf32> to vector<1x64xf32>
    %146 = arith.truncf %145 : vector<1x64xf32> to vector<1x64xbf16>
    %c0_143 = arith.constant 0 : index
    %c384 = arith.constant 384 : index
    %147 = vector.load %arg15[%c0_143, %c384] : memref<1x1024xbf16, #tpu.memory_space<vmem>>, vector<1x64xbf16>
    tpu.vector_store %arg15[%c0_143, %c384], %146 {strides = array<i32>} : memref<1x1024xbf16, #tpu.memory_space<vmem>>, vector<1x64xbf16>,
    %148 = vector.extract_strided_slice %119 {offsets = [1, 3, 0], sizes = [1, 1, 64], strides = [1, 1, 1]} : vector<4x4x64xf32> to vector<1x1x64xf32>
    %149 = vector.shape_cast %148 : vector<1x1x64xf32> to vector<1x64xf32>
    %150 = arith.truncf %149 : vector<1x64xf32> to vector<1x64xbf16>
    %c0_144 = arith.constant 0 : index
    %c448 = arith.constant 448 : index
    %151 = vector.load %arg15[%c0_144, %c448] : memref<1x1024xbf16, #tpu.memory_space<vmem>>, vector<1x64xbf16>
    tpu.vector_store %arg15[%c0_144, %c448], %150 {strides = array<i32>} : memref<1x1024xbf16, #tpu.memory_space<vmem>>, vector<1x64xbf16>,
    %152 = vector.extract_strided_slice %119 {offsets = [2, 0, 0], sizes = [1, 1, 64], strides = [1, 1, 1]} : vector<4x4x64xf32> to vector<1x1x64xf32>
    %153 = vector.shape_cast %152 : vector<1x1x64xf32> to vector<1x64xf32>
    %154 = arith.truncf %153 : vector<1x64xf32> to vector<1x64xbf16>
    %c0_145 = arith.constant 0 : index
    %c512 = arith.constant 512 : index
    %155 = vector.load %arg15[%c0_145, %c512] : memref<1x1024xbf16, #tpu.memory_space<vmem>>, vector<1x64xbf16>
    tpu.vector_store %arg15[%c0_145, %c512], %154 {strides = array<i32>} : memref<1x1024xbf16, #tpu.memory_space<vmem>>, vector<1x64xbf16>,
    %156 = vector.extract_strided_slice %119 {offsets = [2, 1, 0], sizes = [1, 1, 64], strides = [1, 1, 1]} : vector<4x4x64xf32> to vector<1x1x64xf32>
    %157 = vector.shape_cast %156 : vector<1x1x64xf32> to vector<1x64xf32>
    %158 = arith.truncf %157 : vector<1x64xf32> to vector<1x64xbf16>
    %c0_146 = arith.constant 0 : index
    %c576 = arith.constant 576 : index
    %159 = vector.load %arg15[%c0_146, %c576] : memref<1x1024xbf16, #tpu.memory_space<vmem>>, vector<1x64xbf16>
    tpu.vector_store %arg15[%c0_146, %c576], %158 {strides = array<i32>} : memref<1x1024xbf16, #tpu.memory_space<vmem>>, vector<1x64xbf16>,
    %160 = vector.extract_strided_slice %119 {offsets = [2, 2, 0], sizes = [1, 1, 64], strides = [1, 1, 1]} : vector<4x4x64xf32> to vector<1x1x64xf32>
    %161 = vector.shape_cast %160 : vector<1x1x64xf32> to vector<1x64xf32>
    %162 = arith.truncf %161 : vector<1x64xf32> to vector<1x64xbf16>
    %c0_147 = arith.constant 0 : index
    %c640 = arith.constant 640 : index
    %163 = vector.load %arg15[%c0_147, %c640] : memref<1x1024xbf16, #tpu.memory_space<vmem>>, vector<1x64xbf16>
    tpu.vector_store %arg15[%c0_147, %c640], %162 {strides = array<i32>} : memref<1x1024xbf16, #tpu.memory_space<vmem>>, vector<1x64xbf16>,
    %164 = vector.extract_strided_slice %119 {offsets = [2, 3, 0], sizes = [1, 1, 64], strides = [1, 1, 1]} : vector<4x4x64xf32> to vector<1x1x64xf32>
    %165 = vector.shape_cast %164 : vector<1x1x64xf32> to vector<1x64xf32>
    %166 = arith.truncf %165 : vector<1x64xf32> to vector<1x64xbf16>
    %c0_148 = arith.constant 0 : index
    %c704 = arith.constant 704 : index
    %167 = vector.load %arg15[%c0_148, %c704] : memref<1x1024xbf16, #tpu.memory_space<vmem>>, vector<1x64xbf16>
    tpu.vector_store %arg15[%c0_148, %c704], %166 {strides = array<i32>} : memref<1x1024xbf16, #tpu.memory_space<vmem>>, vector<1x64xbf16>,
    %168 = vector.extract_strided_slice %119 {offsets = [3, 0, 0], sizes = [1, 1, 64], strides = [1, 1, 1]} : vector<4x4x64xf32> to vector<1x1x64xf32>
    %169 = vector.shape_cast %168 : vector<1x1x64xf32> to vector<1x64xf32>
    %170 = arith.truncf %169 : vector<1x64xf32> to vector<1x64xbf16>
    %c0_149 = arith.constant 0 : index
    %c768 = arith.constant 768 : index
    %171 = vector.load %arg15[%c0_149, %c768] : memref<1x1024xbf16, #tpu.memory_space<vmem>>, vector<1x64xbf16>
    tpu.vector_store %arg15[%c0_149, %c768], %170 {strides = array<i32>} : memref<1x1024xbf16, #tpu.memory_space<vmem>>, vector<1x64xbf16>,
    %172 = vector.extract_strided_slice %119 {offsets = [3, 1, 0], sizes = [1, 1, 64], strides = [1, 1, 1]} : vector<4x4x64xf32> to vector<1x1x64xf32>
    %173 = vector.shape_cast %172 : vector<1x1x64xf32> to vector<1x64xf32>
    %174 = arith.truncf %173 : vector<1x64xf32> to vector<1x64xbf16>
    %c0_150 = arith.constant 0 : index
    %c832 = arith.constant 832 : index
    %175 = vector.load %arg15[%c0_150, %c832] : memref<1x1024xbf16, #tpu.memory_space<vmem>>, vector<1x64xbf16>
    tpu.vector_store %arg15[%c0_150, %c832], %174 {strides = array<i32>} : memref<1x1024xbf16, #tpu.memory_space<vmem>>, vector<1x64xbf16>,
    %176 = vector.extract_strided_slice %119 {offsets = [3, 2, 0], sizes = [1, 1, 64], strides = [1, 1, 1]} : vector<4x4x64xf32> to vector<1x1x64xf32>
    %177 = vector.shape_cast %176 : vector<1x1x64xf32> to vector<1x64xf32>
    %178 = arith.truncf %177 : vector<1x64xf32> to vector<1x64xbf16>
    %c0_151 = arith.constant 0 : index
    %c896 = arith.constant 896 : index
    %179 = vector.load %arg15[%c0_151, %c896] : memref<1x1024xbf16, #tpu.memory_space<vmem>>, vector<1x64xbf16>
    tpu.vector_store %arg15[%c0_151, %c896], %178 {strides = array<i32>} : memref<1x1024xbf16, #tpu.memory_space<vmem>>, vector<1x64xbf16>,
    %180 = vector.extract_strided_slice %119 {offsets = [3, 3, 0], sizes = [1, 1, 64], strides = [1, 1, 1]} : vector<4x4x64xf32> to vector<1x1x64xf32>
    %181 = vector.shape_cast %180 : vector<1x1x64xf32> to vector<1x64xf32>
    %182 = arith.truncf %181 : vector<1x64xf32> to vector<1x64xbf16>
    %c0_152 = arith.constant 0 : index
    %c960 = arith.constant 960 : index
    %183 = vector.load %arg15[%c0_152, %c960] : memref<1x1024xbf16, #tpu.memory_space<vmem>>, vector<1x64xbf16>
    tpu.vector_store %arg15[%c0_152, %c960], %182 {strides = array<i32>} : memref<1x1024xbf16, #tpu.memory_space<vmem>>, vector<1x64xbf16>,
    %c0_153 = arith.constant 0 : index
    %c0_154 = arith.constant 0 : index
    %184 = vector.load %arg15[%c0_153, %c0_154] : memref<1x1024xbf16, #tpu.memory_space<vmem>>, vector<1x1024xbf16>
    %c0_155 = arith.constant 0 : index
    %c0_156 = arith.constant 0 : index
    %185 = vector.load %arg6[%c0_155, %c0_156] : memref<1024x32xbf16, #tpu.memory_space<vmem>>, vector<1024x32xbf16>
    %cst_157 = arith.constant dense<0.000000e+00> : vector<1x32xf32>
    %186 = tpu.matmul %184, %185, %cst_157 {dimension_numbers = #tpu.dot_dimension_numbers<[1], [0], [0], [1], [0, 0, 1, 1], [], []>} : vector<1x1024xbf16>, vector<1024x32xbf16>, vector<1x32xf32> -> vector<1x32xf32>
    %c0_158 = arith.constant 0 : index
    %c0_159 = arith.constant 0 : index
    %187 = vector.load %arg7[%c0_158, %c0_159] : memref<1x32xf32, #tpu.memory_space<vmem>>, vector<1x32xf32>
    %188 = arith.addf %186, %187 : vector<1x32xf32>
    %cst_160 = arith.constant 0.000000e+00 : f32
    %189 = vector.broadcast %cst_160 : f32 to vector<1x32xf32>
    %190 = arith.maximumf %188, %189 : vector<1x32xf32>
    %191 = arith.truncf %190 : vector<1x32xf32> to vector<1x32xbf16>
    %c0_161 = arith.constant 0 : index
    %c0_162 = arith.constant 0 : index
    %192 = vector.load %arg8[%c0_161, %c0_162] : memref<32x2xbf16, #tpu.memory_space<vmem>>, vector<32x2xbf16>
    %cst_163 = arith.constant dense<0.000000e+00> : vector<1x2xf32>
    %193 = tpu.matmul %191, %192, %cst_163 {dimension_numbers = #tpu.dot_dimension_numbers<[1], [0], [0], [1], [0, 0, 1, 1], [], []>} : vector<1x32xbf16>, vector<32x2xbf16>, vector<1x2xf32> -> vector<1x2xf32>
    %c0_164 = arith.constant 0 : index
    %c0_165 = arith.constant 0 : index
    %194 = vector.load %arg9[%c0_164, %c0_165] : memref<1x2xf32, #tpu.memory_space<vmem>>, vector<1x2xf32>
    %195 = arith.addf %193, %194 : vector<1x2xf32>
    %c0_166 = arith.constant 0 : index
    %c0_167 = arith.constant 0 : index
    %c0_168 = arith.constant 0 : index
    %196 = vector.load %arg10[%c0_166, %c0_167, %c0_168] : memref<1x1x2xf32, #tpu.memory_space<vmem>>, vector<1x1x2xf32>
    %197 = vector.shape_cast %196 : vector<1x1x2xf32> to vector<1x2xf32>
    %198 = vector.shape_cast %195 : vector<1x2xf32> to vector<1x1x2xf32>
    tpu.vector_store %arg10[%c0_166, %c0_167, %c0_168], %198 {strides = array<i32>} : memref<1x1x2xf32, #tpu.memory_space<vmem>>, vector<1x1x2xf32>,
    return
  }
  func.func @transform_0(%arg0: i32) -> (i32, i32, i32, i32) {
    %c0_i32 = arith.constant 0 : i32
    %c0_i32_0 = arith.constant 0 : i32
    %c0_i32_1 = arith.constant 0 : i32
    %c0_i32_2 = arith.constant 0 : i32
    return %arg0, %c0_i32, %c0_i32_0, %c0_i32_1 : i32, i32, i32, i32
  }
  func.func @transform_1(%arg0: i32) -> (i32, i32) {
    %c0_i32 = arith.constant 0 : i32
    %c0_i32_0 = arith.constant 0 : i32
    %c0_i32_1 = arith.constant 0 : i32
    return %c0_i32, %c0_i32_0 : i32, i32
  }
  func.func @transform_2(%arg0: i32) -> (i32, i32) {
    %c0_i32 = arith.constant 0 : i32
    %c0_i32_0 = arith.constant 0 : i32
    %c0_i32_1 = arith.constant 0 : i32
    return %c0_i32, %c0_i32_0 : i32, i32
  }
  func.func @transform_3(%arg0: i32) -> (i32, i32) {
    %c0_i32 = arith.constant 0 : i32
    %c0_i32_0 = arith.constant 0 : i32
    %c0_i32_1 = arith.constant 0 : i32
    return %c0_i32, %c0_i32_0 : i32, i32
  }
  func.func @transform_4(%arg0: i32) -> (i32, i32) {
    %c0_i32 = arith.constant 0 : i32
    %c0_i32_0 = arith.constant 0 : i32
    %c0_i32_1 = arith.constant 0 : i32
    return %c0_i32, %c0_i32_0 : i32, i32
  }
  func.func @transform_5(%arg0: i32) -> (i32, i32) {
    %c0_i32 = arith.constant 0 : i32
    %c0_i32_0 = arith.constant 0 : i32
    %c0_i32_1 = arith.constant 0 : i32
    return %c0_i32, %c0_i32_0 : i32, i32
  }
  func.func @transform_6(%arg0: i32) -> (i32, i32) {
    %c0_i32 = arith.constant 0 : i32
    %c0_i32_0 = arith.constant 0 : i32
    %c0_i32_1 = arith.constant 0 : i32
    return %c0_i32, %c0_i32_0 : i32, i32
  }
  func.func @transform_7(%arg0: i32) -> (i32, i32) {
    %c0_i32 = arith.constant 0 : i32
    %c0_i32_0 = arith.constant 0 : i32
    %c0_i32_1 = arith.constant 0 : i32
    return %c0_i32, %c0_i32_0 : i32, i32
  }
  func.func @transform_8(%arg0: i32) -> (i32, i32) {
    %c0_i32 = arith.constant 0 : i32
    %c0_i32_0 = arith.constant 0 : i32
    %c0_i32_1 = arith.constant 0 : i32
    return %c0_i32, %c0_i32_0 : i32, i32
  }
  func.func @transform_9(%arg0: i32) -> (i32, i32, i32) {
    %c0_i32 = arith.constant 0 : i32
    %c0_i32_0 = arith.constant 0 : i32
    %c0_i32_1 = arith.constant 0 : i32
    return %arg0, %c0_i32, %c0_i32_0 : i32, i32, i32
  }
}

</mosaic_0001>

<llo_original>
// kernel: tpu_custom_call.1
$region0: #{tpu_custom_call.1}
  #allocation0 [shape = 'u32[]', space=smem, size = 0x4, offset = 0x4, fixed_abs, tag = 'smem constant byte address 0x4 - core index']
  #allocation1 [shape = 'u32[144,128]{1,0:T(1,128)}', space=vmem, size = 0x12000, scoped, tag = 'internal scratch']
  #allocation2 [shape = 'f32[18,32,3]{2,1,0:T(8,128)}', space=vmem, size = 0x48000, scoped, tag = 'scratch operand']
  #allocation3 [shape = 'bf16[256,128]{1,0:T(8,128)(2,1)}', space=vmem, size = 0x10000, scoped, tag = 'scratch operand']
  #allocation4 [shape = 'f32[10,24,32]{2,1,0:T(8,128)}', space=vmem, size = 0x1e000, scoped, tag = 'scratch operand']
  #allocation5 [shape = 'bf16[64,384]{1,0:T(8,128)(2,1)}', space=vmem, size = 0xc000, scoped, tag = 'scratch operand']
  #allocation6 [shape = 'bf16[1,1024]{1,0:T(2,128)(2,1)}', space=vmem, size = 0x1000, scoped, tag = 'scratch operand']
  %s0 = inlined_call_operand.vmem [shape: f32[2,16,16,3], index: 0, kind: input, shape index: {}]
  %s1 = inlined_call_operand.vmem [shape: bf16[128,32], index: 1, kind: input, shape index: {}]
  %s2 = inlined_call_operand.vmem [shape: f32[1,32], index: 2, kind: input, shape index: {}]
  %s3 = inlined_call_operand.vmem [shape: bf16[384,64], index: 3, kind: input, shape index: {}]
  %s4 = inlined_call_operand.vmem [shape: f32[1,64], index: 4, kind: input, shape index: {}]
  %s5 = inlined_call_operand.vmem [shape: bf16[1024,32], index: 5, kind: input, shape index: {}]
  %s6 = inlined_call_operand.vmem [shape: f32[1,32], index: 6, kind: input, shape index: {}]
  %s7 = inlined_call_operand.vmem [shape: bf16[32,2], index: 7, kind: input, shape index: {}]
  %s8 = inlined_call_operand.vmem [shape: f32[1,2], index: 8, kind: input, shape index: {}]
  %s9 = inlined_call_operand.hbm [shape: f32[2,1,2], index: 9, kind: output, shape index: {}]
  %s10 = sld [smem:[#allocation0]]
  $region69: #{tpu_custom_call.1} parent=0
    _
  %s12 = ssub.s32 1, %s10
  %s13 = scalar_select 0, %s12, %s10
  $region1: #{tpu_custom_call.1} parent=0
    #allocation7 [shape = 'u8[1024]{0}', space=vmem, size = 0x400, scoped, tag = 'output window, operand 0']
    #allocation8 [shape = 's32[2]{0}', space=sflag, size = 0x8, scoped, tag = 'scoped memory for tpu_custom_call.1']
    %14 = vsyncpa [#allocation8], 0
    %s15 = scalar_lea.sflag [#allocation8], 1
    %16 = vsyncpa %s15, 0
    loop: start=0, step=1, limit=4
    $region2: #{tpu_custom_call.1} parent=1 // loop_pre_header
      _
    $region3: #{tpu_custom_call.1} parent=1 // loop_header
      %s18 = sphi 0, %s22
      %p19 = scmp.ge.s32.totalorder %s18, 4
      %s28 = sphi 0, %s30
      %s31 = sphi 0, %s28
      %s32 = sphi 0, %s31
      %s48 = sphi 0, %s32
      %s52 = sphi 0, %s52
      %s54 = sphi 0, %s52
      %s55 = sphi 0, %s54
      %s69 = sphi 0, %s55
      %s73 = sphi 0, %s73
      %s75 = sphi 0, %s73
      %s76 = sphi 0, %s75
      %s90 = sphi 0, %s76
      %s94 = sphi 0, %s94
      %s96 = sphi 0, %s94
      %s97 = sphi 0, %s96
      %s111 = sphi 0, %s97
      %s115 = sphi 0, %s115
      %s117 = sphi 0, %s115
      %s118 = sphi 0, %s117
      %s132 = sphi 0, %s118
      %s136 = sphi 0, %s136
      %s138 = sphi 0, %s136
      %s139 = sphi 0, %s138
      %s153 = sphi 0, %s139
      %s157 = sphi 0, %s157
      %s159 = sphi 0, %s157
      %s160 = sphi 0, %s159
      %s174 = sphi 0, %s160
      %s178 = sphi 0, %s178
      %s180 = sphi 0, %s178
      %s181 = sphi 0, %s180
      %s195 = sphi 0, %s181
      %s199 = sphi 0, %s199
      %s201 = sphi 0, %s199
      %s202 = sphi 0, %s201
      %s216 = sphi 0, %s202
      %s222 = sphi 0, %s224
      %s225 = sphi 0, %s222
      %s226 = sphi 0, %s225
      %s242 = sphi 0, %s226
    $region4: #{tpu_custom_call.1} parent=1 // loop_header_branch
      %21 = sbr.rel (%p19) target = $region8
    $region5: #{tpu_custom_call.1} parent=1 // loop_body
      %s23 = ssub.s32 %s18, 1
      %s24 = ssub.s32 %s18, 2
      %s25 = sadd.s32 %s18, 1
      %s26 = ssub.s32 %s18, %s25
      %p27 = scmp.eq.s32.totalorder %s26, 0
      %s29 = sadd.s32 %s28, 1
      %s30 = scalar_select %p27, %s28, %s29
      %p33 = pneg %p27
      %p34 = scmp.eq.s32.totalorder %s18, 1
      %p35 = por %p33, %p34
      %p36 = scmp.ne.s32.totalorder %s28, %s31
      %p37 = scmp.eq.s32.totalorder %s18, 0
      %p38 = por %p36, %p37
      %p39 = scmp.ne.s32.totalorder %s28, %s31
      %p40 = scmp.eq.s32.totalorder %s23, 1
      %p41 = por %p39, %p40
      %p42 = scmp.ne.s32.totalorder %s31, %s32
      %p43 = scmp.eq.s32.totalorder %s23, 0
      %p44 = por %p42, %p43
      %p45 = scmp.ne.s32.totalorder %s31, %s32
      %p46 = scmp.eq.s32.totalorder %s24, 1
      %p47 = por %p45, %p46
      %p49 = scmp.ne.s32.totalorder %s32, %s48
      %p50 = scmp.eq.s32.totalorder %s24, 0
      %p51 = por %p49, %p50
      %s53 = sadd.s32 %s52, 1
      %p56 = scmp.eq.s32.totalorder %s18, 1
      %p57 = scmp.ne.s32.totalorder %s52, %s54
      %p58 = scmp.eq.s32.totalorder %s18, 0
      %p59 = por %p57, %p58
      %p60 = scmp.ne.s32.totalorder %s52, %s54
      %p61 = scmp.eq.s32.totalorder %s23, 1
      %p62 = por %p60, %p61
      %p63 = scmp.ne.s32.totalorder %s54, %s55
      %p64 = scmp.eq.s32.totalorder %s23, 0
      %p65 = por %p63, %p64
      %p66 = scmp.ne.s32.totalorder %s54, %s55
      %p67 = scmp.eq.s32.totalorder %s24, 1
      %p68 = por %p66, %p67
      %p70 = scmp.ne.s32.totalorder %s55, %s69
      %p71 = scmp.eq.s32.totalorder %s24, 0
      %p72 = por %p70, %p71
      %s74 = sadd.s32 %s73, 1
      %p77 = scmp.eq.s32.totalorder %s18, 1
      %p78 = scmp.ne.s32.totalorder %s73, %s75
      %p79 = scmp.eq.s32.totalorder %s18, 0
      %p80 = por %p78, %p79
      %p81 = scmp.ne.s32.totalorder %s73, %s75
      %p82 = scmp.eq.s32.totalorder %s23, 1
      %p83 = por %p81, %p82
      %p84 = scmp.ne.s32.totalorder %s75, %s76
      %p85 = scmp.eq.s32.totalorder %s23, 0
      %p86 = por %p84, %p85
      %p87 = scmp.ne.s32.totalorder %s75, %s76
      %p88 = scmp.eq.s32.totalorder %s24, 1
      %p89 = por %p87, %p88
      %p91 = scmp.ne.s32.totalorder %s76, %s90
      %p92 = scmp.eq.s32.totalorder %s24, 0
      %p93 = por %p91, %p92
      %s95 = sadd.s32 %s94, 1
      %p98 = scmp.eq.s32.totalorder %s18, 1
      %p99 = scmp.ne.s32.totalorder %s94, %s96
      %p100 = scmp.eq.s32.totalorder %s18, 0
      %p101 = por %p99, %p100
      %p102 = scmp.ne.s32.totalorder %s94, %s96
      %p103 = scmp.eq.s32.totalorder %s23, 1
      %p104 = por %p102, %p103
      %p105 = scmp.ne.s32.totalorder %s96, %s97
      %p106 = scmp.eq.s32.totalorder %s23, 0
      %p107 = por %p105, %p106
      %p108 = scmp.ne.s32.totalorder %s96, %s97
      %p109 = scmp.eq.s32.totalorder %s24, 1
      %p110 = por %p108, %p109
      %p112 = scmp.ne.s32.totalorder %s97, %s111
      %p113 = scmp.eq.s32.totalorder %s24, 0
      %p114 = por %p112, %p113
      %s116 = sadd.s32 %s115, 1
      %p119 = scmp.eq.s32.totalorder %s18, 1
      %p120 = scmp.ne.s32.totalorder %s115, %s117
      %p121 = scmp.eq.s32.totalorder %s18, 0
      %p122 = por %p120, %p121
      %p123 = scmp.ne.s32.totalorder %s115, %s117
      %p124 = scmp.eq.s32.totalorder %s23, 1
      %p125 = por %p123, %p124
      %p126 = scmp.ne.s32.totalorder %s117, %s118
      %p127 = scmp.eq.s32.totalorder %s23, 0
      %p128 = por %p126, %p127
      %p129 = scmp.ne.s32.totalorder %s117, %s118
      %p130 = scmp.eq.s32.totalorder %s24, 1
      %p131 = por %p129, %p130
      %p133 = scmp.ne.s32.totalorder %s118, %s132
      %p134 = scmp.eq.s32.totalorder %s24, 0
      %p135 = por %p133, %p134
      %s137 = sadd.s32 %s136, 1
      %p140 = scmp.eq.s32.totalorder %s18, 1
      %p141 = scmp.ne.s32.totalorder %s136, %s138
      %p142 = scmp.eq.s32.totalorder %s18, 0
      %p143 = por %p141, %p142
      %p144 = scmp.ne.s32.totalorder %s136, %s138
      %p145 = scmp.eq.s32.totalorder %s23, 1
      %p146 = por %p144, %p145
      %p147 = scmp.ne.s32.totalorder %s138, %s139
      %p148 = scmp.eq.s32.totalorder %s23, 0
      %p149 = por %p147, %p148
      %p150 = scmp.ne.s32.totalorder %s138, %s139
      %p151 = scmp.eq.s32.totalorder %s24, 1
      %p152 = por %p150, %p151
      %p154 = scmp.ne.s32.totalorder %s139, %s153
      %p155 = scmp.eq.s32.totalorder %s24, 0
      %p156 = por %p154, %p155
      %s158 = sadd.s32 %s157, 1
      %p161 = scmp.eq.s32.totalorder %s18, 1
      %p162 = scmp.ne.s32.totalorder %s157, %s159
      %p163 = scmp.eq.s32.totalorder %s18, 0
      %p164 = por %p162, %p163
      %p165 = scmp.ne.s32.totalorder %s157, %s159
      %p166 = scmp.eq.s32.totalorder %s23, 1
      %p167 = por %p165, %p166
      %p168 = scmp.ne.s32.totalorder %s159, %s160
      %p169 = scmp.eq.s32.totalorder %s23, 0
      %p170 = por %p168, %p169
      %p171 = scmp.ne.s32.totalorder %s159, %s160
      %p172 = scmp.eq.s32.totalorder %s24, 1
      %p173 = por %p171, %p172
      %p175 = scmp.ne.s32.totalorder %s160, %s174
      %p176 = scmp.eq.s32.totalorder %s24, 0
      %p177 = por %p175, %p176
      %s179 = sadd.s32 %s178, 1
      %p182 = scmp.eq.s32.totalorder %s18, 1
      %p183 = scmp.ne.s32.totalorder %s178, %s180
      %p184 = scmp.eq.s32.totalorder %s18, 0
      %p185 = por %p183, %p184
      %p186 = scmp.ne.s32.totalorder %s178, %s180
      %p187 = scmp.eq.s32.totalorder %s23, 1
      %p188 = por %p186, %p187
      %p189 = scmp.ne.s32.totalorder %s180, %s181
      %p190 = scmp.eq.s32.totalorder %s23, 0
      %p191 = por %p189, %p190
      %p192 = scmp.ne.s32.totalorder %s180, %s181
      %p193 = scmp.eq.s32.totalorder %s24, 1
      %p194 = por %p192, %p193
      %p196 = scmp.ne.s32.totalorder %s181, %s195
      %p197 = scmp.eq.s32.totalorder %s24, 0
      %p198 = por %p196, %p197
      %s200 = sadd.s32 %s199, 1
      %p203 = scmp.eq.s32.totalorder %s18, 1
      %p204 = scmp.ne.s32.totalorder %s199, %s201
      %p205 = scmp.eq.s32.totalorder %s18, 0
      %p206 = por %p204, %p205
      %p207 = scmp.ne.s32.totalorder %s199, %s201
      %p208 = scmp.eq.s32.totalorder %s23, 1
      %p209 = por %p207, %p208
      %p210 = scmp.ne.s32.totalorder %s201, %s202
      %p211 = scmp.eq.s32.totalorder %s23, 0
      %p212 = por %p210, %p211
      %p213 = scmp.ne.s32.totalorder %s201, %s202
      %p214 = scmp.eq.s32.totalorder %s24, 1
      %p215 = por %p213, %p214
      %p217 = scmp.ne.s32.totalorder %s202, %s216
      %p218 = scmp.eq.s32.totalorder %s24, 0
      %p219 = por %p217, %p218
      %s220 = ssub.s32 %s18, %s25
      %p221 = scmp.eq.s32.totalorder %s220, 0
      %s223 = sadd.s32 %s222, 1
      %s224 = scalar_select %p221, %s222, %s223
      %p227 = pneg %p221
      %p228 = scmp.eq.s32.totalorder %s18, 1
      %p229 = por %p227, %p228
      %p230 = scmp.ne.s32.totalorder %s222, %s225
      %p231 = scmp.eq.s32.totalorder %s18, 0
      %p232 = por %p230, %p231
      %p233 = scmp.ne.s32.totalorder %s222, %s225
      %p234 = scmp.eq.s32.totalorder %s23, 1
      %p235 = por %p233, %p234
      %p236 = scmp.ne.s32.totalorder %s225, %s226
      %p237 = scmp.eq.s32.totalorder %s23, 0
      %p238 = por %p236, %p237
      %p239 = scmp.ne.s32.totalorder %s225, %s226
      %p240 = scmp.eq.s32.totalorder %s24, 1
      %p241 = por %p239, %p240
      %p243 = scmp.ne.s32.totalorder %s226, %s242
      %p244 = scmp.eq.s32.totalorder %s24, 0
      %p245 = por %p243, %p244
      %p246 = scmp.le.s32.totalorder 1, %s18
      %p247 = scmp.lt.s32.totalorder %s18, 3
      %p248 = pnand %p246, %p247
      %p249 = pneg %p248
      // Predicated region
      $region9: #{tpu_custom_call.1} parent=5 // pred_check
        _
      $region10: #{tpu_custom_call.1} parent=5 // pred_check_branch
        %251 = sbr.rel (%p248) target = $region12
      $region11: #{tpu_custom_call.1} parent=5 // pred_region
        %s252 = ssub.s32 %s18, 1
        // Predicated region
        $region13: #{tpu_custom_call.1} parent=11 // pred_check
          %p253 = pneg %p65
        $region14: #{tpu_custom_call.1} parent=11 // pred_check_branch
          %255 = sbr.rel (%p253) target = $region16
        $region15: #{tpu_custom_call.1} parent=11 // pred_region
          _
        $region16: #{tpu_custom_call.1} parent=11 // pred_fallthru
          _
        // Predicated region
        $region17: #{tpu_custom_call.1} parent=11 // pred_check
          %p256 = pneg %p86
        $region18: #{tpu_custom_call.1} parent=11 // pred_check_branch
          %258 = sbr.rel (%p256) target = $region20
        $region19: #{tpu_custom_call.1} parent=11 // pred_region
          _
        $region20: #{tpu_custom_call.1} parent=11 // pred_fallthru
          _
        // Predicated region
        $region21: #{tpu_custom_call.1} parent=11 // pred_check
          %p259 = pneg %p107
        $region22: #{tpu_custom_call.1} parent=11 // pred_check_branch
          %261 = sbr.rel (%p259) target = $region24
        $region23: #{tpu_custom_call.1} parent=11 // pred_region
          _
        $region24: #{tpu_custom_call.1} parent=11 // pred_fallthru
          _
        // Predicated region
        $region25: #{tpu_custom_call.1} parent=11 // pred_check
          %p262 = pneg %p128
        $region26: #{tpu_custom_call.1} parent=11 // pred_check_branch
          %264 = sbr.rel (%p262) target = $region28
        $region27: #{tpu_custom_call.1} parent=11 // pred_region
          _
        $region28: #{tpu_custom_call.1} parent=11 // pred_fallthru
          _
        // Predicated region
        $region29: #{tpu_custom_call.1} parent=11 // pred_check
          %p265 = pneg %p149
        $region30: #{tpu_custom_call.1} parent=11 // pred_check_branch
          %267 = sbr.rel (%p265) target = $region32
        $region31: #{tpu_custom_call.1} parent=11 // pred_region
          _
        $region32: #{tpu_custom_call.1} parent=11 // pred_fallthru
          _
        // Predicated region
        $region33: #{tpu_custom_call.1} parent=11 // pred_check
          %p268 = pneg %p170
        $region34: #{tpu_custom_call.1} parent=11 // pred_check_branch
          %270 = sbr.rel (%p268) target = $region36
        $region35: #{tpu_custom_call.1} parent=11 // pred_region
          _
        $region36: #{tpu_custom_call.1} parent=11 // pred_fallthru
          _
        // Predicated region
        $region37: #{tpu_custom_call.1} parent=11 // pred_check
          %p271 = pneg %p191
        $region38: #{tpu_custom_call.1} parent=11 // pred_check_branch
          %273 = sbr.rel (%p271) target = $region40
        $region39: #{tpu_custom_call.1} parent=11 // pred_region
          _
        $region40: #{tpu_custom_call.1} parent=11 // pred_fallthru
          _
        // Predicated region
        $region41: #{tpu_custom_call.1} parent=11 // pred_check
          %p274 = pneg %p212
        $region42: #{tpu_custom_call.1} parent=11 // pred_check_branch
          %276 = sbr.rel (%p274) target = $region44
        $region43: #{tpu_custom_call.1} parent=11 // pred_region
          _
        $region44: #{tpu_custom_call.1} parent=11 // pred_fallthru
          _
      $region12: #{tpu_custom_call.1} parent=5 // pred_fallthru
        _
      %p277 = scmp.lt.s32.totalorder %s18, 2
      // Predicated region
      $region45: #{tpu_custom_call.1} parent=5 // pred_check
        %p278 = pneg %p277
      $region46: #{tpu_custom_call.1} parent=5 // pred_check_branch
        %280 = sbr.rel (%p278) target = $region48
      $region47: #{tpu_custom_call.1} parent=5 // pred_region
        // Predicated region
        $region49: #{tpu_custom_call.1} parent=47 // pred_check
          %p281 = pneg %p38
        $region50: #{tpu_custom_call.1} parent=47 // pred_check_branch
          %283 = sbr.rel (%p281) target = $region52
        $region51: #{tpu_custom_call.1} parent=47 // pred_region
          %p284 = scmp.lt.s32.totalorder %s18, 1
          %s285 = scalar_select %p284, %s18, 1
          %s286 = smul.addr %s285, 32
          %s287 = smul.addr %s286, 8
          %s288 = scalar_lea.vmem %s0, %s287
        $region52: #{tpu_custom_call.1} parent=47 // pred_fallthru
          _
      $region48: #{tpu_custom_call.1} parent=5 // pred_fallthru
        _
      %p289 = scmp.le.s32.totalorder 1, %s18
      %p290 = scmp.lt.s32.totalorder %s18, 3
      %p291 = pnand %p289, %p290
      %p292 = pneg %p291
      // Predicated region
      $region53: #{tpu_custom_call.1} parent=5 // pred_check
        _
      $region54: #{tpu_custom_call.1} parent=5 // pred_check_branch
        %294 = sbr.rel (%p291) target = $region56
      $region55: #{tpu_custom_call.1} parent=5 // pred_region
        %s295 = ssub.s32 %s18, 1
        %p296 = scmp.lt.s32.totalorder %s23, 1
        %s297 = scalar_select %p296, %s23, 1
        %s298 = smul.addr %s297, 32
        %s299 = smul.addr %s298, 8
        %s300 = scalar_lea.vmem %s0, %s299
        %p301 = pneg %p44
        %p302 = pneg %p41
        %p303 = pneg %p65
        %p304 = pneg %p62
        %p305 = pneg %p86
        %p306 = pneg %p83
        %p307 = pneg %p107
        %p308 = pneg %p104
        %p309 = pneg %p128
        %p310 = pneg %p125
        %p311 = pneg %p149
        %p312 = pneg %p146
        %p313 = pneg %p170
        %p314 = pneg %p167
        %p315 = pneg %p191
        %p316 = pneg %p188
        %p317 = pneg %p212
        %p318 = pneg %p209
        %p319 = pneg %p238
        %p320 = pneg %p235
        %s321 = sand.u32 %s225, 1
        %s322 = scalar_lea.sflag [#allocation8], %s321
        %s323 = sand.u32 %s225, 1
        %s324 = scalar_lea.vmem [#allocation7], %s323
        %p325 = scmp.lt.s32.totalorder %s23, 1
        %s326 = scalar_select %p325, %s23, 1
        %s327 = smul.addr %s326, 32
        %s328 = smul.addr %s327, 8
        %s329 = scalar_lea.vmem %s0, %s328
        %v331 = vld [vmem:[%s329] sm:$0xff]
        %v332 = vld [vmem:[%s329 + $0x8] sm:$0xff]
        %v333 = vld [vmem:[%s329 + $0x10] sm:$0xff]
        %v334 = vld [vmem:[%s329 + $0x18] sm:$0xff]
        %v335 = vld [vmem:[%s329 + $0x20] sm:$0xff]
        %v336 = vld [vmem:[%s329 + $0x28] sm:$0xff]
        %v337 = vld [vmem:[%s329 + $0x30] sm:$0xff]
        %v338 = vld [vmem:[%s329 + $0x38] sm:$0xff]
        %v339 = vld [vmem:[%s329 + $0x40] sm:$0xff]
        %v340 = vld [vmem:[%s329 + $0x48] sm:$0xff]
        %v341 = vld [vmem:[%s329 + $0x50] sm:$0xff]
        %v342 = vld [vmem:[%s329 + $0x58] sm:$0xff]
        %v343 = vld [vmem:[%s329 + $0x60] sm:$0xff]
        %v344 = vld [vmem:[%s329 + $0x68] sm:$0xff]
        %v345 = vld [vmem:[%s329 + $0x70] sm:$0xff]
        %v346 = vld [vmem:[%s329 + $0x78] sm:$0xff]
        %v347 = vld [vmem:[%s329 + $0x80] sm:$0xff]
        %v348 = vld [vmem:[%s329 + $0x88] sm:$0xff]
        %v349 = vld [vmem:[%s329 + $0x90] sm:$0xff]
        %v350 = vld [vmem:[%s329 + $0x98] sm:$0xff]
        %v351 = vld [vmem:[%s329 + $0xa0] sm:$0xff]
        %v352 = vld [vmem:[%s329 + $0xa8] sm:$0xff]
        %v353 = vld [vmem:[%s329 + $0xb0] sm:$0xff]
        %v354 = vld [vmem:[%s329 + $0xb8] sm:$0xff]
        %v355 = vld [vmem:[%s329 + $0xc0] sm:$0xff]
        %v356 = vld [vmem:[%s329 + $0xc8] sm:$0xff]
        %v357 = vld [vmem:[%s329 + $0xd0] sm:$0xff]
        %v358 = vld [vmem:[%s329 + $0xd8] sm:$0xff]
        %v359 = vld [vmem:[%s329 + $0xe0] sm:$0xff]
        %v360 = vld [vmem:[%s329 + $0xe8] sm:$0xff]
        %v361 = vld [vmem:[%s329 + $0xf0] sm:$0xff]
        %v362 = vld [vmem:[%s329 + $0xf8] sm:$0xff]
        %vm363 = vcmask 23552
        %364 = vst.msk [vmem:[#allocation2] sm:$0xff] %vm363, 0.0
        %365 = vst.msk [vmem:[#allocation2 + $0x8] sm:$0xff] %vm363, 0.0
        %366 = vst.msk [vmem:[#allocation2 + $0x10] sm:$0xff] %vm363, 0.0
        %367 = vst.msk [vmem:[#allocation2 + $0x18] sm:$0xff] %vm363, 0.0
        %s368 = scalar_lea.vmem [#allocation2], 544
        %369 = vst.msk [vmem:[%s368] sm:$0xff] %vm363, 0.0
        %370 = vst.msk [vmem:[%s368 + $0x8] sm:$0xff] %vm363, 0.0
        %371 = vst.msk [vmem:[%s368 + $0x10] sm:$0xff] %vm363, 0.0
        %372 = vst.msk [vmem:[%s368 + $0x18] sm:$0xff] %vm363, 0.0
        %s373 = scalar_lea.vmem [#allocation2], 32
        %374 = vst.msk [vmem:[%s373] sm:$0xff] %vm363, 0.0
        %375 = vst.msk [vmem:[%s373 + $0x20] sm:$0xff] %vm363, 0.0
        %376 = vst.msk [vmem:[%s373 + $0x40] sm:$0xff] %vm363, 0.0
        %377 = vst.msk [vmem:[%s373 + $0x60] sm:$0xff] %vm363, 0.0
        %378 = vst.msk [vmem:[%s373 + $0x80] sm:$0xff] %vm363, 0.0
        %379 = vst.msk [vmem:[%s373 + $0xa0] sm:$0xff] %vm363, 0.0
        %380 = vst.msk [vmem:[%s373 + $0xc0] sm:$0xff] %vm363, 0.0
        %381 = vst.msk [vmem:[%s373 + $0xe0] sm:$0xff] %vm363, 0.0
        %382 = vst.msk [vmem:[%s373 + $0x100] sm:$0xff] %vm363, 0.0
        %383 = vst.msk [vmem:[%s373 + $0x120] sm:$0xff] %vm363, 0.0
        %384 = vst.msk [vmem:[%s373 + $0x140] sm:$0xff] %vm363, 0.0
        %385 = vst.msk [vmem:[%s373 + $0x160] sm:$0xff] %vm363, 0.0
        %386 = vst.msk [vmem:[%s373 + $0x180] sm:$0xff] %vm363, 0.0
        %387 = vst.msk [vmem:[%s373 + $0x1a0] sm:$0xff] %vm363, 0.0
        %388 = vst.msk [vmem:[%s373 + $0x1c0] sm:$0xff] %vm363, 0.0
        %389 = vst.msk [vmem:[%s373 + $0x1e0] sm:$0xff] %vm363, 0.0
        %390 = vst.msk [vmem:[%s373 + $0x18] sm:$0xff] %vm363, 0.0
        %391 = vst.msk [vmem:[%s373 + $0x38] sm:$0xff] %vm363, 0.0
        %392 = vst.msk [vmem:[%s373 + $0x58] sm:$0xff] %vm363, 0.0
        %393 = vst.msk [vmem:[%s373 + $0x78] sm:$0xff] %vm363, 0.0
        %394 = vst.msk [vmem:[%s373 + $0x98] sm:$0xff] %vm363, 0.0
        %395 = vst.msk [vmem:[%s373 + $0xb8] sm:$0xff] %vm363, 0.0
        %396 = vst.msk [vmem:[%s373 + $0xd8] sm:$0xff] %vm363, 0.0
        %397 = vst.msk [vmem:[%s373 + $0xf8] sm:$0xff] %vm363, 0.0
        %398 = vst.msk [vmem:[%s373 + $0x118] sm:$0xff] %vm363, 0.0
        %399 = vst.msk [vmem:[%s373 + $0x138] sm:$0xff] %vm363, 0.0
        %400 = vst.msk [vmem:[%s373 + $0x158] sm:$0xff] %vm363, 0.0
        %401 = vst.msk [vmem:[%s373 + $0x178] sm:$0xff] %vm363, 0.0
        %402 = vst.msk [vmem:[%s373 + $0x198] sm:$0xff] %vm363, 0.0
        %403 = vst.msk [vmem:[%s373 + $0x1b8] sm:$0xff] %vm363, 0.0
        %404 = vst.msk [vmem:[%s373 + $0x1d8] sm:$0xff] %vm363, 0.0
        %405 = vst.msk [vmem:[%s373 + $0x1f8] sm:$0xff] %vm363, 0.0
        %406 = vst.msk [vmem:[%s373 + $0x8] sm:$0xff] %vm363, %v331
        %407 = vst.msk [vmem:[%s373 + $0x10] sm:$0xff] %vm363, %v332
        %408 = vst.msk [vmem:[%s373 + $0x28] sm:$0xff] %vm363, %v333
        %409 = vst.msk [vmem:[%s373 + $0x30] sm:$0xff] %vm363, %v334
        %410 = vst.msk [vmem:[%s373 + $0x48] sm:$0xff] %vm363, %v335
        %411 = vst.msk [vmem:[%s373 + $0x50] sm:$0xff] %vm363, %v336
        %412 = vst.msk [vmem:[%s373 + $0x68] sm:$0xff] %vm363, %v337
        %413 = vst.msk [vmem:[%s373 + $0x70] sm:$0xff] %vm363, %v338
        %414 = vst.msk [vmem:[%s373 + $0x88] sm:$0xff] %vm363, %v339
        %415 = vst.msk [vmem:[%s373 + $0x90] sm:$0xff] %vm363, %v340
        %416 = vst.msk [vmem:[%s373 + $0xa8] sm:$0xff] %vm363, %v341
        %417 = vst.msk [vmem:[%s373 + $0xb0] sm:$0xff] %vm363, %v342
        %418 = vst.msk [vmem:[%s373 + $0xc8] sm:$0xff] %vm363, %v343
        %419 = vst.msk [vmem:[%s373 + $0xd0] sm:$0xff] %vm363, %v344
        %420 = vst.msk [vmem:[%s373 + $0xe8] sm:$0xff] %vm363, %v345
        %421 = vst.msk [vmem:[%s373 + $0xf0] sm:$0xff] %vm363, %v346
        %422 = vst.msk [vmem:[%s373 + $0x108] sm:$0xff] %vm363, %v347
        %423 = vst.msk [vmem:[%s373 + $0x110] sm:$0xff] %vm363, %v348
        %424 = vst.msk [vmem:[%s373 + $0x128] sm:$0xff] %vm363, %v349
        %425 = vst.msk [vmem:[%s373 + $0x130] sm:$0xff] %vm363, %v350
        %426 = vst.msk [vmem:[%s373 + $0x148] sm:$0xff] %vm363, %v351
        %427 = vst.msk [vmem:[%s373 + $0x150] sm:$0xff] %vm363, %v352
        %428 = vst.msk [vmem:[%s373 + $0x168] sm:$0xff] %vm363, %v353
        %429 = vst.msk [vmem:[%s373 + $0x170] sm:$0xff] %vm363, %v354
        %430 = vst.msk [vmem:[%s373 + $0x188] sm:$0xff] %vm363, %v355
        %431 = vst.msk [vmem:[%s373 + $0x190] sm:$0xff] %vm363, %v356
        %432 = vst.msk [vmem:[%s373 + $0x1a8] sm:$0xff] %vm363, %v357
        %433 = vst.msk [vmem:[%s373 + $0x1b0] sm:$0xff] %vm363, %v358
        %434 = vst.msk [vmem:[%s373 + $0x1c8] sm:$0xff] %vm363, %v359
        %435 = vst.msk [vmem:[%s373 + $0x1d0] sm:$0xff] %vm363, %v360
        %436 = vst.msk [vmem:[%s373 + $0x1e8] sm:$0xff] %vm363, %v361
        %437 = vst.msk [vmem:[%s373 + $0x1f0] sm:$0xff] %vm363, %v362
        %v438 = vld [vmem:[#allocation2 + $0x7] sm:$0xff]
        %v439 = vld [vmem:[#allocation2 + $0xf] sm:$0xff]
        %v440 = vld [vmem:[#allocation2 + $0x27] sm:$0xff]
        %v441 = vld [vmem:[#allocation2 + $0x2f] sm:$0xff]
        %v442 = vld [vmem:[#allocation2 + $0x47] sm:$0xff]
        %v443 = vld [vmem:[#allocation2 + $0x4f] sm:$0xff]
        %v444 = vld [vmem:[#allocation2 + $0x67] sm:$0xff]
        %v445 = vld [vmem:[#allocation2 + $0x6f] sm:$0xff]
        %v446 = vld [vmem:[#allocation2 + $0x87] sm:$0xff]
        %v447 = vld [vmem:[#allocation2 + $0x8f] sm:$0xff]
        %v448 = vld [vmem:[#allocation2 + $0xa7] sm:$0xff]
        %v449 = vld [vmem:[#allocation2 + $0xaf] sm:$0xff]
        %v450 = vld [vmem:[#allocation2 + $0xc7] sm:$0xff]
        %v451 = vld [vmem:[#allocation2 + $0xcf] sm:$0xff]
        %v452 = vld [vmem:[#allocation2 + $0xe7] sm:$0xff]
        %v453 = vld [vmem:[#allocation2 + $0xef] sm:$0xff]
        %v454 = vld [vmem:[#allocation2 + $0x107] sm:$0xff]
        %v455 = vld [vmem:[#allocation2 + $0x10f] sm:$0xff]
        %v456 = vld [vmem:[#allocation2 + $0x127] sm:$0xff]
        %v457 = vld [vmem:[#allocation2 + $0x12f] sm:$0xff]
        %v458 = vld [vmem:[#allocation2 + $0x147] sm:$0xff]
        %v459 = vld [vmem:[#allocation2 + $0x14f] sm:$0xff]
        %v460 = vld [vmem:[#allocation2 + $0x167] sm:$0xff]
        %v461 = vld [vmem:[#allocation2 + $0x16f] sm:$0xff]
        %v462 = vld [vmem:[#allocation2 + $0x187] sm:$0xff]
        %v463 = vld [vmem:[#allocation2 + $0x18f] sm:$0xff]
        %v464 = vld [vmem:[#allocation2 + $0x1a7] sm:$0xff]
        %v465 = vld [vmem:[#allocation2 + $0x1af] sm:$0xff]
        %v466 = vld [vmem:[#allocation2 + $0x1c7] sm:$0xff]
        %v467 = vld [vmem:[#allocation2 + $0x1cf] sm:$0xff]
        %v468 = vld [vmem:[#allocation2 + $0x1e7] sm:$0xff]
        %v469 = vld [vmem:[#allocation2 + $0x1ef] sm:$0xff]
        %v470 = vpack.c.bf16 %v439, %v438
        %v471 = vpack.c.bf16 %v441, %v440
        %v472 = vpack.c.bf16 %v443, %v442
        %v473 = vpack.c.bf16 %v445, %v444
        %v474 = vpack.c.bf16 %v447, %v446
        %v475 = vpack.c.bf16 %v449, %v448
        %v476 = vpack.c.bf16 %v451, %v450
        %v477 = vpack.c.bf16 %v453, %v452
        %v478 = vpack.c.bf16 %v455, %v454
        %v479 = vpack.c.bf16 %v457, %v456
        %v480 = vpack.c.bf16 %v459, %v458
        %v481 = vpack.c.bf16 %v461, %v460
        %v482 = vpack.c.bf16 %v463, %v462
        %v483 = vpack.c.bf16 %v465, %v464
        %v484 = vpack.c.bf16 %v467, %v466
        %v485 = vpack.c.bf16 %v469, %v468
        %v502 = vunpack.c.l.b16 %v470
        %v503 = vunpack.c.h.b16 %v470
        %v504 = vunpack.c.l.b16 %v471
        %v505 = vunpack.c.h.b16 %v471
        %v506 = vunpack.c.l.b16 %v472
        %v507 = vunpack.c.h.b16 %v472
        %v508 = vunpack.c.l.b16 %v473
        %v509 = vunpack.c.h.b16 %v473
        %v510 = vunpack.c.l.b16 %v474
        %v511 = vunpack.c.h.b16 %v474
        %v512 = vunpack.c.l.b16 %v475
        %v513 = vunpack.c.h.b16 %v475
        %v514 = vunpack.c.l.b16 %v476
        %v515 = vunpack.c.h.b16 %v476
        %v516 = vunpack.c.l.b16 %v477
        %v517 = vunpack.c.h.b16 %v477
        %v518 = vunpack.c.l.b16 %v478
        %v519 = vunpack.c.h.b16 %v478
        %v520 = vunpack.c.l.b16 %v479
        %v521 = vunpack.c.h.b16 %v479
        %v522 = vunpack.c.l.b16 %v480
        %v523 = vunpack.c.h.b16 %v480
        %v524 = vunpack.c.l.b16 %v481
        %v525 = vunpack.c.h.b16 %v481
        %v526 = vunpack.c.l.b16 %v482
        %v527 = vunpack.c.h.b16 %v482
        %v528 = vunpack.c.l.b16 %v483
        %v529 = vunpack.c.h.b16 %v483
        %v530 = vunpack.c.l.b16 %v484
        %v531 = vunpack.c.h.b16 %v484
        %v532 = vunpack.c.l.b16 %v485
        %v533 = vunpack.c.h.b16 %v485
        %v534 = vpack.c.b16 %v502, %v502
        %v535 = vpack.c.b16 %v503, %v503
        %v536 = vpack.c.b16 %v504, %v504
        %v537 = vpack.c.b16 %v505, %v505
        %v538 = vpack.c.b16 %v506, %v506
        %v539 = vpack.c.b16 %v507, %v507
        %v540 = vpack.c.b16 %v508, %v508
        %v541 = vpack.c.b16 %v509, %v509
        %v542 = vpack.c.b16 %v510, %v510
        %v543 = vpack.c.b16 %v511, %v511
        %v544 = vpack.c.b16 %v512, %v512
        %v545 = vpack.c.b16 %v513, %v513
        %v546 = vpack.c.b16 %v514, %v514
        %v547 = vpack.c.b16 %v515, %v515
        %v548 = vpack.c.b16 %v516, %v516
        %v549 = vpack.c.b16 %v517, %v517
        %v550 = vpack.c.b16 %v518, %v518
        %v551 = vpack.c.b16 %v519, %v519
        %v552 = vpack.c.b16 %v520, %v520
        %v553 = vpack.c.b16 %v521, %v521
        %v554 = vpack.c.b16 %v522, %v522
        %v555 = vpack.c.b16 %v523, %v523
        %v556 = vpack.c.b16 %v524, %v524
        %v557 = vpack.c.b16 %v525, %v525
        %v558 = vpack.c.b16 %v526, %v526
        %v559 = vpack.c.b16 %v527, %v527
        %v560 = vpack.c.b16 %v528, %v528
        %v561 = vpack.c.b16 %v529, %v529
        %v562 = vpack.c.b16 %v530, %v530
        %v563 = vpack.c.b16 %v531, %v531
        %v564 = vpack.c.b16 %v532, %v532
        %v565 = vpack.c.b16 %v533, %v533
        %vm598 = vcmask 19456
        %599 = vst.msk [vmem:[#allocation3] sm:$0xf] %vm598, %v534
        %600 = vst.msk [vmem:[#allocation3 + $0x4] sm:$0xf] %vm598, %v535
        %601 = vst.msk [vmem:[#allocation3 + $0x8] sm:$0xf] %vm598, %v536
        %602 = vst.msk [vmem:[#allocation3 + $0xc] sm:$0xf] %vm598, %v537
        %603 = vst.msk [vmem:[#allocation3 + $0x10] sm:$0xf] %vm598, %v538
        %604 = vst.msk [vmem:[#allocation3 + $0x14] sm:$0xf] %vm598, %v539
        %605 = vst.msk [vmem:[#allocation3 + $0x18] sm:$0xf] %vm598, %v540
        %606 = vst.msk [vmem:[#allocation3 + $0x1c] sm:$0xf] %vm598, %v541
        %607 = vst.msk [vmem:[#allocation3 + $0x20] sm:$0xf] %vm598, %v542
        %608 = vst.msk [vmem:[#allocation3 + $0x24] sm:$0xf] %vm598, %v543
        %609 = vst.msk [vmem:[#allocation3 + $0x28] sm:$0xf] %vm598, %v544
        %610 = vst.msk [vmem:[#allocation3 + $0x2c] sm:$0xf] %vm598, %v545
        %611 = vst.msk [vmem:[#allocation3 + $0x30] sm:$0xf] %vm598, %v546
        %612 = vst.msk [vmem:[#allocation3 + $0x34] sm:$0xf] %vm598, %v547
        %613 = vst.msk [vmem:[#allocation3 + $0x38] sm:$0xf] %vm598, %v548
        %614 = vst.msk [vmem:[#allocation3 + $0x3c] sm:$0xf] %vm598, %v549
        %615 = vst.msk [vmem:[#allocation3 + $0x40] sm:$0xf] %vm598, %v550
        %616 = vst.msk [vmem:[#allocation3 + $0x44] sm:$0xf] %vm598, %v551
        %617 = vst.msk [vmem:[#allocation3 + $0x48] sm:$0xf] %vm598, %v552
        %618 = vst.msk [vmem:[#allocation3 + $0x4c] sm:$0xf] %vm598, %v553
        %619 = vst.msk [vmem:[#allocation3 + $0x50] sm:$0xf] %vm598, %v554
        %620 = vst.msk [vmem:[#allocation3 + $0x54] sm:$0xf] %vm598, %v555
        %621 = vst.msk [vmem:[#allocation3 + $0x58] sm:$0xf] %vm598, %v556
        %622 = vst.msk [vmem:[#allocation3 + $0x5c] sm:$0xf] %vm598, %v557
        %623 = vst.msk [vmem:[#allocation3 + $0x60] sm:$0xf] %vm598, %v558
        %624 = vst.msk [vmem:[#allocation3 + $0x64] sm:$0xf] %vm598, %v559
        %625 = vst.msk [vmem:[#allocation3 + $0x68] sm:$0xf] %vm598, %v560
        %626 = vst.msk [vmem:[#allocation3 + $0x6c] sm:$0xf] %vm598, %v561
        %627 = vst.msk [vmem:[#allocation3 + $0x70] sm:$0xf] %vm598, %v562
        %628 = vst.msk [vmem:[#allocation3 + $0x74] sm:$0xf] %vm598, %v563
        %629 = vst.msk [vmem:[#allocation3 + $0x78] sm:$0xf] %vm598, %v564
        %630 = vst.msk [vmem:[#allocation3 + $0x7c] sm:$0xf] %vm598, %v565
        %v631 = vld [vmem:[#allocation2 + $0x8] sm:$0xff]
        %v632 = vld [vmem:[#allocation2 + $0x10] sm:$0xff]
        %v633 = vld [vmem:[#allocation2 + $0x28] sm:$0xff]
        %v634 = vld [vmem:[#allocation2 + $0x30] sm:$0xff]
        %v635 = vld [vmem:[#allocation2 + $0x48] sm:$0xff]
        %v636 = vld [vmem:[#allocation2 + $0x50] sm:$0xff]
        %v637 = vld [vmem:[#allocation2 + $0x68] sm:$0xff]
        %v638 = vld [vmem:[#allocation2 + $0x70] sm:$0xff]
        %v639 = vld [vmem:[#allocation2 + $0x88] sm:$0xff]
        %v640 = vld [vmem:[#allocation2 + $0x90] sm:$0xff]
        %v641 = vld [vmem:[#allocation2 + $0xa8] sm:$0xff]
        %v642 = vld [vmem:[#allocation2 + $0xb0] sm:$0xff]
        %v643 = vld [vmem:[#allocation2 + $0xc8] sm:$0xff]
        %v644 = vld [vmem:[#allocation2 + $0xd0] sm:$0xff]
        %v645 = vld [vmem:[#allocation2 + $0xe8] sm:$0xff]
        %v646 = vld [vmem:[#allocation2 + $0xf0] sm:$0xff]
        %v647 = vld [vmem:[#allocation2 + $0x108] sm:$0xff]
        %v648 = vld [vmem:[#allocation2 + $0x110] sm:$0xff]
        %v649 = vld [vmem:[#allocation2 + $0x128] sm:$0xff]
        %v650 = vld [vmem:[#allocation2 + $0x130] sm:$0xff]
        %v651 = vld [vmem:[#allocation2 + $0x148] sm:$0xff]
        %v652 = vld [vmem:[#allocation2 + $0x150] sm:$0xff]
        %v653 = vld [vmem:[#allocation2 + $0x168] sm:$0xff]
        %v654 = vld [vmem:[#allocation2 + $0x170] sm:$0xff]
        %v655 = vld [vmem:[#allocation2 + $0x188] sm:$0xff]
        %v656 = vld [vmem:[#allocation2 + $0x190] sm:$0xff]
        %v657 = vld [vmem:[#allocation2 + $0x1a8] sm:$0xff]
        %v658 = vld [vmem:[#allocation2 + $0x1b0] sm:$0xff]
        %v659 = vld [vmem:[#allocation2 + $0x1c8] sm:$0xff]
        %v660 = vld [vmem:[#allocation2 + $0x1d0] sm:$0xff]
        %v661 = vld [vmem:[#allocation2 + $0x1e8] sm:$0xff]
        %v662 = vld [vmem:[#allocation2 + $0x1f0] sm:$0xff]
        %v663 = vpack.c.bf16 %v632, %v631
        %v664 = vpack.c.bf16 %v634, %v633
        %v665 = vpack.c.bf16 %v636, %v635
        %v666 = vpack.c.bf16 %v638, %v637
        %v667 = vpack.c.bf16 %v640, %v639
        %v668 = vpack.c.bf16 %v642, %v641
        %v669 = vpack.c.bf16 %v644, %v643
        %v670 = vpack.c.bf16 %v646, %v645
        %v671 = vpack.c.bf16 %v648, %v647
        %v672 = vpack.c.bf16 %v650, %v649
        %v673 = vpack.c.bf16 %v652, %v651
        %v674 = vpack.c.bf16 %v654, %v653
        %v675 = vpack.c.bf16 %v656, %v655
        %v676 = vpack.c.bf16 %v658, %v657
        %v677 = vpack.c.bf16 %v660, %v659
        %v678 = vpack.c.bf16 %v662, %v661
        %v695 = vunpack.c.l.b16 %v663
        %v696 = vunpack.c.h.b16 %v663
        %v697 = vunpack.c.l.b16 %v664
        %v698 = vunpack.c.h.b16 %v664
        %v699 = vunpack.c.l.b16 %v665
        %v700 = vunpack.c.h.b16 %v665
        %v701 = vunpack.c.l.b16 %v666
        %v702 = vunpack.c.h.b16 %v666
        %v703 = vunpack.c.l.b16 %v667
        %v704 = vunpack.c.h.b16 %v667
        %v705 = vunpack.c.l.b16 %v668
        %v706 = vunpack.c.h.b16 %v668
        %v707 = vunpack.c.l.b16 %v669
        %v708 = vunpack.c.h.b16 %v669
        %v709 = vunpack.c.l.b16 %v670
        %v710 = vunpack.c.h.b16 %v670
        %v711 = vunpack.c.l.b16 %v671
        %v712 = vunpack.c.h.b16 %v671
        %v713 = vunpack.c.l.b16 %v672
        %v714 = vunpack.c.h.b16 %v672
        %v715 = vunpack.c.l.b16 %v673
        %v716 = vunpack.c.h.b16 %v673
        %v717 = vunpack.c.l.b16 %v674
        %v718 = vunpack.c.h.b16 %v674
        %v719 = vunpack.c.l.b16 %v675
        %v720 = vunpack.c.h.b16 %v675
        %v721 = vunpack.c.l.b16 %v676
        %v722 = vunpack.c.h.b16 %v676
        %v723 = vunpack.c.l.b16 %v677
        %v724 = vunpack.c.h.b16 %v677
        %v725 = vunpack.c.l.b16 %v678
        %v726 = vunpack.c.h.b16 %v678
        %v727 = vpack.c.b16 %v695, %v695
        %v728 = vpack.c.b16 %v696, %v696
        %v729 = vpack.c.b16 %v697, %v697
        %v730 = vpack.c.b16 %v698, %v698
        %v731 = vpack.c.b16 %v699, %v699
        %v732 = vpack.c.b16 %v700, %v700
        %v733 = vpack.c.b16 %v701, %v701
        %v734 = vpack.c.b16 %v702, %v702
        %v735 = vpack.c.b16 %v703, %v703
        %v736 = vpack.c.b16 %v704, %v704
        %v737 = vpack.c.b16 %v705, %v705
        %v738 = vpack.c.b16 %v706, %v706
        %v739 = vpack.c.b16 %v707, %v707
        %v740 = vpack.c.b16 %v708, %v708
        %v741 = vpack.c.b16 %v709, %v709
        %v742 = vpack.c.b16 %v710, %v710
        %v743 = vpack.c.b16 %v711, %v711
        %v744 = vpack.c.b16 %v712, %v712
        %v745 = vpack.c.b16 %v713, %v713
        %v746 = vpack.c.b16 %v714, %v714
        %v747 = vpack.c.b16 %v715, %v715
        %v748 = vpack.c.b16 %v716, %v716
        %v749 = vpack.c.b16 %v717, %v717
        %v750 = vpack.c.b16 %v718, %v718
        %v751 = vpack.c.b16 %v719, %v719
        %v752 = vpack.c.b16 %v720, %v720
        %v753 = vpack.c.b16 %v721, %v721
        %v754 = vpack.c.b16 %v722, %v722
        %v755 = vpack.c.b16 %v723, %v723
        %v756 = vpack.c.b16 %v724, %v724
        %v757 = vpack.c.b16 %v725, %v725
        %v758 = vpack.c.b16 %v726, %v726
        %759 = vrot.lane.b32.xlu0 %v727, 3
        %v760 = vpop.permute.xlu0 %759
        %761 = vrot.lane.b32.xlu0 %v728, 3
        %v762 = vpop.permute.xlu0 %761
        %763 = vrot.lane.b32.xlu0 %v729, 3
        %v764 = vpop.permute.xlu0 %763
        %765 = vrot.lane.b32.xlu0 %v730, 3
        %v766 = vpop.permute.xlu0 %765
        %767 = vrot.lane.b32.xlu0 %v731, 3
        %v768 = vpop.permute.xlu0 %767
        %769 = vrot.lane.b32.xlu0 %v732, 3
        %v770 = vpop.permute.xlu0 %769
        %771 = vrot.lane.b32.xlu0 %v733, 3
        %v772 = vpop.permute.xlu0 %771
        %773 = vrot.lane.b32.xlu0 %v734, 3
        %v774 = vpop.permute.xlu0 %773
        %775 = vrot.lane.b32.xlu0 %v735, 3
        %v776 = vpop.permute.xlu0 %775
        %777 = vrot.lane.b32.xlu0 %v736, 3
        %v778 = vpop.permute.xlu0 %777
        %779 = vrot.lane.b32.xlu0 %v737, 3
        %v780 = vpop.permute.xlu0 %779
        %781 = vrot.lane.b32.xlu0 %v738, 3
        %v782 = vpop.permute.xlu0 %781
        %783 = vrot.lane.b32.xlu0 %v739, 3
        %v784 = vpop.permute.xlu0 %783
        %785 = vrot.lane.b32.xlu0 %v740, 3
        %v786 = vpop.permute.xlu0 %785
        %787 = vrot.lane.b32.xlu0 %v741, 3
        %v788 = vpop.permute.xlu0 %787
        %789 = vrot.lane.b32.xlu0 %v742, 3
        %v790 = vpop.permute.xlu0 %789
        %791 = vrot.lane.b32.xlu0 %v743, 3
        %v792 = vpop.permute.xlu0 %791
        %793 = vrot.lane.b32.xlu0 %v744, 3
        %v794 = vpop.permute.xlu0 %793
        %795 = vrot.lane.b32.xlu0 %v745, 3
        %v796 = vpop.permute.xlu0 %795
        %797 = vrot.lane.b32.xlu0 %v746, 3
        %v798 = vpop.permute.xlu0 %797
        %799 = vrot.lane.b32.xlu0 %v747, 3
        %v800 = vpop.permute.xlu0 %799
        %801 = vrot.lane.b32.xlu0 %v748, 3
        %v802 = vpop.permute.xlu0 %801
        %803 = vrot.lane.b32.xlu0 %v749, 3
        %v804 = vpop.permute.xlu0 %803
        %805 = vrot.lane.b32.xlu0 %v750, 3
        %v806 = vpop.permute.xlu0 %805
        %807 = vrot.lane.b32.xlu0 %v751, 3
        %v808 = vpop.permute.xlu0 %807
        %809 = vrot.lane.b32.xlu0 %v752, 3
        %v810 = vpop.permute.xlu0 %809
        %811 = vrot.lane.b32.xlu0 %v753, 3
        %v812 = vpop.permute.xlu0 %811
        %813 = vrot.lane.b32.xlu0 %v754, 3
        %v814 = vpop.permute.xlu0 %813
        %815 = vrot.lane.b32.xlu0 %v755, 3
        %v816 = vpop.permute.xlu0 %815
        %817 = vrot.lane.b32.xlu0 %v756, 3
        %v818 = vpop.permute.xlu0 %817
        %819 = vrot.lane.b32.xlu0 %v757, 3
        %v820 = vpop.permute.xlu0 %819
        %821 = vrot.lane.b32.xlu0 %v758, 3
        %v822 = vpop.permute.xlu0 %821
        %vm855 = vcmask 44056
        %856 = vst.msk [vmem:[#allocation3] sm:$0xf] %vm855, %v760
        %857 = vst.msk [vmem:[#allocation3 + $0x4] sm:$0xf] %vm855, %v762
        %858 = vst.msk [vmem:[#allocation3 + $0x8] sm:$0xf] %vm855, %v764
        %859 = vst.msk [vmem:[#allocation3 + $0xc] sm:$0xf] %vm855, %v766
        %860 = vst.msk [vmem:[#allocation3 + $0x10] sm:$0xf] %vm855, %v768
        %861 = vst.msk [vmem:[#allocation3 + $0x14] sm:$0xf] %vm855, %v770
        %862 = vst.msk [vmem:[#allocation3 + $0x18] sm:$0xf] %vm855, %v772
        %863 = vst.msk [vmem:[#allocation3 + $0x1c] sm:$0xf] %vm855, %v774
        %864 = vst.msk [vmem:[#allocation3 + $0x20] sm:$0xf] %vm855, %v776
        %865 = vst.msk [vmem:[#allocation3 + $0x24] sm:$0xf] %vm855, %v778
        %866 = vst.msk [vmem:[#allocation3 + $0x28] sm:$0xf] %vm855, %v780
        %867 = vst.msk [vmem:[#allocation3 + $0x2c] sm:$0xf] %vm855, %v782
        %868 = vst.msk [vmem:[#allocation3 + $0x30] sm:$0xf] %vm855, %v784
        %869 = vst.msk [vmem:[#allocation3 + $0x34] sm:$0xf] %vm855, %v786
        %870 = vst.msk [vmem:[#allocation3 + $0x38] sm:$0xf] %vm855, %v788
        %871 = vst.msk [vmem:[#allocation3 + $0x3c] sm:$0xf] %vm855, %v790
        %872 = vst.msk [vmem:[#allocation3 + $0x40] sm:$0xf] %vm855, %v792
        %873 = vst.msk [vmem:[#allocation3 + $0x44] sm:$0xf] %vm855, %v794
        %874 = vst.msk [vmem:[#allocation3 + $0x48] sm:$0xf] %vm855, %v796
        %875 = vst.msk [vmem:[#allocation3 + $0x4c] sm:$0xf] %vm855, %v798
        %876 = vst.msk [vmem:[#allocation3 + $0x50] sm:$0xf] %vm855, %v800
        %877 = vst.msk [vmem:[#allocation3 + $0x54] sm:$0xf] %vm855, %v802
        %878 = vst.msk [vmem:[#allocation3 + $0x58] sm:$0xf] %vm855, %v804
        %879 = vst.msk [vmem:[#allocation3 + $0x5c] sm:$0xf] %vm855, %v806
        %880 = vst.msk [vmem:[#allocation3 + $0x60] sm:$0xf] %vm855, %v808
        %881 = vst.msk [vmem:[#allocation3 + $0x64] sm:$0xf] %vm855, %v810
        %882 = vst.msk [vmem:[#allocation3 + $0x68] sm:$0xf] %vm855, %v812
        %883 = vst.msk [vmem:[#allocation3 + $0x6c] sm:$0xf] %vm855, %v814
        %884 = vst.msk [vmem:[#allocation3 + $0x70] sm:$0xf] %vm855, %v816
        %885 = vst.msk [vmem:[#allocation3 + $0x74] sm:$0xf] %vm855, %v818
        %886 = vst.msk [vmem:[#allocation3 + $0x78] sm:$0xf] %vm855, %v820
        %887 = vst.msk [vmem:[#allocation3 + $0x7c] sm:$0xf] %vm855, %v822
        %v888 = vld [vmem:[#allocation2 + $0x9] sm:$0xff]
        %v889 = vld [vmem:[#allocation2 + $0x11] sm:$0xff]
        %v890 = vld [vmem:[#allocation2 + $0x29] sm:$0xff]
        %v891 = vld [vmem:[#allocation2 + $0x31] sm:$0xff]
        %v892 = vld [vmem:[#allocation2 + $0x49] sm:$0xff]
        %v893 = vld [vmem:[#allocation2 + $0x51] sm:$0xff]
        %v894 = vld [vmem:[#allocation2 + $0x69] sm:$0xff]
        %v895 = vld [vmem:[#allocation2 + $0x71] sm:$0xff]
        %v896 = vld [vmem:[#allocation2 + $0x89] sm:$0xff]
        %v897 = vld [vmem:[#allocation2 + $0x91] sm:$0xff]
        %v898 = vld [vmem:[#allocation2 + $0xa9] sm:$0xff]
        %v899 = vld [vmem:[#allocation2 + $0xb1] sm:$0xff]
        %v900 = vld [vmem:[#allocation2 + $0xc9] sm:$0xff]
        %v901 = vld [vmem:[#allocation2 + $0xd1] sm:$0xff]
        %v902 = vld [vmem:[#allocation2 + $0xe9] sm:$0xff]
        %v903 = vld [vmem:[#allocation2 + $0xf1] sm:$0xff]
        %v904 = vld [vmem:[#allocation2 + $0x109] sm:$0xff]
        %v905 = vld [vmem:[#allocation2 + $0x111] sm:$0xff]
        %v906 = vld [vmem:[#allocation2 + $0x129] sm:$0xff]
        %v907 = vld [vmem:[#allocation2 + $0x131] sm:$0xff]
        %v908 = vld [vmem:[#allocation2 + $0x149] sm:$0xff]
        %v909 = vld [vmem:[#allocation2 + $0x151] sm:$0xff]
        %v910 = vld [vmem:[#allocation2 + $0x169] sm:$0xff]
        %v911 = vld [vmem:[#allocation2 + $0x171] sm:$0xff]
        %v912 = vld [vmem:[#allocation2 + $0x189] sm:$0xff]
        %v913 = vld [vmem:[#allocation2 + $0x191] sm:$0xff]
        %v914 = vld [vmem:[#allocation2 + $0x1a9] sm:$0xff]
        %v915 = vld [vmem:[#allocation2 + $0x1b1] sm:$0xff]
        %v916 = vld [vmem:[#allocation2 + $0x1c9] sm:$0xff]
        %v917 = vld [vmem:[#allocation2 + $0x1d1] sm:$0xff]
        %v918 = vld [vmem:[#allocation2 + $0x1e9] sm:$0xff]
        %v919 = vld [vmem:[#allocation2 + $0x1f1] sm:$0xff]
        %v920 = vpack.c.bf16 %v889, %v888
        %v921 = vpack.c.bf16 %v891, %v890
        %v922 = vpack.c.bf16 %v893, %v892
        %v923 = vpack.c.bf16 %v895, %v894
        %v924 = vpack.c.bf16 %v897, %v896
        %v925 = vpack.c.bf16 %v899, %v898
        %v926 = vpack.c.bf16 %v901, %v900
        %v927 = vpack.c.bf16 %v903, %v902
        %v928 = vpack.c.bf16 %v905, %v904
        %v929 = vpack.c.bf16 %v907, %v906
        %v930 = vpack.c.bf16 %v909, %v908
        %v931 = vpack.c.bf16 %v911, %v910
        %v932 = vpack.c.bf16 %v913, %v912
        %v933 = vpack.c.bf16 %v915, %v914
        %v934 = vpack.c.bf16 %v917, %v916
        %v935 = vpack.c.bf16 %v919, %v918
        %v952 = vunpack.c.l.b16 %v920
        %v953 = vunpack.c.h.b16 %v920
        %v954 = vunpack.c.l.b16 %v921
        %v955 = vunpack.c.h.b16 %v921
        %v956 = vunpack.c.l.b16 %v922
        %v957 = vunpack.c.h.b16 %v922
        %v958 = vunpack.c.l.b16 %v923
        %v959 = vunpack.c.h.b16 %v923
        %v960 = vunpack.c.l.b16 %v924
        %v961 = vunpack.c.h.b16 %v924
        %v962 = vunpack.c.l.b16 %v925
        %v963 = vunpack.c.h.b16 %v925
        %v964 = vunpack.c.l.b16 %v926
        %v965 = vunpack.c.h.b16 %v926
        %v966 = vunpack.c.l.b16 %v927
        %v967 = vunpack.c.h.b16 %v927
        %v968 = vunpack.c.l.b16 %v928
        %v969 = vunpack.c.h.b16 %v928
        %v970 = vunpack.c.l.b16 %v929
        %v971 = vunpack.c.h.b16 %v929
        %v972 = vunpack.c.l.b16 %v930
        %v973 = vunpack.c.h.b16 %v930
        %v974 = vunpack.c.l.b16 %v931
        %v975 = vunpack.c.h.b16 %v931
        %v976 = vunpack.c.l.b16 %v932
        %v977 = vunpack.c.h.b16 %v932
        %v978 = vunpack.c.l.b16 %v933
        %v979 = vunpack.c.h.b16 %v933
        %v980 = vunpack.c.l.b16 %v934
        %v981 = vunpack.c.h.b16 %v934
        %v982 = vunpack.c.l.b16 %v935
        %v983 = vunpack.c.h.b16 %v935
        %v984 = vpack.c.b16 %v952, %v952
        %v985 = vpack.c.b16 %v953, %v953
        %v986 = vpack.c.b16 %v954, %v954
        %v987 = vpack.c.b16 %v955, %v955
        %v988 = vpack.c.b16 %v956, %v956
        %v989 = vpack.c.b16 %v957, %v957
        %v990 = vpack.c.b16 %v958, %v958
        %v991 = vpack.c.b16 %v959, %v959
        %v992 = vpack.c.b16 %v960, %v960
        %v993 = vpack.c.b16 %v961, %v961
        %v994 = vpack.c.b16 %v962, %v962
        %v995 = vpack.c.b16 %v963, %v963
        %v996 = vpack.c.b16 %v964, %v964
        %v997 = vpack.c.b16 %v965, %v965
        %v998 = vpack.c.b16 %v966, %v966
        %v999 = vpack.c.b16 %v967, %v967
        %v1000 = vpack.c.b16 %v968, %v968
        %v1001 = vpack.c.b16 %v969, %v969
        %v1002 = vpack.c.b16 %v970, %v970
        %v1003 = vpack.c.b16 %v971, %v971
        %v1004 = vpack.c.b16 %v972, %v972
        %v1005 = vpack.c.b16 %v973, %v973
        %v1006 = vpack.c.b16 %v974, %v974
        %v1007 = vpack.c.b16 %v975, %v975
        %v1008 = vpack.c.b16 %v976, %v976
        %v1009 = vpack.c.b16 %v977, %v977
        %v1010 = vpack.c.b16 %v978, %v978
        %v1011 = vpack.c.b16 %v979, %v979
        %v1012 = vpack.c.b16 %v980, %v980
        %v1013 = vpack.c.b16 %v981, %v981
        %v1014 = vpack.c.b16 %v982, %v982
        %v1015 = vpack.c.b16 %v983, %v983
        %1016 = vrot.lane.b32.xlu0 %v984, 6
        %v1017 = vpop.permute.xlu0 %1016
        %1018 = vrot.lane.b32.xlu0 %v985, 6
        %v1019 = vpop.permute.xlu0 %1018
        %1020 = vrot.lane.b32.xlu0 %v986, 6
        %v1021 = vpop.permute.xlu0 %1020
        %1022 = vrot.lane.b32.xlu0 %v987, 6
        %v1023 = vpop.permute.xlu0 %1022
        %1024 = vrot.lane.b32.xlu0 %v988, 6
        %v1025 = vpop.permute.xlu0 %1024
        %1026 = vrot.lane.b32.xlu0 %v989, 6
        %v1027 = vpop.permute.xlu0 %1026
        %1028 = vrot.lane.b32.xlu0 %v990, 6
        %v1029 = vpop.permute.xlu0 %1028
        %1030 = vrot.lane.b32.xlu0 %v991, 6
        %v1031 = vpop.permute.xlu0 %1030
        %1032 = vrot.lane.b32.xlu0 %v992, 6
        %v1033 = vpop.permute.xlu0 %1032
        %1034 = vrot.lane.b32.xlu0 %v993, 6
        %v1035 = vpop.permute.xlu0 %1034
        %1036 = vrot.lane.b32.xlu0 %v994, 6
        %v1037 = vpop.permute.xlu0 %1036
        %1038 = vrot.lane.b32.xlu0 %v995, 6
        %v1039 = vpop.permute.xlu0 %1038
        %1040 = vrot.lane.b32.xlu0 %v996, 6
        %v1041 = vpop.permute.xlu0 %1040
        %1042 = vrot.lane.b32.xlu0 %v997, 6
        %v1043 = vpop.permute.xlu0 %1042
        %1044 = vrot.lane.b32.xlu0 %v998, 6
        %v1045 = vpop.permute.xlu0 %1044
        %1046 = vrot.lane.b32.xlu0 %v999, 6
        %v1047 = vpop.permute.xlu0 %1046
        %1048 = vrot.lane.b32.xlu0 %v1000, 6
        %v1049 = vpop.permute.xlu0 %1048
        %1050 = vrot.lane.b32.xlu0 %v1001, 6
        %v1051 = vpop.permute.xlu0 %1050
        %1052 = vrot.lane.b32.xlu0 %v1002, 6
        %v1053 = vpop.permute.xlu0 %1052
        %1054 = vrot.lane.b32.xlu0 %v1003, 6
        %v1055 = vpop.permute.xlu0 %1054
        %1056 = vrot.lane.b32.xlu0 %v1004, 6
        %v1057 = vpop.permute.xlu0 %1056
        %1058 = vrot.lane.b32.xlu0 %v1005, 6
        %v1059 = vpop.permute.xlu0 %1058
        %1060 = vrot.lane.b32.xlu0 %v1006, 6
        %v1061 = vpop.permute.xlu0 %1060
        %1062 = vrot.lane.b32.xlu0 %v1007, 6
        %v1063 = vpop.permute.xlu0 %1062
        %1064 = vrot.lane.b32.xlu0 %v1008, 6
        %v1065 = vpop.permute.xlu0 %1064
        %1066 = vrot.lane.b32.xlu0 %v1009, 6
        %v1067 = vpop.permute.xlu0 %1066
        %1068 = vrot.lane.b32.xlu0 %v1010, 6
        %v1069 = vpop.permute.xlu0 %1068
        %1070 = vrot.lane.b32.xlu0 %v1011, 6
        %v1071 = vpop.permute.xlu0 %1070
        %1072 = vrot.lane.b32.xlu0 %v1012, 6
        %v1073 = vpop.permute.xlu0 %1072
        %1074 = vrot.lane.b32.xlu0 %v1013, 6
        %v1075 = vpop.permute.xlu0 %1074
        %1076 = vrot.lane.b32.xlu0 %v1014, 6
        %v1077 = vpop.permute.xlu0 %1076
        %1078 = vrot.lane.b32.xlu0 %v1015, 6
        %v1079 = vpop.permute.xlu0 %1078
        %vm1112 = vcmask 68656
        %1113 = vst.msk [vmem:[#allocation3] sm:$0xf] %vm1112, %v1017
        %1114 = vst.msk [vmem:[#allocation3 + $0x4] sm:$0xf] %vm1112, %v1019
        %1115 = vst.msk [vmem:[#allocation3 + $0x8] sm:$0xf] %vm1112, %v1021
        %1116 = vst.msk [vmem:[#allocation3 + $0xc] sm:$0xf] %vm1112, %v1023
        %1117 = vst.msk [vmem:[#allocation3 + $0x10] sm:$0xf] %vm1112, %v1025
        %1118 = vst.msk [vmem:[#allocation3 + $0x14] sm:$0xf] %vm1112, %v1027
        %1119 = vst.msk [vmem:[#allocation3 + $0x18] sm:$0xf] %vm1112, %v1029
        %1120 = vst.msk [vmem:[#allocation3 + $0x1c] sm:$0xf] %vm1112, %v1031
        %1121 = vst.msk [vmem:[#allocation3 + $0x20] sm:$0xf] %vm1112, %v1033
        %1122 = vst.msk [vmem:[#allocation3 + $0x24] sm:$0xf] %vm1112, %v1035
        %1123 = vst.msk [vmem:[#allocation3 + $0x28] sm:$0xf] %vm1112, %v1037
        %1124 = vst.msk [vmem:[#allocation3 + $0x2c] sm:$0xf] %vm1112, %v1039
        %1125 = vst.msk [vmem:[#allocation3 + $0x30] sm:$0xf] %vm1112, %v1041
        %1126 = vst.msk [vmem:[#allocation3 + $0x34] sm:$0xf] %vm1112, %v1043
        %1127 = vst.msk [vmem:[#allocation3 + $0x38] sm:$0xf] %vm1112, %v1045
        %1128 = vst.msk [vmem:[#allocation3 + $0x3c] sm:$0xf] %vm1112, %v1047
        %1129 = vst.msk [vmem:[#allocation3 + $0x40] sm:$0xf] %vm1112, %v1049
        %1130 = vst.msk [vmem:[#allocation3 + $0x44] sm:$0xf] %vm1112, %v1051
        %1131 = vst.msk [vmem:[#allocation3 + $0x48] sm:$0xf] %vm1112, %v1053
        %1132 = vst.msk [vmem:[#allocation3 + $0x4c] sm:$0xf] %vm1112, %v1055
        %1133 = vst.msk [vmem:[#allocation3 + $0x50] sm:$0xf] %vm1112, %v1057
        %1134 = vst.msk [vmem:[#allocation3 + $0x54] sm:$0xf] %vm1112, %v1059
        %1135 = vst.msk [vmem:[#allocation3 + $0x58] sm:$0xf] %vm1112, %v1061
        %1136 = vst.msk [vmem:[#allocation3 + $0x5c] sm:$0xf] %vm1112, %v1063
        %1137 = vst.msk [vmem:[#allocation3 + $0x60] sm:$0xf] %vm1112, %v1065
        %1138 = vst.msk [vmem:[#allocation3 + $0x64] sm:$0xf] %vm1112, %v1067
        %1139 = vst.msk [vmem:[#allocation3 + $0x68] sm:$0xf] %vm1112, %v1069
        %1140 = vst.msk [vmem:[#allocation3 + $0x6c] sm:$0xf] %vm1112, %v1071
        %1141 = vst.msk [vmem:[#allocation3 + $0x70] sm:$0xf] %vm1112, %v1073
        %1142 = vst.msk [vmem:[#allocation3 + $0x74] sm:$0xf] %vm1112, %v1075
        %1143 = vst.msk [vmem:[#allocation3 + $0x78] sm:$0xf] %vm1112, %v1077
        %1144 = vst.msk [vmem:[#allocation3 + $0x7c] sm:$0xf] %vm1112, %v1079
        %v1145 = vld [vmem:[%s373 + $0x7] sm:$0xff]
        %v1146 = vld [vmem:[%s373 + $0xf] sm:$0xff]
        %v1147 = vld [vmem:[%s373 + $0x27] sm:$0xff]
        %v1148 = vld [vmem:[%s373 + $0x2f] sm:$0xff]
        %v1149 = vld [vmem:[%s373 + $0x47] sm:$0xff]
        %v1150 = vld [vmem:[%s373 + $0x4f] sm:$0xff]
        %v1151 = vld [vmem:[%s373 + $0x67] sm:$0xff]
        %v1152 = vld [vmem:[%s373 + $0x6f] sm:$0xff]
        %v1153 = vld [vmem:[%s373 + $0x87] sm:$0xff]
        %v1154 = vld [vmem:[%s373 + $0x8f] sm:$0xff]
        %v1155 = vld [vmem:[%s373 + $0xa7] sm:$0xff]
        %v1156 = vld [vmem:[%s373 + $0xaf] sm:$0xff]
        %v1157 = vld [vmem:[%s373 + $0xc7] sm:$0xff]
        %v1158 = vld [vmem:[%s373 + $0xcf] sm:$0xff]
        %v1159 = vld [vmem:[%s373 + $0xe7] sm:$0xff]
        %v1160 = vld [vmem:[%s373 + $0xef] sm:$0xff]
        %v1161 = vld [vmem:[%s373 + $0x107] sm:$0xff]
        %v1162 = vld [vmem:[%s373 + $0x10f] sm:$0xff]
        %v1163 = vld [vmem:[%s373 + $0x127] sm:$0xff]
        %v1164 = vld [vmem:[%s373 + $0x12f] sm:$0xff]
        %v1165 = vld [vmem:[%s373 + $0x147] sm:$0xff]
        %v1166 = vld [vmem:[%s373 + $0x14f] sm:$0xff]
        %v1167 = vld [vmem:[%s373 + $0x167] sm:$0xff]
        %v1168 = vld [vmem:[%s373 + $0x16f] sm:$0xff]
        %v1169 = vld [vmem:[%s373 + $0x187] sm:$0xff]
        %v1170 = vld [vmem:[%s373 + $0x18f] sm:$0xff]
        %v1171 = vld [vmem:[%s373 + $0x1a7] sm:$0xff]
        %v1172 = vld [vmem:[%s373 + $0x1af] sm:$0xff]
        %v1173 = vld [vmem:[%s373 + $0x1c7] sm:$0xff]
        %v1174 = vld [vmem:[%s373 + $0x1cf] sm:$0xff]
        %v1175 = vld [vmem:[%s373 + $0x1e7] sm:$0xff]
        %v1176 = vld [vmem:[%s373 + $0x1ef] sm:$0xff]
        %v1177 = vpack.c.bf16 %v1146, %v1145
        %v1178 = vpack.c.bf16 %v1148, %v1147
        %v1179 = vpack.c.bf16 %v1150, %v1149
        %v1180 = vpack.c.bf16 %v1152, %v1151
        %v1181 = vpack.c.bf16 %v1154, %v1153
        %v1182 = vpack.c.bf16 %v1156, %v1155
        %v1183 = vpack.c.bf16 %v1158, %v1157
        %v1184 = vpack.c.bf16 %v1160, %v1159
        %v1185 = vpack.c.bf16 %v1162, %v1161
        %v1186 = vpack.c.bf16 %v1164, %v1163
        %v1187 = vpack.c.bf16 %v1166, %v1165
        %v1188 = vpack.c.bf16 %v1168, %v1167
        %v1189 = vpack.c.bf16 %v1170, %v1169
        %v1190 = vpack.c.bf16 %v1172, %v1171
        %v1191 = vpack.c.bf16 %v1174, %v1173
        %v1192 = vpack.c.bf16 %v1176, %v1175
        %v1209 = vunpack.c.l.b16 %v1177
        %v1210 = vunpack.c.h.b16 %v1177
        %v1211 = vunpack.c.l.b16 %v1178
        %v1212 = vunpack.c.h.b16 %v1178
        %v1213 = vunpack.c.l.b16 %v1179
        %v1214 = vunpack.c.h.b16 %v1179
        %v1215 = vunpack.c.l.b16 %v1180
        %v1216 = vunpack.c.h.b16 %v1180
        %v1217 = vunpack.c.l.b16 %v1181
        %v1218 = vunpack.c.h.b16 %v1181
        %v1219 = vunpack.c.l.b16 %v1182
        %v1220 = vunpack.c.h.b16 %v1182
        %v1221 = vunpack.c.l.b16 %v1183
        %v1222 = vunpack.c.h.b16 %v1183
        %v1223 = vunpack.c.l.b16 %v1184
        %v1224 = vunpack.c.h.b16 %v1184
        %v1225 = vunpack.c.l.b16 %v1185
        %v1226 = vunpack.c.h.b16 %v1185
        %v1227 = vunpack.c.l.b16 %v1186
        %v1228 = vunpack.c.h.b16 %v1186
        %v1229 = vunpack.c.l.b16 %v1187
        %v1230 = vunpack.c.h.b16 %v1187
        %v1231 = vunpack.c.l.b16 %v1188
        %v1232 = vunpack.c.h.b16 %v1188
        %v1233 = vunpack.c.l.b16 %v1189
        %v1234 = vunpack.c.h.b16 %v1189
        %v1235 = vunpack.c.l.b16 %v1190
        %v1236 = vunpack.c.h.b16 %v1190
        %v1237 = vunpack.c.l.b16 %v1191
        %v1238 = vunpack.c.h.b16 %v1191
        %v1239 = vunpack.c.l.b16 %v1192
        %v1240 = vunpack.c.h.b16 %v1192
        %v1241 = vpack.c.b16 %v1209, %v1209
        %v1242 = vpack.c.b16 %v1210, %v1210
        %v1243 = vpack.c.b16 %v1211, %v1211
        %v1244 = vpack.c.b16 %v1212, %v1212
        %v1245 = vpack.c.b16 %v1213, %v1213
        %v1246 = vpack.c.b16 %v1214, %v1214
        %v1247 = vpack.c.b16 %v1215, %v1215
        %v1248 = vpack.c.b16 %v1216, %v1216
        %v1249 = vpack.c.b16 %v1217, %v1217
        %v1250 = vpack.c.b16 %v1218, %v1218
        %v1251 = vpack.c.b16 %v1219, %v1219
        %v1252 = vpack.c.b16 %v1220, %v1220
        %v1253 = vpack.c.b16 %v1221, %v1221
        %v1254 = vpack.c.b16 %v1222, %v1222
        %v1255 = vpack.c.b16 %v1223, %v1223
        %v1256 = vpack.c.b16 %v1224, %v1224
        %v1257 = vpack.c.b16 %v1225, %v1225
        %v1258 = vpack.c.b16 %v1226, %v1226
        %v1259 = vpack.c.b16 %v1227, %v1227
        %v1260 = vpack.c.b16 %v1228, %v1228
        %v1261 = vpack.c.b16 %v1229, %v1229
        %v1262 = vpack.c.b16 %v1230, %v1230
        %v1263 = vpack.c.b16 %v1231, %v1231
        %v1264 = vpack.c.b16 %v1232, %v1232
        %v1265 = vpack.c.b16 %v1233, %v1233
        %v1266 = vpack.c.b16 %v1234, %v1234
        %v1267 = vpack.c.b16 %v1235, %v1235
        %v1268 = vpack.c.b16 %v1236, %v1236
        %v1269 = vpack.c.b16 %v1237, %v1237
        %v1270 = vpack.c.b16 %v1238, %v1238
        %v1271 = vpack.c.b16 %v1239, %v1239
        %v1272 = vpack.c.b16 %v1240, %v1240
        %1273 = vrot.lane.b32.xlu0 %v1241, 9
        %v1274 = vpop.permute.xlu0 %1273
        %1275 = vrot.lane.b32.xlu0 %v1242, 9
        %v1276 = vpop.permute.xlu0 %1275
        %1277 = vrot.lane.b32.xlu0 %v1243, 9
        %v1278 = vpop.permute.xlu0 %1277
        %1279 = vrot.lane.b32.xlu0 %v1244, 9
        %v1280 = vpop.permute.xlu0 %1279
        %1281 = vrot.lane.b32.xlu0 %v1245, 9
        %v1282 = vpop.permute.xlu0 %1281
        %1283 = vrot.lane.b32.xlu0 %v1246, 9
        %v1284 = vpop.permute.xlu0 %1283
        %1285 = vrot.lane.b32.xlu0 %v1247, 9
        %v1286 = vpop.permute.xlu0 %1285
        %1287 = vrot.lane.b32.xlu0 %v1248, 9
        %v1288 = vpop.permute.xlu0 %1287
        %1289 = vrot.lane.b32.xlu0 %v1249, 9
        %v1290 = vpop.permute.xlu0 %1289
        %1291 = vrot.lane.b32.xlu0 %v1250, 9
        %v1292 = vpop.permute.xlu0 %1291
        %1293 = vrot.lane.b32.xlu0 %v1251, 9
        %v1294 = vpop.permute.xlu0 %1293
        %1295 = vrot.lane.b32.xlu0 %v1252, 9
        %v1296 = vpop.permute.xlu0 %1295
        %1297 = vrot.lane.b32.xlu0 %v1253, 9
        %v1298 = vpop.permute.xlu0 %1297
        %1299 = vrot.lane.b32.xlu0 %v1254, 9
        %v1300 = vpop.permute.xlu0 %1299
        %1301 = vrot.lane.b32.xlu0 %v1255, 9
        %v1302 = vpop.permute.xlu0 %1301
        %1303 = vrot.lane.b32.xlu0 %v1256, 9
        %v1304 = vpop.permute.xlu0 %1303
        %1305 = vrot.lane.b32.xlu0 %v1257, 9
        %v1306 = vpop.permute.xlu0 %1305
        %1307 = vrot.lane.b32.xlu0 %v1258, 9
        %v1308 = vpop.permute.xlu0 %1307
        %1309 = vrot.lane.b32.xlu0 %v1259, 9
        %v1310 = vpop.permute.xlu0 %1309
        %1311 = vrot.lane.b32.xlu0 %v1260, 9
        %v1312 = vpop.permute.xlu0 %1311
        %1313 = vrot.lane.b32.xlu0 %v1261, 9
        %v1314 = vpop.permute.xlu0 %1313
        %1315 = vrot.lane.b32.xlu0 %v1262, 9
        %v1316 = vpop.permute.xlu0 %1315
        %1317 = vrot.lane.b32.xlu0 %v1263, 9
        %v1318 = vpop.permute.xlu0 %1317
        %1319 = vrot.lane.b32.xlu0 %v1264, 9
        %v1320 = vpop.permute.xlu0 %1319
        %1321 = vrot.lane.b32.xlu0 %v1265, 9
        %v1322 = vpop.permute.xlu0 %1321
        %1323 = vrot.lane.b32.xlu0 %v1266, 9
        %v1324 = vpop.permute.xlu0 %1323
        %1325 = vrot.lane.b32.xlu0 %v1267, 9
        %v1326 = vpop.permute.xlu0 %1325
        %1327 = vrot.lane.b32.xlu0 %v1268, 9
        %v1328 = vpop.permute.xlu0 %1327
        %1329 = vrot.lane.b32.xlu0 %v1269, 9
        %v1330 = vpop.permute.xlu0 %1329
        %1331 = vrot.lane.b32.xlu0 %v1270, 9
        %v1332 = vpop.permute.xlu0 %1331
        %1333 = vrot.lane.b32.xlu0 %v1271, 9
        %v1334 = vpop.permute.xlu0 %1333
        %1335 = vrot.lane.b32.xlu0 %v1272, 9
        %v1336 = vpop.permute.xlu0 %1335
        %vm1369 = vcmask 93256
        %1370 = vst.msk [vmem:[#allocation3] sm:$0xf] %vm1369, %v1274
        %1371 = vst.msk [vmem:[#allocation3 + $0x4] sm:$0xf] %vm1369, %v1276
        %1372 = vst.msk [vmem:[#allocation3 + $0x8] sm:$0xf] %vm1369, %v1278
        %1373 = vst.msk [vmem:[#allocation3 + $0xc] sm:$0xf] %vm1369, %v1280
        %1374 = vst.msk [vmem:[#allocation3 + $0x10] sm:$0xf] %vm1369, %v1282
        %1375 = vst.msk [vmem:[#allocation3 + $0x14] sm:$0xf] %vm1369, %v1284
        %1376 = vst.msk [vmem:[#allocation3 + $0x18] sm:$0xf] %vm1369, %v1286
        %1377 = vst.msk [vmem:[#allocation3 + $0x1c] sm:$0xf] %vm1369, %v1288
        %1378 = vst.msk [vmem:[#allocation3 + $0x20] sm:$0xf] %vm1369, %v1290
        %1379 = vst.msk [vmem:[#allocation3 + $0x24] sm:$0xf] %vm1369, %v1292
        %1380 = vst.msk [vmem:[#allocation3 + $0x28] sm:$0xf] %vm1369, %v1294
        %1381 = vst.msk [vmem:[#allocation3 + $0x2c] sm:$0xf] %vm1369, %v1296
        %1382 = vst.msk [vmem:[#allocation3 + $0x30] sm:$0xf] %vm1369, %v1298
        %1383 = vst.msk [vmem:[#allocation3 + $0x34] sm:$0xf] %vm1369, %v1300
        %1384 = vst.msk [vmem:[#allocation3 + $0x38] sm:$0xf] %vm1369, %v1302
        %1385 = vst.msk [vmem:[#allocation3 + $0x3c] sm:$0xf] %vm1369, %v1304
        %1386 = vst.msk [vmem:[#allocation3 + $0x40] sm:$0xf] %vm1369, %v1306
        %1387 = vst.msk [vmem:[#allocation3 + $0x44] sm:$0xf] %vm1369, %v1308
        %1388 = vst.msk [vmem:[#allocation3 + $0x48] sm:$0xf] %vm1369, %v1310
        %1389 = vst.msk [vmem:[#allocation3 + $0x4c] sm:$0xf] %vm1369, %v1312
        %1390 = vst.msk [vmem:[#allocation3 + $0x50] sm:$0xf] %vm1369, %v1314
        %1391 = vst.msk [vmem:[#allocation3 + $0x54] sm:$0xf] %vm1369, %v1316
        %1392 = vst.msk [vmem:[#allocation3 + $0x58] sm:$0xf] %vm1369, %v1318
        %1393 = vst.msk [vmem:[#allocation3 + $0x5c] sm:$0xf] %vm1369, %v1320
        %1394 = vst.msk [vmem:[#allocation3 + $0x60] sm:$0xf] %vm1369, %v1322
        %1395 = vst.msk [vmem:[#allocation3 + $0x64] sm:$0xf] %vm1369, %v1324
        %1396 = vst.msk [vmem:[#allocation3 + $0x68] sm:$0xf] %vm1369, %v1326
        %1397 = vst.msk [vmem:[#allocation3 + $0x6c] sm:$0xf] %vm1369, %v1328
        %1398 = vst.msk [vmem:[#allocation3 + $0x70] sm:$0xf] %vm1369, %v1330
        %1399 = vst.msk [vmem:[#allocation3 + $0x74] sm:$0xf] %vm1369, %v1332
        %1400 = vst.msk [vmem:[#allocation3 + $0x78] sm:$0xf] %vm1369, %v1334
        %1401 = vst.msk [vmem:[#allocation3 + $0x7c] sm:$0xf] %vm1369, %v1336
        %v1402 = vld [vmem:[%s373 + $0x8] sm:$0xff]
        %v1403 = vld [vmem:[%s373 + $0x10] sm:$0xff]
        %v1404 = vld [vmem:[%s373 + $0x28] sm:$0xff]
        %v1405 = vld [vmem:[%s373 + $0x30] sm:$0xff]
        %v1406 = vld [vmem:[%s373 + $0x48] sm:$0xff]
        %v1407 = vld [vmem:[%s373 + $0x50] sm:$0xff]
        %v1408 = vld [vmem:[%s373 + $0x68] sm:$0xff]
        %v1409 = vld [vmem:[%s373 + $0x70] sm:$0xff]
        %v1410 = vld [vmem:[%s373 + $0x88] sm:$0xff]
        %v1411 = vld [vmem:[%s373 + $0x90] sm:$0xff]
        %v1412 = vld [vmem:[%s373 + $0xa8] sm:$0xff]
        %v1413 = vld [vmem:[%s373 + $0xb0] sm:$0xff]
        %v1414 = vld [vmem:[%s373 + $0xc8] sm:$0xff]
        %v1415 = vld [vmem:[%s373 + $0xd0] sm:$0xff]
        %v1416 = vld [vmem:[%s373 + $0xe8] sm:$0xff]
        %v1417 = vld [vmem:[%s373 + $0xf0] sm:$0xff]
        %v1418 = vld [vmem:[%s373 + $0x108] sm:$0xff]
        %v1419 = vld [vmem:[%s373 + $0x110] sm:$0xff]
        %v1420 = vld [vmem:[%s373 + $0x128] sm:$0xff]
        %v1421 = vld [vmem:[%s373 + $0x130] sm:$0xff]
        %v1422 = vld [vmem:[%s373 + $0x148] sm:$0xff]
        %v1423 = vld [vmem:[%s373 + $0x150] sm:$0xff]
        %v1424 = vld [vmem:[%s373 + $0x168] sm:$0xff]
        %v1425 = vld [vmem:[%s373 + $0x170] sm:$0xff]
        %v1426 = vld [vmem:[%s373 + $0x188] sm:$0xff]
        %v1427 = vld [vmem:[%s373 + $0x190] sm:$0xff]
        %v1428 = vld [vmem:[%s373 + $0x1a8] sm:$0xff]
        %v1429 = vld [vmem:[%s373 + $0x1b0] sm:$0xff]
        %v1430 = vld [vmem:[%s373 + $0x1c8] sm:$0xff]
        %v1431 = vld [vmem:[%s373 + $0x1d0] sm:$0xff]
        %v1432 = vld [vmem:[%s373 + $0x1e8] sm:$0xff]
        %v1433 = vld [vmem:[%s373 + $0x1f0] sm:$0xff]
        %v1434 = vpack.c.bf16 %v1403, %v1402
        %v1435 = vpack.c.bf16 %v1405, %v1404
        %v1436 = vpack.c.bf16 %v1407, %v1406
        %v1437 = vpack.c.bf16 %v1409, %v1408
        %v1438 = vpack.c.bf16 %v1411, %v1410
        %v1439 = vpack.c.bf16 %v1413, %v1412
        %v1440 = vpack.c.bf16 %v1415, %v1414
        %v1441 = vpack.c.bf16 %v1417, %v1416
        %v1442 = vpack.c.bf16 %v1419, %v1418
        %v1443 = vpack.c.bf16 %v1421, %v1420
        %v1444 = vpack.c.bf16 %v1423, %v1422
        %v1445 = vpack.c.bf16 %v1425, %v1424
        %v1446 = vpack.c.bf16 %v1427, %v1426
        %v1447 = vpack.c.bf16 %v1429, %v1428
        %v1448 = vpack.c.bf16 %v1431, %v1430
        %v1449 = vpack.c.bf16 %v1433, %v1432
        %v1466 = vunpack.c.l.b16 %v1434
        %v1467 = vunpack.c.h.b16 %v1434
        %v1468 = vunpack.c.l.b16 %v1435
        %v1469 = vunpack.c.h.b16 %v1435
        %v1470 = vunpack.c.l.b16 %v1436
        %v1471 = vunpack.c.h.b16 %v1436
        %v1472 = vunpack.c.l.b16 %v1437
        %v1473 = vunpack.c.h.b16 %v1437
        %v1474 = vunpack.c.l.b16 %v1438
        %v1475 = vunpack.c.h.b16 %v1438
        %v1476 = vunpack.c.l.b16 %v1439
        %v1477 = vunpack.c.h.b16 %v1439
        %v1478 = vunpack.c.l.b16 %v1440
        %v1479 = vunpack.c.h.b16 %v1440
        %v1480 = vunpack.c.l.b16 %v1441
        %v1481 = vunpack.c.h.b16 %v1441
        %v1482 = vunpack.c.l.b16 %v1442
        %v1483 = vunpack.c.h.b16 %v1442
        %v1484 = vunpack.c.l.b16 %v1443
        %v1485 = vunpack.c.h.b16 %v1443
        %v1486 = vunpack.c.l.b16 %v1444
        %v1487 = vunpack.c.h.b16 %v1444
        %v1488 = vunpack.c.l.b16 %v1445
        %v1489 = vunpack.c.h.b16 %v1445
        %v1490 = vunpack.c.l.b16 %v1446
        %v1491 = vunpack.c.h.b16 %v1446
        %v1492 = vunpack.c.l.b16 %v1447
        %v1493 = vunpack.c.h.b16 %v1447
        %v1494 = vunpack.c.l.b16 %v1448
        %v1495 = vunpack.c.h.b16 %v1448
        %v1496 = vunpack.c.l.b16 %v1449
        %v1497 = vunpack.c.h.b16 %v1449
        %v1498 = vpack.c.b16 %v1466, %v1466
        %v1499 = vpack.c.b16 %v1467, %v1467
        %v1500 = vpack.c.b16 %v1468, %v1468
        %v1501 = vpack.c.b16 %v1469, %v1469
        %v1502 = vpack.c.b16 %v1470, %v1470
        %v1503 = vpack.c.b16 %v1471, %v1471
        %v1504 = vpack.c.b16 %v1472, %v1472
        %v1505 = vpack.c.b16 %v1473, %v1473
        %v1506 = vpack.c.b16 %v1474, %v1474
        %v1507 = vpack.c.b16 %v1475, %v1475
        %v1508 = vpack.c.b16 %v1476, %v1476
        %v1509 = vpack.c.b16 %v1477, %v1477
        %v1510 = vpack.c.b16 %v1478, %v1478
        %v1511 = vpack.c.b16 %v1479, %v1479
        %v1512 = vpack.c.b16 %v1480, %v1480
        %v1513 = vpack.c.b16 %v1481, %v1481
        %v1514 = vpack.c.b16 %v1482, %v1482
        %v1515 = vpack.c.b16 %v1483, %v1483
        %v1516 = vpack.c.b16 %v1484, %v1484
        %v1517 = vpack.c.b16 %v1485, %v1485
        %v1518 = vpack.c.b16 %v1486, %v1486
        %v1519 = vpack.c.b16 %v1487, %v1487
        %v1520 = vpack.c.b16 %v1488, %v1488
        %v1521 = vpack.c.b16 %v1489, %v1489
        %v1522 = vpack.c.b16 %v1490, %v1490
        %v1523 = vpack.c.b16 %v1491, %v1491
        %v1524 = vpack.c.b16 %v1492, %v1492
        %v1525 = vpack.c.b16 %v1493, %v1493
        %v1526 = vpack.c.b16 %v1494, %v1494
        %v1527 = vpack.c.b16 %v1495, %v1495
        %v1528 = vpack.c.b16 %v1496, %v1496
        %v1529 = vpack.c.b16 %v1497, %v1497
        %1530 = vrot.lane.b32.xlu0 %v1498, 12
        %v1531 = vpop.permute.xlu0 %1530
        %1532 = vrot.lane.b32.xlu0 %v1499, 12
        %v1533 = vpop.permute.xlu0 %1532
        %1534 = vrot.lane.b32.xlu0 %v1500, 12
        %v1535 = vpop.permute.xlu0 %1534
        %1536 = vrot.lane.b32.xlu0 %v1501, 12
        %v1537 = vpop.permute.xlu0 %1536
        %1538 = vrot.lane.b32.xlu0 %v1502, 12
        %v1539 = vpop.permute.xlu0 %1538
        %1540 = vrot.lane.b32.xlu0 %v1503, 12
        %v1541 = vpop.permute.xlu0 %1540
        %1542 = vrot.lane.b32.xlu0 %v1504, 12
        %v1543 = vpop.permute.xlu0 %1542
        %1544 = vrot.lane.b32.xlu0 %v1505, 12
        %v1545 = vpop.permute.xlu0 %1544
        %1546 = vrot.lane.b32.xlu0 %v1506, 12
        %v1547 = vpop.permute.xlu0 %1546
        %1548 = vrot.lane.b32.xlu0 %v1507, 12
        %v1549 = vpop.permute.xlu0 %1548
        %1550 = vrot.lane.b32.xlu0 %v1508, 12
        %v1551 = vpop.permute.xlu0 %1550
        %1552 = vrot.lane.b32.xlu0 %v1509, 12
        %v1553 = vpop.permute.xlu0 %1552
        %1554 = vrot.lane.b32.xlu0 %v1510, 12
        %v1555 = vpop.permute.xlu0 %1554
        %1556 = vrot.lane.b32.xlu0 %v1511, 12
        %v1557 = vpop.permute.xlu0 %1556
        %1558 = vrot.lane.b32.xlu0 %v1512, 12
        %v1559 = vpop.permute.xlu0 %1558
        %1560 = vrot.lane.b32.xlu0 %v1513, 12
        %v1561 = vpop.permute.xlu0 %1560
        %1562 = vrot.lane.b32.xlu0 %v1514, 12
        %v1563 = vpop.permute.xlu0 %1562
        %1564 = vrot.lane.b32.xlu0 %v1515, 12
        %v1565 = vpop.permute.xlu0 %1564
        %1566 = vrot.lane.b32.xlu0 %v1516, 12
        %v1567 = vpop.permute.xlu0 %1566
        %1568 = vrot.lane.b32.xlu0 %v1517, 12
        %v1569 = vpop.permute.xlu0 %1568
        %1570 = vrot.lane.b32.xlu0 %v1518, 12
        %v1571 = vpop.permute.xlu0 %1570
        %1572 = vrot.lane.b32.xlu0 %v1519, 12
        %v1573 = vpop.permute.xlu0 %1572
        %1574 = vrot.lane.b32.xlu0 %v1520, 12
        %v1575 = vpop.permute.xlu0 %1574
        %1576 = vrot.lane.b32.xlu0 %v1521, 12
        %v1577 = vpop.permute.xlu0 %1576
        %1578 = vrot.lane.b32.xlu0 %v1522, 12
        %v1579 = vpop.permute.xlu0 %1578
        %1580 = vrot.lane.b32.xlu0 %v1523, 12
        %v1581 = vpop.permute.xlu0 %1580
        %1582 = vrot.lane.b32.xlu0 %v1524, 12
        %v1583 = vpop.permute.xlu0 %1582
        %1584 = vrot.lane.b32.xlu0 %v1525, 12
        %v1585 = vpop.permute.xlu0 %1584
        %1586 = vrot.lane.b32.xlu0 %v1526, 12
        %v1587 = vpop.permute.xlu0 %1586
        %1588 = vrot.lane.b32.xlu0 %v1527, 12
        %v1589 = vpop.permute.xlu0 %1588
        %1590 = vrot.lane.b32.xlu0 %v1528, 12
        %v1591 = vpop.permute.xlu0 %1590
        %1592 = vrot.lane.b32.xlu0 %v1529, 12
        %v1593 = vpop.permute.xlu0 %1592
        %vm1626 = vcmask 117856
        %1627 = vst.msk [vmem:[#allocation3] sm:$0xf] %vm1626, %v1531
        %1628 = vst.msk [vmem:[#allocation3 + $0x4] sm:$0xf] %vm1626, %v1533
        %1629 = vst.msk [vmem:[#allocation3 + $0x8] sm:$0xf] %vm1626, %v1535
        %1630 = vst.msk [vmem:[#allocation3 + $0xc] sm:$0xf] %vm1626, %v1537
        %1631 = vst.msk [vmem:[#allocation3 + $0x10] sm:$0xf] %vm1626, %v1539
        %1632 = vst.msk [vmem:[#allocation3 + $0x14] sm:$0xf] %vm1626, %v1541
        %1633 = vst.msk [vmem:[#allocation3 + $0x18] sm:$0xf] %vm1626, %v1543
        %1634 = vst.msk [vmem:[#allocation3 + $0x1c] sm:$0xf] %vm1626, %v1545
        %1635 = vst.msk [vmem:[#allocation3 + $0x20] sm:$0xf] %vm1626, %v1547
        %1636 = vst.msk [vmem:[#allocation3 + $0x24] sm:$0xf] %vm1626, %v1549
        %1637 = vst.msk [vmem:[#allocation3 + $0x28] sm:$0xf] %vm1626, %v1551
        %1638 = vst.msk [vmem:[#allocation3 + $0x2c] sm:$0xf] %vm1626, %v1553
        %1639 = vst.msk [vmem:[#allocation3 + $0x30] sm:$0xf] %vm1626, %v1555
        %1640 = vst.msk [vmem:[#allocation3 + $0x34] sm:$0xf] %vm1626, %v1557
        %1641 = vst.msk [vmem:[#allocation3 + $0x38] sm:$0xf] %vm1626, %v1559
        %1642 = vst.msk [vmem:[#allocation3 + $0x3c] sm:$0xf] %vm1626, %v1561
        %1643 = vst.msk [vmem:[#allocation3 + $0x40] sm:$0xf] %vm1626, %v1563
        %1644 = vst.msk [vmem:[#allocation3 + $0x44] sm:$0xf] %vm1626, %v1565
        %1645 = vst.msk [vmem:[#allocation3 + $0x48] sm:$0xf] %vm1626, %v1567
        %1646 = vst.msk [vmem:[#allocation3 + $0x4c] sm:$0xf] %vm1626, %v1569
        %1647 = vst.msk [vmem:[#allocation3 + $0x50] sm:$0xf] %vm1626, %v1571
        %1648 = vst.msk [vmem:[#allocation3 + $0x54] sm:$0xf] %vm1626, %v1573
        %1649 = vst.msk [vmem:[#allocation3 + $0x58] sm:$0xf] %vm1626, %v1575
        %1650 = vst.msk [vmem:[#allocation3 + $0x5c] sm:$0xf] %vm1626, %v1577
        %1651 = vst.msk [vmem:[#allocation3 + $0x60] sm:$0xf] %vm1626, %v1579
        %1652 = vst.msk [vmem:[#allocation3 + $0x64] sm:$0xf] %vm1626, %v1581
        %1653 = vst.msk [vmem:[#allocation3 + $0x68] sm:$0xf] %vm1626, %v1583
        %1654 = vst.msk [vmem:[#allocation3 + $0x6c] sm:$0xf] %vm1626, %v1585
        %1655 = vst.msk [vmem:[#allocation3 + $0x70] sm:$0xf] %vm1626, %v1587
        %1656 = vst.msk [vmem:[#allocation3 + $0x74] sm:$0xf] %vm1626, %v1589
        %1657 = vst.msk [vmem:[#allocation3 + $0x78] sm:$0xf] %vm1626, %v1591
        %1658 = vst.msk [vmem:[#allocation3 + $0x7c] sm:$0xf] %vm1626, %v1593
        %v1659 = vld [vmem:[%s373 + $0x9] sm:$0xff]
        %v1660 = vld [vmem:[%s373 + $0x11] sm:$0xff]
        %v1661 = vld [vmem:[%s373 + $0x29] sm:$0xff]
        %v1662 = vld [vmem:[%s373 + $0x31] sm:$0xff]
        %v1663 = vld [vmem:[%s373 + $0x49] sm:$0xff]
        %v1664 = vld [vmem:[%s373 + $0x51] sm:$0xff]
        %v1665 = vld [vmem:[%s373 + $0x69] sm:$0xff]
        %v1666 = vld [vmem:[%s373 + $0x71] sm:$0xff]
        %v1667 = vld [vmem:[%s373 + $0x89] sm:$0xff]
        %v1668 = vld [vmem:[%s373 + $0x91] sm:$0xff]
        %v1669 = vld [vmem:[%s373 + $0xa9] sm:$0xff]
        %v1670 = vld [vmem:[%s373 + $0xb1] sm:$0xff]
        %v1671 = vld [vmem:[%s373 + $0xc9] sm:$0xff]
        %v1672 = vld [vmem:[%s373 + $0xd1] sm:$0xff]
        %v1673 = vld [vmem:[%s373 + $0xe9] sm:$0xff]
        %v1674 = vld [vmem:[%s373 + $0xf1] sm:$0xff]
        %v1675 = vld [vmem:[%s373 + $0x109] sm:$0xff]
        %v1676 = vld [vmem:[%s373 + $0x111] sm:$0xff]
        %v1677 = vld [vmem:[%s373 + $0x129] sm:$0xff]
        %v1678 = vld [vmem:[%s373 + $0x131] sm:$0xff]
        %v1679 = vld [vmem:[%s373 + $0x149] sm:$0xff]
        %v1680 = vld [vmem:[%s373 + $0x151] sm:$0xff]
        %v1681 = vld [vmem:[%s373 + $0x169] sm:$0xff]
        %v1682 = vld [vmem:[%s373 + $0x171] sm:$0xff]
        %v1683 = vld [vmem:[%s373 + $0x189] sm:$0xff]
        %v1684 = vld [vmem:[%s373 + $0x191] sm:$0xff]
        %v1685 = vld [vmem:[%s373 + $0x1a9] sm:$0xff]
        %v1686 = vld [vmem:[%s373 + $0x1b1] sm:$0xff]
        %v1687 = vld [vmem:[%s373 + $0x1c9] sm:$0xff]
        %v1688 = vld [vmem:[%s373 + $0x1d1] sm:$0xff]
        %v1689 = vld [vmem:[%s373 + $0x1e9] sm:$0xff]
        %v1690 = vld [vmem:[%s373 + $0x1f1] sm:$0xff]
        %v1691 = vpack.c.bf16 %v1660, %v1659
        %v1692 = vpack.c.bf16 %v1662, %v1661
        %v1693 = vpack.c.bf16 %v1664, %v1663
        %v1694 = vpack.c.bf16 %v1666, %v1665
        %v1695 = vpack.c.bf16 %v1668, %v1667
        %v1696 = vpack.c.bf16 %v1670, %v1669
        %v1697 = vpack.c.bf16 %v1672, %v1671
        %v1698 = vpack.c.bf16 %v1674, %v1673
        %v1699 = vpack.c.bf16 %v1676, %v1675
        %v1700 = vpack.c.bf16 %v1678, %v1677
        %v1701 = vpack.c.bf16 %v1680, %v1679
        %v1702 = vpack.c.bf16 %v1682, %v1681
        %v1703 = vpack.c.bf16 %v1684, %v1683
        %v1704 = vpack.c.bf16 %v1686, %v1685
        %v1705 = vpack.c.bf16 %v1688, %v1687
        %v1706 = vpack.c.bf16 %v1690, %v1689
        %v1723 = vunpack.c.l.b16 %v1691
        %v1724 = vunpack.c.h.b16 %v1691
        %v1725 = vunpack.c.l.b16 %v1692
        %v1726 = vunpack.c.h.b16 %v1692
        %v1727 = vunpack.c.l.b16 %v1693
        %v1728 = vunpack.c.h.b16 %v1693
        %v1729 = vunpack.c.l.b16 %v1694
        %v1730 = vunpack.c.h.b16 %v1694
        %v1731 = vunpack.c.l.b16 %v1695
        %v1732 = vunpack.c.h.b16 %v1695
        %v1733 = vunpack.c.l.b16 %v1696
        %v1734 = vunpack.c.h.b16 %v1696
        %v1735 = vunpack.c.l.b16 %v1697
        %v1736 = vunpack.c.h.b16 %v1697
        %v1737 = vunpack.c.l.b16 %v1698
        %v1738 = vunpack.c.h.b16 %v1698
        %v1739 = vunpack.c.l.b16 %v1699
        %v1740 = vunpack.c.h.b16 %v1699
        %v1741 = vunpack.c.l.b16 %v1700
        %v1742 = vunpack.c.h.b16 %v1700
        %v1743 = vunpack.c.l.b16 %v1701
        %v1744 = vunpack.c.h.b16 %v1701
        %v1745 = vunpack.c.l.b16 %v1702
        %v1746 = vunpack.c.h.b16 %v1702
        %v1747 = vunpack.c.l.b16 %v1703
        %v1748 = vunpack.c.h.b16 %v1703
        %v1749 = vunpack.c.l.b16 %v1704
        %v1750 = vunpack.c.h.b16 %v1704
        %v1751 = vunpack.c.l.b16 %v1705
        %v1752 = vunpack.c.h.b16 %v1705
        %v1753 = vunpack.c.l.b16 %v1706
        %v1754 = vunpack.c.h.b16 %v1706
        %v1755 = vpack.c.b16 %v1723, %v1723
        %v1756 = vpack.c.b16 %v1724, %v1724
        %v1757 = vpack.c.b16 %v1725, %v1725
        %v1758 = vpack.c.b16 %v1726, %v1726
        %v1759 = vpack.c.b16 %v1727, %v1727
        %v1760 = vpack.c.b16 %v1728, %v1728
        %v1761 = vpack.c.b16 %v1729, %v1729
        %v1762 = vpack.c.b16 %v1730, %v1730
        %v1763 = vpack.c.b16 %v1731, %v1731
        %v1764 = vpack.c.b16 %v1732, %v1732
        %v1765 = vpack.c.b16 %v1733, %v1733
        %v1766 = vpack.c.b16 %v1734, %v1734
        %v1767 = vpack.c.b16 %v1735, %v1735
        %v1768 = vpack.c.b16 %v1736, %v1736
        %v1769 = vpack.c.b16 %v1737, %v1737
        %v1770 = vpack.c.b16 %v1738, %v1738
        %v1771 = vpack.c.b16 %v1739, %v1739
        %v1772 = vpack.c.b16 %v1740, %v1740
        %v1773 = vpack.c.b16 %v1741, %v1741
        %v1774 = vpack.c.b16 %v1742, %v1742
        %v1775 = vpack.c.b16 %v1743, %v1743
        %v1776 = vpack.c.b16 %v1744, %v1744
        %v1777 = vpack.c.b16 %v1745, %v1745
        %v1778 = vpack.c.b16 %v1746, %v1746
        %v1779 = vpack.c.b16 %v1747, %v1747
        %v1780 = vpack.c.b16 %v1748, %v1748
        %v1781 = vpack.c.b16 %v1749, %v1749
        %v1782 = vpack.c.b16 %v1750, %v1750
        %v1783 = vpack.c.b16 %v1751, %v1751
        %v1784 = vpack.c.b16 %v1752, %v1752
        %v1785 = vpack.c.b16 %v1753, %v1753
        %v1786 = vpack.c.b16 %v1754, %v1754
        %1787 = vrot.lane.b32.xlu0 %v1755, 15
        %v1788 = vpop.permute.xlu0 %1787
        %1789 = vrot.lane.b32.xlu0 %v1756, 15
        %v1790 = vpop.permute.xlu0 %1789
        %1791 = vrot.lane.b32.xlu0 %v1757, 15
        %v1792 = vpop.permute.xlu0 %1791
        %1793 = vrot.lane.b32.xlu0 %v1758, 15
        %v1794 = vpop.permute.xlu0 %1793
        %1795 = vrot.lane.b32.xlu0 %v1759, 15
        %v1796 = vpop.permute.xlu0 %1795
        %1797 = vrot.lane.b32.xlu0 %v1760, 15
        %v1798 = vpop.permute.xlu0 %1797
        %1799 = vrot.lane.b32.xlu0 %v1761, 15
        %v1800 = vpop.permute.xlu0 %1799
        %1801 = vrot.lane.b32.xlu0 %v1762, 15
        %v1802 = vpop.permute.xlu0 %1801
        %1803 = vrot.lane.b32.xlu0 %v1763, 15
        %v1804 = vpop.permute.xlu0 %1803
        %1805 = vrot.lane.b32.xlu0 %v1764, 15
        %v1806 = vpop.permute.xlu0 %1805
        %1807 = vrot.lane.b32.xlu0 %v1765, 15
        %v1808 = vpop.permute.xlu0 %1807
        %1809 = vrot.lane.b32.xlu0 %v1766, 15
        %v1810 = vpop.permute.xlu0 %1809
        %1811 = vrot.lane.b32.xlu0 %v1767, 15
        %v1812 = vpop.permute.xlu0 %1811
        %1813 = vrot.lane.b32.xlu0 %v1768, 15
        %v1814 = vpop.permute.xlu0 %1813
        %1815 = vrot.lane.b32.xlu0 %v1769, 15
        %v1816 = vpop.permute.xlu0 %1815
        %1817 = vrot.lane.b32.xlu0 %v1770, 15
        %v1818 = vpop.permute.xlu0 %1817
        %1819 = vrot.lane.b32.xlu0 %v1771, 15
        %v1820 = vpop.permute.xlu0 %1819
        %1821 = vrot.lane.b32.xlu0 %v1772, 15
        %v1822 = vpop.permute.xlu0 %1821
        %1823 = vrot.lane.b32.xlu0 %v1773, 15
        %v1824 = vpop.permute.xlu0 %1823
        %1825 = vrot.lane.b32.xlu0 %v1774, 15
        %v1826 = vpop.permute.xlu0 %1825
        %1827 = vrot.lane.b32.xlu0 %v1775, 15
        %v1828 = vpop.permute.xlu0 %1827
        %1829 = vrot.lane.b32.xlu0 %v1776, 15
        %v1830 = vpop.permute.xlu0 %1829
        %1831 = vrot.lane.b32.xlu0 %v1777, 15
        %v1832 = vpop.permute.xlu0 %1831
        %1833 = vrot.lane.b32.xlu0 %v1778, 15
        %v1834 = vpop.permute.xlu0 %1833
        %1835 = vrot.lane.b32.xlu0 %v1779, 15
        %v1836 = vpop.permute.xlu0 %1835
        %1837 = vrot.lane.b32.xlu0 %v1780, 15
        %v1838 = vpop.permute.xlu0 %1837
        %1839 = vrot.lane.b32.xlu0 %v1781, 15
        %v1840 = vpop.permute.xlu0 %1839
        %1841 = vrot.lane.b32.xlu0 %v1782, 15
        %v1842 = vpop.permute.xlu0 %1841
        %1843 = vrot.lane.b32.xlu0 %v1783, 15
        %v1844 = vpop.permute.xlu0 %1843
        %1845 = vrot.lane.b32.xlu0 %v1784, 15
        %v1846 = vpop.permute.xlu0 %1845
        %1847 = vrot.lane.b32.xlu0 %v1785, 15
        %v1848 = vpop.permute.xlu0 %1847
        %1849 = vrot.lane.b32.xlu0 %v1786, 15
        %v1850 = vpop.permute.xlu0 %1849
        %vm1883 = vcmask 142456
        %1884 = vst.msk [vmem:[#allocation3] sm:$0xf] %vm1883, %v1788
        %1885 = vst.msk [vmem:[#allocation3 + $0x4] sm:$0xf] %vm1883, %v1790
        %1886 = vst.msk [vmem:[#allocation3 + $0x8] sm:$0xf] %vm1883, %v1792
        %1887 = vst.msk [vmem:[#allocation3 + $0xc] sm:$0xf] %vm1883, %v1794
        %1888 = vst.msk [vmem:[#allocation3 + $0x10] sm:$0xf] %vm1883, %v1796
        %1889 = vst.msk [vmem:[#allocation3 + $0x14] sm:$0xf] %vm1883, %v1798
        %1890 = vst.msk [vmem:[#allocation3 + $0x18] sm:$0xf] %vm1883, %v1800
        %1891 = vst.msk [vmem:[#allocation3 + $0x1c] sm:$0xf] %vm1883, %v1802
        %1892 = vst.msk [vmem:[#allocation3 + $0x20] sm:$0xf] %vm1883, %v1804
        %1893 = vst.msk [vmem:[#allocation3 + $0x24] sm:$0xf] %vm1883, %v1806
        %1894 = vst.msk [vmem:[#allocation3 + $0x28] sm:$0xf] %vm1883, %v1808
        %1895 = vst.msk [vmem:[#allocation3 + $0x2c] sm:$0xf] %vm1883, %v1810
        %1896 = vst.msk [vmem:[#allocation3 + $0x30] sm:$0xf] %vm1883, %v1812
        %1897 = vst.msk [vmem:[#allocation3 + $0x34] sm:$0xf] %vm1883, %v1814
        %1898 = vst.msk [vmem:[#allocation3 + $0x38] sm:$0xf] %vm1883, %v1816
        %1899 = vst.msk [vmem:[#allocation3 + $0x3c] sm:$0xf] %vm1883, %v1818
        %1900 = vst.msk [vmem:[#allocation3 + $0x40] sm:$0xf] %vm1883, %v1820
        %1901 = vst.msk [vmem:[#allocation3 + $0x44] sm:$0xf] %vm1883, %v1822
        %1902 = vst.msk [vmem:[#allocation3 + $0x48] sm:$0xf] %vm1883, %v1824
        %1903 = vst.msk [vmem:[#allocation3 + $0x4c] sm:$0xf] %vm1883, %v1826
        %1904 = vst.msk [vmem:[#allocation3 + $0x50] sm:$0xf] %vm1883, %v1828
        %1905 = vst.msk [vmem:[#allocation3 + $0x54] sm:$0xf] %vm1883, %v1830
        %1906 = vst.msk [vmem:[#allocation3 + $0x58] sm:$0xf] %vm1883, %v1832
        %1907 = vst.msk [vmem:[#allocation3 + $0x5c] sm:$0xf] %vm1883, %v1834
        %1908 = vst.msk [vmem:[#allocation3 + $0x60] sm:$0xf] %vm1883, %v1836
        %1909 = vst.msk [vmem:[#allocation3 + $0x64] sm:$0xf] %vm1883, %v1838
        %1910 = vst.msk [vmem:[#allocation3 + $0x68] sm:$0xf] %vm1883, %v1840
        %1911 = vst.msk [vmem:[#allocation3 + $0x6c] sm:$0xf] %vm1883, %v1842
        %1912 = vst.msk [vmem:[#allocation3 + $0x70] sm:$0xf] %vm1883, %v1844
        %1913 = vst.msk [vmem:[#allocation3 + $0x74] sm:$0xf] %vm1883, %v1846
        %1914 = vst.msk [vmem:[#allocation3 + $0x78] sm:$0xf] %vm1883, %v1848
        %1915 = vst.msk [vmem:[#allocation3 + $0x7c] sm:$0xf] %vm1883, %v1850
        %s1916 = scalar_lea.vmem [#allocation2], 64
        %v1917 = vld [vmem:[%s1916 + $0x7] sm:$0xff]
        %v1918 = vld [vmem:[%s1916 + $0xf] sm:$0xff]
        %v1919 = vld [vmem:[%s1916 + $0x27] sm:$0xff]
        %v1920 = vld [vmem:[%s1916 + $0x2f] sm:$0xff]
        %v1921 = vld [vmem:[%s1916 + $0x47] sm:$0xff]
        %v1922 = vld [vmem:[%s1916 + $0x4f] sm:$0xff]
        %v1923 = vld [vmem:[%s1916 + $0x67] sm:$0xff]
        %v1924 = vld [vmem:[%s1916 + $0x6f] sm:$0xff]
        %v1925 = vld [vmem:[%s1916 + $0x87] sm:$0xff]
        %v1926 = vld [vmem:[%s1916 + $0x8f] sm:$0xff]
        %v1927 = vld [vmem:[%s1916 + $0xa7] sm:$0xff]
        %v1928 = vld [vmem:[%s1916 + $0xaf] sm:$0xff]
        %v1929 = vld [vmem:[%s1916 + $0xc7] sm:$0xff]
        %v1930 = vld [vmem:[%s1916 + $0xcf] sm:$0xff]
        %v1931 = vld [vmem:[%s1916 + $0xe7] sm:$0xff]
        %v1932 = vld [vmem:[%s1916 + $0xef] sm:$0xff]
        %v1933 = vld [vmem:[%s1916 + $0x107] sm:$0xff]
        %v1934 = vld [vmem:[%s1916 + $0x10f] sm:$0xff]
        %v1935 = vld [vmem:[%s1916 + $0x127] sm:$0xff]
        %v1936 = vld [vmem:[%s1916 + $0x12f] sm:$0xff]
        %v1937 = vld [vmem:[%s1916 + $0x147] sm:$0xff]
        %v1938 = vld [vmem:[%s1916 + $0x14f] sm:$0xff]
        %v1939 = vld [vmem:[%s1916 + $0x167] sm:$0xff]
        %v1940 = vld [vmem:[%s1916 + $0x16f] sm:$0xff]
        %v1941 = vld [vmem:[%s1916 + $0x187] sm:$0xff]
        %v1942 = vld [vmem:[%s1916 + $0x18f] sm:$0xff]
        %v1943 = vld [vmem:[%s1916 + $0x1a7] sm:$0xff]
        %v1944 = vld [vmem:[%s1916 + $0x1af] sm:$0xff]
        %v1945 = vld [vmem:[%s1916 + $0x1c7] sm:$0xff]
        %v1946 = vld [vmem:[%s1916 + $0x1cf] sm:$0xff]
        %v1947 = vld [vmem:[%s1916 + $0x1e7] sm:$0xff]
        %v1948 = vld [vmem:[%s1916 + $0x1ef] sm:$0xff]
        %v1949 = vpack.c.bf16 %v1918, %v1917
        %v1950 = vpack.c.bf16 %v1920, %v1919
        %v1951 = vpack.c.bf16 %v1922, %v1921
        %v1952 = vpack.c.bf16 %v1924, %v1923
        %v1953 = vpack.c.bf16 %v1926, %v1925
        %v1954 = vpack.c.bf16 %v1928, %v1927
        %v1955 = vpack.c.bf16 %v1930, %v1929
        %v1956 = vpack.c.bf16 %v1932, %v1931
        %v1957 = vpack.c.bf16 %v1934, %v1933
        %v1958 = vpack.c.bf16 %v1936, %v1935
        %v1959 = vpack.c.bf16 %v1938, %v1937
        %v1960 = vpack.c.bf16 %v1940, %v1939
        %v1961 = vpack.c.bf16 %v1942, %v1941
        %v1962 = vpack.c.bf16 %v1944, %v1943
        %v1963 = vpack.c.bf16 %v1946, %v1945
        %v1964 = vpack.c.bf16 %v1948, %v1947
        %v1981 = vunpack.c.l.b16 %v1949
        %v1982 = vunpack.c.h.b16 %v1949
        %v1983 = vunpack.c.l.b16 %v1950
        %v1984 = vunpack.c.h.b16 %v1950
        %v1985 = vunpack.c.l.b16 %v1951
        %v1986 = vunpack.c.h.b16 %v1951
        %v1987 = vunpack.c.l.b16 %v1952
        %v1988 = vunpack.c.h.b16 %v1952
        %v1989 = vunpack.c.l.b16 %v1953
        %v1990 = vunpack.c.h.b16 %v1953
        %v1991 = vunpack.c.l.b16 %v1954
        %v1992 = vunpack.c.h.b16 %v1954
        %v1993 = vunpack.c.l.b16 %v1955
        %v1994 = vunpack.c.h.b16 %v1955
        %v1995 = vunpack.c.l.b16 %v1956
        %v1996 = vunpack.c.h.b16 %v1956
        %v1997 = vunpack.c.l.b16 %v1957
        %v1998 = vunpack.c.h.b16 %v1957
        %v1999 = vunpack.c.l.b16 %v1958
        %v2000 = vunpack.c.h.b16 %v1958
        %v2001 = vunpack.c.l.b16 %v1959
        %v2002 = vunpack.c.h.b16 %v1959
        %v2003 = vunpack.c.l.b16 %v1960
        %v2004 = vunpack.c.h.b16 %v1960
        %v2005 = vunpack.c.l.b16 %v1961
        %v2006 = vunpack.c.h.b16 %v1961
        %v2007 = vunpack.c.l.b16 %v1962
        %v2008 = vunpack.c.h.b16 %v1962
        %v2009 = vunpack.c.l.b16 %v1963
        %v2010 = vunpack.c.h.b16 %v1963
        %v2011 = vunpack.c.l.b16 %v1964
        %v2012 = vunpack.c.h.b16 %v1964
        %v2013 = vpack.c.b16 %v1981, %v1981
        %v2014 = vpack.c.b16 %v1982, %v1982
        %v2015 = vpack.c.b16 %v1983, %v1983
        %v2016 = vpack.c.b16 %v1984, %v1984
        %v2017 = vpack.c.b16 %v1985, %v1985
        %v2018 = vpack.c.b16 %v1986, %v1986
        %v2019 = vpack.c.b16 %v1987, %v1987
        %v2020 = vpack.c.b16 %v1988, %v1988
        %v2021 = vpack.c.b16 %v1989, %v1989
        %v2022 = vpack.c.b16 %v1990, %v1990
        %v2023 = vpack.c.b16 %v1991, %v1991
        %v2024 = vpack.c.b16 %v1992, %v1992
        %v2025 = vpack.c.b16 %v1993, %v1993
        %v2026 = vpack.c.b16 %v1994, %v1994
        %v2027 = vpack.c.b16 %v1995, %v1995
        %v2028 = vpack.c.b16 %v1996, %v1996
        %v2029 = vpack.c.b16 %v1997, %v1997
        %v2030 = vpack.c.b16 %v1998, %v1998
        %v2031 = vpack.c.b16 %v1999, %v1999
        %v2032 = vpack.c.b16 %v2000, %v2000
        %v2033 = vpack.c.b16 %v2001, %v2001
        %v2034 = vpack.c.b16 %v2002, %v2002
        %v2035 = vpack.c.b16 %v2003, %v2003
        %v2036 = vpack.c.b16 %v2004, %v2004
        %v2037 = vpack.c.b16 %v2005, %v2005
        %v2038 = vpack.c.b16 %v2006, %v2006
        %v2039 = vpack.c.b16 %v2007, %v2007
        %v2040 = vpack.c.b16 %v2008, %v2008
        %v2041 = vpack.c.b16 %v2009, %v2009
        %v2042 = vpack.c.b16 %v2010, %v2010
        %v2043 = vpack.c.b16 %v2011, %v2011
        %v2044 = vpack.c.b16 %v2012, %v2012
        %2045 = vrot.lane.b32.xlu0 %v2013, 18
        %v2046 = vpop.permute.xlu0 %2045
        %2047 = vrot.lane.b32.xlu0 %v2014, 18
        %v2048 = vpop.permute.xlu0 %2047
        %2049 = vrot.lane.b32.xlu0 %v2015, 18
        %v2050 = vpop.permute.xlu0 %2049
        %2051 = vrot.lane.b32.xlu0 %v2016, 18
        %v2052 = vpop.permute.xlu0 %2051
        %2053 = vrot.lane.b32.xlu0 %v2017, 18
        %v2054 = vpop.permute.xlu0 %2053
        %2055 = vrot.lane.b32.xlu0 %v2018, 18
        %v2056 = vpop.permute.xlu0 %2055
        %2057 = vrot.lane.b32.xlu0 %v2019, 18
        %v2058 = vpop.permute.xlu0 %2057
        %2059 = vrot.lane.b32.xlu0 %v2020, 18
        %v2060 = vpop.permute.xlu0 %2059
        %2061 = vrot.lane.b32.xlu0 %v2021, 18
        %v2062 = vpop.permute.xlu0 %2061
        %2063 = vrot.lane.b32.xlu0 %v2022, 18
        %v2064 = vpop.permute.xlu0 %2063
        %2065 = vrot.lane.b32.xlu0 %v2023, 18
        %v2066 = vpop.permute.xlu0 %2065
        %2067 = vrot.lane.b32.xlu0 %v2024, 18
        %v2068 = vpop.permute.xlu0 %2067
        %2069 = vrot.lane.b32.xlu0 %v2025, 18
        %v2070 = vpop.permute.xlu0 %2069
        %2071 = vrot.lane.b32.xlu0 %v2026, 18
        %v2072 = vpop.permute.xlu0 %2071
        %2073 = vrot.lane.b32.xlu0 %v2027, 18
        %v2074 = vpop.permute.xlu0 %2073
        %2075 = vrot.lane.b32.xlu0 %v2028, 18
        %v2076 = vpop.permute.xlu0 %2075
        %2077 = vrot.lane.b32.xlu0 %v2029, 18
        %v2078 = vpop.permute.xlu0 %2077
        %2079 = vrot.lane.b32.xlu0 %v2030, 18
        %v2080 = vpop.permute.xlu0 %2079
        %2081 = vrot.lane.b32.xlu0 %v2031, 18
        %v2082 = vpop.permute.xlu0 %2081
        %2083 = vrot.lane.b32.xlu0 %v2032, 18
        %v2084 = vpop.permute.xlu0 %2083
        %2085 = vrot.lane.b32.xlu0 %v2033, 18
        %v2086 = vpop.permute.xlu0 %2085
        %2087 = vrot.lane.b32.xlu0 %v2034, 18
        %v2088 = vpop.permute.xlu0 %2087
        %2089 = vrot.lane.b32.xlu0 %v2035, 18
        %v2090 = vpop.permute.xlu0 %2089
        %2091 = vrot.lane.b32.xlu0 %v2036, 18
        %v2092 = vpop.permute.xlu0 %2091
        %2093 = vrot.lane.b32.xlu0 %v2037, 18
        %v2094 = vpop.permute.xlu0 %2093
        %2095 = vrot.lane.b32.xlu0 %v2038, 18
        %v2096 = vpop.permute.xlu0 %2095
        %2097 = vrot.lane.b32.xlu0 %v2039, 18
        %v2098 = vpop.permute.xlu0 %2097
        %2099 = vrot.lane.b32.xlu0 %v2040, 18
        %v2100 = vpop.permute.xlu0 %2099
        %2101 = vrot.lane.b32.xlu0 %v2041, 18
        %v2102 = vpop.permute.xlu0 %2101
        %2103 = vrot.lane.b32.xlu0 %v2042, 18
        %v2104 = vpop.permute.xlu0 %2103
        %2105 = vrot.lane.b32.xlu0 %v2043, 18
        %v2106 = vpop.permute.xlu0 %2105
        %2107 = vrot.lane.b32.xlu0 %v2044, 18
        %v2108 = vpop.permute.xlu0 %2107
        %vm2141 = vcmask 167056
        %2142 = vst.msk [vmem:[#allocation3] sm:$0xf] %vm2141, %v2046
        %2143 = vst.msk [vmem:[#allocation3 + $0x4] sm:$0xf] %vm2141, %v2048
        %2144 = vst.msk [vmem:[#allocation3 + $0x8] sm:$0xf] %vm2141, %v2050
        %2145 = vst.msk [vmem:[#allocation3 + $0xc] sm:$0xf] %vm2141, %v2052
        %2146 = vst.msk [vmem:[#allocation3 + $0x10] sm:$0xf] %vm2141, %v2054
        %2147 = vst.msk [vmem:[#allocation3 + $0x14] sm:$0xf] %vm2141, %v2056
        %2148 = vst.msk [vmem:[#allocation3 + $0x18] sm:$0xf] %vm2141, %v2058
        %2149 = vst.msk [vmem:[#allocation3 + $0x1c] sm:$0xf] %vm2141, %v2060
        %2150 = vst.msk [vmem:[#allocation3 + $0x20] sm:$0xf] %vm2141, %v2062
        %2151 = vst.msk [vmem:[#allocation3 + $0x24] sm:$0xf] %vm2141, %v2064
        %2152 = vst.msk [vmem:[#allocation3 + $0x28] sm:$0xf] %vm2141, %v2066
        %2153 = vst.msk [vmem:[#allocation3 + $0x2c] sm:$0xf] %vm2141, %v2068
        %2154 = vst.msk [vmem:[#allocation3 + $0x30] sm:$0xf] %vm2141, %v2070
        %2155 = vst.msk [vmem:[#allocation3 + $0x34] sm:$0xf] %vm2141, %v2072
        %2156 = vst.msk [vmem:[#allocation3 + $0x38] sm:$0xf] %vm2141, %v2074
        %2157 = vst.msk [vmem:[#allocation3 + $0x3c] sm:$0xf] %vm2141, %v2076
        %2158 = vst.msk [vmem:[#allocation3 + $0x40] sm:$0xf] %vm2141, %v2078
        %2159 = vst.msk [vmem:[#allocation3 + $0x44] sm:$0xf] %vm2141, %v2080
        %2160 = vst.msk [vmem:[#allocation3 + $0x48] sm:$0xf] %vm2141, %v2082
        %2161 = vst.msk [vmem:[#allocation3 + $0x4c] sm:$0xf] %vm2141, %v2084
        %2162 = vst.msk [vmem:[#allocation3 + $0x50] sm:$0xf] %vm2141, %v2086
        %2163 = vst.msk [vmem:[#allocation3 + $0x54] sm:$0xf] %vm2141, %v2088
        %2164 = vst.msk [vmem:[#allocation3 + $0x58] sm:$0xf] %vm2141, %v2090
        %2165 = vst.msk [vmem:[#allocation3 + $0x5c] sm:$0xf] %vm2141, %v2092
        %2166 = vst.msk [vmem:[#allocation3 + $0x60] sm:$0xf] %vm2141, %v2094
        %2167 = vst.msk [vmem:[#allocation3 + $0x64] sm:$0xf] %vm2141, %v2096
        %2168 = vst.msk [vmem:[#allocation3 + $0x68] sm:$0xf] %vm2141, %v2098
        %2169 = vst.msk [vmem:[#allocation3 + $0x6c] sm:$0xf] %vm2141, %v2100
        %2170 = vst.msk [vmem:[#allocation3 + $0x70] sm:$0xf] %vm2141, %v2102
        %2171 = vst.msk [vmem:[#allocation3 + $0x74] sm:$0xf] %vm2141, %v2104
        %2172 = vst.msk [vmem:[#allocation3 + $0x78] sm:$0xf] %vm2141, %v2106
        %2173 = vst.msk [vmem:[#allocation3 + $0x7c] sm:$0xf] %vm2141, %v2108
        %v2174 = vld [vmem:[%s1916 + $0x8] sm:$0xff]
        %v2175 = vld [vmem:[%s1916 + $0x10] sm:$0xff]
        %v2176 = vld [vmem:[%s1916 + $0x28] sm:$0xff]
        %v2177 = vld [vmem:[%s1916 + $0x30] sm:$0xff]
        %v2178 = vld [vmem:[%s1916 + $0x48] sm:$0xff]
        %v2179 = vld [vmem:[%s1916 + $0x50] sm:$0xff]
        %v2180 = vld [vmem:[%s1916 + $0x68] sm:$0xff]
        %v2181 = vld [vmem:[%s1916 + $0x70] sm:$0xff]
        %v2182 = vld [vmem:[%s1916 + $0x88] sm:$0xff]
        %v2183 = vld [vmem:[%s1916 + $0x90] sm:$0xff]
        %v2184 = vld [vmem:[%s1916 + $0xa8] sm:$0xff]
        %v2185 = vld [vmem:[%s1916 + $0xb0] sm:$0xff]
        %v2186 = vld [vmem:[%s1916 + $0xc8] sm:$0xff]
        %v2187 = vld [vmem:[%s1916 + $0xd0] sm:$0xff]
        %v2188 = vld [vmem:[%s1916 + $0xe8] sm:$0xff]
        %v2189 = vld [vmem:[%s1916 + $0xf0] sm:$0xff]
        %v2190 = vld [vmem:[%s1916 + $0x108] sm:$0xff]
        %v2191 = vld [vmem:[%s1916 + $0x110] sm:$0xff]
        %v2192 = vld [vmem:[%s1916 + $0x128] sm:$0xff]
        %v2193 = vld [vmem:[%s1916 + $0x130] sm:$0xff]
        %v2194 = vld [vmem:[%s1916 + $0x148] sm:$0xff]
        %v2195 = vld [vmem:[%s1916 + $0x150] sm:$0xff]
        %v2196 = vld [vmem:[%s1916 + $0x168] sm:$0xff]
        %v2197 = vld [vmem:[%s1916 + $0x170] sm:$0xff]
        %v2198 = vld [vmem:[%s1916 + $0x188] sm:$0xff]
        %v2199 = vld [vmem:[%s1916 + $0x190] sm:$0xff]
        %v2200 = vld [vmem:[%s1916 + $0x1a8] sm:$0xff]
        %v2201 = vld [vmem:[%s1916 + $0x1b0] sm:$0xff]
        %v2202 = vld [vmem:[%s1916 + $0x1c8] sm:$0xff]
        %v2203 = vld [vmem:[%s1916 + $0x1d0] sm:$0xff]
        %v2204 = vld [vmem:[%s1916 + $0x1e8] sm:$0xff]
        %v2205 = vld [vmem:[%s1916 + $0x1f0] sm:$0xff]
        %v2206 = vpack.c.bf16 %v2175, %v2174
        %v2207 = vpack.c.bf16 %v2177, %v2176
        %v2208 = vpack.c.bf16 %v2179, %v2178
        %v2209 = vpack.c.bf16 %v2181, %v2180
        %v2210 = vpack.c.bf16 %v2183, %v2182
        %v2211 = vpack.c.bf16 %v2185, %v2184
        %v2212 = vpack.c.bf16 %v2187, %v2186
        %v2213 = vpack.c.bf16 %v2189, %v2188
        %v2214 = vpack.c.bf16 %v2191, %v2190
        %v2215 = vpack.c.bf16 %v2193, %v2192
        %v2216 = vpack.c.bf16 %v2195, %v2194
        %v2217 = vpack.c.bf16 %v2197, %v2196
        %v2218 = vpack.c.bf16 %v2199, %v2198
        %v2219 = vpack.c.bf16 %v2201, %v2200
        %v2220 = vpack.c.bf16 %v2203, %v2202
        %v2221 = vpack.c.bf16 %v2205, %v2204
        %v2238 = vunpack.c.l.b16 %v2206
        %v2239 = vunpack.c.h.b16 %v2206
        %v2240 = vunpack.c.l.b16 %v2207
        %v2241 = vunpack.c.h.b16 %v2207
        %v2242 = vunpack.c.l.b16 %v2208
        %v2243 = vunpack.c.h.b16 %v2208
        %v2244 = vunpack.c.l.b16 %v2209
        %v2245 = vunpack.c.h.b16 %v2209
        %v2246 = vunpack.c.l.b16 %v2210
        %v2247 = vunpack.c.h.b16 %v2210
        %v2248 = vunpack.c.l.b16 %v2211
        %v2249 = vunpack.c.h.b16 %v2211
        %v2250 = vunpack.c.l.b16 %v2212
        %v2251 = vunpack.c.h.b16 %v2212
        %v2252 = vunpack.c.l.b16 %v2213
        %v2253 = vunpack.c.h.b16 %v2213
        %v2254 = vunpack.c.l.b16 %v2214
        %v2255 = vunpack.c.h.b16 %v2214
        %v2256 = vunpack.c.l.b16 %v2215
        %v2257 = vunpack.c.h.b16 %v2215
        %v2258 = vunpack.c.l.b16 %v2216
        %v2259 = vunpack.c.h.b16 %v2216
        %v2260 = vunpack.c.l.b16 %v2217
        %v2261 = vunpack.c.h.b16 %v2217
        %v2262 = vunpack.c.l.b16 %v2218
        %v2263 = vunpack.c.h.b16 %v2218
        %v2264 = vunpack.c.l.b16 %v2219
        %v2265 = vunpack.c.h.b16 %v2219
        %v2266 = vunpack.c.l.b16 %v2220
        %v2267 = vunpack.c.h.b16 %v2220
        %v2268 = vunpack.c.l.b16 %v2221
        %v2269 = vunpack.c.h.b16 %v2221
        %v2270 = vpack.c.b16 %v2238, %v2238
        %v2271 = vpack.c.b16 %v2239, %v2239
        %v2272 = vpack.c.b16 %v2240, %v2240
        %v2273 = vpack.c.b16 %v2241, %v2241
        %v2274 = vpack.c.b16 %v2242, %v2242
        %v2275 = vpack.c.b16 %v2243, %v2243
        %v2276 = vpack.c.b16 %v2244, %v2244
        %v2277 = vpack.c.b16 %v2245, %v2245
        %v2278 = vpack.c.b16 %v2246, %v2246
        %v2279 = vpack.c.b16 %v2247, %v2247
        %v2280 = vpack.c.b16 %v2248, %v2248
        %v2281 = vpack.c.b16 %v2249, %v2249
        %v2282 = vpack.c.b16 %v2250, %v2250
        %v2283 = vpack.c.b16 %v2251, %v2251
        %v2284 = vpack.c.b16 %v2252, %v2252
        %v2285 = vpack.c.b16 %v2253, %v2253
        %v2286 = vpack.c.b16 %v2254, %v2254
        %v2287 = vpack.c.b16 %v2255, %v2255
        %v2288 = vpack.c.b16 %v2256, %v2256
        %v2289 = vpack.c.b16 %v2257, %v2257
        %v2290 = vpack.c.b16 %v2258, %v2258
        %v2291 = vpack.c.b16 %v2259, %v2259
        %v2292 = vpack.c.b16 %v2260, %v2260
        %v2293 = vpack.c.b16 %v2261, %v2261
        %v2294 = vpack.c.b16 %v2262, %v2262
        %v2295 = vpack.c.b16 %v2263, %v2263
        %v2296 = vpack.c.b16 %v2264, %v2264
        %v2297 = vpack.c.b16 %v2265, %v2265
        %v2298 = vpack.c.b16 %v2266, %v2266
        %v2299 = vpack.c.b16 %v2267, %v2267
        %v2300 = vpack.c.b16 %v2268, %v2268
        %v2301 = vpack.c.b16 %v2269, %v2269
        %2302 = vrot.lane.b32.xlu0 %v2270, 21
        %v2303 = vpop.permute.xlu0 %2302
        %2304 = vrot.lane.b32.xlu0 %v2271, 21
        %v2305 = vpop.permute.xlu0 %2304
        %2306 = vrot.lane.b32.xlu0 %v2272, 21
        %v2307 = vpop.permute.xlu0 %2306
        %2308 = vrot.lane.b32.xlu0 %v2273, 21
        %v2309 = vpop.permute.xlu0 %2308
        %2310 = vrot.lane.b32.xlu0 %v2274, 21
        %v2311 = vpop.permute.xlu0 %2310
        %2312 = vrot.lane.b32.xlu0 %v2275, 21
        %v2313 = vpop.permute.xlu0 %2312
        %2314 = vrot.lane.b32.xlu0 %v2276, 21
        %v2315 = vpop.permute.xlu0 %2314
        %2316 = vrot.lane.b32.xlu0 %v2277, 21
        %v2317 = vpop.permute.xlu0 %2316
        %2318 = vrot.lane.b32.xlu0 %v2278, 21
        %v2319 = vpop.permute.xlu0 %2318
        %2320 = vrot.lane.b32.xlu0 %v2279, 21
        %v2321 = vpop.permute.xlu0 %2320
        %2322 = vrot.lane.b32.xlu0 %v2280, 21
        %v2323 = vpop.permute.xlu0 %2322
        %2324 = vrot.lane.b32.xlu0 %v2281, 21
        %v2325 = vpop.permute.xlu0 %2324
        %2326 = vrot.lane.b32.xlu0 %v2282, 21
        %v2327 = vpop.permute.xlu0 %2326
        %2328 = vrot.lane.b32.xlu0 %v2283, 21
        %v2329 = vpop.permute.xlu0 %2328
        %2330 = vrot.lane.b32.xlu0 %v2284, 21
        %v2331 = vpop.permute.xlu0 %2330
        %2332 = vrot.lane.b32.xlu0 %v2285, 21
        %v2333 = vpop.permute.xlu0 %2332
        %2334 = vrot.lane.b32.xlu0 %v2286, 21
        %v2335 = vpop.permute.xlu0 %2334
        %2336 = vrot.lane.b32.xlu0 %v2287, 21
        %v2337 = vpop.permute.xlu0 %2336
        %2338 = vrot.lane.b32.xlu0 %v2288, 21
        %v2339 = vpop.permute.xlu0 %2338
        %2340 = vrot.lane.b32.xlu0 %v2289, 21
        %v2341 = vpop.permute.xlu0 %2340
        %2342 = vrot.lane.b32.xlu0 %v2290, 21
        %v2343 = vpop.permute.xlu0 %2342
        %2344 = vrot.lane.b32.xlu0 %v2291, 21
        %v2345 = vpop.permute.xlu0 %2344
        %2346 = vrot.lane.b32.xlu0 %v2292, 21
        %v2347 = vpop.permute.xlu0 %2346
        %2348 = vrot.lane.b32.xlu0 %v2293, 21
        %v2349 = vpop.permute.xlu0 %2348
        %2350 = vrot.lane.b32.xlu0 %v2294, 21
        %v2351 = vpop.permute.xlu0 %2350
        %2352 = vrot.lane.b32.xlu0 %v2295, 21
        %v2353 = vpop.permute.xlu0 %2352
        %2354 = vrot.lane.b32.xlu0 %v2296, 21
        %v2355 = vpop.permute.xlu0 %2354
        %2356 = vrot.lane.b32.xlu0 %v2297, 21
        %v2357 = vpop.permute.xlu0 %2356
        %2358 = vrot.lane.b32.xlu0 %v2298, 21
        %v2359 = vpop.permute.xlu0 %2358
        %2360 = vrot.lane.b32.xlu0 %v2299, 21
        %v2361 = vpop.permute.xlu0 %2360
        %2362 = vrot.lane.b32.xlu0 %v2300, 21
        %v2363 = vpop.permute.xlu0 %2362
        %2364 = vrot.lane.b32.xlu0 %v2301, 21
        %v2365 = vpop.permute.xlu0 %2364
        %vm2398 = vcmask 191656
        %2399 = vst.msk [vmem:[#allocation3] sm:$0xf] %vm2398, %v2303
        %2400 = vst.msk [vmem:[#allocation3 + $0x4] sm:$0xf] %vm2398, %v2305
        %2401 = vst.msk [vmem:[#allocation3 + $0x8] sm:$0xf] %vm2398, %v2307
        %2402 = vst.msk [vmem:[#allocation3 + $0xc] sm:$0xf] %vm2398, %v2309
        %2403 = vst.msk [vmem:[#allocation3 + $0x10] sm:$0xf] %vm2398, %v2311
        %2404 = vst.msk [vmem:[#allocation3 + $0x14] sm:$0xf] %vm2398, %v2313
        %2405 = vst.msk [vmem:[#allocation3 + $0x18] sm:$0xf] %vm2398, %v2315
        %2406 = vst.msk [vmem:[#allocation3 + $0x1c] sm:$0xf] %vm2398, %v2317
        %2407 = vst.msk [vmem:[#allocation3 + $0x20] sm:$0xf] %vm2398, %v2319
        %2408 = vst.msk [vmem:[#allocation3 + $0x24] sm:$0xf] %vm2398, %v2321
        %2409 = vst.msk [vmem:[#allocation3 + $0x28] sm:$0xf] %vm2398, %v2323
        %2410 = vst.msk [vmem:[#allocation3 + $0x2c] sm:$0xf] %vm2398, %v2325
        %2411 = vst.msk [vmem:[#allocation3 + $0x30] sm:$0xf] %vm2398, %v2327
        %2412 = vst.msk [vmem:[#allocation3 + $0x34] sm:$0xf] %vm2398, %v2329
        %2413 = vst.msk [vmem:[#allocation3 + $0x38] sm:$0xf] %vm2398, %v2331
        %2414 = vst.msk [vmem:[#allocation3 + $0x3c] sm:$0xf] %vm2398, %v2333
        %2415 = vst.msk [vmem:[#allocation3 + $0x40] sm:$0xf] %vm2398, %v2335
        %2416 = vst.msk [vmem:[#allocation3 + $0x44] sm:$0xf] %vm2398, %v2337
        %2417 = vst.msk [vmem:[#allocation3 + $0x48] sm:$0xf] %vm2398, %v2339
        %2418 = vst.msk [vmem:[#allocation3 + $0x4c] sm:$0xf] %vm2398, %v2341
        %2419 = vst.msk [vmem:[#allocation3 + $0x50] sm:$0xf] %vm2398, %v2343
        %2420 = vst.msk [vmem:[#allocation3 + $0x54] sm:$0xf] %vm2398, %v2345
        %2421 = vst.msk [vmem:[#allocation3 + $0x58] sm:$0xf] %vm2398, %v2347
        %2422 = vst.msk [vmem:[#allocation3 + $0x5c] sm:$0xf] %vm2398, %v2349
        %2423 = vst.msk [vmem:[#allocation3 + $0x60] sm:$0xf] %vm2398, %v2351
        %2424 = vst.msk [vmem:[#allocation3 + $0x64] sm:$0xf] %vm2398, %v2353
        %2425 = vst.msk [vmem:[#allocation3 + $0x68] sm:$0xf] %vm2398, %v2355
        %2426 = vst.msk [vmem:[#allocation3 + $0x6c] sm:$0xf] %vm2398, %v2357
        %2427 = vst.msk [vmem:[#allocation3 + $0x70] sm:$0xf] %vm2398, %v2359
        %2428 = vst.msk [vmem:[#allocation3 + $0x74] sm:$0xf] %vm2398, %v2361
        %2429 = vst.msk [vmem:[#allocation3 + $0x78] sm:$0xf] %vm2398, %v2363
        %2430 = vst.msk [vmem:[#allocation3 + $0x7c] sm:$0xf] %vm2398, %v2365
        %v2431 = vld [vmem:[%s1916 + $0x9] sm:$0xff]
        %v2432 = vld [vmem:[%s1916 + $0x11] sm:$0xff]
        %v2433 = vld [vmem:[%s1916 + $0x29] sm:$0xff]
        %v2434 = vld [vmem:[%s1916 + $0x31] sm:$0xff]
        %v2435 = vld [vmem:[%s1916 + $0x49] sm:$0xff]
        %v2436 = vld [vmem:[%s1916 + $0x51] sm:$0xff]
        %v2437 = vld [vmem:[%s1916 + $0x69] sm:$0xff]
        %v2438 = vld [vmem:[%s1916 + $0x71] sm:$0xff]
        %v2439 = vld [vmem:[%s1916 + $0x89] sm:$0xff]
        %v2440 = vld [vmem:[%s1916 + $0x91] sm:$0xff]
        %v2441 = vld [vmem:[%s1916 + $0xa9] sm:$0xff]
        %v2442 = vld [vmem:[%s1916 + $0xb1] sm:$0xff]
        %v2443 = vld [vmem:[%s1916 + $0xc9] sm:$0xff]
        %v2444 = vld [vmem:[%s1916 + $0xd1] sm:$0xff]
        %v2445 = vld [vmem:[%s1916 + $0xe9] sm:$0xff]
        %v2446 = vld [vmem:[%s1916 + $0xf1] sm:$0xff]
        %v2447 = vld [vmem:[%s1916 + $0x109] sm:$0xff]
        %v2448 = vld [vmem:[%s1916 + $0x111] sm:$0xff]
        %v2449 = vld [vmem:[%s1916 + $0x129] sm:$0xff]
        %v2450 = vld [vmem:[%s1916 + $0x131] sm:$0xff]
        %v2451 = vld [vmem:[%s1916 + $0x149] sm:$0xff]
        %v2452 = vld [vmem:[%s1916 + $0x151] sm:$0xff]
        %v2453 = vld [vmem:[%s1916 + $0x169] sm:$0xff]
        %v2454 = vld [vmem:[%s1916 + $0x171] sm:$0xff]
        %v2455 = vld [vmem:[%s1916 + $0x189] sm:$0xff]
        %v2456 = vld [vmem:[%s1916 + $0x191] sm:$0xff]
        %v2457 = vld [vmem:[%s1916 + $0x1a9] sm:$0xff]
        %v2458 = vld [vmem:[%s1916 + $0x1b1] sm:$0xff]
        %v2459 = vld [vmem:[%s1916 + $0x1c9] sm:$0xff]
        %v2460 = vld [vmem:[%s1916 + $0x1d1] sm:$0xff]
        %v2461 = vld [vmem:[%s1916 + $0x1e9] sm:$0xff]
        %v2462 = vld [vmem:[%s1916 + $0x1f1] sm:$0xff]
        %v2463 = vpack.c.bf16 %v2432, %v2431
        %v2464 = vpack.c.bf16 %v2434, %v2433
        %v2465 = vpack.c.bf16 %v2436, %v2435
        %v2466 = vpack.c.bf16 %v2438, %v2437
        %v2467 = vpack.c.bf16 %v2440, %v2439
        %v2468 = vpack.c.bf16 %v2442, %v2441
        %v2469 = vpack.c.bf16 %v2444, %v2443
        %v2470 = vpack.c.bf16 %v2446, %v2445
        %v2471 = vpack.c.bf16 %v2448, %v2447
        %v2472 = vpack.c.bf16 %v2450, %v2449
        %v2473 = vpack.c.bf16 %v2452, %v2451
        %v2474 = vpack.c.bf16 %v2454, %v2453
        %v2475 = vpack.c.bf16 %v2456, %v2455
        %v2476 = vpack.c.bf16 %v2458, %v2457
        %v2477 = vpack.c.bf16 %v2460, %v2459
        %v2478 = vpack.c.bf16 %v2462, %v2461
        %v2495 = vunpack.c.l.b16 %v2463
        %v2496 = vunpack.c.h.b16 %v2463
        %v2497 = vunpack.c.l.b16 %v2464
        %v2498 = vunpack.c.h.b16 %v2464
        %v2499 = vunpack.c.l.b16 %v2465
        %v2500 = vunpack.c.h.b16 %v2465
        %v2501 = vunpack.c.l.b16 %v2466
        %v2502 = vunpack.c.h.b16 %v2466
        %v2503 = vunpack.c.l.b16 %v2467
        %v2504 = vunpack.c.h.b16 %v2467
        %v2505 = vunpack.c.l.b16 %v2468
        %v2506 = vunpack.c.h.b16 %v2468
        %v2507 = vunpack.c.l.b16 %v2469
        %v2508 = vunpack.c.h.b16 %v2469
        %v2509 = vunpack.c.l.b16 %v2470
        %v2510 = vunpack.c.h.b16 %v2470
        %v2511 = vunpack.c.l.b16 %v2471
        %v2512 = vunpack.c.h.b16 %v2471
        %v2513 = vunpack.c.l.b16 %v2472
        %v2514 = vunpack.c.h.b16 %v2472
        %v2515 = vunpack.c.l.b16 %v2473
        %v2516 = vunpack.c.h.b16 %v2473
        %v2517 = vunpack.c.l.b16 %v2474
        %v2518 = vunpack.c.h.b16 %v2474
        %v2519 = vunpack.c.l.b16 %v2475
        %v2520 = vunpack.c.h.b16 %v2475
        %v2521 = vunpack.c.l.b16 %v2476
        %v2522 = vunpack.c.h.b16 %v2476
        %v2523 = vunpack.c.l.b16 %v2477
        %v2524 = vunpack.c.h.b16 %v2477
        %v2525 = vunpack.c.l.b16 %v2478
        %v2526 = vunpack.c.h.b16 %v2478
        %v2527 = vpack.c.b16 %v2495, %v2495
        %v2528 = vpack.c.b16 %v2496, %v2496
        %v2529 = vpack.c.b16 %v2497, %v2497
        %v2530 = vpack.c.b16 %v2498, %v2498
        %v2531 = vpack.c.b16 %v2499, %v2499
        %v2532 = vpack.c.b16 %v2500, %v2500
        %v2533 = vpack.c.b16 %v2501, %v2501
        %v2534 = vpack.c.b16 %v2502, %v2502
        %v2535 = vpack.c.b16 %v2503, %v2503
        %v2536 = vpack.c.b16 %v2504, %v2504
        %v2537 = vpack.c.b16 %v2505, %v2505
        %v2538 = vpack.c.b16 %v2506, %v2506
        %v2539 = vpack.c.b16 %v2507, %v2507
        %v2540 = vpack.c.b16 %v2508, %v2508
        %v2541 = vpack.c.b16 %v2509, %v2509
        %v2542 = vpack.c.b16 %v2510, %v2510
        %v2543 = vpack.c.b16 %v2511, %v2511
        %v2544 = vpack.c.b16 %v2512, %v2512
        %v2545 = vpack.c.b16 %v2513, %v2513
        %v2546 = vpack.c.b16 %v2514, %v2514
        %v2547 = vpack.c.b16 %v2515, %v2515
        %v2548 = vpack.c.b16 %v2516, %v2516
        %v2549 = vpack.c.b16 %v2517, %v2517
        %v2550 = vpack.c.b16 %v2518, %v2518
        %v2551 = vpack.c.b16 %v2519, %v2519
        %v2552 = vpack.c.b16 %v2520, %v2520
        %v2553 = vpack.c.b16 %v2521, %v2521
        %v2554 = vpack.c.b16 %v2522, %v2522
        %v2555 = vpack.c.b16 %v2523, %v2523
        %v2556 = vpack.c.b16 %v2524, %v2524
        %v2557 = vpack.c.b16 %v2525, %v2525
        %v2558 = vpack.c.b16 %v2526, %v2526
        %2559 = vrot.lane.b32.xlu0 %v2527, 24
        %v2560 = vpop.permute.xlu0 %2559
        %2561 = vrot.lane.b32.xlu0 %v2528, 24
        %v2562 = vpop.permute.xlu0 %2561
        %2563 = vrot.lane.b32.xlu0 %v2529, 24
        %v2564 = vpop.permute.xlu0 %2563
        %2565 = vrot.lane.b32.xlu0 %v2530, 24
        %v2566 = vpop.permute.xlu0 %2565
        %2567 = vrot.lane.b32.xlu0 %v2531, 24
        %v2568 = vpop.permute.xlu0 %2567
        %2569 = vrot.lane.b32.xlu0 %v2532, 24
        %v2570 = vpop.permute.xlu0 %2569
        %2571 = vrot.lane.b32.xlu0 %v2533, 24
        %v2572 = vpop.permute.xlu0 %2571
        %2573 = vrot.lane.b32.xlu0 %v2534, 24
        %v2574 = vpop.permute.xlu0 %2573
        %2575 = vrot.lane.b32.xlu0 %v2535, 24
        %v2576 = vpop.permute.xlu0 %2575
        %2577 = vrot.lane.b32.xlu0 %v2536, 24
        %v2578 = vpop.permute.xlu0 %2577
        %2579 = vrot.lane.b32.xlu0 %v2537, 24
        %v2580 = vpop.permute.xlu0 %2579
        %2581 = vrot.lane.b32.xlu0 %v2538, 24
        %v2582 = vpop.permute.xlu0 %2581
        %2583 = vrot.lane.b32.xlu0 %v2539, 24
        %v2584 = vpop.permute.xlu0 %2583
        %2585 = vrot.lane.b32.xlu0 %v2540, 24
        %v2586 = vpop.permute.xlu0 %2585
        %2587 = vrot.lane.b32.xlu0 %v2541, 24
        %v2588 = vpop.permute.xlu0 %2587
        %2589 = vrot.lane.b32.xlu0 %v2542, 24
        %v2590 = vpop.permute.xlu0 %2589
        %2591 = vrot.lane.b32.xlu0 %v2543, 24
        %v2592 = vpop.permute.xlu0 %2591
        %2593 = vrot.lane.b32.xlu0 %v2544, 24
        %v2594 = vpop.permute.xlu0 %2593
        %2595 = vrot.lane.b32.xlu0 %v2545, 24
        %v2596 = vpop.permute.xlu0 %2595
        %2597 = vrot.lane.b32.xlu0 %v2546, 24
        %v2598 = vpop.permute.xlu0 %2597
        %2599 = vrot.lane.b32.xlu0 %v2547, 24
        %v2600 = vpop.permute.xlu0 %2599
        %2601 = vrot.lane.b32.xlu0 %v2548, 24
        %v2602 = vpop.permute.xlu0 %2601
        %2603 = vrot.lane.b32.xlu0 %v2549, 24
        %v2604 = vpop.permute.xlu0 %2603
        %2605 = vrot.lane.b32.xlu0 %v2550, 24
        %v2606 = vpop.permute.xlu0 %2605
        %2607 = vrot.lane.b32.xlu0 %v2551, 24
        %v2608 = vpop.permute.xlu0 %2607
        %2609 = vrot.lane.b32.xlu0 %v2552, 24
        %v2610 = vpop.permute.xlu0 %2609
        %2611 = vrot.lane.b32.xlu0 %v2553, 24
        %v2612 = vpop.permute.xlu0 %2611
        %2613 = vrot.lane.b32.xlu0 %v2554, 24
        %v2614 = vpop.permute.xlu0 %2613
        %2615 = vrot.lane.b32.xlu0 %v2555, 24
        %v2616 = vpop.permute.xlu0 %2615
        %2617 = vrot.lane.b32.xlu0 %v2556, 24
        %v2618 = vpop.permute.xlu0 %2617
        %2619 = vrot.lane.b32.xlu0 %v2557, 24
        %v2620 = vpop.permute.xlu0 %2619
        %2621 = vrot.lane.b32.xlu0 %v2558, 24
        %v2622 = vpop.permute.xlu0 %2621
        %vm2655 = vcmask 216256
        %2656 = vst.msk [vmem:[#allocation3] sm:$0xf] %vm2655, %v2560
        %2657 = vst.msk [vmem:[#allocation3 + $0x4] sm:$0xf] %vm2655, %v2562
        %2658 = vst.msk [vmem:[#allocation3 + $0x8] sm:$0xf] %vm2655, %v2564
        %2659 = vst.msk [vmem:[#allocation3 + $0xc] sm:$0xf] %vm2655, %v2566
        %2660 = vst.msk [vmem:[#allocation3 + $0x10] sm:$0xf] %vm2655, %v2568
        %2661 = vst.msk [vmem:[#allocation3 + $0x14] sm:$0xf] %vm2655, %v2570
        %2662 = vst.msk [vmem:[#allocation3 + $0x18] sm:$0xf] %vm2655, %v2572
        %2663 = vst.msk [vmem:[#allocation3 + $0x1c] sm:$0xf] %vm2655, %v2574
        %2664 = vst.msk [vmem:[#allocation3 + $0x20] sm:$0xf] %vm2655, %v2576
        %2665 = vst.msk [vmem:[#allocation3 + $0x24] sm:$0xf] %vm2655, %v2578
        %2666 = vst.msk [vmem:[#allocation3 + $0x28] sm:$0xf] %vm2655, %v2580
        %2667 = vst.msk [vmem:[#allocation3 + $0x2c] sm:$0xf] %vm2655, %v2582
        %2668 = vst.msk [vmem:[#allocation3 + $0x30] sm:$0xf] %vm2655, %v2584
        %2669 = vst.msk [vmem:[#allocation3 + $0x34] sm:$0xf] %vm2655, %v2586
        %2670 = vst.msk [vmem:[#allocation3 + $0x38] sm:$0xf] %vm2655, %v2588
        %2671 = vst.msk [vmem:[#allocation3 + $0x3c] sm:$0xf] %vm2655, %v2590
        %2672 = vst.msk [vmem:[#allocation3 + $0x40] sm:$0xf] %vm2655, %v2592
        %2673 = vst.msk [vmem:[#allocation3 + $0x44] sm:$0xf] %vm2655, %v2594
        %2674 = vst.msk [vmem:[#allocation3 + $0x48] sm:$0xf] %vm2655, %v2596
        %2675 = vst.msk [vmem:[#allocation3 + $0x4c] sm:$0xf] %vm2655, %v2598
        %2676 = vst.msk [vmem:[#allocation3 + $0x50] sm:$0xf] %vm2655, %v2600
        %2677 = vst.msk [vmem:[#allocation3 + $0x54] sm:$0xf] %vm2655, %v2602
        %2678 = vst.msk [vmem:[#allocation3 + $0x58] sm:$0xf] %vm2655, %v2604
        %2679 = vst.msk [vmem:[#allocation3 + $0x5c] sm:$0xf] %vm2655, %v2606
        %2680 = vst.msk [vmem:[#allocation3 + $0x60] sm:$0xf] %vm2655, %v2608
        %2681 = vst.msk [vmem:[#allocation3 + $0x64] sm:$0xf] %vm2655, %v2610
        %2682 = vst.msk [vmem:[#allocation3 + $0x68] sm:$0xf] %vm2655, %v2612
        %2683 = vst.msk [vmem:[#allocation3 + $0x6c] sm:$0xf] %vm2655, %v2614
        %2684 = vst.msk [vmem:[#allocation3 + $0x70] sm:$0xf] %vm2655, %v2616
        %2685 = vst.msk [vmem:[#allocation3 + $0x74] sm:$0xf] %vm2655, %v2618
        %2686 = vst.msk [vmem:[#allocation3 + $0x78] sm:$0xf] %vm2655, %v2620
        %2687 = vst.msk [vmem:[#allocation3 + $0x7c] sm:$0xf] %vm2655, %v2622
        %vm2688 = vcmask 1043672
        %2689 = vst.msk [vmem:[#allocation3] sm:$0xf] %vm2688, 0
        %2690 = vst.msk [vmem:[#allocation3 + $0x4] sm:$0xf] %vm2688, 0
        %2691 = vst.msk [vmem:[#allocation3 + $0x8] sm:$0xf] %vm2688, 0
        %2692 = vst.msk [vmem:[#allocation3 + $0xc] sm:$0xf] %vm2688, 0
        %2693 = vst.msk [vmem:[#allocation3 + $0x10] sm:$0xf] %vm2688, 0
        %2694 = vst.msk [vmem:[#allocation3 + $0x14] sm:$0xf] %vm2688, 0
        %2695 = vst.msk [vmem:[#allocation3 + $0x18] sm:$0xf] %vm2688, 0
        %2696 = vst.msk [vmem:[#allocation3 + $0x1c] sm:$0xf] %vm2688, 0
        %2697 = vst.msk [vmem:[#allocation3 + $0x20] sm:$0xf] %vm2688, 0
        %2698 = vst.msk [vmem:[#allocation3 + $0x24] sm:$0xf] %vm2688, 0
        %2699 = vst.msk [vmem:[#allocation3 + $0x28] sm:$0xf] %vm2688, 0
        %2700 = vst.msk [vmem:[#allocation3 + $0x2c] sm:$0xf] %vm2688, 0
        %2701 = vst.msk [vmem:[#allocation3 + $0x30] sm:$0xf] %vm2688, 0
        %2702 = vst.msk [vmem:[#allocation3 + $0x34] sm:$0xf] %vm2688, 0
        %2703 = vst.msk [vmem:[#allocation3 + $0x38] sm:$0xf] %vm2688, 0
        %2704 = vst.msk [vmem:[#allocation3 + $0x3c] sm:$0xf] %vm2688, 0
        %2705 = vst.msk [vmem:[#allocation3 + $0x40] sm:$0xf] %vm2688, 0
        %2706 = vst.msk [vmem:[#allocation3 + $0x44] sm:$0xf] %vm2688, 0
        %2707 = vst.msk [vmem:[#allocation3 + $0x48] sm:$0xf] %vm2688, 0
        %2708 = vst.msk [vmem:[#allocation3 + $0x4c] sm:$0xf] %vm2688, 0
        %2709 = vst.msk [vmem:[#allocation3 + $0x50] sm:$0xf] %vm2688, 0
        %2710 = vst.msk [vmem:[#allocation3 + $0x54] sm:$0xf] %vm2688, 0
        %2711 = vst.msk [vmem:[#allocation3 + $0x58] sm:$0xf] %vm2688, 0
        %2712 = vst.msk [vmem:[#allocation3 + $0x5c] sm:$0xf] %vm2688, 0
        %2713 = vst.msk [vmem:[#allocation3 + $0x60] sm:$0xf] %vm2688, 0
        %2714 = vst.msk [vmem:[#allocation3 + $0x64] sm:$0xf] %vm2688, 0
        %2715 = vst.msk [vmem:[#allocation3 + $0x68] sm:$0xf] %vm2688, 0
        %2716 = vst.msk [vmem:[#allocation3 + $0x6c] sm:$0xf] %vm2688, 0
        %2717 = vst.msk [vmem:[#allocation3 + $0x70] sm:$0xf] %vm2688, 0
        %2718 = vst.msk [vmem:[#allocation3 + $0x74] sm:$0xf] %vm2688, 0
        %2719 = vst.msk [vmem:[#allocation3 + $0x78] sm:$0xf] %vm2688, 0
        %2720 = vst.msk [vmem:[#allocation3 + $0x7c] sm:$0xf] %vm2688, 0
        %v2721 = vld [vmem:[#allocation3] sm:$0xf]
        %v2722 = vld [vmem:[#allocation3 + $0x4] sm:$0xf]
        %v2723 = vld [vmem:[#allocation3 + $0x8] sm:$0xf]
        %v2724 = vld [vmem:[#allocation3 + $0xc] sm:$0xf]
        %v2725 = vld [vmem:[#allocation3 + $0x10] sm:$0xf]
        %v2726 = vld [vmem:[#allocation3 + $0x14] sm:$0xf]
        %v2727 = vld [vmem:[#allocation3 + $0x18] sm:$0xf]
        %v2728 = vld [vmem:[#allocation3 + $0x1c] sm:$0xf]
        %v2729 = vld [vmem:[#allocation3 + $0x20] sm:$0xf]
        %v2730 = vld [vmem:[#allocation3 + $0x24] sm:$0xf]
        %v2731 = vld [vmem:[#allocation3 + $0x28] sm:$0xf]
        %v2732 = vld [vmem:[#allocation3 + $0x2c] sm:$0xf]
        %v2733 = vld [vmem:[#allocation3 + $0x30] sm:$0xf]
        %v2734 = vld [vmem:[#allocation3 + $0x34] sm:$0xf]
        %v2735 = vld [vmem:[#allocation3 + $0x38] sm:$0xf]
        %v2736 = vld [vmem:[#allocation3 + $0x3c] sm:$0xf]
        %v2737 = vld [vmem:[#allocation3 + $0x40] sm:$0xf]
        %v2738 = vld [vmem:[#allocation3 + $0x44] sm:$0xf]
        %v2739 = vld [vmem:[#allocation3 + $0x48] sm:$0xf]
        %v2740 = vld [vmem:[#allocation3 + $0x4c] sm:$0xf]
        %v2741 = vld [vmem:[#allocation3 + $0x50] sm:$0xf]
        %v2742 = vld [vmem:[#allocation3 + $0x54] sm:$0xf]
        %v2743 = vld [vmem:[#allocation3 + $0x58] sm:$0xf]
        %v2744 = vld [vmem:[#allocation3 + $0x5c] sm:$0xf]
        %v2745 = vld [vmem:[#allocation3 + $0x60] sm:$0xf]
        %v2746 = vld [vmem:[#allocation3 + $0x64] sm:$0xf]
        %v2747 = vld [vmem:[#allocation3 + $0x68] sm:$0xf]
        %v2748 = vld [vmem:[#allocation3 + $0x6c] sm:$0xf]
        %v2749 = vld [vmem:[#allocation3 + $0x70] sm:$0xf]
        %v2750 = vld [vmem:[#allocation3 + $0x74] sm:$0xf]
        %v2751 = vld [vmem:[#allocation3 + $0x78] sm:$0xf]
        %v2752 = vld [vmem:[#allocation3 + $0x7c] sm:$0xf]
        %v2753 = vld [vmem:[%s1] sm:$0xf]
        %v2754 = vld [vmem:[%s1 + $0x4] sm:$0xf]
        %v2755 = vld [vmem:[%s1 + $0x8] sm:$0xf]
        %v2756 = vld [vmem:[%s1 + $0xc] sm:$0xf]
        %v2757 = vld [vmem:[%s1 + $0x10] sm:$0xf]
        %v2758 = vld [vmem:[%s1 + $0x14] sm:$0xf]
        %v2759 = vld [vmem:[%s1 + $0x18] sm:$0xf]
        %v2760 = vld [vmem:[%s1 + $0x1c] sm:$0xf]
        %v2761 = vld [vmem:[%s1 + $0x20] sm:$0xf]
        %v2762 = vld [vmem:[%s1 + $0x24] sm:$0xf]
        %v2763 = vld [vmem:[%s1 + $0x28] sm:$0xf]
        %v2764 = vld [vmem:[%s1 + $0x2c] sm:$0xf]
        %v2765 = vld [vmem:[%s1 + $0x30] sm:$0xf]
        %v2766 = vld [vmem:[%s1 + $0x34] sm:$0xf]
        %v2767 = vld [vmem:[%s1 + $0x38] sm:$0xf]
        %v2768 = vld [vmem:[%s1 + $0x3c] sm:$0xf]
        %v2769 = vld [vmem:[%s2] sm:$0x1]
        %v2771 = vlaneseq
        %v2772 = vshrl.u32 %v2771, 7
        %v2773 = vsub.s32 0, %v2772
        %v2774 = vrot.slane %v2769, %v2773
        %v2808 = vunpack.c.l.b16 %v2721
        %v2809 = vunpack.c.l.b16 %v2722
        %v2810 = vunpack.c.l.b16 %v2723
        %v2811 = vunpack.c.l.b16 %v2724
        %v2812 = vunpack.c.l.b16 %v2725
        %v2813 = vunpack.c.l.b16 %v2726
        %v2814 = vunpack.c.l.b16 %v2727
        %v2815 = vunpack.c.l.b16 %v2728
        %v2816 = vunpack.c.l.b16 %v2729
        %v2817 = vunpack.c.l.b16 %v2730
        %v2818 = vunpack.c.l.b16 %v2731
        %v2819 = vunpack.c.l.b16 %v2732
        %v2820 = vunpack.c.l.b16 %v2733
        %v2821 = vunpack.c.l.b16 %v2734
        %v2822 = vunpack.c.l.b16 %v2735
        %v2823 = vunpack.c.l.b16 %v2736
        %v2824 = vunpack.c.l.b16 %v2737
        %v2825 = vunpack.c.l.b16 %v2738
        %v2826 = vunpack.c.l.b16 %v2739
        %v2827 = vunpack.c.l.b16 %v2740
        %v2828 = vunpack.c.l.b16 %v2741
        %v2829 = vunpack.c.l.b16 %v2742
        %v2830 = vunpack.c.l.b16 %v2743
        %v2831 = vunpack.c.l.b16 %v2744
        %v2832 = vunpack.c.l.b16 %v2745
        %v2833 = vunpack.c.l.b16 %v2746
        %v2834 = vunpack.c.l.b16 %v2747
        %v2835 = vunpack.c.l.b16 %v2748
        %v2836 = vunpack.c.l.b16 %v2749
        %v2837 = vunpack.c.l.b16 %v2750
        %v2838 = vunpack.c.l.b16 %v2751
        %v2839 = vunpack.c.l.b16 %v2752
        %v2840 = vpack.c.b16 %v2809, %v2808
        %v2841 = vpack.c.b16 %v2811, %v2810
        %v2842 = vpack.c.b16 %v2813, %v2812
        %v2843 = vpack.c.b16 %v2815, %v2814
        %v2844 = vpack.c.b16 %v2817, %v2816
        %v2845 = vpack.c.b16 %v2819, %v2818
        %v2846 = vpack.c.b16 %v2821, %v2820
        %v2847 = vpack.c.b16 %v2823, %v2822
        %v2848 = vpack.c.b16 %v2825, %v2824
        %v2849 = vpack.c.b16 %v2827, %v2826
        %v2850 = vpack.c.b16 %v2829, %v2828
        %v2851 = vpack.c.b16 %v2831, %v2830
        %v2852 = vpack.c.b16 %v2833, %v2832
        %v2853 = vpack.c.b16 %v2835, %v2834
        %v2854 = vpack.c.b16 %v2837, %v2836
        %v2855 = vpack.c.b16 %v2839, %v2838
        %v2888 = vunpack.c.l.b16 %v2753
        %v2889 = vunpack.c.l.b16 %v2754
        %v2890 = vunpack.c.l.b16 %v2755
        %v2891 = vunpack.c.l.b16 %v2756
        %v2892 = vunpack.c.l.b16 %v2757
        %v2893 = vunpack.c.l.b16 %v2758
        %v2894 = vunpack.c.l.b16 %v2759
        %v2895 = vunpack.c.l.b16 %v2760
        %v2896 = vunpack.c.l.b16 %v2761
        %v2897 = vunpack.c.l.b16 %v2762
        %v2898 = vunpack.c.l.b16 %v2763
        %v2899 = vunpack.c.l.b16 %v2764
        %v2900 = vunpack.c.l.b16 %v2765
        %v2901 = vunpack.c.l.b16 %v2766
        %v2902 = vunpack.c.l.b16 %v2767
        %v2903 = vunpack.c.l.b16 %v2768
        %v2904 = vpack.c.b16 %v2889, %v2888
        %v2905 = vpack.c.b16 %v2891, %v2890
        %v2906 = vpack.c.b16 %v2893, %v2892
        %v2907 = vpack.c.b16 %v2895, %v2894
        %v2908 = vpack.c.b16 %v2897, %v2896
        %v2909 = vpack.c.b16 %v2899, %v2898
        %v2910 = vpack.c.b16 %v2901, %v2900
        %v2911 = vpack.c.b16 %v2903, %v2902
        %2920 = vmatprep.subr.bf16.mxu0 0
        %2921 = vmatpush1.bf16.msra.mxu0 %v2911
        %2922 = vmatprep.subr.bf16.mxu0 0
        %2923 = vmatpush1.bf16.msra.mxu0 %v2910
        %2924 = vmatprep.subr.bf16.mxu0 0
        %2925 = vmatpush1.bf16.msra.mxu0 %v2909
        %2926 = vmatprep.subr.bf16.mxu0 0
        %2927 = vmatpush1.bf16.msra.mxu0 %v2908
        %2928 = vmatprep.subr.bf16.mxu0 0
        %2929 = vmatpush1.bf16.msra.mxu0 %v2907
        %2930 = vmatprep.subr.bf16.mxu0 0
        %2931 = vmatpush1.bf16.msra.mxu0 %v2906
        %2932 = vmatprep.subr.bf16.mxu0 0
        %2933 = vmatpush1.bf16.msra.mxu0 %v2905
        %2934 = vmatprep.subr.bf16.mxu0 0
        %2935 = vmatpush1.bf16.msra.mxu0 %v2904
        %2936 = vmatprep.subr.bf16.mxu0 0
        %2937 = vmatpush2.bf16.msra.mxu0 0
        %2938 = vmatprep.subr.bf16.mxu0 0
        %2939 = vmatpush2.bf16.msra.mxu0 0
        %2940 = vmatprep.subr.bf16.mxu0 0
        %2941 = vmatpush2.bf16.msra.mxu0 0
        %2942 = vmatprep.subr.bf16.mxu0 0
        %2943 = vmatpush2.bf16.msra.mxu0 0
        %2944 = vmatprep.subr.bf16.mxu0 0
        %2945 = vmatpush2.bf16.msra.mxu0 0
        %2946 = vmatprep.subr.bf16.mxu0 0
        %2947 = vmatpush2.bf16.msra.mxu0 0
        %2948 = vmatprep.subr.bf16.mxu0 0
        %2949 = vmatpush2.bf16.msra.mxu0 0
        %2950 = vmatprep.subr.bf16.mxu0 0
        %2951 = vmatpush2.bf16.msra.mxu0 0
        %2952 = vmatprep.mubr.bf16.mxu0 0
        %2953 = vmatmul.mubr.bf16.gmra.mxu0 %v2840
        %v2954 = vpop.f32.mrf.mxu0
        %v2955 = vadd.f32 %v2774, %v2954
        %v2956 = vpop.f32.mrf.mxu0
        %v2957 = vpop.f32.mrf.mxu0
        %v2958 = vadd.f32 %v2774, %v2957
        %v2959 = vpop.f32.mrf.mxu0
        %2960 = vmatprep.mubr.bf16.mxu0 0
        %2961 = vmatmul.mubr.bf16.gmra.mxu0 %v2841
        %v2962 = vpop.f32.mrf.mxu0
        %v2963 = vadd.f32 %v2774, %v2962
        %v2964 = vpop.f32.mrf.mxu0
        %v2965 = vpop.f32.mrf.mxu0
        %v2966 = vadd.f32 %v2774, %v2965
        %v2967 = vpop.f32.mrf.mxu0
        %2968 = vmatprep.mubr.bf16.mxu0 0
        %2969 = vmatmul.mubr.bf16.gmra.mxu0 %v2842
        %v2970 = vpop.f32.mrf.mxu0
        %v2971 = vadd.f32 %v2774, %v2970
        %v2972 = vpop.f32.mrf.mxu0
        %v2973 = vpop.f32.mrf.mxu0
        %v2974 = vadd.f32 %v2774, %v2973
        %v2975 = vpop.f32.mrf.mxu0
        %2976 = vmatprep.mubr.bf16.mxu0 0
        %2977 = vmatmul.mubr.bf16.gmra.mxu0 %v2843
        %v2978 = vpop.f32.mrf.mxu0
        %v2979 = vadd.f32 %v2774, %v2978
        %v2980 = vpop.f32.mrf.mxu0
        %v2981 = vpop.f32.mrf.mxu0
        %v2982 = vadd.f32 %v2774, %v2981
        %v2983 = vpop.f32.mrf.mxu0
        %2984 = vmatprep.mubr.bf16.mxu0 0
        %2985 = vmatmul.mubr.bf16.gmra.mxu0 %v2844
        %v2986 = vpop.f32.mrf.mxu0
        %v2987 = vadd.f32 %v2774, %v2986
        %v2988 = vpop.f32.mrf.mxu0
        %v2989 = vpop.f32.mrf.mxu0
        %v2990 = vadd.f32 %v2774, %v2989
        %v2991 = vpop.f32.mrf.mxu0
        %2992 = vmatprep.mubr.bf16.mxu0 0
        %2993 = vmatmul.mubr.bf16.gmra.mxu0 %v2845
        %v2994 = vpop.f32.mrf.mxu0
        %v2995 = vadd.f32 %v2774, %v2994
        %v2996 = vpop.f32.mrf.mxu0
        %v2997 = vpop.f32.mrf.mxu0
        %v2998 = vadd.f32 %v2774, %v2997
        %v2999 = vpop.f32.mrf.mxu0
        %3000 = vmatprep.mubr.bf16.mxu0 0
        %3001 = vmatmul.mubr.bf16.gmra.mxu0 %v2846
        %v3002 = vpop.f32.mrf.mxu0
        %v3003 = vadd.f32 %v2774, %v3002
        %v3004 = vpop.f32.mrf.mxu0
        %v3005 = vpop.f32.mrf.mxu0
        %v3006 = vadd.f32 %v2774, %v3005
        %v3007 = vpop.f32.mrf.mxu0
        %3008 = vmatprep.mubr.bf16.mxu0 0
        %3009 = vmatmul.mubr.bf16.gmra.mxu0 %v2847
        %v3010 = vpop.f32.mrf.mxu0
        %v3011 = vadd.f32 %v2774, %v3010
        %v3012 = vpop.f32.mrf.mxu0
        %v3013 = vpop.f32.mrf.mxu0
        %v3014 = vadd.f32 %v2774, %v3013
        %v3015 = vpop.f32.mrf.mxu0
        %3016 = vmatprep.mubr.bf16.mxu0 0
        %3017 = vmatmul.mubr.bf16.gmra.mxu0 %v2848
        %v3018 = vpop.f32.mrf.mxu0
        %v3019 = vadd.f32 %v2774, %v3018
        %v3020 = vpop.f32.mrf.mxu0
        %v3021 = vpop.f32.mrf.mxu0
        %v3022 = vadd.f32 %v2774, %v3021
        %v3023 = vpop.f32.mrf.mxu0
        %3024 = vmatprep.mubr.bf16.mxu0 0
        %3025 = vmatmul.mubr.bf16.gmra.mxu0 %v2849
        %v3026 = vpop.f32.mrf.mxu0
        %v3027 = vadd.f32 %v2774, %v3026
        %v3028 = vpop.f32.mrf.mxu0
        %v3029 = vpop.f32.mrf.mxu0
        %v3030 = vadd.f32 %v2774, %v3029
        %v3031 = vpop.f32.mrf.mxu0
        %3032 = vmatprep.mubr.bf16.mxu0 0
        %3033 = vmatmul.mubr.bf16.gmra.mxu0 %v2850
        %v3034 = vpop.f32.mrf.mxu0
        %v3035 = vadd.f32 %v2774, %v3034
        %v3036 = vpop.f32.mrf.mxu0
        %v3037 = vpop.f32.mrf.mxu0
        %v3038 = vadd.f32 %v2774, %v3037
        %v3039 = vpop.f32.mrf.mxu0
        %3040 = vmatprep.mubr.bf16.mxu0 0
        %3041 = vmatmul.mubr.bf16.gmra.mxu0 %v2851
        %v3042 = vpop.f32.mrf.mxu0
        %v3043 = vadd.f32 %v2774, %v3042
        %v3044 = vpop.f32.mrf.mxu0
        %v3045 = vpop.f32.mrf.mxu0
        %v3046 = vadd.f32 %v2774, %v3045
        %v3047 = vpop.f32.mrf.mxu0
        %3048 = vmatprep.mubr.bf16.mxu0 0
        %3049 = vmatmul.mubr.bf16.gmra.mxu0 %v2852
        %v3050 = vpop.f32.mrf.mxu0
        %v3051 = vadd.f32 %v2774, %v3050
        %v3052 = vpop.f32.mrf.mxu0
        %v3053 = vpop.f32.mrf.mxu0
        %v3054 = vadd.f32 %v2774, %v3053
        %v3055 = vpop.f32.mrf.mxu0
        %3056 = vmatprep.mubr.bf16.mxu0 0
        %3057 = vmatmul.mubr.bf16.gmra.mxu0 %v2853
        %v3058 = vpop.f32.mrf.mxu0
        %v3059 = vadd.f32 %v2774, %v3058
        %v3060 = vpop.f32.mrf.mxu0
        %v3061 = vpop.f32.mrf.mxu0
        %v3062 = vadd.f32 %v2774, %v3061
        %v3063 = vpop.f32.mrf.mxu0
        %3064 = vmatprep.mubr.bf16.mxu0 0
        %3065 = vmatmul.mubr.bf16.gmra.mxu0 %v2854
        %v3066 = vpop.f32.mrf.mxu0
        %v3067 = vadd.f32 %v2774, %v3066
        %v3068 = vpop.f32.mrf.mxu0
        %v3069 = vpop.f32.mrf.mxu0
        %v3070 = vadd.f32 %v2774, %v3069
        %v3071 = vpop.f32.mrf.mxu0
        %3072 = vmatprep.mubr.bf16.mxu0 0
        %3073 = vmatmul.mubr.bf16.gmra.mxu0 %v2855
        %v3074 = vpop.f32.mrf.mxu0
        %v3075 = vadd.f32 %v2774, %v3074
        %v3076 = vpop.f32.mrf.mxu0
        %v3077 = vpop.f32.mrf.mxu0
        %v3078 = vadd.f32 %v2774, %v3077
        %v3079 = vpop.f32.mrf.mxu0
        %3080 = vdwg.mxu0
        %v3081 = vmax.f32 %v2955, 0.0
        %v3082 = vmax.f32 %v2958, 0.0
        %v3083 = vmax.f32 %v2963, 0.0
        %v3084 = vmax.f32 %v2966, 0.0
        %v3085 = vmax.f32 %v2971, 0.0
        %v3086 = vmax.f32 %v2974, 0.0
        %v3087 = vmax.f32 %v2979, 0.0
        %v3088 = vmax.f32 %v2982, 0.0
        %v3089 = vmax.f32 %v2987, 0.0
        %v3090 = vmax.f32 %v2990, 0.0
        %v3091 = vmax.f32 %v2995, 0.0
        %v3092 = vmax.f32 %v2998, 0.0
        %v3093 = vmax.f32 %v3003, 0.0
        %v3094 = vmax.f32 %v3006, 0.0
        %v3095 = vmax.f32 %v3011, 0.0
        %v3096 = vmax.f32 %v3014, 0.0
        %v3097 = vmax.f32 %v3019, 0.0
        %v3098 = vmax.f32 %v3022, 0.0
        %v3099 = vmax.f32 %v3027, 0.0
        %v3100 = vmax.f32 %v3030, 0.0
        %v3101 = vmax.f32 %v3035, 0.0
        %v3102 = vmax.f32 %v3038, 0.0
        %v3103 = vmax.f32 %v3043, 0.0
        %v3104 = vmax.f32 %v3046, 0.0
        %v3105 = vmax.f32 %v3051, 0.0
        %v3106 = vmax.f32 %v3054, 0.0
        %v3107 = vmax.f32 %v3059, 0.0
        %v3108 = vmax.f32 %v3062, 0.0
        %v3109 = vmax.f32 %v3067, 0.0
        %v3110 = vmax.f32 %v3070, 0.0
        %v3111 = vmax.f32 %v3075, 0.0
        %v3112 = vmax.f32 %v3078, 0.0
        %v3145 = vcombine.high %v3081, %v3081
        %v3147 = vunpack.c.l.s4 1983009808
        %v3148 = vunpack.c.0.s8 %v3147
        %v3149 = vlaneseq
        %v3150 = vshrl.u32 %v3149, 7
        %v3151 = vsub.s32 %v3148, %v3150
        %v3152 = vrot.slane %v3081, %v3151
        %v3154 = vunpack.c.l.s4 1983009808
        %v3155 = vunpack.c.0.s8 %v3154
        %v3156 = vlaneseq
        %v3157 = vshrl.u32 %v3156, 7
        %v3158 = vsub.s32 %v3155, %v3157
        %v3159 = vrot.slane %v3145, %v3158
        %v3160 = vcombine.high %v3152, %v3152
        %v3161 = vcombine.high %v3159, %v3159
        %v3162 = vcombine.high %v3082, %v3082
        %v3164 = vunpack.c.l.s4 1983009808
        %v3165 = vunpack.c.0.s8 %v3164
        %v3166 = vlaneseq
        %v3167 = vshrl.u32 %v3166, 7
        %v3168 = vsub.s32 %v3165, %v3167
        %v3169 = vrot.slane %v3082, %v3168
        %v3171 = vunpack.c.l.s4 1983009808
        %v3172 = vunpack.c.0.s8 %v3171
        %v3173 = vlaneseq
        %v3174 = vshrl.u32 %v3173, 7
        %v3175 = vsub.s32 %v3172, %v3174
        %v3176 = vrot.slane %v3162, %v3175
        %v3177 = vcombine.high %v3169, %v3169
        %v3178 = vcombine.high %v3176, %v3176
        %v3179 = vcombine.high %v3083, %v3083
        %v3181 = vunpack.c.l.s4 1983009808
        %v3182 = vunpack.c.0.s8 %v3181
        %v3183 = vlaneseq
        %v3184 = vshrl.u32 %v3183, 7
        %v3185 = vsub.s32 %v3182, %v3184
        %v3186 = vrot.slane %v3083, %v3185
        %v3188 = vunpack.c.l.s4 1983009808
        %v3189 = vunpack.c.0.s8 %v3188
        %v3190 = vlaneseq
        %v3191 = vshrl.u32 %v3190, 7
        %v3192 = vsub.s32 %v3189, %v3191
        %v3193 = vrot.slane %v3179, %v3192
        %v3194 = vcombine.high %v3186, %v3186
        %v3195 = vcombine.high %v3193, %v3193
        %v3196 = vcombine.high %v3084, %v3084
        %v3198 = vunpack.c.l.s4 1983009808
        %v3199 = vunpack.c.0.s8 %v3198
        %v3200 = vlaneseq
        %v3201 = vshrl.u32 %v3200, 7
        %v3202 = vsub.s32 %v3199, %v3201
        %v3203 = vrot.slane %v3084, %v3202
        %v3205 = vunpack.c.l.s4 1983009808
        %v3206 = vunpack.c.0.s8 %v3205
        %v3207 = vlaneseq
        %v3208 = vshrl.u32 %v3207, 7
        %v3209 = vsub.s32 %v3206, %v3208
        %v3210 = vrot.slane %v3196, %v3209
        %v3211 = vcombine.high %v3203, %v3203
        %v3212 = vcombine.high %v3210, %v3210
        %v3213 = vcombine.high %v3085, %v3085
        %v3215 = vunpack.c.l.s4 1983009808
        %v3216 = vunpack.c.0.s8 %v3215
        %v3217 = vlaneseq
        %v3218 = vshrl.u32 %v3217, 7
        %v3219 = vsub.s32 %v3216, %v3218
        %v3220 = vrot.slane %v3085, %v3219
        %v3222 = vunpack.c.l.s4 1983009808
        %v3223 = vunpack.c.0.s8 %v3222
        %v3224 = vlaneseq
        %v3225 = vshrl.u32 %v3224, 7
        %v3226 = vsub.s32 %v3223, %v3225
        %v3227 = vrot.slane %v3213, %v3226
        %v3228 = vcombine.high %v3220, %v3220
        %v3229 = vcombine.high %v3227, %v3227
        %v3230 = vcombine.high %v3086, %v3086
        %v3232 = vunpack.c.l.s4 1983009808
        %v3233 = vunpack.c.0.s8 %v3232
        %v3234 = vlaneseq
        %v3235 = vshrl.u32 %v3234, 7
        %v3236 = vsub.s32 %v3233, %v3235
        %v3237 = vrot.slane %v3086, %v3236
        %v3239 = vunpack.c.l.s4 1983009808
        %v3240 = vunpack.c.0.s8 %v3239
        %v3241 = vlaneseq
        %v3242 = vshrl.u32 %v3241, 7
        %v3243 = vsub.s32 %v3240, %v3242
        %v3244 = vrot.slane %v3230, %v3243
        %v3245 = vcombine.high %v3237, %v3237
        %v3246 = vcombine.high %v3244, %v3244
        %v3247 = vcombine.high %v3087, %v3087
        %v3249 = vunpack.c.l.s4 1983009808
        %v3250 = vunpack.c.0.s8 %v3249
        %v3251 = vlaneseq
        %v3252 = vshrl.u32 %v3251, 7
        %v3253 = vsub.s32 %v3250, %v3252
        %v3254 = vrot.slane %v3087, %v3253
        %v3256 = vunpack.c.l.s4 1983009808
        %v3257 = vunpack.c.0.s8 %v3256
        %v3258 = vlaneseq
        %v3259 = vshrl.u32 %v3258, 7
        %v3260 = vsub.s32 %v3257, %v3259
        %v3261 = vrot.slane %v3247, %v3260
        %v3262 = vcombine.high %v3254, %v3254
        %v3263 = vcombine.high %v3261, %v3261
        %v3264 = vcombine.high %v3088, %v3088
        %v3266 = vunpack.c.l.s4 1983009808
        %v3267 = vunpack.c.0.s8 %v3266
        %v3268 = vlaneseq
        %v3269 = vshrl.u32 %v3268, 7
        %v3270 = vsub.s32 %v3267, %v3269
        %v3271 = vrot.slane %v3088, %v3270
        %v3273 = vunpack.c.l.s4 1983009808
        %v3274 = vunpack.c.0.s8 %v3273
        %v3275 = vlaneseq
        %v3276 = vshrl.u32 %v3275, 7
        %v3277 = vsub.s32 %v3274, %v3276
        %v3278 = vrot.slane %v3264, %v3277
        %v3279 = vcombine.high %v3271, %v3271
        %v3280 = vcombine.high %v3278, %v3278
        %v3281 = vcombine.high %v3089, %v3089
        %v3283 = vunpack.c.l.s4 1983009808
        %v3284 = vunpack.c.0.s8 %v3283
        %v3285 = vlaneseq
        %v3286 = vshrl.u32 %v3285, 7
        %v3287 = vsub.s32 %v3284, %v3286
        %v3288 = vrot.slane %v3089, %v3287
        %v3290 = vunpack.c.l.s4 1983009808
        %v3291 = vunpack.c.0.s8 %v3290
        %v3292 = vlaneseq
        %v3293 = vshrl.u32 %v3292, 7
        %v3294 = vsub.s32 %v3291, %v3293
        %v3295 = vrot.slane %v3281, %v3294
        %v3296 = vcombine.high %v3288, %v3288
        %v3297 = vcombine.high %v3295, %v3295
        %v3298 = vcombine.high %v3090, %v3090
        %v3300 = vunpack.c.l.s4 1983009808
        %v3301 = vunpack.c.0.s8 %v3300
        %v3302 = vlaneseq
        %v3303 = vshrl.u32 %v3302, 7
        %v3304 = vsub.s32 %v3301, %v3303
        %v3305 = vrot.slane %v3090, %v3304
        %v3307 = vunpack.c.l.s4 1983009808
        %v3308 = vunpack.c.0.s8 %v3307
        %v3309 = vlaneseq
        %v3310 = vshrl.u32 %v3309, 7
        %v3311 = vsub.s32 %v3308, %v3310
        %v3312 = vrot.slane %v3298, %v3311
        %v3313 = vcombine.high %v3305, %v3305
        %v3314 = vcombine.high %v3312, %v3312
        %v3315 = vcombine.high %v3091, %v3091
        %v3317 = vunpack.c.l.s4 1983009808
        %v3318 = vunpack.c.0.s8 %v3317
        %v3319 = vlaneseq
        %v3320 = vshrl.u32 %v3319, 7
        %v3321 = vsub.s32 %v3318, %v3320
        %v3322 = vrot.slane %v3091, %v3321
        %v3324 = vunpack.c.l.s4 1983009808
        %v3325 = vunpack.c.0.s8 %v3324
        %v3326 = vlaneseq
        %v3327 = vshrl.u32 %v3326, 7
        %v3328 = vsub.s32 %v3325, %v3327
        %v3329 = vrot.slane %v3315, %v3328
        %v3330 = vcombine.high %v3322, %v3322
        %v3331 = vcombine.high %v3329, %v3329
        %v3332 = vcombine.high %v3092, %v3092
        %v3334 = vunpack.c.l.s4 1983009808
        %v3335 = vunpack.c.0.s8 %v3334
        %v3336 = vlaneseq
        %v3337 = vshrl.u32 %v3336, 7
        %v3338 = vsub.s32 %v3335, %v3337
        %v3339 = vrot.slane %v3092, %v3338
        %v3341 = vunpack.c.l.s4 1983009808
        %v3342 = vunpack.c.0.s8 %v3341
        %v3343 = vlaneseq
        %v3344 = vshrl.u32 %v3343, 7
        %v3345 = vsub.s32 %v3342, %v3344
        %v3346 = vrot.slane %v3332, %v3345
        %v3347 = vcombine.high %v3339, %v3339
        %v3348 = vcombine.high %v3346, %v3346
        %v3349 = vcombine.high %v3093, %v3093
        %v3351 = vunpack.c.l.s4 1983009808
        %v3352 = vunpack.c.0.s8 %v3351
        %v3353 = vlaneseq
        %v3354 = vshrl.u32 %v3353, 7
        %v3355 = vsub.s32 %v3352, %v3354
        %v3356 = vrot.slane %v3093, %v3355
        %v3358 = vunpack.c.l.s4 1983009808
        %v3359 = vunpack.c.0.s8 %v3358
        %v3360 = vlaneseq
        %v3361 = vshrl.u32 %v3360, 7
        %v3362 = vsub.s32 %v3359, %v3361
        %v3363 = vrot.slane %v3349, %v3362
        %v3364 = vcombine.high %v3356, %v3356
        %v3365 = vcombine.high %v3363, %v3363
        %v3366 = vcombine.high %v3094, %v3094
        %v3368 = vunpack.c.l.s4 1983009808
        %v3369 = vunpack.c.0.s8 %v3368
        %v3370 = vlaneseq
        %v3371 = vshrl.u32 %v3370, 7
        %v3372 = vsub.s32 %v3369, %v3371
        %v3373 = vrot.slane %v3094, %v3372
        %v3375 = vunpack.c.l.s4 1983009808
        %v3376 = vunpack.c.0.s8 %v3375
        %v3377 = vlaneseq
        %v3378 = vshrl.u32 %v3377, 7
        %v3379 = vsub.s32 %v3376, %v3378
        %v3380 = vrot.slane %v3366, %v3379
        %v3381 = vcombine.high %v3373, %v3373
        %v3382 = vcombine.high %v3380, %v3380
        %v3383 = vcombine.high %v3095, %v3095
        %v3385 = vunpack.c.l.s4 1983009808
        %v3386 = vunpack.c.0.s8 %v3385
        %v3387 = vlaneseq
        %v3388 = vshrl.u32 %v3387, 7
        %v3389 = vsub.s32 %v3386, %v3388
        %v3390 = vrot.slane %v3095, %v3389
        %v3392 = vunpack.c.l.s4 1983009808
        %v3393 = vunpack.c.0.s8 %v3392
        %v3394 = vlaneseq
        %v3395 = vshrl.u32 %v3394, 7
        %v3396 = vsub.s32 %v3393, %v3395
        %v3397 = vrot.slane %v3383, %v3396
        %v3398 = vcombine.high %v3390, %v3390
        %v3399 = vcombine.high %v3397, %v3397
        %v3400 = vcombine.high %v3096, %v3096
        %v3402 = vunpack.c.l.s4 1983009808
        %v3403 = vunpack.c.0.s8 %v3402
        %v3404 = vlaneseq
        %v3405 = vshrl.u32 %v3404, 7
        %v3406 = vsub.s32 %v3403, %v3405
        %v3407 = vrot.slane %v3096, %v3406
        %v3409 = vunpack.c.l.s4 1983009808
        %v3410 = vunpack.c.0.s8 %v3409
        %v3411 = vlaneseq
        %v3412 = vshrl.u32 %v3411, 7
        %v3413 = vsub.s32 %v3410, %v3412
        %v3414 = vrot.slane %v3400, %v3413
        %v3415 = vcombine.high %v3407, %v3407
        %v3416 = vcombine.high %v3414, %v3414
        %v3417 = vcombine.high %v3097, %v3097
        %v3419 = vunpack.c.l.s4 1983009808
        %v3420 = vunpack.c.0.s8 %v3419
        %v3421 = vlaneseq
        %v3422 = vshrl.u32 %v3421, 7
        %v3423 = vsub.s32 %v3420, %v3422
        %v3424 = vrot.slane %v3097, %v3423
        %v3426 = vunpack.c.l.s4 1983009808
        %v3427 = vunpack.c.0.s8 %v3426
        %v3428 = vlaneseq
        %v3429 = vshrl.u32 %v3428, 7
        %v3430 = vsub.s32 %v3427, %v3429
        %v3431 = vrot.slane %v3417, %v3430
        %v3432 = vcombine.high %v3424, %v3424
        %v3433 = vcombine.high %v3431, %v3431
        %v3434 = vcombine.high %v3098, %v3098
        %v3436 = vunpack.c.l.s4 1983009808
        %v3437 = vunpack.c.0.s8 %v3436
        %v3438 = vlaneseq
        %v3439 = vshrl.u32 %v3438, 7
        %v3440 = vsub.s32 %v3437, %v3439
        %v3441 = vrot.slane %v3098, %v3440
        %v3443 = vunpack.c.l.s4 1983009808
        %v3444 = vunpack.c.0.s8 %v3443
        %v3445 = vlaneseq
        %v3446 = vshrl.u32 %v3445, 7
        %v3447 = vsub.s32 %v3444, %v3446
        %v3448 = vrot.slane %v3434, %v3447
        %v3449 = vcombine.high %v3441, %v3441
        %v3450 = vcombine.high %v3448, %v3448
        %v3451 = vcombine.high %v3099, %v3099
        %v3453 = vunpack.c.l.s4 1983009808
        %v3454 = vunpack.c.0.s8 %v3453
        %v3455 = vlaneseq
        %v3456 = vshrl.u32 %v3455, 7
        %v3457 = vsub.s32 %v3454, %v3456
        %v3458 = vrot.slane %v3099, %v3457
        %v3460 = vunpack.c.l.s4 1983009808
        %v3461 = vunpack.c.0.s8 %v3460
        %v3462 = vlaneseq
        %v3463 = vshrl.u32 %v3462, 7
        %v3464 = vsub.s32 %v3461, %v3463
        %v3465 = vrot.slane %v3451, %v3464
        %v3466 = vcombine.high %v3458, %v3458
        %v3467 = vcombine.high %v3465, %v3465
        %v3468 = vcombine.high %v3100, %v3100
        %v3470 = vunpack.c.l.s4 1983009808
        %v3471 = vunpack.c.0.s8 %v3470
        %v3472 = vlaneseq
        %v3473 = vshrl.u32 %v3472, 7
        %v3474 = vsub.s32 %v3471, %v3473
        %v3475 = vrot.slane %v3100, %v3474
        %v3477 = vunpack.c.l.s4 1983009808
        %v3478 = vunpack.c.0.s8 %v3477
        %v3479 = vlaneseq
        %v3480 = vshrl.u32 %v3479, 7
        %v3481 = vsub.s32 %v3478, %v3480
        %v3482 = vrot.slane %v3468, %v3481
        %v3483 = vcombine.high %v3475, %v3475
        %v3484 = vcombine.high %v3482, %v3482
        %v3485 = vcombine.high %v3101, %v3101
        %v3487 = vunpack.c.l.s4 1983009808
        %v3488 = vunpack.c.0.s8 %v3487
        %v3489 = vlaneseq
        %v3490 = vshrl.u32 %v3489, 7
        %v3491 = vsub.s32 %v3488, %v3490
        %v3492 = vrot.slane %v3101, %v3491
        %v3494 = vunpack.c.l.s4 1983009808
        %v3495 = vunpack.c.0.s8 %v3494
        %v3496 = vlaneseq
        %v3497 = vshrl.u32 %v3496, 7
        %v3498 = vsub.s32 %v3495, %v3497
        %v3499 = vrot.slane %v3485, %v3498
        %v3500 = vcombine.high %v3492, %v3492
        %v3501 = vcombine.high %v3499, %v3499
        %v3502 = vcombine.high %v3102, %v3102
        %v3504 = vunpack.c.l.s4 1983009808
        %v3505 = vunpack.c.0.s8 %v3504
        %v3506 = vlaneseq
        %v3507 = vshrl.u32 %v3506, 7
        %v3508 = vsub.s32 %v3505, %v3507
        %v3509 = vrot.slane %v3102, %v3508
        %v3511 = vunpack.c.l.s4 1983009808
        %v3512 = vunpack.c.0.s8 %v3511
        %v3513 = vlaneseq
        %v3514 = vshrl.u32 %v3513, 7
        %v3515 = vsub.s32 %v3512, %v3514
        %v3516 = vrot.slane %v3502, %v3515
        %v3517 = vcombine.high %v3509, %v3509
        %v3518 = vcombine.high %v3516, %v3516
        %v3519 = vcombine.high %v3103, %v3103
        %v3521 = vunpack.c.l.s4 1983009808
        %v3522 = vunpack.c.0.s8 %v3521
        %v3523 = vlaneseq
        %v3524 = vshrl.u32 %v3523, 7
        %v3525 = vsub.s32 %v3522, %v3524
        %v3526 = vrot.slane %v3103, %v3525
        %v3528 = vunpack.c.l.s4 1983009808
        %v3529 = vunpack.c.0.s8 %v3528
        %v3530 = vlaneseq
        %v3531 = vshrl.u32 %v3530, 7
        %v3532 = vsub.s32 %v3529, %v3531
        %v3533 = vrot.slane %v3519, %v3532
        %v3534 = vcombine.high %v3526, %v3526
        %v3535 = vcombine.high %v3533, %v3533
        %v3536 = vcombine.high %v3104, %v3104
        %v3538 = vunpack.c.l.s4 1983009808
        %v3539 = vunpack.c.0.s8 %v3538
        %v3540 = vlaneseq
        %v3541 = vshrl.u32 %v3540, 7
        %v3542 = vsub.s32 %v3539, %v3541
        %v3543 = vrot.slane %v3104, %v3542
        %v3545 = vunpack.c.l.s4 1983009808
        %v3546 = vunpack.c.0.s8 %v3545
        %v3547 = vlaneseq
        %v3548 = vshrl.u32 %v3547, 7
        %v3549 = vsub.s32 %v3546, %v3548
        %v3550 = vrot.slane %v3536, %v3549
        %v3551 = vcombine.high %v3543, %v3543
        %v3552 = vcombine.high %v3550, %v3550
        %v3553 = vcombine.high %v3105, %v3105
        %v3555 = vunpack.c.l.s4 1983009808
        %v3556 = vunpack.c.0.s8 %v3555
        %v3557 = vlaneseq
        %v3558 = vshrl.u32 %v3557, 7
        %v3559 = vsub.s32 %v3556, %v3558
        %v3560 = vrot.slane %v3105, %v3559
        %v3562 = vunpack.c.l.s4 1983009808
        %v3563 = vunpack.c.0.s8 %v3562
        %v3564 = vlaneseq
        %v3565 = vshrl.u32 %v3564, 7
        %v3566 = vsub.s32 %v3563, %v3565
        %v3567 = vrot.slane %v3553, %v3566
        %v3568 = vcombine.high %v3560, %v3560
        %v3569 = vcombine.high %v3567, %v3567
        %v3570 = vcombine.high %v3106, %v3106
        %v3572 = vunpack.c.l.s4 1983009808
        %v3573 = vunpack.c.0.s8 %v3572
        %v3574 = vlaneseq
        %v3575 = vshrl.u32 %v3574, 7
        %v3576 = vsub.s32 %v3573, %v3575
        %v3577 = vrot.slane %v3106, %v3576
        %v3579 = vunpack.c.l.s4 1983009808
        %v3580 = vunpack.c.0.s8 %v3579
        %v3581 = vlaneseq
        %v3582 = vshrl.u32 %v3581, 7
        %v3583 = vsub.s32 %v3580, %v3582
        %v3584 = vrot.slane %v3570, %v3583
        %v3585 = vcombine.high %v3577, %v3577
        %v3586 = vcombine.high %v3584, %v3584
        %v3587 = vcombine.high %v3107, %v3107
        %v3589 = vunpack.c.l.s4 1983009808
        %v3590 = vunpack.c.0.s8 %v3589
        %v3591 = vlaneseq
        %v3592 = vshrl.u32 %v3591, 7
        %v3593 = vsub.s32 %v3590, %v3592
        %v3594 = vrot.slane %v3107, %v3593
        %v3596 = vunpack.c.l.s4 1983009808
        %v3597 = vunpack.c.0.s8 %v3596
        %v3598 = vlaneseq
        %v3599 = vshrl.u32 %v3598, 7
        %v3600 = vsub.s32 %v3597, %v3599
        %v3601 = vrot.slane %v3587, %v3600
        %v3602 = vcombine.high %v3594, %v3594
        %v3603 = vcombine.high %v3601, %v3601
        %v3604 = vcombine.high %v3108, %v3108
        %v3606 = vunpack.c.l.s4 1983009808
        %v3607 = vunpack.c.0.s8 %v3606
        %v3608 = vlaneseq
        %v3609 = vshrl.u32 %v3608, 7
        %v3610 = vsub.s32 %v3607, %v3609
        %v3611 = vrot.slane %v3108, %v3610
        %v3613 = vunpack.c.l.s4 1983009808
        %v3614 = vunpack.c.0.s8 %v3613
        %v3615 = vlaneseq
        %v3616 = vshrl.u32 %v3615, 7
        %v3617 = vsub.s32 %v3614, %v3616
        %v3618 = vrot.slane %v3604, %v3617
        %v3619 = vcombine.high %v3611, %v3611
        %v3620 = vcombine.high %v3618, %v3618
        %v3621 = vcombine.high %v3109, %v3109
        %v3623 = vunpack.c.l.s4 1983009808
        %v3624 = vunpack.c.0.s8 %v3623
        %v3625 = vlaneseq
        %v3626 = vshrl.u32 %v3625, 7
        %v3627 = vsub.s32 %v3624, %v3626
        %v3628 = vrot.slane %v3109, %v3627
        %v3630 = vunpack.c.l.s4 1983009808
        %v3631 = vunpack.c.0.s8 %v3630
        %v3632 = vlaneseq
        %v3633 = vshrl.u32 %v3632, 7
        %v3634 = vsub.s32 %v3631, %v3633
        %v3635 = vrot.slane %v3621, %v3634
        %v3636 = vcombine.high %v3628, %v3628
        %v3637 = vcombine.high %v3635, %v3635
        %v3638 = vcombine.high %v3110, %v3110
        %v3640 = vunpack.c.l.s4 1983009808
        %v3641 = vunpack.c.0.s8 %v3640
        %v3642 = vlaneseq
        %v3643 = vshrl.u32 %v3642, 7
        %v3644 = vsub.s32 %v3641, %v3643
        %v3645 = vrot.slane %v3110, %v3644
        %v3647 = vunpack.c.l.s4 1983009808
        %v3648 = vunpack.c.0.s8 %v3647
        %v3649 = vlaneseq
        %v3650 = vshrl.u32 %v3649, 7
        %v3651 = vsub.s32 %v3648, %v3650
        %v3652 = vrot.slane %v3638, %v3651
        %v3653 = vcombine.high %v3645, %v3645
        %v3654 = vcombine.high %v3652, %v3652
        %v3655 = vcombine.high %v3111, %v3111
        %v3657 = vunpack.c.l.s4 1983009808
        %v3658 = vunpack.c.0.s8 %v3657
        %v3659 = vlaneseq
        %v3660 = vshrl.u32 %v3659, 7
        %v3661 = vsub.s32 %v3658, %v3660
        %v3662 = vrot.slane %v3111, %v3661
        %v3664 = vunpack.c.l.s4 1983009808
        %v3665 = vunpack.c.0.s8 %v3664
        %v3666 = vlaneseq
        %v3667 = vshrl.u32 %v3666, 7
        %v3668 = vsub.s32 %v3665, %v3667
        %v3669 = vrot.slane %v3655, %v3668
        %v3670 = vcombine.high %v3662, %v3662
        %v3671 = vcombine.high %v3669, %v3669
        %v3672 = vcombine.high %v3112, %v3112
        %v3674 = vunpack.c.l.s4 1983009808
        %v3675 = vunpack.c.0.s8 %v3674
        %v3676 = vlaneseq
        %v3677 = vshrl.u32 %v3676, 7
        %v3678 = vsub.s32 %v3675, %v3677
        %v3679 = vrot.slane %v3112, %v3678
        %v3681 = vunpack.c.l.s4 1983009808
        %v3682 = vunpack.c.0.s8 %v3681
        %v3683 = vlaneseq
        %v3684 = vshrl.u32 %v3683, 7
        %v3685 = vsub.s32 %v3682, %v3684
        %v3686 = vrot.slane %v3672, %v3685
        %v3687 = vcombine.high %v3679, %v3679
        %v3688 = vcombine.high %v3686, %v3686
        %vm3817 = vcmask 254976
        %v3818 = vsel %vm3817, %v3152, -inf
        %v3819 = vrot.slane %v3818, 4
        %v3820 = vmax.f32 %v3818, %v3819
        %v3821 = vrot.slane %v3820, 2
        %v3822 = vmax.f32 %v3820, %v3821
        %v3823 = vrot.slane %v3822, 1
        %v3824 = vmax.f32 %v3822, %v3823
        %v3825 = vsel %vm3817, %v3160, -inf
        %v3826 = vrot.slane %v3825, 4
        %v3827 = vmax.f32 %v3825, %v3826
        %v3828 = vrot.slane %v3827, 2
        %v3829 = vmax.f32 %v3827, %v3828
        %v3830 = vrot.slane %v3829, 1
        %v3831 = vmax.f32 %v3829, %v3830
        %v3832 = vsel %vm3817, %v3159, -inf
        %v3833 = vrot.slane %v3832, 4
        %v3834 = vmax.f32 %v3832, %v3833
        %v3835 = vrot.slane %v3834, 2
        %v3836 = vmax.f32 %v3834, %v3835
        %v3837 = vrot.slane %v3836, 1
        %v3838 = vmax.f32 %v3836, %v3837
        %v3839 = vsel %vm3817, %v3161, -inf
        %v3840 = vrot.slane %v3839, 4
        %v3841 = vmax.f32 %v3839, %v3840
        %v3842 = vrot.slane %v3841, 2
        %v3843 = vmax.f32 %v3841, %v3842
        %v3844 = vrot.slane %v3843, 1
        %v3845 = vmax.f32 %v3843, %v3844
        %v3846 = vsel %vm3817, %v3169, -inf
        %v3847 = vrot.slane %v3846, 4
        %v3848 = vmax.f32 %v3846, %v3847
        %v3849 = vrot.slane %v3848, 2
        %v3850 = vmax.f32 %v3848, %v3849
        %v3851 = vrot.slane %v3850, 1
        %v3852 = vmax.f32 %v3850, %v3851
        %v3853 = vsel %vm3817, %v3177, -inf
        %v3854 = vrot.slane %v3853, 4
        %v3855 = vmax.f32 %v3853, %v3854
        %v3856 = vrot.slane %v3855, 2
        %v3857 = vmax.f32 %v3855, %v3856
        %v3858 = vrot.slane %v3857, 1
        %v3859 = vmax.f32 %v3857, %v3858
        %v3860 = vsel %vm3817, %v3176, -inf
        %v3861 = vrot.slane %v3860, 4
        %v3862 = vmax.f32 %v3860, %v3861
        %v3863 = vrot.slane %v3862, 2
        %v3864 = vmax.f32 %v3862, %v3863
        %v3865 = vrot.slane %v3864, 1
        %v3866 = vmax.f32 %v3864, %v3865
        %v3867 = vsel %vm3817, %v3178, -inf
        %v3868 = vrot.slane %v3867, 4
        %v3869 = vmax.f32 %v3867, %v3868
        %v3870 = vrot.slane %v3869, 2
        %v3871 = vmax.f32 %v3869, %v3870
        %v3872 = vrot.slane %v3871, 1
        %v3873 = vmax.f32 %v3871, %v3872
        %v3874 = vsel %vm3817, %v3186, -inf
        %v3875 = vrot.slane %v3874, 4
        %v3876 = vmax.f32 %v3874, %v3875
        %v3877 = vrot.slane %v3876, 2
        %v3878 = vmax.f32 %v3876, %v3877
        %v3879 = vrot.slane %v3878, 1
        %v3880 = vmax.f32 %v3878, %v3879
        %v3881 = vsel %vm3817, %v3194, -inf
        %v3882 = vrot.slane %v3881, 4
        %v3883 = vmax.f32 %v3881, %v3882
        %v3884 = vrot.slane %v3883, 2
        %v3885 = vmax.f32 %v3883, %v3884
        %v3886 = vrot.slane %v3885, 1
        %v3887 = vmax.f32 %v3885, %v3886
        %v3888 = vsel %vm3817, %v3193, -inf
        %v3889 = vrot.slane %v3888, 4
        %v3890 = vmax.f32 %v3888, %v3889
        %v3891 = vrot.slane %v3890, 2
        %v3892 = vmax.f32 %v3890, %v3891
        %v3893 = vrot.slane %v3892, 1
        %v3894 = vmax.f32 %v3892, %v3893
        %v3895 = vsel %vm3817, %v3195, -inf
        %v3896 = vrot.slane %v3895, 4
        %v3897 = vmax.f32 %v3895, %v3896
        %v3898 = vrot.slane %v3897, 2
        %v3899 = vmax.f32 %v3897, %v3898
        %v3900 = vrot.slane %v3899, 1
        %v3901 = vmax.f32 %v3899, %v3900
        %v3902 = vsel %vm3817, %v3203, -inf
        %v3903 = vrot.slane %v3902, 4
        %v3904 = vmax.f32 %v3902, %v3903
        %v3905 = vrot.slane %v3904, 2
        %v3906 = vmax.f32 %v3904, %v3905
        %v3907 = vrot.slane %v3906, 1
        %v3908 = vmax.f32 %v3906, %v3907
        %v3909 = vsel %vm3817, %v3211, -inf
        %v3910 = vrot.slane %v3909, 4
        %v3911 = vmax.f32 %v3909, %v3910
        %v3912 = vrot.slane %v3911, 2
        %v3913 = vmax.f32 %v3911, %v3912
        %v3914 = vrot.slane %v3913, 1
        %v3915 = vmax.f32 %v3913, %v3914
        %v3916 = vsel %vm3817, %v3210, -inf
        %v3917 = vrot.slane %v3916, 4
        %v3918 = vmax.f32 %v3916, %v3917
        %v3919 = vrot.slane %v3918, 2
        %v3920 = vmax.f32 %v3918, %v3919
        %v3921 = vrot.slane %v3920, 1
        %v3922 = vmax.f32 %v3920, %v3921
        %v3923 = vsel %vm3817, %v3212, -inf
        %v3924 = vrot.slane %v3923, 4
        %v3925 = vmax.f32 %v3923, %v3924
        %v3926 = vrot.slane %v3925, 2
        %v3927 = vmax.f32 %v3925, %v3926
        %v3928 = vrot.slane %v3927, 1
        %v3929 = vmax.f32 %v3927, %v3928
        %v3930 = vsel %vm3817, %v3220, -inf
        %v3931 = vrot.slane %v3930, 4
        %v3932 = vmax.f32 %v3930, %v3931
        %v3933 = vrot.slane %v3932, 2
        %v3934 = vmax.f32 %v3932, %v3933
        %v3935 = vrot.slane %v3934, 1
        %v3936 = vmax.f32 %v3934, %v3935
        %v3937 = vsel %vm3817, %v3228, -inf
        %v3938 = vrot.slane %v3937, 4
        %v3939 = vmax.f32 %v3937, %v3938
        %v3940 = vrot.slane %v3939, 2
        %v3941 = vmax.f32 %v3939, %v3940
        %v3942 = vrot.slane %v3941, 1
        %v3943 = vmax.f32 %v3941, %v3942
        %v3944 = vsel %vm3817, %v3227, -inf
        %v3945 = vrot.slane %v3944, 4
        %v3946 = vmax.f32 %v3944, %v3945
        %v3947 = vrot.slane %v3946, 2
        %v3948 = vmax.f32 %v3946, %v3947
        %v3949 = vrot.slane %v3948, 1
        %v3950 = vmax.f32 %v3948, %v3949
        %v3951 = vsel %vm3817, %v3229, -inf
        %v3952 = vrot.slane %v3951, 4
        %v3953 = vmax.f32 %v3951, %v3952
        %v3954 = vrot.slane %v3953, 2
        %v3955 = vmax.f32 %v3953, %v3954
        %v3956 = vrot.slane %v3955, 1
        %v3957 = vmax.f32 %v3955, %v3956
        %v3958 = vsel %vm3817, %v3237, -inf
        %v3959 = vrot.slane %v3958, 4
        %v3960 = vmax.f32 %v3958, %v3959
        %v3961 = vrot.slane %v3960, 2
        %v3962 = vmax.f32 %v3960, %v3961
        %v3963 = vrot.slane %v3962, 1
        %v3964 = vmax.f32 %v3962, %v3963
        %v3965 = vsel %vm3817, %v3245, -inf
        %v3966 = vrot.slane %v3965, 4
        %v3967 = vmax.f32 %v3965, %v3966
        %v3968 = vrot.slane %v3967, 2
        %v3969 = vmax.f32 %v3967, %v3968
        %v3970 = vrot.slane %v3969, 1
        %v3971 = vmax.f32 %v3969, %v3970
        %v3972 = vsel %vm3817, %v3244, -inf
        %v3973 = vrot.slane %v3972, 4
        %v3974 = vmax.f32 %v3972, %v3973
        %v3975 = vrot.slane %v3974, 2
        %v3976 = vmax.f32 %v3974, %v3975
        %v3977 = vrot.slane %v3976, 1
        %v3978 = vmax.f32 %v3976, %v3977
        %v3979 = vsel %vm3817, %v3246, -inf
        %v3980 = vrot.slane %v3979, 4
        %v3981 = vmax.f32 %v3979, %v3980
        %v3982 = vrot.slane %v3981, 2
        %v3983 = vmax.f32 %v3981, %v3982
        %v3984 = vrot.slane %v3983, 1
        %v3985 = vmax.f32 %v3983, %v3984
        %v3986 = vsel %vm3817, %v3254, -inf
        %v3987 = vrot.slane %v3986, 4
        %v3988 = vmax.f32 %v3986, %v3987
        %v3989 = vrot.slane %v3988, 2
        %v3990 = vmax.f32 %v3988, %v3989
        %v3991 = vrot.slane %v3990, 1
        %v3992 = vmax.f32 %v3990, %v3991
        %v3993 = vsel %vm3817, %v3262, -inf
        %v3994 = vrot.slane %v3993, 4
        %v3995 = vmax.f32 %v3993, %v3994
        %v3996 = vrot.slane %v3995, 2
        %v3997 = vmax.f32 %v3995, %v3996
        %v3998 = vrot.slane %v3997, 1
        %v3999 = vmax.f32 %v3997, %v3998
        %v4000 = vsel %vm3817, %v3261, -inf
        %v4001 = vrot.slane %v4000, 4
        %v4002 = vmax.f32 %v4000, %v4001
        %v4003 = vrot.slane %v4002, 2
        %v4004 = vmax.f32 %v4002, %v4003
        %v4005 = vrot.slane %v4004, 1
        %v4006 = vmax.f32 %v4004, %v4005
        %v4007 = vsel %vm3817, %v3263, -inf
        %v4008 = vrot.slane %v4007, 4
        %v4009 = vmax.f32 %v4007, %v4008
        %v4010 = vrot.slane %v4009, 2
        %v4011 = vmax.f32 %v4009, %v4010
        %v4012 = vrot.slane %v4011, 1
        %v4013 = vmax.f32 %v4011, %v4012
        %v4014 = vsel %vm3817, %v3271, -inf
        %v4015 = vrot.slane %v4014, 4
        %v4016 = vmax.f32 %v4014, %v4015
        %v4017 = vrot.slane %v4016, 2
        %v4018 = vmax.f32 %v4016, %v4017
        %v4019 = vrot.slane %v4018, 1
        %v4020 = vmax.f32 %v4018, %v4019
        %v4021 = vsel %vm3817, %v3279, -inf
        %v4022 = vrot.slane %v4021, 4
        %v4023 = vmax.f32 %v4021, %v4022
        %v4024 = vrot.slane %v4023, 2
        %v4025 = vmax.f32 %v4023, %v4024
        %v4026 = vrot.slane %v4025, 1
        %v4027 = vmax.f32 %v4025, %v4026
        %v4028 = vsel %vm3817, %v3278, -inf
        %v4029 = vrot.slane %v4028, 4
        %v4030 = vmax.f32 %v4028, %v4029
        %v4031 = vrot.slane %v4030, 2
        %v4032 = vmax.f32 %v4030, %v4031
        %v4033 = vrot.slane %v4032, 1
        %v4034 = vmax.f32 %v4032, %v4033
        %v4035 = vsel %vm3817, %v3280, -inf
        %v4036 = vrot.slane %v4035, 4
        %v4037 = vmax.f32 %v4035, %v4036
        %v4038 = vrot.slane %v4037, 2
        %v4039 = vmax.f32 %v4037, %v4038
        %v4040 = vrot.slane %v4039, 1
        %v4041 = vmax.f32 %v4039, %v4040
        %v4042 = vsel %vm3817, %v3288, -inf
        %v4043 = vrot.slane %v4042, 4
        %v4044 = vmax.f32 %v4042, %v4043
        %v4045 = vrot.slane %v4044, 2
        %v4046 = vmax.f32 %v4044, %v4045
        %v4047 = vrot.slane %v4046, 1
        %v4048 = vmax.f32 %v4046, %v4047
        %v4049 = vsel %vm3817, %v3296, -inf
        %v4050 = vrot.slane %v4049, 4
        %v4051 = vmax.f32 %v4049, %v4050
        %v4052 = vrot.slane %v4051, 2
        %v4053 = vmax.f32 %v4051, %v4052
        %v4054 = vrot.slane %v4053, 1
        %v4055 = vmax.f32 %v4053, %v4054
        %v4056 = vsel %vm3817, %v3295, -inf
        %v4057 = vrot.slane %v4056, 4
        %v4058 = vmax.f32 %v4056, %v4057
        %v4059 = vrot.slane %v4058, 2
        %v4060 = vmax.f32 %v4058, %v4059
        %v4061 = vrot.slane %v4060, 1
        %v4062 = vmax.f32 %v4060, %v4061
        %v4063 = vsel %vm3817, %v3297, -inf
        %v4064 = vrot.slane %v4063, 4
        %v4065 = vmax.f32 %v4063, %v4064
        %v4066 = vrot.slane %v4065, 2
        %v4067 = vmax.f32 %v4065, %v4066
        %v4068 = vrot.slane %v4067, 1
        %v4069 = vmax.f32 %v4067, %v4068
        %v4070 = vsel %vm3817, %v3305, -inf
        %v4071 = vrot.slane %v4070, 4
        %v4072 = vmax.f32 %v4070, %v4071
        %v4073 = vrot.slane %v4072, 2
        %v4074 = vmax.f32 %v4072, %v4073
        %v4075 = vrot.slane %v4074, 1
        %v4076 = vmax.f32 %v4074, %v4075
        %v4077 = vsel %vm3817, %v3313, -inf
        %v4078 = vrot.slane %v4077, 4
        %v4079 = vmax.f32 %v4077, %v4078
        %v4080 = vrot.slane %v4079, 2
        %v4081 = vmax.f32 %v4079, %v4080
        %v4082 = vrot.slane %v4081, 1
        %v4083 = vmax.f32 %v4081, %v4082
        %v4084 = vsel %vm3817, %v3312, -inf
        %v4085 = vrot.slane %v4084, 4
        %v4086 = vmax.f32 %v4084, %v4085
        %v4087 = vrot.slane %v4086, 2
        %v4088 = vmax.f32 %v4086, %v4087
        %v4089 = vrot.slane %v4088, 1
        %v4090 = vmax.f32 %v4088, %v4089
        %v4091 = vsel %vm3817, %v3314, -inf
        %v4092 = vrot.slane %v4091, 4
        %v4093 = vmax.f32 %v4091, %v4092
        %v4094 = vrot.slane %v4093, 2
        %v4095 = vmax.f32 %v4093, %v4094
        %v4096 = vrot.slane %v4095, 1
        %v4097 = vmax.f32 %v4095, %v4096
        %v4098 = vsel %vm3817, %v3322, -inf
        %v4099 = vrot.slane %v4098, 4
        %v4100 = vmax.f32 %v4098, %v4099
        %v4101 = vrot.slane %v4100, 2
        %v4102 = vmax.f32 %v4100, %v4101
        %v4103 = vrot.slane %v4102, 1
        %v4104 = vmax.f32 %v4102, %v4103
        %v4105 = vsel %vm3817, %v3330, -inf
        %v4106 = vrot.slane %v4105, 4
        %v4107 = vmax.f32 %v4105, %v4106
        %v4108 = vrot.slane %v4107, 2
        %v4109 = vmax.f32 %v4107, %v4108
        %v4110 = vrot.slane %v4109, 1
        %v4111 = vmax.f32 %v4109, %v4110
        %v4112 = vsel %vm3817, %v3329, -inf
        %v4113 = vrot.slane %v4112, 4
        %v4114 = vmax.f32 %v4112, %v4113
        %v4115 = vrot.slane %v4114, 2
        %v4116 = vmax.f32 %v4114, %v4115
        %v4117 = vrot.slane %v4116, 1
        %v4118 = vmax.f32 %v4116, %v4117
        %v4119 = vsel %vm3817, %v3331, -inf
        %v4120 = vrot.slane %v4119, 4
        %v4121 = vmax.f32 %v4119, %v4120
        %v4122 = vrot.slane %v4121, 2
        %v4123 = vmax.f32 %v4121, %v4122
        %v4124 = vrot.slane %v4123, 1
        %v4125 = vmax.f32 %v4123, %v4124
        %v4126 = vsel %vm3817, %v3339, -inf
        %v4127 = vrot.slane %v4126, 4
        %v4128 = vmax.f32 %v4126, %v4127
        %v4129 = vrot.slane %v4128, 2
        %v4130 = vmax.f32 %v4128, %v4129
        %v4131 = vrot.slane %v4130, 1
        %v4132 = vmax.f32 %v4130, %v4131
        %v4133 = vsel %vm3817, %v3347, -inf
        %v4134 = vrot.slane %v4133, 4
        %v4135 = vmax.f32 %v4133, %v4134
        %v4136 = vrot.slane %v4135, 2
        %v4137 = vmax.f32 %v4135, %v4136
        %v4138 = vrot.slane %v4137, 1
        %v4139 = vmax.f32 %v4137, %v4138
        %v4140 = vsel %vm3817, %v3346, -inf
        %v4141 = vrot.slane %v4140, 4
        %v4142 = vmax.f32 %v4140, %v4141
        %v4143 = vrot.slane %v4142, 2
        %v4144 = vmax.f32 %v4142, %v4143
        %v4145 = vrot.slane %v4144, 1
        %v4146 = vmax.f32 %v4144, %v4145
        %v4147 = vsel %vm3817, %v3348, -inf
        %v4148 = vrot.slane %v4147, 4
        %v4149 = vmax.f32 %v4147, %v4148
        %v4150 = vrot.slane %v4149, 2
        %v4151 = vmax.f32 %v4149, %v4150
        %v4152 = vrot.slane %v4151, 1
        %v4153 = vmax.f32 %v4151, %v4152
        %v4154 = vsel %vm3817, %v3356, -inf
        %v4155 = vrot.slane %v4154, 4
        %v4156 = vmax.f32 %v4154, %v4155
        %v4157 = vrot.slane %v4156, 2
        %v4158 = vmax.f32 %v4156, %v4157
        %v4159 = vrot.slane %v4158, 1
        %v4160 = vmax.f32 %v4158, %v4159
        %v4161 = vsel %vm3817, %v3364, -inf
        %v4162 = vrot.slane %v4161, 4
        %v4163 = vmax.f32 %v4161, %v4162
        %v4164 = vrot.slane %v4163, 2
        %v4165 = vmax.f32 %v4163, %v4164
        %v4166 = vrot.slane %v4165, 1
        %v4167 = vmax.f32 %v4165, %v4166
        %v4168 = vsel %vm3817, %v3363, -inf
        %v4169 = vrot.slane %v4168, 4
        %v4170 = vmax.f32 %v4168, %v4169
        %v4171 = vrot.slane %v4170, 2
        %v4172 = vmax.f32 %v4170, %v4171
        %v4173 = vrot.slane %v4172, 1
        %v4174 = vmax.f32 %v4172, %v4173
        %v4175 = vsel %vm3817, %v3365, -inf
        %v4176 = vrot.slane %v4175, 4
        %v4177 = vmax.f32 %v4175, %v4176
        %v4178 = vrot.slane %v4177, 2
        %v4179 = vmax.f32 %v4177, %v4178
        %v4180 = vrot.slane %v4179, 1
        %v4181 = vmax.f32 %v4179, %v4180
        %v4182 = vsel %vm3817, %v3373, -inf
        %v4183 = vrot.slane %v4182, 4
        %v4184 = vmax.f32 %v4182, %v4183
        %v4185 = vrot.slane %v4184, 2
        %v4186 = vmax.f32 %v4184, %v4185
        %v4187 = vrot.slane %v4186, 1
        %v4188 = vmax.f32 %v4186, %v4187
        %v4189 = vsel %vm3817, %v3381, -inf
        %v4190 = vrot.slane %v4189, 4
        %v4191 = vmax.f32 %v4189, %v4190
        %v4192 = vrot.slane %v4191, 2
        %v4193 = vmax.f32 %v4191, %v4192
        %v4194 = vrot.slane %v4193, 1
        %v4195 = vmax.f32 %v4193, %v4194
        %v4196 = vsel %vm3817, %v3380, -inf
        %v4197 = vrot.slane %v4196, 4
        %v4198 = vmax.f32 %v4196, %v4197
        %v4199 = vrot.slane %v4198, 2
        %v4200 = vmax.f32 %v4198, %v4199
        %v4201 = vrot.slane %v4200, 1
        %v4202 = vmax.f32 %v4200, %v4201
        %v4203 = vsel %vm3817, %v3382, -inf
        %v4204 = vrot.slane %v4203, 4
        %v4205 = vmax.f32 %v4203, %v4204
        %v4206 = vrot.slane %v4205, 2
        %v4207 = vmax.f32 %v4205, %v4206
        %v4208 = vrot.slane %v4207, 1
        %v4209 = vmax.f32 %v4207, %v4208
        %v4210 = vsel %vm3817, %v3390, -inf
        %v4211 = vrot.slane %v4210, 4
        %v4212 = vmax.f32 %v4210, %v4211
        %v4213 = vrot.slane %v4212, 2
        %v4214 = vmax.f32 %v4212, %v4213
        %v4215 = vrot.slane %v4214, 1
        %v4216 = vmax.f32 %v4214, %v4215
        %v4217 = vsel %vm3817, %v3398, -inf
        %v4218 = vrot.slane %v4217, 4
        %v4219 = vmax.f32 %v4217, %v4218
        %v4220 = vrot.slane %v4219, 2
        %v4221 = vmax.f32 %v4219, %v4220
        %v4222 = vrot.slane %v4221, 1
        %v4223 = vmax.f32 %v4221, %v4222
        %v4224 = vsel %vm3817, %v3397, -inf
        %v4225 = vrot.slane %v4224, 4
        %v4226 = vmax.f32 %v4224, %v4225
        %v4227 = vrot.slane %v4226, 2
        %v4228 = vmax.f32 %v4226, %v4227
        %v4229 = vrot.slane %v4228, 1
        %v4230 = vmax.f32 %v4228, %v4229
        %v4231 = vsel %vm3817, %v3399, -inf
        %v4232 = vrot.slane %v4231, 4
        %v4233 = vmax.f32 %v4231, %v4232
        %v4234 = vrot.slane %v4233, 2
        %v4235 = vmax.f32 %v4233, %v4234
        %v4236 = vrot.slane %v4235, 1
        %v4237 = vmax.f32 %v4235, %v4236
        %v4238 = vsel %vm3817, %v3407, -inf
        %v4239 = vrot.slane %v4238, 4
        %v4240 = vmax.f32 %v4238, %v4239
        %v4241 = vrot.slane %v4240, 2
        %v4242 = vmax.f32 %v4240, %v4241
        %v4243 = vrot.slane %v4242, 1
        %v4244 = vmax.f32 %v4242, %v4243
        %v4245 = vsel %vm3817, %v3415, -inf
        %v4246 = vrot.slane %v4245, 4
        %v4247 = vmax.f32 %v4245, %v4246
        %v4248 = vrot.slane %v4247, 2
        %v4249 = vmax.f32 %v4247, %v4248
        %v4250 = vrot.slane %v4249, 1
        %v4251 = vmax.f32 %v4249, %v4250
        %v4252 = vsel %vm3817, %v3414, -inf
        %v4253 = vrot.slane %v4252, 4
        %v4254 = vmax.f32 %v4252, %v4253
        %v4255 = vrot.slane %v4254, 2
        %v4256 = vmax.f32 %v4254, %v4255
        %v4257 = vrot.slane %v4256, 1
        %v4258 = vmax.f32 %v4256, %v4257
        %v4259 = vsel %vm3817, %v3416, -inf
        %v4260 = vrot.slane %v4259, 4
        %v4261 = vmax.f32 %v4259, %v4260
        %v4262 = vrot.slane %v4261, 2
        %v4263 = vmax.f32 %v4261, %v4262
        %v4264 = vrot.slane %v4263, 1
        %v4265 = vmax.f32 %v4263, %v4264
        %v4266 = vsel %vm3817, %v3424, -inf
        %v4267 = vrot.slane %v4266, 4
        %v4268 = vmax.f32 %v4266, %v4267
        %v4269 = vrot.slane %v4268, 2
        %v4270 = vmax.f32 %v4268, %v4269
        %v4271 = vrot.slane %v4270, 1
        %v4272 = vmax.f32 %v4270, %v4271
        %v4273 = vsel %vm3817, %v3432, -inf
        %v4274 = vrot.slane %v4273, 4
        %v4275 = vmax.f32 %v4273, %v4274
        %v4276 = vrot.slane %v4275, 2
        %v4277 = vmax.f32 %v4275, %v4276
        %v4278 = vrot.slane %v4277, 1
        %v4279 = vmax.f32 %v4277, %v4278
        %v4280 = vsel %vm3817, %v3431, -inf
        %v4281 = vrot.slane %v4280, 4
        %v4282 = vmax.f32 %v4280, %v4281
        %v4283 = vrot.slane %v4282, 2
        %v4284 = vmax.f32 %v4282, %v4283
        %v4285 = vrot.slane %v4284, 1
        %v4286 = vmax.f32 %v4284, %v4285
        %v4287 = vsel %vm3817, %v3433, -inf
        %v4288 = vrot.slane %v4287, 4
        %v4289 = vmax.f32 %v4287, %v4288
        %v4290 = vrot.slane %v4289, 2
        %v4291 = vmax.f32 %v4289, %v4290
        %v4292 = vrot.slane %v4291, 1
        %v4293 = vmax.f32 %v4291, %v4292
        %v4294 = vsel %vm3817, %v3441, -inf
        %v4295 = vrot.slane %v4294, 4
        %v4296 = vmax.f32 %v4294, %v4295
        %v4297 = vrot.slane %v4296, 2
        %v4298 = vmax.f32 %v4296, %v4297
        %v4299 = vrot.slane %v4298, 1
        %v4300 = vmax.f32 %v4298, %v4299
        %v4301 = vsel %vm3817, %v3449, -inf
        %v4302 = vrot.slane %v4301, 4
        %v4303 = vmax.f32 %v4301, %v4302
        %v4304 = vrot.slane %v4303, 2
        %v4305 = vmax.f32 %v4303, %v4304
        %v4306 = vrot.slane %v4305, 1
        %v4307 = vmax.f32 %v4305, %v4306
        %v4308 = vsel %vm3817, %v3448, -inf
        %v4309 = vrot.slane %v4308, 4
        %v4310 = vmax.f32 %v4308, %v4309
        %v4311 = vrot.slane %v4310, 2
        %v4312 = vmax.f32 %v4310, %v4311
        %v4313 = vrot.slane %v4312, 1
        %v4314 = vmax.f32 %v4312, %v4313
        %v4315 = vsel %vm3817, %v3450, -inf
        %v4316 = vrot.slane %v4315, 4
        %v4317 = vmax.f32 %v4315, %v4316
        %v4318 = vrot.slane %v4317, 2
        %v4319 = vmax.f32 %v4317, %v4318
        %v4320 = vrot.slane %v4319, 1
        %v4321 = vmax.f32 %v4319, %v4320
        %v4322 = vsel %vm3817, %v3458, -inf
        %v4323 = vrot.slane %v4322, 4
        %v4324 = vmax.f32 %v4322, %v4323
        %v4325 = vrot.slane %v4324, 2
        %v4326 = vmax.f32 %v4324, %v4325
        %v4327 = vrot.slane %v4326, 1
        %v4328 = vmax.f32 %v4326, %v4327
        %v4329 = vsel %vm3817, %v3466, -inf
        %v4330 = vrot.slane %v4329, 4
        %v4331 = vmax.f32 %v4329, %v4330
        %v4332 = vrot.slane %v4331, 2
        %v4333 = vmax.f32 %v4331, %v4332
        %v4334 = vrot.slane %v4333, 1
        %v4335 = vmax.f32 %v4333, %v4334
        %v4336 = vsel %vm3817, %v3465, -inf
        %v4337 = vrot.slane %v4336, 4
        %v4338 = vmax.f32 %v4336, %v4337
        %v4339 = vrot.slane %v4338, 2
        %v4340 = vmax.f32 %v4338, %v4339
        %v4341 = vrot.slane %v4340, 1
        %v4342 = vmax.f32 %v4340, %v4341
        %v4343 = vsel %vm3817, %v3467, -inf
        %v4344 = vrot.slane %v4343, 4
        %v4345 = vmax.f32 %v4343, %v4344
        %v4346 = vrot.slane %v4345, 2
        %v4347 = vmax.f32 %v4345, %v4346
        %v4348 = vrot.slane %v4347, 1
        %v4349 = vmax.f32 %v4347, %v4348
        %v4350 = vsel %vm3817, %v3475, -inf
        %v4351 = vrot.slane %v4350, 4
        %v4352 = vmax.f32 %v4350, %v4351
        %v4353 = vrot.slane %v4352, 2
        %v4354 = vmax.f32 %v4352, %v4353
        %v4355 = vrot.slane %v4354, 1
        %v4356 = vmax.f32 %v4354, %v4355
        %v4357 = vsel %vm3817, %v3483, -inf
        %v4358 = vrot.slane %v4357, 4
        %v4359 = vmax.f32 %v4357, %v4358
        %v4360 = vrot.slane %v4359, 2
        %v4361 = vmax.f32 %v4359, %v4360
        %v4362 = vrot.slane %v4361, 1
        %v4363 = vmax.f32 %v4361, %v4362
        %v4364 = vsel %vm3817, %v3482, -inf
        %v4365 = vrot.slane %v4364, 4
        %v4366 = vmax.f32 %v4364, %v4365
        %v4367 = vrot.slane %v4366, 2
        %v4368 = vmax.f32 %v4366, %v4367
        %v4369 = vrot.slane %v4368, 1
        %v4370 = vmax.f32 %v4368, %v4369
        %v4371 = vsel %vm3817, %v3484, -inf
        %v4372 = vrot.slane %v4371, 4
        %v4373 = vmax.f32 %v4371, %v4372
        %v4374 = vrot.slane %v4373, 2
        %v4375 = vmax.f32 %v4373, %v4374
        %v4376 = vrot.slane %v4375, 1
        %v4377 = vmax.f32 %v4375, %v4376
        %v4378 = vsel %vm3817, %v3492, -inf
        %v4379 = vrot.slane %v4378, 4
        %v4380 = vmax.f32 %v4378, %v4379
        %v4381 = vrot.slane %v4380, 2
        %v4382 = vmax.f32 %v4380, %v4381
        %v4383 = vrot.slane %v4382, 1
        %v4384 = vmax.f32 %v4382, %v4383
        %v4385 = vsel %vm3817, %v3500, -inf
        %v4386 = vrot.slane %v4385, 4
        %v4387 = vmax.f32 %v4385, %v4386
        %v4388 = vrot.slane %v4387, 2
        %v4389 = vmax.f32 %v4387, %v4388
        %v4390 = vrot.slane %v4389, 1
        %v4391 = vmax.f32 %v4389, %v4390
        %v4392 = vsel %vm3817, %v3499, -inf
        %v4393 = vrot.slane %v4392, 4
        %v4394 = vmax.f32 %v4392, %v4393
        %v4395 = vrot.slane %v4394, 2
        %v4396 = vmax.f32 %v4394, %v4395
        %v4397 = vrot.slane %v4396, 1
        %v4398 = vmax.f32 %v4396, %v4397
        %v4399 = vsel %vm3817, %v3501, -inf
        %v4400 = vrot.slane %v4399, 4
        %v4401 = vmax.f32 %v4399, %v4400
        %v4402 = vrot.slane %v4401, 2
        %v4403 = vmax.f32 %v4401, %v4402
        %v4404 = vrot.slane %v4403, 1
        %v4405 = vmax.f32 %v4403, %v4404
        %v4406 = vsel %vm3817, %v3509, -inf
        %v4407 = vrot.slane %v4406, 4
        %v4408 = vmax.f32 %v4406, %v4407
        %v4409 = vrot.slane %v4408, 2
        %v4410 = vmax.f32 %v4408, %v4409
        %v4411 = vrot.slane %v4410, 1
        %v4412 = vmax.f32 %v4410, %v4411
        %v4413 = vsel %vm3817, %v3517, -inf
        %v4414 = vrot.slane %v4413, 4
        %v4415 = vmax.f32 %v4413, %v4414
        %v4416 = vrot.slane %v4415, 2
        %v4417 = vmax.f32 %v4415, %v4416
        %v4418 = vrot.slane %v4417, 1
        %v4419 = vmax.f32 %v4417, %v4418
        %v4420 = vsel %vm3817, %v3516, -inf
        %v4421 = vrot.slane %v4420, 4
        %v4422 = vmax.f32 %v4420, %v4421
        %v4423 = vrot.slane %v4422, 2
        %v4424 = vmax.f32 %v4422, %v4423
        %v4425 = vrot.slane %v4424, 1
        %v4426 = vmax.f32 %v4424, %v4425
        %v4427 = vsel %vm3817, %v3518, -inf
        %v4428 = vrot.slane %v4427, 4
        %v4429 = vmax.f32 %v4427, %v4428
        %v4430 = vrot.slane %v4429, 2
        %v4431 = vmax.f32 %v4429, %v4430
        %v4432 = vrot.slane %v4431, 1
        %v4433 = vmax.f32 %v4431, %v4432
        %v4434 = vsel %vm3817, %v3526, -inf
        %v4435 = vrot.slane %v4434, 4
        %v4436 = vmax.f32 %v4434, %v4435
        %v4437 = vrot.slane %v4436, 2
        %v4438 = vmax.f32 %v4436, %v4437
        %v4439 = vrot.slane %v4438, 1
        %v4440 = vmax.f32 %v4438, %v4439
        %v4441 = vsel %vm3817, %v3534, -inf
        %v4442 = vrot.slane %v4441, 4
        %v4443 = vmax.f32 %v4441, %v4442
        %v4444 = vrot.slane %v4443, 2
        %v4445 = vmax.f32 %v4443, %v4444
        %v4446 = vrot.slane %v4445, 1
        %v4447 = vmax.f32 %v4445, %v4446
        %v4448 = vsel %vm3817, %v3533, -inf
        %v4449 = vrot.slane %v4448, 4
        %v4450 = vmax.f32 %v4448, %v4449
        %v4451 = vrot.slane %v4450, 2
        %v4452 = vmax.f32 %v4450, %v4451
        %v4453 = vrot.slane %v4452, 1
        %v4454 = vmax.f32 %v4452, %v4453
        %v4455 = vsel %vm3817, %v3535, -inf
        %v4456 = vrot.slane %v4455, 4
        %v4457 = vmax.f32 %v4455, %v4456
        %v4458 = vrot.slane %v4457, 2
        %v4459 = vmax.f32 %v4457, %v4458
        %v4460 = vrot.slane %v4459, 1
        %v4461 = vmax.f32 %v4459, %v4460
        %v4462 = vsel %vm3817, %v3543, -inf
        %v4463 = vrot.slane %v4462, 4
        %v4464 = vmax.f32 %v4462, %v4463
        %v4465 = vrot.slane %v4464, 2
        %v4466 = vmax.f32 %v4464, %v4465
        %v4467 = vrot.slane %v4466, 1
        %v4468 = vmax.f32 %v4466, %v4467
        %v4469 = vsel %vm3817, %v3551, -inf
        %v4470 = vrot.slane %v4469, 4
        %v4471 = vmax.f32 %v4469, %v4470
        %v4472 = vrot.slane %v4471, 2
        %v4473 = vmax.f32 %v4471, %v4472
        %v4474 = vrot.slane %v4473, 1
        %v4475 = vmax.f32 %v4473, %v4474
        %v4476 = vsel %vm3817, %v3550, -inf
        %v4477 = vrot.slane %v4476, 4
        %v4478 = vmax.f32 %v4476, %v4477
        %v4479 = vrot.slane %v4478, 2
        %v4480 = vmax.f32 %v4478, %v4479
        %v4481 = vrot.slane %v4480, 1
        %v4482 = vmax.f32 %v4480, %v4481
        %v4483 = vsel %vm3817, %v3552, -inf
        %v4484 = vrot.slane %v4483, 4
        %v4485 = vmax.f32 %v4483, %v4484
        %v4486 = vrot.slane %v4485, 2
        %v4487 = vmax.f32 %v4485, %v4486
        %v4488 = vrot.slane %v4487, 1
        %v4489 = vmax.f32 %v4487, %v4488
        %v4490 = vsel %vm3817, %v3560, -inf
        %v4491 = vrot.slane %v4490, 4
        %v4492 = vmax.f32 %v4490, %v4491
        %v4493 = vrot.slane %v4492, 2
        %v4494 = vmax.f32 %v4492, %v4493
        %v4495 = vrot.slane %v4494, 1
        %v4496 = vmax.f32 %v4494, %v4495
        %v4497 = vsel %vm3817, %v3568, -inf
        %v4498 = vrot.slane %v4497, 4
        %v4499 = vmax.f32 %v4497, %v4498
        %v4500 = vrot.slane %v4499, 2
        %v4501 = vmax.f32 %v4499, %v4500
        %v4502 = vrot.slane %v4501, 1
        %v4503 = vmax.f32 %v4501, %v4502
        %v4504 = vsel %vm3817, %v3567, -inf
        %v4505 = vrot.slane %v4504, 4
        %v4506 = vmax.f32 %v4504, %v4505
        %v4507 = vrot.slane %v4506, 2
        %v4508 = vmax.f32 %v4506, %v4507
        %v4509 = vrot.slane %v4508, 1
        %v4510 = vmax.f32 %v4508, %v4509
        %v4511 = vsel %vm3817, %v3569, -inf
        %v4512 = vrot.slane %v4511, 4
        %v4513 = vmax.f32 %v4511, %v4512
        %v4514 = vrot.slane %v4513, 2
        %v4515 = vmax.f32 %v4513, %v4514
        %v4516 = vrot.slane %v4515, 1
        %v4517 = vmax.f32 %v4515, %v4516
        %v4518 = vsel %vm3817, %v3577, -inf
        %v4519 = vrot.slane %v4518, 4
        %v4520 = vmax.f32 %v4518, %v4519
        %v4521 = vrot.slane %v4520, 2
        %v4522 = vmax.f32 %v4520, %v4521
        %v4523 = vrot.slane %v4522, 1
        %v4524 = vmax.f32 %v4522, %v4523
        %v4525 = vsel %vm3817, %v3585, -inf
        %v4526 = vrot.slane %v4525, 4
        %v4527 = vmax.f32 %v4525, %v4526
        %v4528 = vrot.slane %v4527, 2
        %v4529 = vmax.f32 %v4527, %v4528
        %v4530 = vrot.slane %v4529, 1
        %v4531 = vmax.f32 %v4529, %v4530
        %v4532 = vsel %vm3817, %v3584, -inf
        %v4533 = vrot.slane %v4532, 4
        %v4534 = vmax.f32 %v4532, %v4533
        %v4535 = vrot.slane %v4534, 2
        %v4536 = vmax.f32 %v4534, %v4535
        %v4537 = vrot.slane %v4536, 1
        %v4538 = vmax.f32 %v4536, %v4537
        %v4539 = vsel %vm3817, %v3586, -inf
        %v4540 = vrot.slane %v4539, 4
        %v4541 = vmax.f32 %v4539, %v4540
        %v4542 = vrot.slane %v4541, 2
        %v4543 = vmax.f32 %v4541, %v4542
        %v4544 = vrot.slane %v4543, 1
        %v4545 = vmax.f32 %v4543, %v4544
        %v4546 = vsel %vm3817, %v3594, -inf
        %v4547 = vrot.slane %v4546, 4
        %v4548 = vmax.f32 %v4546, %v4547
        %v4549 = vrot.slane %v4548, 2
        %v4550 = vmax.f32 %v4548, %v4549
        %v4551 = vrot.slane %v4550, 1
        %v4552 = vmax.f32 %v4550, %v4551
        %v4553 = vsel %vm3817, %v3602, -inf
        %v4554 = vrot.slane %v4553, 4
        %v4555 = vmax.f32 %v4553, %v4554
        %v4556 = vrot.slane %v4555, 2
        %v4557 = vmax.f32 %v4555, %v4556
        %v4558 = vrot.slane %v4557, 1
        %v4559 = vmax.f32 %v4557, %v4558
        %v4560 = vsel %vm3817, %v3601, -inf
        %v4561 = vrot.slane %v4560, 4
        %v4562 = vmax.f32 %v4560, %v4561
        %v4563 = vrot.slane %v4562, 2
        %v4564 = vmax.f32 %v4562, %v4563
        %v4565 = vrot.slane %v4564, 1
        %v4566 = vmax.f32 %v4564, %v4565
        %v4567 = vsel %vm3817, %v3603, -inf
        %v4568 = vrot.slane %v4567, 4
        %v4569 = vmax.f32 %v4567, %v4568
        %v4570 = vrot.slane %v4569, 2
        %v4571 = vmax.f32 %v4569, %v4570
        %v4572 = vrot.slane %v4571, 1
        %v4573 = vmax.f32 %v4571, %v4572
        %v4574 = vsel %vm3817, %v3611, -inf
        %v4575 = vrot.slane %v4574, 4
        %v4576 = vmax.f32 %v4574, %v4575
        %v4577 = vrot.slane %v4576, 2
        %v4578 = vmax.f32 %v4576, %v4577
        %v4579 = vrot.slane %v4578, 1
        %v4580 = vmax.f32 %v4578, %v4579
        %v4581 = vsel %vm3817, %v3619, -inf
        %v4582 = vrot.slane %v4581, 4
        %v4583 = vmax.f32 %v4581, %v4582
        %v4584 = vrot.slane %v4583, 2
        %v4585 = vmax.f32 %v4583, %v4584
        %v4586 = vrot.slane %v4585, 1
        %v4587 = vmax.f32 %v4585, %v4586
        %v4588 = vsel %vm3817, %v3618, -inf
        %v4589 = vrot.slane %v4588, 4
        %v4590 = vmax.f32 %v4588, %v4589
        %v4591 = vrot.slane %v4590, 2
        %v4592 = vmax.f32 %v4590, %v4591
        %v4593 = vrot.slane %v4592, 1
        %v4594 = vmax.f32 %v4592, %v4593
        %v4595 = vsel %vm3817, %v3620, -inf
        %v4596 = vrot.slane %v4595, 4
        %v4597 = vmax.f32 %v4595, %v4596
        %v4598 = vrot.slane %v4597, 2
        %v4599 = vmax.f32 %v4597, %v4598
        %v4600 = vrot.slane %v4599, 1
        %v4601 = vmax.f32 %v4599, %v4600
        %v4602 = vsel %vm3817, %v3628, -inf
        %v4603 = vrot.slane %v4602, 4
        %v4604 = vmax.f32 %v4602, %v4603
        %v4605 = vrot.slane %v4604, 2
        %v4606 = vmax.f32 %v4604, %v4605
        %v4607 = vrot.slane %v4606, 1
        %v4608 = vmax.f32 %v4606, %v4607
        %v4609 = vsel %vm3817, %v3636, -inf
        %v4610 = vrot.slane %v4609, 4
        %v4611 = vmax.f32 %v4609, %v4610
        %v4612 = vrot.slane %v4611, 2
        %v4613 = vmax.f32 %v4611, %v4612
        %v4614 = vrot.slane %v4613, 1
        %v4615 = vmax.f32 %v4613, %v4614
        %v4616 = vsel %vm3817, %v3635, -inf
        %v4617 = vrot.slane %v4616, 4
        %v4618 = vmax.f32 %v4616, %v4617
        %v4619 = vrot.slane %v4618, 2
        %v4620 = vmax.f32 %v4618, %v4619
        %v4621 = vrot.slane %v4620, 1
        %v4622 = vmax.f32 %v4620, %v4621
        %v4623 = vsel %vm3817, %v3637, -inf
        %v4624 = vrot.slane %v4623, 4
        %v4625 = vmax.f32 %v4623, %v4624
        %v4626 = vrot.slane %v4625, 2
        %v4627 = vmax.f32 %v4625, %v4626
        %v4628 = vrot.slane %v4627, 1
        %v4629 = vmax.f32 %v4627, %v4628
        %v4630 = vsel %vm3817, %v3645, -inf
        %v4631 = vrot.slane %v4630, 4
        %v4632 = vmax.f32 %v4630, %v4631
        %v4633 = vrot.slane %v4632, 2
        %v4634 = vmax.f32 %v4632, %v4633
        %v4635 = vrot.slane %v4634, 1
        %v4636 = vmax.f32 %v4634, %v4635
        %v4637 = vsel %vm3817, %v3653, -inf
        %v4638 = vrot.slane %v4637, 4
        %v4639 = vmax.f32 %v4637, %v4638
        %v4640 = vrot.slane %v4639, 2
        %v4641 = vmax.f32 %v4639, %v4640
        %v4642 = vrot.slane %v4641, 1
        %v4643 = vmax.f32 %v4641, %v4642
        %v4644 = vsel %vm3817, %v3652, -inf
        %v4645 = vrot.slane %v4644, 4
        %v4646 = vmax.f32 %v4644, %v4645
        %v4647 = vrot.slane %v4646, 2
        %v4648 = vmax.f32 %v4646, %v4647
        %v4649 = vrot.slane %v4648, 1
        %v4650 = vmax.f32 %v4648, %v4649
        %v4651 = vsel %vm3817, %v3654, -inf
        %v4652 = vrot.slane %v4651, 4
        %v4653 = vmax.f32 %v4651, %v4652
        %v4654 = vrot.slane %v4653, 2
        %v4655 = vmax.f32 %v4653, %v4654
        %v4656 = vrot.slane %v4655, 1
        %v4657 = vmax.f32 %v4655, %v4656
        %v4658 = vsel %vm3817, %v3662, -inf
        %v4659 = vrot.slane %v4658, 4
        %v4660 = vmax.f32 %v4658, %v4659
        %v4661 = vrot.slane %v4660, 2
        %v4662 = vmax.f32 %v4660, %v4661
        %v4663 = vrot.slane %v4662, 1
        %v4664 = vmax.f32 %v4662, %v4663
        %v4665 = vsel %vm3817, %v3670, -inf
        %v4666 = vrot.slane %v4665, 4
        %v4667 = vmax.f32 %v4665, %v4666
        %v4668 = vrot.slane %v4667, 2
        %v4669 = vmax.f32 %v4667, %v4668
        %v4670 = vrot.slane %v4669, 1
        %v4671 = vmax.f32 %v4669, %v4670
        %v4672 = vsel %vm3817, %v3669, -inf
        %v4673 = vrot.slane %v4672, 4
        %v4674 = vmax.f32 %v4672, %v4673
        %v4675 = vrot.slane %v4674, 2
        %v4676 = vmax.f32 %v4674, %v4675
        %v4677 = vrot.slane %v4676, 1
        %v4678 = vmax.f32 %v4676, %v4677
        %v4679 = vsel %vm3817, %v3671, -inf
        %v4680 = vrot.slane %v4679, 4
        %v4681 = vmax.f32 %v4679, %v4680
        %v4682 = vrot.slane %v4681, 2
        %v4683 = vmax.f32 %v4681, %v4682
        %v4684 = vrot.slane %v4683, 1
        %v4685 = vmax.f32 %v4683, %v4684
        %v4686 = vsel %vm3817, %v3679, -inf
        %v4687 = vrot.slane %v4686, 4
        %v4688 = vmax.f32 %v4686, %v4687
        %v4689 = vrot.slane %v4688, 2
        %v4690 = vmax.f32 %v4688, %v4689
        %v4691 = vrot.slane %v4690, 1
        %v4692 = vmax.f32 %v4690, %v4691
        %v4693 = vsel %vm3817, %v3687, -inf
        %v4694 = vrot.slane %v4693, 4
        %v4695 = vmax.f32 %v4693, %v4694
        %v4696 = vrot.slane %v4695, 2
        %v4697 = vmax.f32 %v4695, %v4696
        %v4698 = vrot.slane %v4697, 1
        %v4699 = vmax.f32 %v4697, %v4698
        %v4700 = vsel %vm3817, %v3686, -inf
        %v4701 = vrot.slane %v4700, 4
        %v4702 = vmax.f32 %v4700, %v4701
        %v4703 = vrot.slane %v4702, 2
        %v4704 = vmax.f32 %v4702, %v4703
        %v4705 = vrot.slane %v4704, 1
        %v4706 = vmax.f32 %v4704, %v4705
        %v4707 = vsel %vm3817, %v3688, -inf
        %v4708 = vrot.slane %v4707, 4
        %v4709 = vmax.f32 %v4707, %v4708
        %v4710 = vrot.slane %v4709, 2
        %v4711 = vmax.f32 %v4709, %v4710
        %v4712 = vrot.slane %v4711, 1
        %v4713 = vmax.f32 %v4711, %v4712
        %vm4714 = vcmask 261120
        %v4715 = vsel %vm4714, %v3824, -inf
        %v4716 = vsel %vm4714, %v3880, -inf
        %v4717 = vmax.f32 %v4715, %v4716
        %v4718 = vsel %vm4714, %v3831, -inf
        %v4719 = vsel %vm4714, %v3887, -inf
        %v4720 = vmax.f32 %v4718, %v4719
        %v4721 = vsel %vm4714, %v3838, -inf
        %v4722 = vsel %vm4714, %v3894, -inf
        %v4723 = vmax.f32 %v4721, %v4722
        %v4724 = vsel %vm4714, %v3845, -inf
        %v4725 = vsel %vm4714, %v3901, -inf
        %v4726 = vmax.f32 %v4724, %v4725
        %v4727 = vsel %vm4714, %v3852, -inf
        %v4728 = vsel %vm4714, %v3908, -inf
        %v4729 = vmax.f32 %v4727, %v4728
        %v4730 = vsel %vm4714, %v3859, -inf
        %v4731 = vsel %vm4714, %v3915, -inf
        %v4732 = vmax.f32 %v4730, %v4731
        %v4733 = vsel %vm4714, %v3866, -inf
        %v4734 = vsel %vm4714, %v3922, -inf
        %v4735 = vmax.f32 %v4733, %v4734
        %v4736 = vsel %vm4714, %v3873, -inf
        %v4737 = vsel %vm4714, %v3929, -inf
        %v4738 = vmax.f32 %v4736, %v4737
        %v4739 = vsel %vm4714, %v3936, -inf
        %v4740 = vsel %vm4714, %v3992, -inf
        %v4741 = vmax.f32 %v4739, %v4740
        %v4742 = vsel %vm4714, %v3943, -inf
        %v4743 = vsel %vm4714, %v3999, -inf
        %v4744 = vmax.f32 %v4742, %v4743
        %v4745 = vsel %vm4714, %v3950, -inf
        %v4746 = vsel %vm4714, %v4006, -inf
        %v4747 = vmax.f32 %v4745, %v4746
        %v4748 = vsel %vm4714, %v3957, -inf
        %v4749 = vsel %vm4714, %v4013, -inf
        %v4750 = vmax.f32 %v4748, %v4749
        %v4751 = vsel %vm4714, %v3964, -inf
        %v4752 = vsel %vm4714, %v4020, -inf
        %v4753 = vmax.f32 %v4751, %v4752
        %v4754 = vsel %vm4714, %v3971, -inf
        %v4755 = vsel %vm4714, %v4027, -inf
        %v4756 = vmax.f32 %v4754, %v4755
        %v4757 = vsel %vm4714, %v3978, -inf
        %v4758 = vsel %vm4714, %v4034, -inf
        %v4759 = vmax.f32 %v4757, %v4758
        %v4760 = vsel %vm4714, %v3985, -inf
        %v4761 = vsel %vm4714, %v4041, -inf
        %v4762 = vmax.f32 %v4760, %v4761
        %v4763 = vsel %vm4714, %v4048, -inf
        %v4764 = vsel %vm4714, %v4104, -inf
        %v4765 = vmax.f32 %v4763, %v4764
        %v4766 = vsel %vm4714, %v4055, -inf
        %v4767 = vsel %vm4714, %v4111, -inf
        %v4768 = vmax.f32 %v4766, %v4767
        %v4769 = vsel %vm4714, %v4062, -inf
        %v4770 = vsel %vm4714, %v4118, -inf
        %v4771 = vmax.f32 %v4769, %v4770
        %v4772 = vsel %vm4714, %v4069, -inf
        %v4773 = vsel %vm4714, %v4125, -inf
        %v4774 = vmax.f32 %v4772, %v4773
        %v4775 = vsel %vm4714, %v4076, -inf
        %v4776 = vsel %vm4714, %v4132, -inf
        %v4777 = vmax.f32 %v4775, %v4776
        %v4778 = vsel %vm4714, %v4083, -inf
        %v4779 = vsel %vm4714, %v4139, -inf
        %v4780 = vmax.f32 %v4778, %v4779
        %v4781 = vsel %vm4714, %v4090, -inf
        %v4782 = vsel %vm4714, %v4146, -inf
        %v4783 = vmax.f32 %v4781, %v4782
        %v4784 = vsel %vm4714, %v4097, -inf
        %v4785 = vsel %vm4714, %v4153, -inf
        %v4786 = vmax.f32 %v4784, %v4785
        %v4787 = vsel %vm4714, %v4160, -inf
        %v4788 = vsel %vm4714, %v4216, -inf
        %v4789 = vmax.f32 %v4787, %v4788
        %v4790 = vsel %vm4714, %v4167, -inf
        %v4791 = vsel %vm4714, %v4223, -inf
        %v4792 = vmax.f32 %v4790, %v4791
        %v4793 = vsel %vm4714, %v4174, -inf
        %v4794 = vsel %vm4714, %v4230, -inf
        %v4795 = vmax.f32 %v4793, %v4794
        %v4796 = vsel %vm4714, %v4181, -inf
        %v4797 = vsel %vm4714, %v4237, -inf
        %v4798 = vmax.f32 %v4796, %v4797
        %v4799 = vsel %vm4714, %v4188, -inf
        %v4800 = vsel %vm4714, %v4244, -inf
        %v4801 = vmax.f32 %v4799, %v4800
        %v4802 = vsel %vm4714, %v4195, -inf
        %v4803 = vsel %vm4714, %v4251, -inf
        %v4804 = vmax.f32 %v4802, %v4803
        %v4805 = vsel %vm4714, %v4202, -inf
        %v4806 = vsel %vm4714, %v4258, -inf
        %v4807 = vmax.f32 %v4805, %v4806
        %v4808 = vsel %vm4714, %v4209, -inf
        %v4809 = vsel %vm4714, %v4265, -inf
        %v4810 = vmax.f32 %v4808, %v4809
        %v4811 = vsel %vm4714, %v4272, -inf
        %v4812 = vsel %vm4714, %v4328, -inf
        %v4813 = vmax.f32 %v4811, %v4812
        %v4814 = vsel %vm4714, %v4279, -inf
        %v4815 = vsel %vm4714, %v4335, -inf
        %v4816 = vmax.f32 %v4814, %v4815
        %v4817 = vsel %vm4714, %v4286, -inf
        %v4818 = vsel %vm4714, %v4342, -inf
        %v4819 = vmax.f32 %v4817, %v4818
        %v4820 = vsel %vm4714, %v4293, -inf
        %v4821 = vsel %vm4714, %v4349, -inf
        %v4822 = vmax.f32 %v4820, %v4821
        %v4823 = vsel %vm4714, %v4300, -inf
        %v4824 = vsel %vm4714, %v4356, -inf
        %v4825 = vmax.f32 %v4823, %v4824
        %v4826 = vsel %vm4714, %v4307, -inf
        %v4827 = vsel %vm4714, %v4363, -inf
        %v4828 = vmax.f32 %v4826, %v4827
        %v4829 = vsel %vm4714, %v4314, -inf
        %v4830 = vsel %vm4714, %v4370, -inf
        %v4831 = vmax.f32 %v4829, %v4830
        %v4832 = vsel %vm4714, %v4321, -inf
        %v4833 = vsel %vm4714, %v4377, -inf
        %v4834 = vmax.f32 %v4832, %v4833
        %v4835 = vsel %vm4714, %v4384, -inf
        %v4836 = vsel %vm4714, %v4440, -inf
        %v4837 = vmax.f32 %v4835, %v4836
        %v4838 = vsel %vm4714, %v4391, -inf
        %v4839 = vsel %vm4714, %v4447, -inf
        %v4840 = vmax.f32 %v4838, %v4839
        %v4841 = vsel %vm4714, %v4398, -inf
        %v4842 = vsel %vm4714, %v4454, -inf
        %v4843 = vmax.f32 %v4841, %v4842
        %v4844 = vsel %vm4714, %v4405, -inf
        %v4845 = vsel %vm4714, %v4461, -inf
        %v4846 = vmax.f32 %v4844, %v4845
        %v4847 = vsel %vm4714, %v4412, -inf
        %v4848 = vsel %vm4714, %v4468, -inf
        %v4849 = vmax.f32 %v4847, %v4848
        %v4850 = vsel %vm4714, %v4419, -inf
        %v4851 = vsel %vm4714, %v4475, -inf
        %v4852 = vmax.f32 %v4850, %v4851
        %v4853 = vsel %vm4714, %v4426, -inf
        %v4854 = vsel %vm4714, %v4482, -inf
        %v4855 = vmax.f32 %v4853, %v4854
        %v4856 = vsel %vm4714, %v4433, -inf
        %v4857 = vsel %vm4714, %v4489, -inf
        %v4858 = vmax.f32 %v4856, %v4857
        %v4859 = vsel %vm4714, %v4496, -inf
        %v4860 = vsel %vm4714, %v4552, -inf
        %v4861 = vmax.f32 %v4859, %v4860
        %v4862 = vsel %vm4714, %v4503, -inf
        %v4863 = vsel %vm4714, %v4559, -inf
        %v4864 = vmax.f32 %v4862, %v4863
        %v4865 = vsel %vm4714, %v4510, -inf
        %v4866 = vsel %vm4714, %v4566, -inf
        %v4867 = vmax.f32 %v4865, %v4866
        %v4868 = vsel %vm4714, %v4517, -inf
        %v4869 = vsel %vm4714, %v4573, -inf
        %v4870 = vmax.f32 %v4868, %v4869
        %v4871 = vsel %vm4714, %v4524, -inf
        %v4872 = vsel %vm4714, %v4580, -inf
        %v4873 = vmax.f32 %v4871, %v4872
        %v4874 = vsel %vm4714, %v4531, -inf
        %v4875 = vsel %vm4714, %v4587, -inf
        %v4876 = vmax.f32 %v4874, %v4875
        %v4877 = vsel %vm4714, %v4538, -inf
        %v4878 = vsel %vm4714, %v4594, -inf
        %v4879 = vmax.f32 %v4877, %v4878
        %v4880 = vsel %vm4714, %v4545, -inf
        %v4881 = vsel %vm4714, %v4601, -inf
        %v4882 = vmax.f32 %v4880, %v4881
        %v4883 = vsel %vm4714, %v4608, -inf
        %v4884 = vsel %vm4714, %v4664, -inf
        %v4885 = vmax.f32 %v4883, %v4884
        %v4886 = vsel %vm4714, %v4615, -inf
        %v4887 = vsel %vm4714, %v4671, -inf
        %v4888 = vmax.f32 %v4886, %v4887
        %v4889 = vsel %vm4714, %v4622, -inf
        %v4890 = vsel %vm4714, %v4678, -inf
        %v4891 = vmax.f32 %v4889, %v4890
        %v4892 = vsel %vm4714, %v4629, -inf
        %v4893 = vsel %vm4714, %v4685, -inf
        %v4894 = vmax.f32 %v4892, %v4893
        %v4895 = vsel %vm4714, %v4636, -inf
        %v4896 = vsel %vm4714, %v4692, -inf
        %v4897 = vmax.f32 %v4895, %v4896
        %v4898 = vsel %vm4714, %v4643, -inf
        %v4899 = vsel %vm4714, %v4699, -inf
        %v4900 = vmax.f32 %v4898, %v4899
        %v4901 = vsel %vm4714, %v4650, -inf
        %v4902 = vsel %vm4714, %v4706, -inf
        %v4903 = vmax.f32 %v4901, %v4902
        %v4904 = vsel %vm4714, %v4657, -inf
        %v4905 = vsel %vm4714, %v4713, -inf
        %v4906 = vmax.f32 %v4904, %v4905
        %4907 = vst.msk [vmem:[#allocation4] sm:$0xff] %vm4714, 0.0
        %4908 = vst.msk [vmem:[#allocation4 + $0x8] sm:$0xff] %vm4714, 0.0
        %4909 = vst.msk [vmem:[#allocation4 + $0x10] sm:$0xff] %vm4714, 0.0
        %s4910 = scalar_lea.vmem [#allocation4], 216
        %4911 = vst.msk [vmem:[%s4910] sm:$0xff] %vm4714, 0.0
        %4912 = vst.msk [vmem:[%s4910 + $0x8] sm:$0xff] %vm4714, 0.0
        %4913 = vst.msk [vmem:[%s4910 + $0x10] sm:$0xff] %vm4714, 0.0
        %s4914 = scalar_lea.vmem [#allocation4], 24
        %4915 = vst.msk [vmem:[%s4914] sm:$0xff] %vm4714, 0.0
        %4916 = vst.msk [vmem:[%s4914 + $0x18] sm:$0xff] %vm4714, 0.0
        %4917 = vst.msk [vmem:[%s4914 + $0x30] sm:$0xff] %vm4714, 0.0
        %4918 = vst.msk [vmem:[%s4914 + $0x48] sm:$0xff] %vm4714, 0.0
        %4919 = vst.msk [vmem:[%s4914 + $0x60] sm:$0xff] %vm4714, 0.0
        %4920 = vst.msk [vmem:[%s4914 + $0x78] sm:$0xff] %vm4714, 0.0
        %4921 = vst.msk [vmem:[%s4914 + $0x90] sm:$0xff] %vm4714, 0.0
        %4922 = vst.msk [vmem:[%s4914 + $0xa8] sm:$0xff] %vm4714, 0.0
        %4923 = vst.msk [vmem:[%s4914 + $0x10] sm:$0xff] %vm4714, 0.0
        %4924 = vst.msk [vmem:[%s4914 + $0x28] sm:$0xff] %vm4714, 0.0
        %4925 = vst.msk [vmem:[%s4914 + $0x40] sm:$0xff] %vm4714, 0.0
        %4926 = vst.msk [vmem:[%s4914 + $0x58] sm:$0xff] %vm4714, 0.0
        %4927 = vst.msk [vmem:[%s4914 + $0x70] sm:$0xff] %vm4714, 0.0
        %4928 = vst.msk [vmem:[%s4914 + $0x88] sm:$0xff] %vm4714, 0.0
        %4929 = vst.msk [vmem:[%s4914 + $0xa0] sm:$0xff] %vm4714, 0.0
        %4930 = vst.msk [vmem:[%s4914 + $0xb8] sm:$0xff] %vm4714, 0.0
        %vm4995 = vcmask 1041409
        %v4996 = vsel %vm4995, %v4720, %v4717
        %vm4997 = vcmask 1042434
        %v4998 = vsel %vm4997, %v4723, %v4996
        %vm4999 = vcmask 1043459
        %v5000 = vsel %vm4999, %v4726, %v4998
        %vm5001 = vcmask 1044484
        %v5002 = vsel %vm5001, %v4729, %v5000
        %vm5003 = vcmask 1045509
        %v5004 = vsel %vm5003, %v4732, %v5002
        %vm5005 = vcmask 1046534
        %v5006 = vsel %vm5005, %v4735, %v5004
        %vm5007 = vcmask 1047559
        %v5008 = vsel %vm5007, %v4738, %v5006
        %v5009 = vsel %vm4995, %v4744, %v4741
        %v5010 = vsel %vm4997, %v4747, %v5009
        %v5011 = vsel %vm4999, %v4750, %v5010
        %v5012 = vsel %vm5001, %v4753, %v5011
        %v5013 = vsel %vm5003, %v4756, %v5012
        %v5014 = vsel %vm5005, %v4759, %v5013
        %v5015 = vsel %vm5007, %v4762, %v5014
        %v5016 = vsel %vm4995, %v4768, %v4765
        %v5017 = vsel %vm4997, %v4771, %v5016
        %v5018 = vsel %vm4999, %v4774, %v5017
        %v5019 = vsel %vm5001, %v4777, %v5018
        %v5020 = vsel %vm5003, %v4780, %v5019
        %v5021 = vsel %vm5005, %v4783, %v5020
        %v5022 = vsel %vm5007, %v4786, %v5021
        %v5023 = vsel %vm4995, %v4792, %v4789
        %v5024 = vsel %vm4997, %v4795, %v5023
        %v5025 = vsel %vm4999, %v4798, %v5024
        %v5026 = vsel %vm5001, %v4801, %v5025
        %v5027 = vsel %vm5003, %v4804, %v5026
        %v5028 = vsel %vm5005, %v4807, %v5027
        %v5029 = vsel %vm5007, %v4810, %v5028
        %v5030 = vsel %vm4995, %v4816, %v4813
        %v5031 = vsel %vm4997, %v4819, %v5030
        %v5032 = vsel %vm4999, %v4822, %v5031
        %v5033 = vsel %vm5001, %v4825, %v5032
        %v5034 = vsel %vm5003, %v4828, %v5033
        %v5035 = vsel %vm5005, %v4831, %v5034
        %v5036 = vsel %vm5007, %v4834, %v5035
        %v5037 = vsel %vm4995, %v4840, %v4837
        %v5038 = vsel %vm4997, %v4843, %v5037
        %v5039 = vsel %vm4999, %v4846, %v5038
        %v5040 = vsel %vm5001, %v4849, %v5039
        %v5041 = vsel %vm5003, %v4852, %v5040
        %v5042 = vsel %vm5005, %v4855, %v5041
        %v5043 = vsel %vm5007, %v4858, %v5042
        %v5044 = vsel %vm4995, %v4864, %v4861
        %v5045 = vsel %vm4997, %v4867, %v5044
        %v5046 = vsel %vm4999, %v4870, %v5045
        %v5047 = vsel %vm5001, %v4873, %v5046
        %v5048 = vsel %vm5003, %v4876, %v5047
        %v5049 = vsel %vm5005, %v4879, %v5048
        %v5050 = vsel %vm5007, %v4882, %v5049
        %v5051 = vsel %vm4995, %v4888, %v4885
        %v5052 = vsel %vm4997, %v4891, %v5051
        %v5053 = vsel %vm4999, %v4894, %v5052
        %v5054 = vsel %vm5001, %v4897, %v5053
        %v5055 = vsel %vm5003, %v4900, %v5054
        %v5056 = vsel %vm5005, %v4903, %v5055
        %v5057 = vsel %vm5007, %v4906, %v5056
        %5066 = vst.msk [vmem:[%s4914 + $0x8] sm:$0xff] %vm4714, %v5008
        %5067 = vst.msk [vmem:[%s4914 + $0x20] sm:$0xff] %vm4714, %v5015
        %5068 = vst.msk [vmem:[%s4914 + $0x38] sm:$0xff] %vm4714, %v5022
        %5069 = vst.msk [vmem:[%s4914 + $0x50] sm:$0xff] %vm4714, %v5029
        %5070 = vst.msk [vmem:[%s4914 + $0x68] sm:$0xff] %vm4714, %v5036
        %5071 = vst.msk [vmem:[%s4914 + $0x80] sm:$0xff] %vm4714, %v5043
        %5072 = vst.msk [vmem:[%s4914 + $0x98] sm:$0xff] %vm4714, %v5050
        %5073 = vst.msk [vmem:[%s4914 + $0xb0] sm:$0xff] %vm4714, %v5057
        %v5074 = vld [vmem:[#allocation4 + $0x7] sm:$0xff]
        %v5075 = vld [vmem:[#allocation4 + $0x1f] sm:$0xff]
        %v5076 = vld [vmem:[#allocation4 + $0x37] sm:$0xff]
        %v5077 = vld [vmem:[#allocation4 + $0x4f] sm:$0xff]
        %v5078 = vld [vmem:[#allocation4 + $0x67] sm:$0xff]
        %v5079 = vld [vmem:[#allocation4 + $0x7f] sm:$0xff]
        %v5080 = vld [vmem:[#allocation4 + $0x97] sm:$0xff]
        %v5081 = vld [vmem:[#allocation4 + $0xaf] sm:$0xff]
        %v5082 = vpack.c.bf16 %v5075, %v5074
        %v5083 = vpack.c.bf16 %v5077, %v5076
        %v5084 = vpack.c.bf16 %v5079, %v5078
        %v5085 = vpack.c.bf16 %v5081, %v5080
        %v5090 = vunpack.c.l.b16 %v5082
        %v5091 = vunpack.c.h.b16 %v5082
        %v5092 = vunpack.c.l.b16 %v5083
        %v5093 = vunpack.c.h.b16 %v5083
        %v5094 = vunpack.c.l.b16 %v5084
        %v5095 = vunpack.c.h.b16 %v5084
        %v5096 = vunpack.c.l.b16 %v5085
        %v5097 = vunpack.c.h.b16 %v5085
        %v5098 = vpack.c.b16 %v5090, %v5090
        %v5099 = vpack.c.b16 %v5091, %v5091
        %v5100 = vpack.c.b16 %v5092, %v5092
        %v5101 = vpack.c.b16 %v5093, %v5093
        %v5102 = vpack.c.b16 %v5094, %v5094
        %v5103 = vpack.c.b16 %v5095, %v5095
        %v5104 = vpack.c.b16 %v5096, %v5096
        %v5105 = vpack.c.b16 %v5097, %v5097
        %vm5114 = vcmask 257024
        %5115 = vst.msk [vmem:[#allocation5] sm:$0xf] %vm5114, %v5098
        %5116 = vst.msk [vmem:[#allocation5 + $0xc] sm:$0xf] %vm5114, %v5099
        %5117 = vst.msk [vmem:[#allocation5 + $0x18] sm:$0xf] %vm5114, %v5100
        %5118 = vst.msk [vmem:[#allocation5 + $0x24] sm:$0xf] %vm5114, %v5101
        %5119 = vst.msk [vmem:[#allocation5 + $0x30] sm:$0xf] %vm5114, %v5102
        %5120 = vst.msk [vmem:[#allocation5 + $0x3c] sm:$0xf] %vm5114, %v5103
        %5121 = vst.msk [vmem:[#allocation5 + $0x48] sm:$0xf] %vm5114, %v5104
        %5122 = vst.msk [vmem:[#allocation5 + $0x54] sm:$0xf] %vm5114, %v5105
        %v5123 = vld [vmem:[#allocation4 + $0x8] sm:$0xff]
        %v5124 = vld [vmem:[#allocation4 + $0x20] sm:$0xff]
        %v5125 = vld [vmem:[#allocation4 + $0x38] sm:$0xff]
        %v5126 = vld [vmem:[#allocation4 + $0x50] sm:$0xff]
        %v5127 = vld [vmem:[#allocation4 + $0x68] sm:$0xff]
        %v5128 = vld [vmem:[#allocation4 + $0x80] sm:$0xff]
        %v5129 = vld [vmem:[#allocation4 + $0x98] sm:$0xff]
        %v5130 = vld [vmem:[#allocation4 + $0xb0] sm:$0xff]
        %v5131 = vpack.c.bf16 %v5124, %v5123
        %v5132 = vpack.c.bf16 %v5126, %v5125
        %v5133 = vpack.c.bf16 %v5128, %v5127
        %v5134 = vpack.c.bf16 %v5130, %v5129
        %v5139 = vunpack.c.l.b16 %v5131
        %v5140 = vunpack.c.h.b16 %v5131
        %v5141 = vunpack.c.l.b16 %v5132
        %v5142 = vunpack.c.h.b16 %v5132
        %v5143 = vunpack.c.l.b16 %v5133
        %v5144 = vunpack.c.h.b16 %v5133
        %v5145 = vunpack.c.l.b16 %v5134
        %v5146 = vunpack.c.h.b16 %v5134
        %v5147 = vpack.c.b16 %v5139, %v5139
        %v5148 = vpack.c.b16 %v5140, %v5140
        %v5149 = vpack.c.b16 %v5141, %v5141
        %v5150 = vpack.c.b16 %v5142, %v5142
        %v5151 = vpack.c.b16 %v5143, %v5143
        %v5152 = vpack.c.b16 %v5144, %v5144
        %v5153 = vpack.c.b16 %v5145, %v5145
        %v5154 = vpack.c.b16 %v5146, %v5146
        %5155 = vrot.lane.b32.xlu0 %v5147, 32
        %v5156 = vpop.permute.xlu0 %5155
        %5157 = vrot.lane.b32.xlu0 %v5148, 32
        %v5158 = vpop.permute.xlu0 %5157
        %5159 = vrot.lane.b32.xlu0 %v5149, 32
        %v5160 = vpop.permute.xlu0 %5159
        %5161 = vrot.lane.b32.xlu0 %v5150, 32
        %v5162 = vpop.permute.xlu0 %5161
        %5163 = vrot.lane.b32.xlu0 %v5151, 32
        %v5164 = vpop.permute.xlu0 %5163
        %5165 = vrot.lane.b32.xlu0 %v5152, 32
        %v5166 = vpop.permute.xlu0 %5165
        %5167 = vrot.lane.b32.xlu0 %v5153, 32
        %v5168 = vpop.permute.xlu0 %5167
        %5169 = vrot.lane.b32.xlu0 %v5154, 32
        %v5170 = vpop.permute.xlu0 %5169
        %vm5179 = vcmask 519424
        %5180 = vst.msk [vmem:[#allocation5] sm:$0xf] %vm5179, %v5156
        %5181 = vst.msk [vmem:[#allocation5 + $0xc] sm:$0xf] %vm5179, %v5158
        %5182 = vst.msk [vmem:[#allocation5 + $0x18] sm:$0xf] %vm5179, %v5160
        %5183 = vst.msk [vmem:[#allocation5 + $0x24] sm:$0xf] %vm5179, %v5162
        %5184 = vst.msk [vmem:[#allocation5 + $0x30] sm:$0xf] %vm5179, %v5164
        %5185 = vst.msk [vmem:[#allocation5 + $0x3c] sm:$0xf] %vm5179, %v5166
        %5186 = vst.msk [vmem:[#allocation5 + $0x48] sm:$0xf] %vm5179, %v5168
        %5187 = vst.msk [vmem:[#allocation5 + $0x54] sm:$0xf] %vm5179, %v5170
        %v5188 = vld [vmem:[#allocation4 + $0x9] sm:$0xff]
        %v5189 = vld [vmem:[#allocation4 + $0x21] sm:$0xff]
        %v5190 = vld [vmem:[#allocation4 + $0x39] sm:$0xff]
        %v5191 = vld [vmem:[#allocation4 + $0x51] sm:$0xff]
        %v5192 = vld [vmem:[#allocation4 + $0x69] sm:$0xff]
        %v5193 = vld [vmem:[#allocation4 + $0x81] sm:$0xff]
        %v5194 = vld [vmem:[#allocation4 + $0x99] sm:$0xff]
        %v5195 = vld [vmem:[#allocation4 + $0xb1] sm:$0xff]
        %v5196 = vpack.c.bf16 %v5189, %v5188
        %v5197 = vpack.c.bf16 %v5191, %v5190
        %v5198 = vpack.c.bf16 %v5193, %v5192
        %v5199 = vpack.c.bf16 %v5195, %v5194
        %v5204 = vunpack.c.l.b16 %v5196
        %v5205 = vunpack.c.h.b16 %v5196
        %v5206 = vunpack.c.l.b16 %v5197
        %v5207 = vunpack.c.h.b16 %v5197
        %v5208 = vunpack.c.l.b16 %v5198
        %v5209 = vunpack.c.h.b16 %v5198
        %v5210 = vunpack.c.l.b16 %v5199
        %v5211 = vunpack.c.h.b16 %v5199
        %v5212 = vpack.c.b16 %v5204, %v5204
        %v5213 = vpack.c.b16 %v5205, %v5205
        %v5214 = vpack.c.b16 %v5206, %v5206
        %v5215 = vpack.c.b16 %v5207, %v5207
        %v5216 = vpack.c.b16 %v5208, %v5208
        %v5217 = vpack.c.b16 %v5209, %v5209
        %v5218 = vpack.c.b16 %v5210, %v5210
        %v5219 = vpack.c.b16 %v5211, %v5211
        %5220 = vrot.lane.b32.xlu0 %v5212, 64
        %v5221 = vpop.permute.xlu0 %5220
        %5222 = vrot.lane.b32.xlu0 %v5213, 64
        %v5223 = vpop.permute.xlu0 %5222
        %5224 = vrot.lane.b32.xlu0 %v5214, 64
        %v5225 = vpop.permute.xlu0 %5224
        %5226 = vrot.lane.b32.xlu0 %v5215, 64
        %v5227 = vpop.permute.xlu0 %5226
        %5228 = vrot.lane.b32.xlu0 %v5216, 64
        %v5229 = vpop.permute.xlu0 %5228
        %5230 = vrot.lane.b32.xlu0 %v5217, 64
        %v5231 = vpop.permute.xlu0 %5230
        %5232 = vrot.lane.b32.xlu0 %v5218, 64
        %v5233 = vpop.permute.xlu0 %5232
        %5234 = vrot.lane.b32.xlu0 %v5219, 64
        %v5235 = vpop.permute.xlu0 %5234
        %vm5244 = vcmask 781824
        %5245 = vst.msk [vmem:[#allocation5] sm:$0xf] %vm5244, %v5221
        %5246 = vst.msk [vmem:[#allocation5 + $0xc] sm:$0xf] %vm5244, %v5223
        %5247 = vst.msk [vmem:[#allocation5 + $0x18] sm:$0xf] %vm5244, %v5225
        %5248 = vst.msk [vmem:[#allocation5 + $0x24] sm:$0xf] %vm5244, %v5227
        %5249 = vst.msk [vmem:[#allocation5 + $0x30] sm:$0xf] %vm5244, %v5229
        %5250 = vst.msk [vmem:[#allocation5 + $0x3c] sm:$0xf] %vm5244, %v5231
        %5251 = vst.msk [vmem:[#allocation5 + $0x48] sm:$0xf] %vm5244, %v5233
        %5252 = vst.msk [vmem:[#allocation5 + $0x54] sm:$0xf] %vm5244, %v5235
        %v5253 = vld [vmem:[%s4914 + $0x7] sm:$0xff]
        %v5254 = vld [vmem:[%s4914 + $0x1f] sm:$0xff]
        %v5255 = vld [vmem:[%s4914 + $0x37] sm:$0xff]
        %v5256 = vld [vmem:[%s4914 + $0x4f] sm:$0xff]
        %v5257 = vld [vmem:[%s4914 + $0x67] sm:$0xff]
        %v5258 = vld [vmem:[%s4914 + $0x7f] sm:$0xff]
        %v5259 = vld [vmem:[%s4914 + $0x97] sm:$0xff]
        %v5260 = vld [vmem:[%s4914 + $0xaf] sm:$0xff]
        %v5261 = vpack.c.bf16 %v5254, %v5253
        %v5262 = vpack.c.bf16 %v5256, %v5255
        %v5263 = vpack.c.bf16 %v5258, %v5257
        %v5264 = vpack.c.bf16 %v5260, %v5259
        %v5269 = vunpack.c.l.b16 %v5261
        %v5270 = vunpack.c.h.b16 %v5261
        %v5271 = vunpack.c.l.b16 %v5262
        %v5272 = vunpack.c.h.b16 %v5262
        %v5273 = vunpack.c.l.b16 %v5263
        %v5274 = vunpack.c.h.b16 %v5263
        %v5275 = vunpack.c.l.b16 %v5264
        %v5276 = vunpack.c.h.b16 %v5264
        %v5277 = vpack.c.b16 %v5269, %v5269
        %v5278 = vpack.c.b16 %v5270, %v5270
        %v5279 = vpack.c.b16 %v5271, %v5271
        %v5280 = vpack.c.b16 %v5272, %v5272
        %v5281 = vpack.c.b16 %v5273, %v5273
        %v5282 = vpack.c.b16 %v5274, %v5274
        %v5283 = vpack.c.b16 %v5275, %v5275
        %v5284 = vpack.c.b16 %v5276, %v5276
        %5285 = vrot.lane.b32.xlu0 %v5277, 96
        %v5286 = vpop.permute.xlu0 %5285
        %5287 = vrot.lane.b32.xlu0 %v5278, 96
        %v5288 = vpop.permute.xlu0 %5287
        %5289 = vrot.lane.b32.xlu0 %v5279, 96
        %v5290 = vpop.permute.xlu0 %5289
        %5291 = vrot.lane.b32.xlu0 %v5280, 96
        %v5292 = vpop.permute.xlu0 %5291
        %5293 = vrot.lane.b32.xlu0 %v5281, 96
        %v5294 = vpop.permute.xlu0 %5293
        %5295 = vrot.lane.b32.xlu0 %v5282, 96
        %v5296 = vpop.permute.xlu0 %5295
        %5297 = vrot.lane.b32.xlu0 %v5283, 96
        %v5298 = vpop.permute.xlu0 %5297
        %5299 = vrot.lane.b32.xlu0 %v5284, 96
        %v5300 = vpop.permute.xlu0 %5299
        %vm5309 = vcmask 1044224
        %5310 = vst.msk [vmem:[#allocation5] sm:$0xf] %vm5309, %v5286
        %5311 = vst.msk [vmem:[#allocation5 + $0xc] sm:$0xf] %vm5309, %v5288
        %5312 = vst.msk [vmem:[#allocation5 + $0x18] sm:$0xf] %vm5309, %v5290
        %5313 = vst.msk [vmem:[#allocation5 + $0x24] sm:$0xf] %vm5309, %v5292
        %5314 = vst.msk [vmem:[#allocation5 + $0x30] sm:$0xf] %vm5309, %v5294
        %5315 = vst.msk [vmem:[#allocation5 + $0x3c] sm:$0xf] %vm5309, %v5296
        %5316 = vst.msk [vmem:[#allocation5 + $0x48] sm:$0xf] %vm5309, %v5298
        %5317 = vst.msk [vmem:[#allocation5 + $0x54] sm:$0xf] %vm5309, %v5300
        %v5318 = vld [vmem:[%s4914 + $0x8] sm:$0xff]
        %v5319 = vld [vmem:[%s4914 + $0x20] sm:$0xff]
        %v5320 = vld [vmem:[%s4914 + $0x38] sm:$0xff]
        %v5321 = vld [vmem:[%s4914 + $0x50] sm:$0xff]
        %v5322 = vld [vmem:[%s4914 + $0x68] sm:$0xff]
        %v5323 = vld [vmem:[%s4914 + $0x80] sm:$0xff]
        %v5324 = vld [vmem:[%s4914 + $0x98] sm:$0xff]
        %v5325 = vld [vmem:[%s4914 + $0xb0] sm:$0xff]
        %v5326 = vpack.c.bf16 %v5319, %v5318
        %v5327 = vpack.c.bf16 %v5321, %v5320
        %v5328 = vpack.c.bf16 %v5323, %v5322
        %v5329 = vpack.c.bf16 %v5325, %v5324
        %v5334 = vunpack.c.l.b16 %v5326
        %v5335 = vunpack.c.h.b16 %v5326
        %v5336 = vunpack.c.l.b16 %v5327
        %v5337 = vunpack.c.h.b16 %v5327
        %v5338 = vunpack.c.l.b16 %v5328
        %v5339 = vunpack.c.h.b16 %v5328
        %v5340 = vunpack.c.l.b16 %v5329
        %v5341 = vunpack.c.h.b16 %v5329
        %v5342 = vpack.c.b16 %v5334, %v5334
        %v5343 = vpack.c.b16 %v5335, %v5335
        %v5344 = vpack.c.b16 %v5336, %v5336
        %v5345 = vpack.c.b16 %v5337, %v5337
        %v5346 = vpack.c.b16 %v5338, %v5338
        %v5347 = vpack.c.b16 %v5339, %v5339
        %v5348 = vpack.c.b16 %v5340, %v5340
        %v5349 = vpack.c.b16 %v5341, %v5341
        %5358 = vst.msk [vmem:[#allocation5 + $0x4] sm:$0xf] %vm5114, %v5342
        %5359 = vst.msk [vmem:[#allocation5 + $0x10] sm:$0xf] %vm5114, %v5343
        %5360 = vst.msk [vmem:[#allocation5 + $0x1c] sm:$0xf] %vm5114, %v5344
        %5361 = vst.msk [vmem:[#allocation5 + $0x28] sm:$0xf] %vm5114, %v5345
        %5362 = vst.msk [vmem:[#allocation5 + $0x34] sm:$0xf] %vm5114, %v5346
        %5363 = vst.msk [vmem:[#allocation5 + $0x40] sm:$0xf] %vm5114, %v5347
        %5364 = vst.msk [vmem:[#allocation5 + $0x4c] sm:$0xf] %vm5114, %v5348
        %5365 = vst.msk [vmem:[#allocation5 + $0x58] sm:$0xf] %vm5114, %v5349
        %v5366 = vld [vmem:[%s4914 + $0x9] sm:$0xff]
        %v5367 = vld [vmem:[%s4914 + $0x21] sm:$0xff]
        %v5368 = vld [vmem:[%s4914 + $0x39] sm:$0xff]
        %v5369 = vld [vmem:[%s4914 + $0x51] sm:$0xff]
        %v5370 = vld [vmem:[%s4914 + $0x69] sm:$0xff]
        %v5371 = vld [vmem:[%s4914 + $0x81] sm:$0xff]
        %v5372 = vld [vmem:[%s4914 + $0x99] sm:$0xff]
        %v5373 = vld [vmem:[%s4914 + $0xb1] sm:$0xff]
        %v5374 = vpack.c.bf16 %v5367, %v5366
        %v5375 = vpack.c.bf16 %v5369, %v5368
        %v5376 = vpack.c.bf16 %v5371, %v5370
        %v5377 = vpack.c.bf16 %v5373, %v5372
        %v5382 = vunpack.c.l.b16 %v5374
        %v5383 = vunpack.c.h.b16 %v5374
        %v5384 = vunpack.c.l.b16 %v5375
        %v5385 = vunpack.c.h.b16 %v5375
        %v5386 = vunpack.c.l.b16 %v5376
        %v5387 = vunpack.c.h.b16 %v5376
        %v5388 = vunpack.c.l.b16 %v5377
        %v5389 = vunpack.c.h.b16 %v5377
        %v5390 = vpack.c.b16 %v5382, %v5382
        %v5391 = vpack.c.b16 %v5383, %v5383
        %v5392 = vpack.c.b16 %v5384, %v5384
        %v5393 = vpack.c.b16 %v5385, %v5385
        %v5394 = vpack.c.b16 %v5386, %v5386
        %v5395 = vpack.c.b16 %v5387, %v5387
        %v5396 = vpack.c.b16 %v5388, %v5388
        %v5397 = vpack.c.b16 %v5389, %v5389
        %5398 = vrot.lane.b32.xlu0 %v5390, 32
        %v5399 = vpop.permute.xlu0 %5398
        %5400 = vrot.lane.b32.xlu0 %v5391, 32
        %v5401 = vpop.permute.xlu0 %5400
        %5402 = vrot.lane.b32.xlu0 %v5392, 32
        %v5403 = vpop.permute.xlu0 %5402
        %5404 = vrot.lane.b32.xlu0 %v5393, 32
        %v5405 = vpop.permute.xlu0 %5404
        %5406 = vrot.lane.b32.xlu0 %v5394, 32
        %v5407 = vpop.permute.xlu0 %5406
        %5408 = vrot.lane.b32.xlu0 %v5395, 32
        %v5409 = vpop.permute.xlu0 %5408
        %5410 = vrot.lane.b32.xlu0 %v5396, 32
        %v5411 = vpop.permute.xlu0 %5410
        %5412 = vrot.lane.b32.xlu0 %v5397, 32
        %v5413 = vpop.permute.xlu0 %5412
        %5422 = vst.msk [vmem:[#allocation5 + $0x4] sm:$0xf] %vm5179, %v5399
        %5423 = vst.msk [vmem:[#allocation5 + $0x10] sm:$0xf] %vm5179, %v5401
        %5424 = vst.msk [vmem:[#allocation5 + $0x1c] sm:$0xf] %vm5179, %v5403
        %5425 = vst.msk [vmem:[#allocation5 + $0x28] sm:$0xf] %vm5179, %v5405
        %5426 = vst.msk [vmem:[#allocation5 + $0x34] sm:$0xf] %vm5179, %v5407
        %5427 = vst.msk [vmem:[#allocation5 + $0x40] sm:$0xf] %vm5179, %v5409
        %5428 = vst.msk [vmem:[#allocation5 + $0x4c] sm:$0xf] %vm5179, %v5411
        %5429 = vst.msk [vmem:[#allocation5 + $0x58] sm:$0xf] %vm5179, %v5413
        %s5430 = scalar_lea.vmem [#allocation4], 48
        %v5431 = vld [vmem:[%s5430 + $0x7] sm:$0xff]
        %v5432 = vld [vmem:[%s5430 + $0x1f] sm:$0xff]
        %v5433 = vld [vmem:[%s5430 + $0x37] sm:$0xff]
        %v5434 = vld [vmem:[%s5430 + $0x4f] sm:$0xff]
        %v5435 = vld [vmem:[%s5430 + $0x67] sm:$0xff]
        %v5436 = vld [vmem:[%s5430 + $0x7f] sm:$0xff]
        %v5437 = vld [vmem:[%s5430 + $0x97] sm:$0xff]
        %v5438 = vld [vmem:[%s5430 + $0xaf] sm:$0xff]
        %v5439 = vpack.c.bf16 %v5432, %v5431
        %v5440 = vpack.c.bf16 %v5434, %v5433
        %v5441 = vpack.c.bf16 %v5436, %v5435
        %v5442 = vpack.c.bf16 %v5438, %v5437
        %v5447 = vunpack.c.l.b16 %v5439
        %v5448 = vunpack.c.h.b16 %v5439
        %v5449 = vunpack.c.l.b16 %v5440
        %v5450 = vunpack.c.h.b16 %v5440
        %v5451 = vunpack.c.l.b16 %v5441
        %v5452 = vunpack.c.h.b16 %v5441
        %v5453 = vunpack.c.l.b16 %v5442
        %v5454 = vunpack.c.h.b16 %v5442
        %v5455 = vpack.c.b16 %v5447, %v5447
        %v5456 = vpack.c.b16 %v5448, %v5448
        %v5457 = vpack.c.b16 %v5449, %v5449
        %v5458 = vpack.c.b16 %v5450, %v5450
        %v5459 = vpack.c.b16 %v5451, %v5451
        %v5460 = vpack.c.b16 %v5452, %v5452
        %v5461 = vpack.c.b16 %v5453, %v5453
        %v5462 = vpack.c.b16 %v5454, %v5454
        %5463 = vrot.lane.b32.xlu0 %v5455, 64
        %v5464 = vpop.permute.xlu0 %5463
        %5465 = vrot.lane.b32.xlu0 %v5456, 64
        %v5466 = vpop.permute.xlu0 %5465
        %5467 = vrot.lane.b32.xlu0 %v5457, 64
        %v5468 = vpop.permute.xlu0 %5467
        %5469 = vrot.lane.b32.xlu0 %v5458, 64
        %v5470 = vpop.permute.xlu0 %5469
        %5471 = vrot.lane.b32.xlu0 %v5459, 64
        %v5472 = vpop.permute.xlu0 %5471
        %5473 = vrot.lane.b32.xlu0 %v5460, 64
        %v5474 = vpop.permute.xlu0 %5473
        %5475 = vrot.lane.b32.xlu0 %v5461, 64
        %v5476 = vpop.permute.xlu0 %5475
        %5477 = vrot.lane.b32.xlu0 %v5462, 64
        %v5478 = vpop.permute.xlu0 %5477
        %5487 = vst.msk [vmem:[#allocation5 + $0x4] sm:$0xf] %vm5244, %v5464
        %5488 = vst.msk [vmem:[#allocation5 + $0x10] sm:$0xf] %vm5244, %v5466
        %5489 = vst.msk [vmem:[#allocation5 + $0x1c] sm:$0xf] %vm5244, %v5468
        %5490 = vst.msk [vmem:[#allocation5 + $0x28] sm:$0xf] %vm5244, %v5470
        %5491 = vst.msk [vmem:[#allocation5 + $0x34] sm:$0xf] %vm5244, %v5472
        %5492 = vst.msk [vmem:[#allocation5 + $0x40] sm:$0xf] %vm5244, %v5474
        %5493 = vst.msk [vmem:[#allocation5 + $0x4c] sm:$0xf] %vm5244, %v5476
        %5494 = vst.msk [vmem:[#allocation5 + $0x58] sm:$0xf] %vm5244, %v5478
        %v5495 = vld [vmem:[%s5430 + $0x8] sm:$0xff]
        %v5496 = vld [vmem:[%s5430 + $0x20] sm:$0xff]
        %v5497 = vld [vmem:[%s5430 + $0x38] sm:$0xff]
        %v5498 = vld [vmem:[%s5430 + $0x50] sm:$0xff]
        %v5499 = vld [vmem:[%s5430 + $0x68] sm:$0xff]
        %v5500 = vld [vmem:[%s5430 + $0x80] sm:$0xff]
        %v5501 = vld [vmem:[%s5430 + $0x98] sm:$0xff]
        %v5502 = vld [vmem:[%s5430 + $0xb0] sm:$0xff]
        %v5503 = vpack.c.bf16 %v5496, %v5495
        %v5504 = vpack.c.bf16 %v5498, %v5497
        %v5505 = vpack.c.bf16 %v5500, %v5499
        %v5506 = vpack.c.bf16 %v5502, %v5501
        %v5511 = vunpack.c.l.b16 %v5503
        %v5512 = vunpack.c.h.b16 %v5503
        %v5513 = vunpack.c.l.b16 %v5504
        %v5514 = vunpack.c.h.b16 %v5504
        %v5515 = vunpack.c.l.b16 %v5505
        %v5516 = vunpack.c.h.b16 %v5505
        %v5517 = vunpack.c.l.b16 %v5506
        %v5518 = vunpack.c.h.b16 %v5506
        %v5519 = vpack.c.b16 %v5511, %v5511
        %v5520 = vpack.c.b16 %v5512, %v5512
        %v5521 = vpack.c.b16 %v5513, %v5513
        %v5522 = vpack.c.b16 %v5514, %v5514
        %v5523 = vpack.c.b16 %v5515, %v5515
        %v5524 = vpack.c.b16 %v5516, %v5516
        %v5525 = vpack.c.b16 %v5517, %v5517
        %v5526 = vpack.c.b16 %v5518, %v5518
        %5527 = vrot.lane.b32.xlu0 %v5519, 96
        %v5528 = vpop.permute.xlu0 %5527
        %5529 = vrot.lane.b32.xlu0 %v5520, 96
        %v5530 = vpop.permute.xlu0 %5529
        %5531 = vrot.lane.b32.xlu0 %v5521, 96
        %v5532 = vpop.permute.xlu0 %5531
        %5533 = vrot.lane.b32.xlu0 %v5522, 96
        %v5534 = vpop.permute.xlu0 %5533
        %5535 = vrot.lane.b32.xlu0 %v5523, 96
        %v5536 = vpop.permute.xlu0 %5535
        %5537 = vrot.lane.b32.xlu0 %v5524, 96
        %v5538 = vpop.permute.xlu0 %5537
        %5539 = vrot.lane.b32.xlu0 %v5525, 96
        %v5540 = vpop.permute.xlu0 %5539
        %5541 = vrot.lane.b32.xlu0 %v5526, 96
        %v5542 = vpop.permute.xlu0 %5541
        %5551 = vst.msk [vmem:[#allocation5 + $0x4] sm:$0xf] %vm5309, %v5528
        %5552 = vst.msk [vmem:[#allocation5 + $0x10] sm:$0xf] %vm5309, %v5530
        %5553 = vst.msk [vmem:[#allocation5 + $0x1c] sm:$0xf] %vm5309, %v5532
        %5554 = vst.msk [vmem:[#allocation5 + $0x28] sm:$0xf] %vm5309, %v5534
        %5555 = vst.msk [vmem:[#allocation5 + $0x34] sm:$0xf] %vm5309, %v5536
        %5556 = vst.msk [vmem:[#allocation5 + $0x40] sm:$0xf] %vm5309, %v5538
        %5557 = vst.msk [vmem:[#allocation5 + $0x4c] sm:$0xf] %vm5309, %v5540
        %5558 = vst.msk [vmem:[#allocation5 + $0x58] sm:$0xf] %vm5309, %v5542
        %v5559 = vld [vmem:[%s5430 + $0x9] sm:$0xff]
        %v5560 = vld [vmem:[%s5430 + $0x21] sm:$0xff]
        %v5561 = vld [vmem:[%s5430 + $0x39] sm:$0xff]
        %v5562 = vld [vmem:[%s5430 + $0x51] sm:$0xff]
        %v5563 = vld [vmem:[%s5430 + $0x69] sm:$0xff]
        %v5564 = vld [vmem:[%s5430 + $0x81] sm:$0xff]
        %v5565 = vld [vmem:[%s5430 + $0x99] sm:$0xff]
        %v5566 = vld [vmem:[%s5430 + $0xb1] sm:$0xff]
        %v5567 = vpack.c.bf16 %v5560, %v5559
        %v5568 = vpack.c.bf16 %v5562, %v5561
        %v5569 = vpack.c.bf16 %v5564, %v5563
        %v5570 = vpack.c.bf16 %v5566, %v5565
        %v5575 = vunpack.c.l.b16 %v5567
        %v5576 = vunpack.c.h.b16 %v5567
        %v5577 = vunpack.c.l.b16 %v5568
        %v5578 = vunpack.c.h.b16 %v5568
        %v5579 = vunpack.c.l.b16 %v5569
        %v5580 = vunpack.c.h.b16 %v5569
        %v5581 = vunpack.c.l.b16 %v5570
        %v5582 = vunpack.c.h.b16 %v5570
        %v5583 = vpack.c.b16 %v5575, %v5575
        %v5584 = vpack.c.b16 %v5576, %v5576
        %v5585 = vpack.c.b16 %v5577, %v5577
        %v5586 = vpack.c.b16 %v5578, %v5578
        %v5587 = vpack.c.b16 %v5579, %v5579
        %v5588 = vpack.c.b16 %v5580, %v5580
        %v5589 = vpack.c.b16 %v5581, %v5581
        %v5590 = vpack.c.b16 %v5582, %v5582
        %5599 = vst.msk [vmem:[#allocation5 + $0x8] sm:$0xf] %vm5114, %v5583
        %5600 = vst.msk [vmem:[#allocation5 + $0x14] sm:$0xf] %vm5114, %v5584
        %5601 = vst.msk [vmem:[#allocation5 + $0x20] sm:$0xf] %vm5114, %v5585
        %5602 = vst.msk [vmem:[#allocation5 + $0x2c] sm:$0xf] %vm5114, %v5586
        %5603 = vst.msk [vmem:[#allocation5 + $0x38] sm:$0xf] %vm5114, %v5587
        %5604 = vst.msk [vmem:[#allocation5 + $0x44] sm:$0xf] %vm5114, %v5588
        %5605 = vst.msk [vmem:[#allocation5 + $0x50] sm:$0xf] %vm5114, %v5589
        %5606 = vst.msk [vmem:[#allocation5 + $0x5c] sm:$0xf] %vm5114, %v5590
        %vm5607 = vcmask 1043712
        %5608 = vst.msk [vmem:[#allocation5 + $0x8] sm:$0xf] %vm5607, 0
        %5609 = vst.msk [vmem:[#allocation5 + $0x14] sm:$0xf] %vm5607, 0
        %5610 = vst.msk [vmem:[#allocation5 + $0x20] sm:$0xf] %vm5607, 0
        %5611 = vst.msk [vmem:[#allocation5 + $0x2c] sm:$0xf] %vm5607, 0
        %5612 = vst.msk [vmem:[#allocation5 + $0x38] sm:$0xf] %vm5607, 0
        %5613 = vst.msk [vmem:[#allocation5 + $0x44] sm:$0xf] %vm5607, 0
        %5614 = vst.msk [vmem:[#allocation5 + $0x50] sm:$0xf] %vm5607, 0
        %5615 = vst.msk [vmem:[#allocation5 + $0x5c] sm:$0xf] %vm5607, 0
        %v5616 = vld [vmem:[#allocation5] sm:$0xff]
        %v5617 = vld [vmem:[#allocation5 + $0x8] sm:$0xf]
        %v5618 = vld [vmem:[#allocation5 + $0xc] sm:$0xff]
        %v5619 = vld [vmem:[#allocation5 + $0x14] sm:$0xf]
        %v5620 = vld [vmem:[#allocation5 + $0x18] sm:$0xff]
        %v5621 = vld [vmem:[#allocation5 + $0x20] sm:$0xf]
        %v5622 = vld [vmem:[#allocation5 + $0x24] sm:$0xff]
        %v5623 = vld [vmem:[#allocation5 + $0x2c] sm:$0xf]
        %v5624 = vld [vmem:[#allocation5 + $0x30] sm:$0xff]
        %v5625 = vld [vmem:[#allocation5 + $0x38] sm:$0xf]
        %v5626 = vld [vmem:[#allocation5 + $0x3c] sm:$0xff]
        %v5627 = vld [vmem:[#allocation5 + $0x44] sm:$0xf]
        %v5628 = vld [vmem:[#allocation5 + $0x48] sm:$0xff]
        %v5629 = vld [vmem:[#allocation5 + $0x50] sm:$0xf]
        %v5630 = vld [vmem:[#allocation5 + $0x54] sm:$0xff]
        %v5631 = vld [vmem:[#allocation5 + $0x5c] sm:$0xf]
        %v5632 = vld [vmem:[%s3] sm:$0xf]
        %v5633 = vld [vmem:[%s3 + $0x4] sm:$0xf]
        %v5634 = vld [vmem:[%s3 + $0x8] sm:$0xf]
        %v5635 = vld [vmem:[%s3 + $0xc] sm:$0xf]
        %v5636 = vld [vmem:[%s3 + $0x10] sm:$0xf]
        %v5637 = vld [vmem:[%s3 + $0x14] sm:$0xf]
        %v5638 = vld [vmem:[%s3 + $0x18] sm:$0xf]
        %v5639 = vld [vmem:[%s3 + $0x1c] sm:$0xf]
        %v5640 = vld [vmem:[%s3 + $0x20] sm:$0xf]
        %v5641 = vld [vmem:[%s3 + $0x24] sm:$0xf]
        %v5642 = vld [vmem:[%s3 + $0x28] sm:$0xf]
        %v5643 = vld [vmem:[%s3 + $0x2c] sm:$0xf]
        %v5644 = vld [vmem:[%s3 + $0x30] sm:$0xf]
        %v5645 = vld [vmem:[%s3 + $0x34] sm:$0xf]
        %v5646 = vld [vmem:[%s3 + $0x38] sm:$0xf]
        %v5647 = vld [vmem:[%s3 + $0x3c] sm:$0xf]
        %v5648 = vld [vmem:[%s3 + $0x40] sm:$0xf]
        %v5649 = vld [vmem:[%s3 + $0x44] sm:$0xf]
        %v5650 = vld [vmem:[%s3 + $0x48] sm:$0xf]
        %v5651 = vld [vmem:[%s3 + $0x4c] sm:$0xf]
        %v5652 = vld [vmem:[%s3 + $0x50] sm:$0xf]
        %v5653 = vld [vmem:[%s3 + $0x54] sm:$0xf]
        %v5654 = vld [vmem:[%s3 + $0x58] sm:$0xf]
        %v5655 = vld [vmem:[%s3 + $0x5c] sm:$0xf]
        %v5656 = vld [vmem:[%s3 + $0x60] sm:$0xf]
        %v5657 = vld [vmem:[%s3 + $0x64] sm:$0xf]
        %v5658 = vld [vmem:[%s3 + $0x68] sm:$0xf]
        %v5659 = vld [vmem:[%s3 + $0x6c] sm:$0xf]
        %v5660 = vld [vmem:[%s3 + $0x70] sm:$0xf]
        %v5661 = vld [vmem:[%s3 + $0x74] sm:$0xf]
        %v5662 = vld [vmem:[%s3 + $0x78] sm:$0xf]
        %v5663 = vld [vmem:[%s3 + $0x7c] sm:$0xf]
        %v5664 = vld [vmem:[%s3 + $0x80] sm:$0xf]
        %v5665 = vld [vmem:[%s3 + $0x84] sm:$0xf]
        %v5666 = vld [vmem:[%s3 + $0x88] sm:$0xf]
        %v5667 = vld [vmem:[%s3 + $0x8c] sm:$0xf]
        %v5668 = vld [vmem:[%s3 + $0x90] sm:$0xf]
        %v5669 = vld [vmem:[%s3 + $0x94] sm:$0xf]
        %v5670 = vld [vmem:[%s3 + $0x98] sm:$0xf]
        %v5671 = vld [vmem:[%s3 + $0x9c] sm:$0xf]
        %v5672 = vld [vmem:[%s3 + $0xa0] sm:$0xf]
        %v5673 = vld [vmem:[%s3 + $0xa4] sm:$0xf]
        %v5674 = vld [vmem:[%s3 + $0xa8] sm:$0xf]
        %v5675 = vld [vmem:[%s3 + $0xac] sm:$0xf]
        %v5676 = vld [vmem:[%s3 + $0xb0] sm:$0xf]
        %v5677 = vld [vmem:[%s3 + $0xb4] sm:$0xf]
        %v5678 = vld [vmem:[%s3 + $0xb8] sm:$0xf]
        %v5679 = vld [vmem:[%s3 + $0xbc] sm:$0xf]
        %v5680 = vld [vmem:[%s4] sm:$0x1]
        %v5682 = vlaneseq
        %v5683 = vshrl.u32 %v5682, 7
        %v5684 = vsub.s32 0, %v5683
        %v5685 = vrot.slane %v5680, %v5684
        %v5703 = vunpack.c.l.b16 %v5616
        %v5704 = vunpack.c.h.b16 %v5616
        %v5705 = vunpack.c.l.b16 %v5617
        %v5706 = vunpack.c.l.b16 %v5618
        %v5707 = vunpack.c.h.b16 %v5618
        %v5708 = vunpack.c.l.b16 %v5619
        %v5709 = vunpack.c.l.b16 %v5620
        %v5710 = vunpack.c.h.b16 %v5620
        %v5711 = vunpack.c.l.b16 %v5621
        %v5712 = vunpack.c.l.b16 %v5622
        %v5713 = vunpack.c.h.b16 %v5622
        %v5714 = vunpack.c.l.b16 %v5623
        %v5715 = vunpack.c.l.b16 %v5624
        %v5716 = vunpack.c.h.b16 %v5624
        %v5717 = vunpack.c.l.b16 %v5625
        %v5718 = vunpack.c.l.b16 %v5626
        %v5719 = vunpack.c.h.b16 %v5626
        %v5720 = vunpack.c.l.b16 %v5627
        %v5721 = vunpack.c.l.b16 %v5628
        %v5722 = vunpack.c.h.b16 %v5628
        %v5723 = vunpack.c.l.b16 %v5629
        %v5724 = vunpack.c.l.b16 %v5630
        %v5725 = vunpack.c.h.b16 %v5630
        %v5726 = vunpack.c.l.b16 %v5631
        %v5727 = vpack.c.b16 %v5706, %v5703
        %v5728 = vpack.c.b16 %v5707, %v5704
        %v5729 = vpack.c.b16 %v5708, %v5705
        %v5730 = vpack.c.b16 %v5712, %v5709
        %v5731 = vpack.c.b16 %v5713, %v5710
        %v5732 = vpack.c.b16 %v5714, %v5711
        %v5733 = vpack.c.b16 %v5718, %v5715
        %v5734 = vpack.c.b16 %v5719, %v5716
        %v5735 = vpack.c.b16 %v5720, %v5717
        %v5736 = vpack.c.b16 %v5724, %v5721
        %v5737 = vpack.c.b16 %v5725, %v5722
        %v5738 = vpack.c.b16 %v5726, %v5723
        %v5799 = vunpack.c.l.b16 %v5632
        %v5800 = vunpack.c.l.b16 %v5633
        %v5801 = vunpack.c.l.b16 %v5634
        %v5802 = vunpack.c.l.b16 %v5635
        %v5803 = vunpack.c.l.b16 %v5636
        %v5804 = vunpack.c.l.b16 %v5637
        %v5805 = vunpack.c.l.b16 %v5638
        %v5806 = vunpack.c.l.b16 %v5639
        %v5807 = vunpack.c.l.b16 %v5640
        %v5808 = vunpack.c.l.b16 %v5641
        %v5809 = vunpack.c.l.b16 %v5642
        %v5810 = vunpack.c.l.b16 %v5643
        %v5811 = vunpack.c.l.b16 %v5644
        %v5812 = vunpack.c.l.b16 %v5645
        %v5813 = vunpack.c.l.b16 %v5646
        %v5814 = vunpack.c.l.b16 %v5647
        %v5815 = vunpack.c.l.b16 %v5648
        %v5816 = vunpack.c.l.b16 %v5649
        %v5817 = vunpack.c.l.b16 %v5650
        %v5818 = vunpack.c.l.b16 %v5651
        %v5819 = vunpack.c.l.b16 %v5652
        %v5820 = vunpack.c.l.b16 %v5653
        %v5821 = vunpack.c.l.b16 %v5654
        %v5822 = vunpack.c.l.b16 %v5655
        %v5823 = vunpack.c.l.b16 %v5656
        %v5824 = vunpack.c.l.b16 %v5657
        %v5825 = vunpack.c.l.b16 %v5658
        %v5826 = vunpack.c.l.b16 %v5659
        %v5827 = vunpack.c.l.b16 %v5660
        %v5828 = vunpack.c.l.b16 %v5661
        %v5829 = vunpack.c.l.b16 %v5662
        %v5830 = vunpack.c.l.b16 %v5663
        %v5831 = vunpack.c.l.b16 %v5664
        %v5832 = vunpack.c.l.b16 %v5665
        %v5833 = vunpack.c.l.b16 %v5666
        %v5834 = vunpack.c.l.b16 %v5667
        %v5835 = vunpack.c.l.b16 %v5668
        %v5836 = vunpack.c.l.b16 %v5669
        %v5837 = vunpack.c.l.b16 %v5670
        %v5838 = vunpack.c.l.b16 %v5671
        %v5839 = vunpack.c.l.b16 %v5672
        %v5840 = vunpack.c.l.b16 %v5673
        %v5841 = vunpack.c.l.b16 %v5674
        %v5842 = vunpack.c.l.b16 %v5675
        %v5843 = vunpack.c.l.b16 %v5676
        %v5844 = vunpack.c.l.b16 %v5677
        %v5845 = vunpack.c.l.b16 %v5678
        %v5846 = vunpack.c.l.b16 %v5679
        %v5847 = vpack.c.b16 %v5800, %v5799
        %v5848 = vpack.c.b16 %v5802, %v5801
        %v5849 = vpack.c.b16 %v5804, %v5803
        %v5850 = vpack.c.b16 %v5806, %v5805
        %v5851 = vpack.c.b16 %v5808, %v5807
        %v5852 = vpack.c.b16 %v5810, %v5809
        %v5853 = vpack.c.b16 %v5812, %v5811
        %v5854 = vpack.c.b16 %v5814, %v5813
        %v5855 = vpack.c.b16 %v5816, %v5815
        %v5856 = vpack.c.b16 %v5818, %v5817
        %v5857 = vpack.c.b16 %v5820, %v5819
        %v5858 = vpack.c.b16 %v5822, %v5821
        %v5859 = vpack.c.b16 %v5824, %v5823
        %v5860 = vpack.c.b16 %v5826, %v5825
        %v5861 = vpack.c.b16 %v5828, %v5827
        %v5862 = vpack.c.b16 %v5830, %v5829
        %v5863 = vpack.c.b16 %v5832, %v5831
        %v5864 = vpack.c.b16 %v5834, %v5833
        %v5865 = vpack.c.b16 %v5836, %v5835
        %v5866 = vpack.c.b16 %v5838, %v5837
        %v5867 = vpack.c.b16 %v5840, %v5839
        %v5868 = vpack.c.b16 %v5842, %v5841
        %v5869 = vpack.c.b16 %v5844, %v5843
        %v5870 = vpack.c.b16 %v5846, %v5845
        %5895 = vmatprep.subr.bf16.mxu0 0
        %5896 = vmatpush1.bf16.msra.mxu0 %v5854
        %5897 = vmatprep.subr.bf16.mxu0 0
        %5898 = vmatpush1.bf16.msra.mxu0 %v5853
        %5899 = vmatprep.subr.bf16.mxu0 0
        %5900 = vmatpush1.bf16.msra.mxu0 %v5852
        %5901 = vmatprep.subr.bf16.mxu0 0
        %5902 = vmatpush1.bf16.msra.mxu0 %v5851
        %5903 = vmatprep.subr.bf16.mxu0 0
        %5904 = vmatpush1.bf16.msra.mxu0 %v5850
        %5905 = vmatprep.subr.bf16.mxu0 0
        %5906 = vmatpush1.bf16.msra.mxu0 %v5849
        %5907 = vmatprep.subr.bf16.mxu0 0
        %5908 = vmatpush1.bf16.msra.mxu0 %v5848
        %5909 = vmatprep.subr.bf16.mxu0 0
        %5910 = vmatpush1.bf16.msra.mxu0 %v5847
        %5911 = vmatprep.subr.bf16.mxu0 0
        %5912 = vmatpush2.bf16.msra.mxu0 %v5862
        %5913 = vmatprep.subr.bf16.mxu0 0
        %5914 = vmatpush2.bf16.msra.mxu0 %v5861
        %5915 = vmatprep.subr.bf16.mxu0 0
        %5916 = vmatpush2.bf16.msra.mxu0 %v5860
        %5917 = vmatprep.subr.bf16.mxu0 0
        %5918 = vmatpush2.bf16.msra.mxu0 %v5859
        %5919 = vmatprep.subr.bf16.mxu0 0
        %5920 = vmatpush2.bf16.msra.mxu0 %v5858
        %5921 = vmatprep.subr.bf16.mxu0 0
        %5922 = vmatpush2.bf16.msra.mxu0 %v5857
        %5923 = vmatprep.subr.bf16.mxu0 0
        %5924 = vmatpush2.bf16.msra.mxu0 %v5856
        %5925 = vmatprep.subr.bf16.mxu0 0
        %5926 = vmatpush2.bf16.msra.mxu0 %v5855
        %5927 = vmatprep.mubr.bf16.mxu0 %v5728
        %5928 = vmatmul.mubr.bf16.gmra.mxu0 %v5727
        %v5929 = vpop.f32.mrf.mxu0
        %v5930 = vadd.f32 %v5685, %v5929
        %v5931 = vpop.f32.mrf.mxu0
        %v5932 = vpop.f32.mrf.mxu0
        %v5933 = vadd.f32 %v5685, %v5932
        %v5934 = vpop.f32.mrf.mxu0
        %5935 = vmatprep.mubr.bf16.mxu0 %v5731
        %5936 = vmatmul.mubr.bf16.gmra.mxu0 %v5730
        %v5937 = vpop.f32.mrf.mxu0
        %v5938 = vadd.f32 %v5685, %v5937
        %v5939 = vpop.f32.mrf.mxu0
        %v5940 = vpop.f32.mrf.mxu0
        %v5941 = vadd.f32 %v5685, %v5940
        %v5942 = vpop.f32.mrf.mxu0
        %5943 = vmatprep.mubr.bf16.mxu0 %v5734
        %5944 = vmatmul.mubr.bf16.gmra.mxu0 %v5733
        %v5945 = vpop.f32.mrf.mxu0
        %v5946 = vadd.f32 %v5685, %v5945
        %v5947 = vpop.f32.mrf.mxu0
        %v5948 = vpop.f32.mrf.mxu0
        %v5949 = vadd.f32 %v5685, %v5948
        %v5950 = vpop.f32.mrf.mxu0
        %5951 = vmatprep.mubr.bf16.mxu0 %v5737
        %5952 = vmatmul.mubr.bf16.gmra.mxu0 %v5736
        %v5953 = vpop.f32.mrf.mxu0
        %v5954 = vadd.f32 %v5685, %v5953
        %v5955 = vpop.f32.mrf.mxu0
        %v5956 = vpop.f32.mrf.mxu0
        %v5957 = vadd.f32 %v5685, %v5956
        %v5958 = vpop.f32.mrf.mxu0
        %5959 = vdwg.mxu0
        %5960 = vmatprep.subr.bf16.mxu0 0
        %5961 = vmatpush1.bf16.msra.mxu0 %v5870
        %5962 = vmatprep.subr.bf16.mxu0 0
        %5963 = vmatpush1.bf16.msra.mxu0 %v5869
        %5964 = vmatprep.subr.bf16.mxu0 0
        %5965 = vmatpush1.bf16.msra.mxu0 %v5868
        %5966 = vmatprep.subr.bf16.mxu0 0
        %5967 = vmatpush1.bf16.msra.mxu0 %v5867
        %5968 = vmatprep.subr.bf16.mxu0 0
        %5969 = vmatpush1.bf16.msra.mxu0 %v5866
        %5970 = vmatprep.subr.bf16.mxu0 0
        %5971 = vmatpush1.bf16.msra.mxu0 %v5865
        %5972 = vmatprep.subr.bf16.mxu0 0
        %5973 = vmatpush1.bf16.msra.mxu0 %v5864
        %5974 = vmatprep.subr.bf16.mxu0 0
        %5975 = vmatpush1.bf16.msra.mxu0 %v5863
        %5976 = vmatprep.subr.bf16.mxu0 0
        %5977 = vmatpush2.bf16.msra.mxu0 0
        %5978 = vmatprep.subr.bf16.mxu0 0
        %5979 = vmatpush2.bf16.msra.mxu0 0
        %5980 = vmatprep.subr.bf16.mxu0 0
        %5981 = vmatpush2.bf16.msra.mxu0 0
        %5982 = vmatprep.subr.bf16.mxu0 0
        %5983 = vmatpush2.bf16.msra.mxu0 0
        %5984 = vmatprep.subr.bf16.mxu0 0
        %5985 = vmatpush2.bf16.msra.mxu0 0
        %5986 = vmatprep.subr.bf16.mxu0 0
        %5987 = vmatpush2.bf16.msra.mxu0 0
        %5988 = vmatprep.subr.bf16.mxu0 0
        %5989 = vmatpush2.bf16.msra.mxu0 0
        %5990 = vmatprep.subr.bf16.mxu0 0
        %5991 = vmatpush2.bf16.msra.mxu0 0
        %5992 = vmatprep.mubr.bf16.mxu0 0
        %5993 = vmatmul.mubr.bf16.gmra.mxu0 %v5729
        %v5994 = vpop.f32.mrf.mxu0
        %v5995 = vadd.f32 %v5930, %v5994
        %v5996 = vpop.f32.mrf.mxu0
        %v5997 = vpop.f32.mrf.mxu0
        %v5998 = vadd.f32 %v5933, %v5997
        %v5999 = vpop.f32.mrf.mxu0
        %6000 = vmatprep.mubr.bf16.mxu0 0
        %6001 = vmatmul.mubr.bf16.gmra.mxu0 %v5732
        %v6002 = vpop.f32.mrf.mxu0
        %v6003 = vadd.f32 %v5938, %v6002
        %v6004 = vpop.f32.mrf.mxu0
        %v6005 = vpop.f32.mrf.mxu0
        %v6006 = vadd.f32 %v5941, %v6005
        %v6007 = vpop.f32.mrf.mxu0
        %6008 = vmatprep.mubr.bf16.mxu0 0
        %6009 = vmatmul.mubr.bf16.gmra.mxu0 %v5735
        %v6010 = vpop.f32.mrf.mxu0
        %v6011 = vadd.f32 %v5946, %v6010
        %v6012 = vpop.f32.mrf.mxu0
        %v6013 = vpop.f32.mrf.mxu0
        %v6014 = vadd.f32 %v5949, %v6013
        %v6015 = vpop.f32.mrf.mxu0
        %6016 = vmatprep.mubr.bf16.mxu0 0
        %6017 = vmatmul.mubr.bf16.gmra.mxu0 %v5738
        %v6018 = vpop.f32.mrf.mxu0
        %v6019 = vadd.f32 %v5954, %v6018
        %v6020 = vpop.f32.mrf.mxu0
        %v6021 = vpop.f32.mrf.mxu0
        %v6022 = vadd.f32 %v5957, %v6021
        %v6023 = vpop.f32.mrf.mxu0
        %6024 = vdwg.mxu0
        %v6025 = vmax.f32 %v5995, 0.0
        %v6026 = vmax.f32 %v5998, 0.0
        %v6027 = vmax.f32 %v6003, 0.0
        %v6028 = vmax.f32 %v6006, 0.0
        %v6029 = vmax.f32 %v6011, 0.0
        %v6030 = vmax.f32 %v6014, 0.0
        %v6031 = vmax.f32 %v6019, 0.0
        %v6032 = vmax.f32 %v6022, 0.0
        %v6041 = vcombine.high %v6025, %v6025
        %v6043 = vunpack.c.l.s4 1983009808
        %v6044 = vunpack.c.0.s8 %v6043
        %v6045 = vlaneseq
        %v6046 = vshrl.u32 %v6045, 7
        %v6047 = vsub.s32 %v6044, %v6046
        %v6048 = vrot.slane %v6025, %v6047
        %v6050 = vunpack.c.l.s4 1983009808
        %v6051 = vunpack.c.0.s8 %v6050
        %v6052 = vlaneseq
        %v6053 = vshrl.u32 %v6052, 7
        %v6054 = vsub.s32 %v6051, %v6053
        %v6055 = vrot.slane %v6041, %v6054
        %v6056 = vcombine.high %v6048, %v6048
        %v6057 = vcombine.high %v6055, %v6055
        %v6058 = vcombine.high %v6026, %v6026
        %v6060 = vunpack.c.l.s4 1983009808
        %v6061 = vunpack.c.0.s8 %v6060
        %v6062 = vlaneseq
        %v6063 = vshrl.u32 %v6062, 7
        %v6064 = vsub.s32 %v6061, %v6063
        %v6065 = vrot.slane %v6026, %v6064
        %v6067 = vunpack.c.l.s4 1983009808
        %v6068 = vunpack.c.0.s8 %v6067
        %v6069 = vlaneseq
        %v6070 = vshrl.u32 %v6069, 7
        %v6071 = vsub.s32 %v6068, %v6070
        %v6072 = vrot.slane %v6058, %v6071
        %v6073 = vcombine.high %v6065, %v6065
        %v6074 = vcombine.high %v6072, %v6072
        %v6075 = vcombine.high %v6027, %v6027
        %v6077 = vunpack.c.l.s4 1983009808
        %v6078 = vunpack.c.0.s8 %v6077
        %v6079 = vlaneseq
        %v6080 = vshrl.u32 %v6079, 7
        %v6081 = vsub.s32 %v6078, %v6080
        %v6082 = vrot.slane %v6027, %v6081
        %v6084 = vunpack.c.l.s4 1983009808
        %v6085 = vunpack.c.0.s8 %v6084
        %v6086 = vlaneseq
        %v6087 = vshrl.u32 %v6086, 7
        %v6088 = vsub.s32 %v6085, %v6087
        %v6089 = vrot.slane %v6075, %v6088
        %v6090 = vcombine.high %v6082, %v6082
        %v6091 = vcombine.high %v6089, %v6089
        %v6092 = vcombine.high %v6028, %v6028
        %v6094 = vunpack.c.l.s4 1983009808
        %v6095 = vunpack.c.0.s8 %v6094
        %v6096 = vlaneseq
        %v6097 = vshrl.u32 %v6096, 7
        %v6098 = vsub.s32 %v6095, %v6097
        %v6099 = vrot.slane %v6028, %v6098
        %v6101 = vunpack.c.l.s4 1983009808
        %v6102 = vunpack.c.0.s8 %v6101
        %v6103 = vlaneseq
        %v6104 = vshrl.u32 %v6103, 7
        %v6105 = vsub.s32 %v6102, %v6104
        %v6106 = vrot.slane %v6092, %v6105
        %v6107 = vcombine.high %v6099, %v6099
        %v6108 = vcombine.high %v6106, %v6106
        %v6109 = vcombine.high %v6029, %v6029
        %v6111 = vunpack.c.l.s4 1983009808
        %v6112 = vunpack.c.0.s8 %v6111
        %v6113 = vlaneseq
        %v6114 = vshrl.u32 %v6113, 7
        %v6115 = vsub.s32 %v6112, %v6114
        %v6116 = vrot.slane %v6029, %v6115
        %v6118 = vunpack.c.l.s4 1983009808
        %v6119 = vunpack.c.0.s8 %v6118
        %v6120 = vlaneseq
        %v6121 = vshrl.u32 %v6120, 7
        %v6122 = vsub.s32 %v6119, %v6121
        %v6123 = vrot.slane %v6109, %v6122
        %v6124 = vcombine.high %v6116, %v6116
        %v6125 = vcombine.high %v6123, %v6123
        %v6126 = vcombine.high %v6030, %v6030
        %v6128 = vunpack.c.l.s4 1983009808
        %v6129 = vunpack.c.0.s8 %v6128
        %v6130 = vlaneseq
        %v6131 = vshrl.u32 %v6130, 7
        %v6132 = vsub.s32 %v6129, %v6131
        %v6133 = vrot.slane %v6030, %v6132
        %v6135 = vunpack.c.l.s4 1983009808
        %v6136 = vunpack.c.0.s8 %v6135
        %v6137 = vlaneseq
        %v6138 = vshrl.u32 %v6137, 7
        %v6139 = vsub.s32 %v6136, %v6138
        %v6140 = vrot.slane %v6126, %v6139
        %v6141 = vcombine.high %v6133, %v6133
        %v6142 = vcombine.high %v6140, %v6140
        %v6143 = vcombine.high %v6031, %v6031
        %v6145 = vunpack.c.l.s4 1983009808
        %v6146 = vunpack.c.0.s8 %v6145
        %v6147 = vlaneseq
        %v6148 = vshrl.u32 %v6147, 7
        %v6149 = vsub.s32 %v6146, %v6148
        %v6150 = vrot.slane %v6031, %v6149
        %v6152 = vunpack.c.l.s4 1983009808
        %v6153 = vunpack.c.0.s8 %v6152
        %v6154 = vlaneseq
        %v6155 = vshrl.u32 %v6154, 7
        %v6156 = vsub.s32 %v6153, %v6155
        %v6157 = vrot.slane %v6143, %v6156
        %v6158 = vcombine.high %v6150, %v6150
        %v6159 = vcombine.high %v6157, %v6157
        %v6160 = vcombine.high %v6032, %v6032
        %v6162 = vunpack.c.l.s4 1983009808
        %v6163 = vunpack.c.0.s8 %v6162
        %v6164 = vlaneseq
        %v6165 = vshrl.u32 %v6164, 7
        %v6166 = vsub.s32 %v6163, %v6165
        %v6167 = vrot.slane %v6032, %v6166
        %v6169 = vunpack.c.l.s4 1983009808
        %v6170 = vunpack.c.0.s8 %v6169
        %v6171 = vlaneseq
        %v6172 = vshrl.u32 %v6171, 7
        %v6173 = vsub.s32 %v6170, %v6172
        %v6174 = vrot.slane %v6160, %v6173
        %v6175 = vcombine.high %v6167, %v6167
        %v6176 = vcombine.high %v6174, %v6174
        %vm6209 = vcmask 517120
        %v6210 = vsel %vm6209, %v6048, -inf
        %v6211 = vrot.slane %v6210, 4
        %v6212 = vmax.f32 %v6210, %v6211
        %v6213 = vrot.slane %v6212, 2
        %v6214 = vmax.f32 %v6212, %v6213
        %v6215 = vrot.slane %v6214, 1
        %v6216 = vmax.f32 %v6214, %v6215
        %v6217 = vsel %vm6209, %v6056, -inf
        %v6218 = vrot.slane %v6217, 4
        %v6219 = vmax.f32 %v6217, %v6218
        %v6220 = vrot.slane %v6219, 2
        %v6221 = vmax.f32 %v6219, %v6220
        %v6222 = vrot.slane %v6221, 1
        %v6223 = vmax.f32 %v6221, %v6222
        %v6224 = vsel %vm6209, %v6055, -inf
        %v6225 = vrot.slane %v6224, 4
        %v6226 = vmax.f32 %v6224, %v6225
        %v6227 = vrot.slane %v6226, 2
        %v6228 = vmax.f32 %v6226, %v6227
        %v6229 = vrot.slane %v6228, 1
        %v6230 = vmax.f32 %v6228, %v6229
        %v6231 = vsel %vm6209, %v6057, -inf
        %v6232 = vrot.slane %v6231, 4
        %v6233 = vmax.f32 %v6231, %v6232
        %v6234 = vrot.slane %v6233, 2
        %v6235 = vmax.f32 %v6233, %v6234
        %v6236 = vrot.slane %v6235, 1
        %v6237 = vmax.f32 %v6235, %v6236
        %v6238 = vsel %vm6209, %v6065, -inf
        %v6239 = vrot.slane %v6238, 4
        %v6240 = vmax.f32 %v6238, %v6239
        %v6241 = vrot.slane %v6240, 2
        %v6242 = vmax.f32 %v6240, %v6241
        %v6243 = vrot.slane %v6242, 1
        %v6244 = vmax.f32 %v6242, %v6243
        %v6245 = vsel %vm6209, %v6073, -inf
        %v6246 = vrot.slane %v6245, 4
        %v6247 = vmax.f32 %v6245, %v6246
        %v6248 = vrot.slane %v6247, 2
        %v6249 = vmax.f32 %v6247, %v6248
        %v6250 = vrot.slane %v6249, 1
        %v6251 = vmax.f32 %v6249, %v6250
        %v6252 = vsel %vm6209, %v6072, -inf
        %v6253 = vrot.slane %v6252, 4
        %v6254 = vmax.f32 %v6252, %v6253
        %v6255 = vrot.slane %v6254, 2
        %v6256 = vmax.f32 %v6254, %v6255
        %v6257 = vrot.slane %v6256, 1
        %v6258 = vmax.f32 %v6256, %v6257
        %v6259 = vsel %vm6209, %v6074, -inf
        %v6260 = vrot.slane %v6259, 4
        %v6261 = vmax.f32 %v6259, %v6260
        %v6262 = vrot.slane %v6261, 2
        %v6263 = vmax.f32 %v6261, %v6262
        %v6264 = vrot.slane %v6263, 1
        %v6265 = vmax.f32 %v6263, %v6264
        %v6266 = vsel %vm6209, %v6082, -inf
        %v6267 = vrot.slane %v6266, 4
        %v6268 = vmax.f32 %v6266, %v6267
        %v6269 = vrot.slane %v6268, 2
        %v6270 = vmax.f32 %v6268, %v6269
        %v6271 = vrot.slane %v6270, 1
        %v6272 = vmax.f32 %v6270, %v6271
        %v6273 = vsel %vm6209, %v6090, -inf
        %v6274 = vrot.slane %v6273, 4
        %v6275 = vmax.f32 %v6273, %v6274
        %v6276 = vrot.slane %v6275, 2
        %v6277 = vmax.f32 %v6275, %v6276
        %v6278 = vrot.slane %v6277, 1
        %v6279 = vmax.f32 %v6277, %v6278
        %v6280 = vsel %vm6209, %v6089, -inf
        %v6281 = vrot.slane %v6280, 4
        %v6282 = vmax.f32 %v6280, %v6281
        %v6283 = vrot.slane %v6282, 2
        %v6284 = vmax.f32 %v6282, %v6283
        %v6285 = vrot.slane %v6284, 1
        %v6286 = vmax.f32 %v6284, %v6285
        %v6287 = vsel %vm6209, %v6091, -inf
        %v6288 = vrot.slane %v6287, 4
        %v6289 = vmax.f32 %v6287, %v6288
        %v6290 = vrot.slane %v6289, 2
        %v6291 = vmax.f32 %v6289, %v6290
        %v6292 = vrot.slane %v6291, 1
        %v6293 = vmax.f32 %v6291, %v6292
        %v6294 = vsel %vm6209, %v6099, -inf
        %v6295 = vrot.slane %v6294, 4
        %v6296 = vmax.f32 %v6294, %v6295
        %v6297 = vrot.slane %v6296, 2
        %v6298 = vmax.f32 %v6296, %v6297
        %v6299 = vrot.slane %v6298, 1
        %v6300 = vmax.f32 %v6298, %v6299
        %v6301 = vsel %vm6209, %v6107, -inf
        %v6302 = vrot.slane %v6301, 4
        %v6303 = vmax.f32 %v6301, %v6302
        %v6304 = vrot.slane %v6303, 2
        %v6305 = vmax.f32 %v6303, %v6304
        %v6306 = vrot.slane %v6305, 1
        %v6307 = vmax.f32 %v6305, %v6306
        %v6308 = vsel %vm6209, %v6106, -inf
        %v6309 = vrot.slane %v6308, 4
        %v6310 = vmax.f32 %v6308, %v6309
        %v6311 = vrot.slane %v6310, 2
        %v6312 = vmax.f32 %v6310, %v6311
        %v6313 = vrot.slane %v6312, 1
        %v6314 = vmax.f32 %v6312, %v6313
        %v6315 = vsel %vm6209, %v6108, -inf
        %v6316 = vrot.slane %v6315, 4
        %v6317 = vmax.f32 %v6315, %v6316
        %v6318 = vrot.slane %v6317, 2
        %v6319 = vmax.f32 %v6317, %v6318
        %v6320 = vrot.slane %v6319, 1
        %v6321 = vmax.f32 %v6319, %v6320
        %v6322 = vsel %vm6209, %v6116, -inf
        %v6323 = vrot.slane %v6322, 4
        %v6324 = vmax.f32 %v6322, %v6323
        %v6325 = vrot.slane %v6324, 2
        %v6326 = vmax.f32 %v6324, %v6325
        %v6327 = vrot.slane %v6326, 1
        %v6328 = vmax.f32 %v6326, %v6327
        %v6329 = vsel %vm6209, %v6124, -inf
        %v6330 = vrot.slane %v6329, 4
        %v6331 = vmax.f32 %v6329, %v6330
        %v6332 = vrot.slane %v6331, 2
        %v6333 = vmax.f32 %v6331, %v6332
        %v6334 = vrot.slane %v6333, 1
        %v6335 = vmax.f32 %v6333, %v6334
        %v6336 = vsel %vm6209, %v6123, -inf
        %v6337 = vrot.slane %v6336, 4
        %v6338 = vmax.f32 %v6336, %v6337
        %v6339 = vrot.slane %v6338, 2
        %v6340 = vmax.f32 %v6338, %v6339
        %v6341 = vrot.slane %v6340, 1
        %v6342 = vmax.f32 %v6340, %v6341
        %v6343 = vsel %vm6209, %v6125, -inf
        %v6344 = vrot.slane %v6343, 4
        %v6345 = vmax.f32 %v6343, %v6344
        %v6346 = vrot.slane %v6345, 2
        %v6347 = vmax.f32 %v6345, %v6346
        %v6348 = vrot.slane %v6347, 1
        %v6349 = vmax.f32 %v6347, %v6348
        %v6350 = vsel %vm6209, %v6133, -inf
        %v6351 = vrot.slane %v6350, 4
        %v6352 = vmax.f32 %v6350, %v6351
        %v6353 = vrot.slane %v6352, 2
        %v6354 = vmax.f32 %v6352, %v6353
        %v6355 = vrot.slane %v6354, 1
        %v6356 = vmax.f32 %v6354, %v6355
        %v6357 = vsel %vm6209, %v6141, -inf
        %v6358 = vrot.slane %v6357, 4
        %v6359 = vmax.f32 %v6357, %v6358
        %v6360 = vrot.slane %v6359, 2
        %v6361 = vmax.f32 %v6359, %v6360
        %v6362 = vrot.slane %v6361, 1
        %v6363 = vmax.f32 %v6361, %v6362
        %v6364 = vsel %vm6209, %v6140, -inf
        %v6365 = vrot.slane %v6364, 4
        %v6366 = vmax.f32 %v6364, %v6365
        %v6367 = vrot.slane %v6366, 2
        %v6368 = vmax.f32 %v6366, %v6367
        %v6369 = vrot.slane %v6368, 1
        %v6370 = vmax.f32 %v6368, %v6369
        %v6371 = vsel %vm6209, %v6142, -inf
        %v6372 = vrot.slane %v6371, 4
        %v6373 = vmax.f32 %v6371, %v6372
        %v6374 = vrot.slane %v6373, 2
        %v6375 = vmax.f32 %v6373, %v6374
        %v6376 = vrot.slane %v6375, 1
        %v6377 = vmax.f32 %v6375, %v6376
        %v6378 = vsel %vm6209, %v6150, -inf
        %v6379 = vrot.slane %v6378, 4
        %v6380 = vmax.f32 %v6378, %v6379
        %v6381 = vrot.slane %v6380, 2
        %v6382 = vmax.f32 %v6380, %v6381
        %v6383 = vrot.slane %v6382, 1
        %v6384 = vmax.f32 %v6382, %v6383
        %v6385 = vsel %vm6209, %v6158, -inf
        %v6386 = vrot.slane %v6385, 4
        %v6387 = vmax.f32 %v6385, %v6386
        %v6388 = vrot.slane %v6387, 2
        %v6389 = vmax.f32 %v6387, %v6388
        %v6390 = vrot.slane %v6389, 1
        %v6391 = vmax.f32 %v6389, %v6390
        %v6392 = vsel %vm6209, %v6157, -inf
        %v6393 = vrot.slane %v6392, 4
        %v6394 = vmax.f32 %v6392, %v6393
        %v6395 = vrot.slane %v6394, 2
        %v6396 = vmax.f32 %v6394, %v6395
        %v6397 = vrot.slane %v6396, 1
        %v6398 = vmax.f32 %v6396, %v6397
        %v6399 = vsel %vm6209, %v6159, -inf
        %v6400 = vrot.slane %v6399, 4
        %v6401 = vmax.f32 %v6399, %v6400
        %v6402 = vrot.slane %v6401, 2
        %v6403 = vmax.f32 %v6401, %v6402
        %v6404 = vrot.slane %v6403, 1
        %v6405 = vmax.f32 %v6403, %v6404
        %v6406 = vsel %vm6209, %v6167, -inf
        %v6407 = vrot.slane %v6406, 4
        %v6408 = vmax.f32 %v6406, %v6407
        %v6409 = vrot.slane %v6408, 2
        %v6410 = vmax.f32 %v6408, %v6409
        %v6411 = vrot.slane %v6410, 1
        %v6412 = vmax.f32 %v6410, %v6411
        %v6413 = vsel %vm6209, %v6175, -inf
        %v6414 = vrot.slane %v6413, 4
        %v6415 = vmax.f32 %v6413, %v6414
        %v6416 = vrot.slane %v6415, 2
        %v6417 = vmax.f32 %v6415, %v6416
        %v6418 = vrot.slane %v6417, 1
        %v6419 = vmax.f32 %v6417, %v6418
        %v6420 = vsel %vm6209, %v6174, -inf
        %v6421 = vrot.slane %v6420, 4
        %v6422 = vmax.f32 %v6420, %v6421
        %v6423 = vrot.slane %v6422, 2
        %v6424 = vmax.f32 %v6422, %v6423
        %v6425 = vrot.slane %v6424, 1
        %v6426 = vmax.f32 %v6424, %v6425
        %v6427 = vsel %vm6209, %v6176, -inf
        %v6428 = vrot.slane %v6427, 4
        %v6429 = vmax.f32 %v6427, %v6428
        %v6430 = vrot.slane %v6429, 2
        %v6431 = vmax.f32 %v6429, %v6430
        %v6432 = vrot.slane %v6431, 1
        %v6433 = vmax.f32 %v6431, %v6432
        %vm6434 = vcmask 523264
        %v6435 = vsel %vm6434, %v6216, -inf
        %v6436 = vsel %vm6434, %v6244, -inf
        %v6437 = vmax.f32 %v6435, %v6436
        %v6438 = vsel %vm6434, %v6223, -inf
        %v6439 = vsel %vm6434, %v6251, -inf
        %v6440 = vmax.f32 %v6438, %v6439
        %v6441 = vsel %vm6434, %v6230, -inf
        %v6442 = vsel %vm6434, %v6258, -inf
        %v6443 = vmax.f32 %v6441, %v6442
        %v6444 = vsel %vm6434, %v6237, -inf
        %v6445 = vsel %vm6434, %v6265, -inf
        %v6446 = vmax.f32 %v6444, %v6445
        %v6447 = vsel %vm6434, %v6272, -inf
        %v6448 = vsel %vm6434, %v6300, -inf
        %v6449 = vmax.f32 %v6447, %v6448
        %v6450 = vsel %vm6434, %v6279, -inf
        %v6451 = vsel %vm6434, %v6307, -inf
        %v6452 = vmax.f32 %v6450, %v6451
        %v6453 = vsel %vm6434, %v6286, -inf
        %v6454 = vsel %vm6434, %v6314, -inf
        %v6455 = vmax.f32 %v6453, %v6454
        %v6456 = vsel %vm6434, %v6293, -inf
        %v6457 = vsel %vm6434, %v6321, -inf
        %v6458 = vmax.f32 %v6456, %v6457
        %v6459 = vsel %vm6434, %v6328, -inf
        %v6460 = vsel %vm6434, %v6356, -inf
        %v6461 = vmax.f32 %v6459, %v6460
        %v6462 = vsel %vm6434, %v6335, -inf
        %v6463 = vsel %vm6434, %v6363, -inf
        %v6464 = vmax.f32 %v6462, %v6463
        %v6465 = vsel %vm6434, %v6342, -inf
        %v6466 = vsel %vm6434, %v6370, -inf
        %v6467 = vmax.f32 %v6465, %v6466
        %v6468 = vsel %vm6434, %v6349, -inf
        %v6469 = vsel %vm6434, %v6377, -inf
        %v6470 = vmax.f32 %v6468, %v6469
        %v6471 = vsel %vm6434, %v6384, -inf
        %v6472 = vsel %vm6434, %v6412, -inf
        %v6473 = vmax.f32 %v6471, %v6472
        %v6474 = vsel %vm6434, %v6391, -inf
        %v6475 = vsel %vm6434, %v6419, -inf
        %v6476 = vmax.f32 %v6474, %v6475
        %v6477 = vsel %vm6434, %v6398, -inf
        %v6478 = vsel %vm6434, %v6426, -inf
        %v6479 = vmax.f32 %v6477, %v6478
        %v6480 = vsel %vm6434, %v6405, -inf
        %v6481 = vsel %vm6434, %v6433, -inf
        %v6482 = vmax.f32 %v6480, %v6481
        %v6483 = vpack.c.bf16 %v6437, %v6437
        %vm6484 = vcmask 516096
        %vm6485 = vsmask.f32 256
        %vm6486 = vmand %vm6484, %vm6485
        %v6487 = vld [vmem:[#allocation6] sm:$0x1]
        %v6488 = vsel %vm6486, %v6483, %v6487
        %6489 = vst [vmem:[#allocation6] sm:$0x1] %v6488
        %v6490 = vpack.c.bf16 %v6440, %v6440
        %v6493 = vunpack.c.l.s4 1966171168
        %v6494 = vunpack.c.0.s8 %v6493
        %v6495 = vlaneseq
        %v6496 = vshrl.u32 %v6495, 7
        %v6497 = vsub.s32 %v6494, %v6496
        %v6498 = vrot.slane %v6490, %v6497
        %v6500 = vunpack.c.l.s4 1966171168
        %v6501 = vunpack.c.0.s8 %v6500
        %v6502 = vlaneseq
        %v6503 = vshrl.u32 %v6502, 7
        %v6504 = vsub.s32 %v6501, %v6503
        %v6505 = vrot.slane %v6498, %v6504
        %6506 = vrot.lane.b32.xlu0 %v6505, 64
        %v6507 = vpop.permute.xlu0 %6506
        %vm6509 = vcmask 1040896
        %vm6510 = vmand %vm6509, %vm6485
        %v6511 = vld [vmem:[#allocation6] sm:$0x1]
        %v6512 = vsel %vm6510, %v6507, %v6511
        %6513 = vst [vmem:[#allocation6] sm:$0x1] %v6512
        %v6514 = vpack.c.bf16 %v6443, %v6443
        %v6515 = vld [vmem:[#allocation6 + $0x1] sm:$0x1]
        %v6516 = vsel %vm6486, %v6514, %v6515
        %6517 = vst [vmem:[#allocation6 + $0x1] sm:$0x1] %v6516
        %v6518 = vpack.c.bf16 %v6446, %v6446
        %v6521 = vunpack.c.l.s4 1966171168
        %v6522 = vunpack.c.0.s8 %v6521
        %v6523 = vlaneseq
        %v6524 = vshrl.u32 %v6523, 7
        %v6525 = vsub.s32 %v6522, %v6524
        %v6526 = vrot.slane %v6518, %v6525
        %v6528 = vunpack.c.l.s4 1966171168
        %v6529 = vunpack.c.0.s8 %v6528
        %v6530 = vlaneseq
        %v6531 = vshrl.u32 %v6530, 7
        %v6532 = vsub.s32 %v6529, %v6531
        %v6533 = vrot.slane %v6526, %v6532
        %6534 = vrot.lane.b32.xlu0 %v6533, 64
        %v6535 = vpop.permute.xlu0 %6534
        %v6537 = vld [vmem:[#allocation6 + $0x1] sm:$0x1]
        %v6538 = vsel %vm6510, %v6535, %v6537
        %6539 = vst [vmem:[#allocation6 + $0x1] sm:$0x1] %v6538
        %v6540 = vpack.c.bf16 %v6449, %v6449
        %v6541 = vld [vmem:[#allocation6 + $0x2] sm:$0x1]
        %v6542 = vsel %vm6486, %v6540, %v6541
        %6543 = vst [vmem:[#allocation6 + $0x2] sm:$0x1] %v6542
        %v6544 = vpack.c.bf16 %v6452, %v6452
        %v6547 = vunpack.c.l.s4 1966171168
        %v6548 = vunpack.c.0.s8 %v6547
        %v6549 = vlaneseq
        %v6550 = vshrl.u32 %v6549, 7
        %v6551 = vsub.s32 %v6548, %v6550
        %v6552 = vrot.slane %v6544, %v6551
        %v6554 = vunpack.c.l.s4 1966171168
        %v6555 = vunpack.c.0.s8 %v6554
        %v6556 = vlaneseq
        %v6557 = vshrl.u32 %v6556, 7
        %v6558 = vsub.s32 %v6555, %v6557
        %v6559 = vrot.slane %v6552, %v6558
        %6560 = vrot.lane.b32.xlu0 %v6559, 64
        %v6561 = vpop.permute.xlu0 %6560
        %v6563 = vld [vmem:[#allocation6 + $0x2] sm:$0x1]
        %v6564 = vsel %vm6510, %v6561, %v6563
        %6565 = vst [vmem:[#allocation6 + $0x2] sm:$0x1] %v6564
        %v6566 = vpack.c.bf16 %v6455, %v6455
        %v6567 = vld [vmem:[#allocation6 + $0x3] sm:$0x1]
        %v6568 = vsel %vm6486, %v6566, %v6567
        %6569 = vst [vmem:[#allocation6 + $0x3] sm:$0x1] %v6568
        %v6570 = vpack.c.bf16 %v6458, %v6458
        %v6573 = vunpack.c.l.s4 1966171168
        %v6574 = vunpack.c.0.s8 %v6573
        %v6575 = vlaneseq
        %v6576 = vshrl.u32 %v6575, 7
        %v6577 = vsub.s32 %v6574, %v6576
        %v6578 = vrot.slane %v6570, %v6577
        %v6580 = vunpack.c.l.s4 1966171168
        %v6581 = vunpack.c.0.s8 %v6580
        %v6582 = vlaneseq
        %v6583 = vshrl.u32 %v6582, 7
        %v6584 = vsub.s32 %v6581, %v6583
        %v6585 = vrot.slane %v6578, %v6584
        %6586 = vrot.lane.b32.xlu0 %v6585, 64
        %v6587 = vpop.permute.xlu0 %6586
        %v6589 = vld [vmem:[#allocation6 + $0x3] sm:$0x1]
        %v6590 = vsel %vm6510, %v6587, %v6589
        %6591 = vst [vmem:[#allocation6 + $0x3] sm:$0x1] %v6590
        %v6592 = vpack.c.bf16 %v6461, %v6461
        %v6593 = vld [vmem:[#allocation6 + $0x4] sm:$0x1]
        %v6594 = vsel %vm6486, %v6592, %v6593
        %6595 = vst [vmem:[#allocation6 + $0x4] sm:$0x1] %v6594
        %v6596 = vpack.c.bf16 %v6464, %v6464
        %v6599 = vunpack.c.l.s4 1966171168
        %v6600 = vunpack.c.0.s8 %v6599
        %v6601 = vlaneseq
        %v6602 = vshrl.u32 %v6601, 7
        %v6603 = vsub.s32 %v6600, %v6602
        %v6604 = vrot.slane %v6596, %v6603
        %v6606 = vunpack.c.l.s4 1966171168
        %v6607 = vunpack.c.0.s8 %v6606
        %v6608 = vlaneseq
        %v6609 = vshrl.u32 %v6608, 7
        %v6610 = vsub.s32 %v6607, %v6609
        %v6611 = vrot.slane %v6604, %v6610
        %6612 = vrot.lane.b32.xlu0 %v6611, 64
        %v6613 = vpop.permute.xlu0 %6612
        %v6615 = vld [vmem:[#allocation6 + $0x4] sm:$0x1]
        %v6616 = vsel %vm6510, %v6613, %v6615
        %6617 = vst [vmem:[#allocation6 + $0x4] sm:$0x1] %v6616
        %v6618 = vpack.c.bf16 %v6467, %v6467
        %v6619 = vld [vmem:[#allocation6 + $0x5] sm:$0x1]
        %v6620 = vsel %vm6486, %v6618, %v6619
        %6621 = vst [vmem:[#allocation6 + $0x5] sm:$0x1] %v6620
        %v6622 = vpack.c.bf16 %v6470, %v6470
        %v6625 = vunpack.c.l.s4 1966171168
        %v6626 = vunpack.c.0.s8 %v6625
        %v6627 = vlaneseq
        %v6628 = vshrl.u32 %v6627, 7
        %v6629 = vsub.s32 %v6626, %v6628
        %v6630 = vrot.slane %v6622, %v6629
        %v6632 = vunpack.c.l.s4 1966171168
        %v6633 = vunpack.c.0.s8 %v6632
        %v6634 = vlaneseq
        %v6635 = vshrl.u32 %v6634, 7
        %v6636 = vsub.s32 %v6633, %v6635
        %v6637 = vrot.slane %v6630, %v6636
        %6638 = vrot.lane.b32.xlu0 %v6637, 64
        %v6639 = vpop.permute.xlu0 %6638
        %v6641 = vld [vmem:[#allocation6 + $0x5] sm:$0x1]
        %v6642 = vsel %vm6510, %v6639, %v6641
        %6643 = vst [vmem:[#allocation6 + $0x5] sm:$0x1] %v6642
        %v6644 = vpack.c.bf16 %v6473, %v6473
        %v6645 = vld [vmem:[#allocation6 + $0x6] sm:$0x1]
        %v6646 = vsel %vm6486, %v6644, %v6645
        %6647 = vst [vmem:[#allocation6 + $0x6] sm:$0x1] %v6646
        %v6648 = vpack.c.bf16 %v6476, %v6476
        %v6651 = vunpack.c.l.s4 1966171168
        %v6652 = vunpack.c.0.s8 %v6651
        %v6653 = vlaneseq
        %v6654 = vshrl.u32 %v6653, 7
        %v6655 = vsub.s32 %v6652, %v6654
        %v6656 = vrot.slane %v6648, %v6655
        %v6658 = vunpack.c.l.s4 1966171168
        %v6659 = vunpack.c.0.s8 %v6658
        %v6660 = vlaneseq
        %v6661 = vshrl.u32 %v6660, 7
        %v6662 = vsub.s32 %v6659, %v6661
        %v6663 = vrot.slane %v6656, %v6662
        %6664 = vrot.lane.b32.xlu0 %v6663, 64
        %v6665 = vpop.permute.xlu0 %6664
        %v6667 = vld [vmem:[#allocation6 + $0x6] sm:$0x1]
        %v6668 = vsel %vm6510, %v6665, %v6667
        %6669 = vst [vmem:[#allocation6 + $0x6] sm:$0x1] %v6668
        %v6670 = vpack.c.bf16 %v6479, %v6479
        %v6671 = vld [vmem:[#allocation6 + $0x7] sm:$0x1]
        %v6672 = vsel %vm6486, %v6670, %v6671
        %6673 = vst [vmem:[#allocation6 + $0x7] sm:$0x1] %v6672
        %v6674 = vpack.c.bf16 %v6482, %v6482
        %v6677 = vunpack.c.l.s4 1966171168
        %v6678 = vunpack.c.0.s8 %v6677
        %v6679 = vlaneseq
        %v6680 = vshrl.u32 %v6679, 7
        %v6681 = vsub.s32 %v6678, %v6680
        %v6682 = vrot.slane %v6674, %v6681
        %v6684 = vunpack.c.l.s4 1966171168
        %v6685 = vunpack.c.0.s8 %v6684
        %v6686 = vlaneseq
        %v6687 = vshrl.u32 %v6686, 7
        %v6688 = vsub.s32 %v6685, %v6687
        %v6689 = vrot.slane %v6682, %v6688
        %6690 = vrot.lane.b32.xlu0 %v6689, 64
        %v6691 = vpop.permute.xlu0 %6690
        %v6693 = vld [vmem:[#allocation6 + $0x7] sm:$0x1]
        %v6694 = vsel %vm6510, %v6691, %v6693
        %6695 = vst [vmem:[#allocation6 + $0x7] sm:$0x1] %v6694
        %v6696 = vld [vmem:[#allocation6] sm:$0xff]
        %v6697 = vld [vmem:[%s5] sm:$0xf]
        %v6698 = vld [vmem:[%s5 + $0x4] sm:$0xf]
        %v6699 = vld [vmem:[%s5 + $0x8] sm:$0xf]
        %v6700 = vld [vmem:[%s5 + $0xc] sm:$0xf]
        %v6701 = vld [vmem:[%s5 + $0x10] sm:$0xf]
        %v6702 = vld [vmem:[%s5 + $0x14] sm:$0xf]
        %v6703 = vld [vmem:[%s5 + $0x18] sm:$0xf]
        %v6704 = vld [vmem:[%s5 + $0x1c] sm:$0xf]
        %v6705 = vld [vmem:[%s5 + $0x20] sm:$0xf]
        %v6706 = vld [vmem:[%s5 + $0x24] sm:$0xf]
        %v6707 = vld [vmem:[%s5 + $0x28] sm:$0xf]
        %v6708 = vld [vmem:[%s5 + $0x2c] sm:$0xf]
        %v6709 = vld [vmem:[%s5 + $0x30] sm:$0xf]
        %v6710 = vld [vmem:[%s5 + $0x34] sm:$0xf]
        %v6711 = vld [vmem:[%s5 + $0x38] sm:$0xf]
        %v6712 = vld [vmem:[%s5 + $0x3c] sm:$0xf]
        %v6713 = vld [vmem:[%s5 + $0x40] sm:$0xf]
        %v6714 = vld [vmem:[%s5 + $0x44] sm:$0xf]
        %v6715 = vld [vmem:[%s5 + $0x48] sm:$0xf]
        %v6716 = vld [vmem:[%s5 + $0x4c] sm:$0xf]
        %v6717 = vld [vmem:[%s5 + $0x50] sm:$0xf]
        %v6718 = vld [vmem:[%s5 + $0x54] sm:$0xf]
        %v6719 = vld [vmem:[%s5 + $0x58] sm:$0xf]
        %v6720 = vld [vmem:[%s5 + $0x5c] sm:$0xf]
        %v6721 = vld [vmem:[%s5 + $0x60] sm:$0xf]
        %v6722 = vld [vmem:[%s5 + $0x64] sm:$0xf]
        %v6723 = vld [vmem:[%s5 + $0x68] sm:$0xf]
        %v6724 = vld [vmem:[%s5 + $0x6c] sm:$0xf]
        %v6725 = vld [vmem:[%s5 + $0x70] sm:$0xf]
        %v6726 = vld [vmem:[%s5 + $0x74] sm:$0xf]
        %v6727 = vld [vmem:[%s5 + $0x78] sm:$0xf]
        %v6728 = vld [vmem:[%s5 + $0x7c] sm:$0xf]
        %v6729 = vld [vmem:[%s5 + $0x80] sm:$0xf]
        %v6730 = vld [vmem:[%s5 + $0x84] sm:$0xf]
        %v6731 = vld [vmem:[%s5 + $0x88] sm:$0xf]
        %v6732 = vld [vmem:[%s5 + $0x8c] sm:$0xf]
        %v6733 = vld [vmem:[%s5 + $0x90] sm:$0xf]
        %v6734 = vld [vmem:[%s5 + $0x94] sm:$0xf]
        %v6735 = vld [vmem:[%s5 + $0x98] sm:$0xf]
        %v6736 = vld [vmem:[%s5 + $0x9c] sm:$0xf]
        %v6737 = vld [vmem:[%s5 + $0xa0] sm:$0xf]
        %v6738 = vld [vmem:[%s5 + $0xa4] sm:$0xf]
        %v6739 = vld [vmem:[%s5 + $0xa8] sm:$0xf]
        %v6740 = vld [vmem:[%s5 + $0xac] sm:$0xf]
        %v6741 = vld [vmem:[%s5 + $0xb0] sm:$0xf]
        %v6742 = vld [vmem:[%s5 + $0xb4] sm:$0xf]
        %v6743 = vld [vmem:[%s5 + $0xb8] sm:$0xf]
        %v6744 = vld [vmem:[%s5 + $0xbc] sm:$0xf]
        %v6745 = vld [vmem:[%s5 + $0xc0] sm:$0xf]
        %v6746 = vld [vmem:[%s5 + $0xc4] sm:$0xf]
        %v6747 = vld [vmem:[%s5 + $0xc8] sm:$0xf]
        %v6748 = vld [vmem:[%s5 + $0xcc] sm:$0xf]
        %v6749 = vld [vmem:[%s5 + $0xd0] sm:$0xf]
        %v6750 = vld [vmem:[%s5 + $0xd4] sm:$0xf]
        %v6751 = vld [vmem:[%s5 + $0xd8] sm:$0xf]
        %v6752 = vld [vmem:[%s5 + $0xdc] sm:$0xf]
        %v6753 = vld [vmem:[%s5 + $0xe0] sm:$0xf]
        %v6754 = vld [vmem:[%s5 + $0xe4] sm:$0xf]
        %v6755 = vld [vmem:[%s5 + $0xe8] sm:$0xf]
        %v6756 = vld [vmem:[%s5 + $0xec] sm:$0xf]
        %v6757 = vld [vmem:[%s5 + $0xf0] sm:$0xf]
        %v6758 = vld [vmem:[%s5 + $0xf4] sm:$0xf]
        %v6759 = vld [vmem:[%s5 + $0xf8] sm:$0xf]
        %v6760 = vld [vmem:[%s5 + $0xfc] sm:$0xf]
        %v6761 = vld [vmem:[%s5 + $0x100] sm:$0xf]
        %v6762 = vld [vmem:[%s5 + $0x104] sm:$0xf]
        %v6763 = vld [vmem:[%s5 + $0x108] sm:$0xf]
        %v6764 = vld [vmem:[%s5 + $0x10c] sm:$0xf]
        %v6765 = vld [vmem:[%s5 + $0x110] sm:$0xf]
        %v6766 = vld [vmem:[%s5 + $0x114] sm:$0xf]
        %v6767 = vld [vmem:[%s5 + $0x118] sm:$0xf]
        %v6768 = vld [vmem:[%s5 + $0x11c] sm:$0xf]
        %v6769 = vld [vmem:[%s5 + $0x120] sm:$0xf]
        %v6770 = vld [vmem:[%s5 + $0x124] sm:$0xf]
        %v6771 = vld [vmem:[%s5 + $0x128] sm:$0xf]
        %v6772 = vld [vmem:[%s5 + $0x12c] sm:$0xf]
        %v6773 = vld [vmem:[%s5 + $0x130] sm:$0xf]
        %v6774 = vld [vmem:[%s5 + $0x134] sm:$0xf]
        %v6775 = vld [vmem:[%s5 + $0x138] sm:$0xf]
        %v6776 = vld [vmem:[%s5 + $0x13c] sm:$0xf]
        %v6777 = vld [vmem:[%s5 + $0x140] sm:$0xf]
        %v6778 = vld [vmem:[%s5 + $0x144] sm:$0xf]
        %v6779 = vld [vmem:[%s5 + $0x148] sm:$0xf]
        %v6780 = vld [vmem:[%s5 + $0x14c] sm:$0xf]
        %v6781 = vld [vmem:[%s5 + $0x150] sm:$0xf]
        %v6782 = vld [vmem:[%s5 + $0x154] sm:$0xf]
        %v6783 = vld [vmem:[%s5 + $0x158] sm:$0xf]
        %v6784 = vld [vmem:[%s5 + $0x15c] sm:$0xf]
        %v6785 = vld [vmem:[%s5 + $0x160] sm:$0xf]
        %v6786 = vld [vmem:[%s5 + $0x164] sm:$0xf]
        %v6787 = vld [vmem:[%s5 + $0x168] sm:$0xf]
        %v6788 = vld [vmem:[%s5 + $0x16c] sm:$0xf]
        %v6789 = vld [vmem:[%s5 + $0x170] sm:$0xf]
        %v6790 = vld [vmem:[%s5 + $0x174] sm:$0xf]
        %v6791 = vld [vmem:[%s5 + $0x178] sm:$0xf]
        %v6792 = vld [vmem:[%s5 + $0x17c] sm:$0xf]
        %v6793 = vld [vmem:[%s5 + $0x180] sm:$0xf]
        %v6794 = vld [vmem:[%s5 + $0x184] sm:$0xf]
        %v6795 = vld [vmem:[%s5 + $0x188] sm:$0xf]
        %v6796 = vld [vmem:[%s5 + $0x18c] sm:$0xf]
        %v6797 = vld [vmem:[%s5 + $0x190] sm:$0xf]
        %v6798 = vld [vmem:[%s5 + $0x194] sm:$0xf]
        %v6799 = vld [vmem:[%s5 + $0x198] sm:$0xf]
        %v6800 = vld [vmem:[%s5 + $0x19c] sm:$0xf]
        %v6801 = vld [vmem:[%s5 + $0x1a0] sm:$0xf]
        %v6802 = vld [vmem:[%s5 + $0x1a4] sm:$0xf]
        %v6803 = vld [vmem:[%s5 + $0x1a8] sm:$0xf]
        %v6804 = vld [vmem:[%s5 + $0x1ac] sm:$0xf]
        %v6805 = vld [vmem:[%s5 + $0x1b0] sm:$0xf]
        %v6806 = vld [vmem:[%s5 + $0x1b4] sm:$0xf]
        %v6807 = vld [vmem:[%s5 + $0x1b8] sm:$0xf]
        %v6808 = vld [vmem:[%s5 + $0x1bc] sm:$0xf]
        %v6809 = vld [vmem:[%s5 + $0x1c0] sm:$0xf]
        %v6810 = vld [vmem:[%s5 + $0x1c4] sm:$0xf]
        %v6811 = vld [vmem:[%s5 + $0x1c8] sm:$0xf]
        %v6812 = vld [vmem:[%s5 + $0x1cc] sm:$0xf]
        %v6813 = vld [vmem:[%s5 + $0x1d0] sm:$0xf]
        %v6814 = vld [vmem:[%s5 + $0x1d4] sm:$0xf]
        %v6815 = vld [vmem:[%s5 + $0x1d8] sm:$0xf]
        %v6816 = vld [vmem:[%s5 + $0x1dc] sm:$0xf]
        %v6817 = vld [vmem:[%s5 + $0x1e0] sm:$0xf]
        %v6818 = vld [vmem:[%s5 + $0x1e4] sm:$0xf]
        %v6819 = vld [vmem:[%s5 + $0x1e8] sm:$0xf]
        %v6820 = vld [vmem:[%s5 + $0x1ec] sm:$0xf]
        %v6821 = vld [vmem:[%s5 + $0x1f0] sm:$0xf]
        %v6822 = vld [vmem:[%s5 + $0x1f4] sm:$0xf]
        %v6823 = vld [vmem:[%s5 + $0x1f8] sm:$0xf]
        %v6824 = vld [vmem:[%s5 + $0x1fc] sm:$0xf]
        %v6825 = vld [vmem:[%s6] sm:$0x1]
        %v6827 = vcombine.high %v6696, %v6696
        %v6829 = vunpack.c.l.s4 1966171168
        %v6830 = vunpack.c.0.s8 %v6829
        %v6831 = vlaneseq
        %v6832 = vshrl.u32 %v6831, 7
        %v6833 = vsub.s32 %v6830, %v6832
        %v6834 = vrot.slane %v6696, %v6833
        %v6836 = vunpack.c.l.s4 1966171168
        %v6837 = vunpack.c.0.s8 %v6836
        %v6838 = vlaneseq
        %v6839 = vshrl.u32 %v6838, 7
        %v6840 = vsub.s32 %v6837, %v6839
        %v6841 = vrot.slane %v6827, %v6840
        %v6842 = vcombine.high %v6834, %v6834
        %v6843 = vcombine.high %v6841, %v6841
        %v6845 = vunpack.c.l.s4 1966171168
        %v6846 = vunpack.c.0.s8 %v6845
        %v6847 = vlaneseq
        %v6848 = vshrl.u32 %v6847, 7
        %v6849 = vsub.s32 %v6846, %v6848
        %v6850 = vrot.slane %v6834, %v6849
        %v6852 = vunpack.c.l.s4 1966171168
        %v6853 = vunpack.c.0.s8 %v6852
        %v6854 = vlaneseq
        %v6855 = vshrl.u32 %v6854, 7
        %v6856 = vsub.s32 %v6853, %v6855
        %v6857 = vrot.slane %v6841, %v6856
        %v6859 = vunpack.c.l.s4 1966171168
        %v6860 = vunpack.c.0.s8 %v6859
        %v6861 = vlaneseq
        %v6862 = vshrl.u32 %v6861, 7
        %v6863 = vsub.s32 %v6860, %v6862
        %v6864 = vrot.slane %v6842, %v6863
        %v6866 = vunpack.c.l.s4 1966171168
        %v6867 = vunpack.c.0.s8 %v6866
        %v6868 = vlaneseq
        %v6869 = vshrl.u32 %v6868, 7
        %v6870 = vsub.s32 %v6867, %v6869
        %v6871 = vrot.slane %v6843, %v6870
        %v6872 = vcombine.high %v6850, %v6850
        %v6873 = vcombine.high %v6857, %v6857
        %v6874 = vcombine.high %v6864, %v6864
        %v6875 = vcombine.high %v6871, %v6871
        %v7012 = vunpack.c.l.b16 %v6697
        %v7013 = vunpack.c.l.b16 %v6698
        %v7014 = vunpack.c.l.b16 %v6699
        %v7015 = vunpack.c.l.b16 %v6700
        %v7016 = vunpack.c.l.b16 %v6701
        %v7017 = vunpack.c.l.b16 %v6702
        %v7018 = vunpack.c.l.b16 %v6703
        %v7019 = vunpack.c.l.b16 %v6704
        %v7020 = vunpack.c.l.b16 %v6705
        %v7021 = vunpack.c.l.b16 %v6706
        %v7022 = vunpack.c.l.b16 %v6707
        %v7023 = vunpack.c.l.b16 %v6708
        %v7024 = vunpack.c.l.b16 %v6709
        %v7025 = vunpack.c.l.b16 %v6710
        %v7026 = vunpack.c.l.b16 %v6711
        %v7027 = vunpack.c.l.b16 %v6712
        %v7028 = vunpack.c.l.b16 %v6713
        %v7029 = vunpack.c.l.b16 %v6714
        %v7030 = vunpack.c.l.b16 %v6715
        %v7031 = vunpack.c.l.b16 %v6716
        %v7032 = vunpack.c.l.b16 %v6717
        %v7033 = vunpack.c.l.b16 %v6718
        %v7034 = vunpack.c.l.b16 %v6719
        %v7035 = vunpack.c.l.b16 %v6720
        %v7036 = vunpack.c.l.b16 %v6721
        %v7037 = vunpack.c.l.b16 %v6722
        %v7038 = vunpack.c.l.b16 %v6723
        %v7039 = vunpack.c.l.b16 %v6724
        %v7040 = vunpack.c.l.b16 %v6725
        %v7041 = vunpack.c.l.b16 %v6726
        %v7042 = vunpack.c.l.b16 %v6727
        %v7043 = vunpack.c.l.b16 %v6728
        %v7044 = vunpack.c.l.b16 %v6729
        %v7045 = vunpack.c.l.b16 %v6730
        %v7046 = vunpack.c.l.b16 %v6731
        %v7047 = vunpack.c.l.b16 %v6732
        %v7048 = vunpack.c.l.b16 %v6733
        %v7049 = vunpack.c.l.b16 %v6734
        %v7050 = vunpack.c.l.b16 %v6735
        %v7051 = vunpack.c.l.b16 %v6736
        %v7052 = vunpack.c.l.b16 %v6737
        %v7053 = vunpack.c.l.b16 %v6738
        %v7054 = vunpack.c.l.b16 %v6739
        %v7055 = vunpack.c.l.b16 %v6740
        %v7056 = vunpack.c.l.b16 %v6741
        %v7057 = vunpack.c.l.b16 %v6742
        %v7058 = vunpack.c.l.b16 %v6743
        %v7059 = vunpack.c.l.b16 %v6744
        %v7060 = vunpack.c.l.b16 %v6745
        %v7061 = vunpack.c.l.b16 %v6746
        %v7062 = vunpack.c.l.b16 %v6747
        %v7063 = vunpack.c.l.b16 %v6748
        %v7064 = vunpack.c.l.b16 %v6749
        %v7065 = vunpack.c.l.b16 %v6750
        %v7066 = vunpack.c.l.b16 %v6751
        %v7067 = vunpack.c.l.b16 %v6752
        %v7068 = vunpack.c.l.b16 %v6753
        %v7069 = vunpack.c.l.b16 %v6754
        %v7070 = vunpack.c.l.b16 %v6755
        %v7071 = vunpack.c.l.b16 %v6756
        %v7072 = vunpack.c.l.b16 %v6757
        %v7073 = vunpack.c.l.b16 %v6758
        %v7074 = vunpack.c.l.b16 %v6759
        %v7075 = vunpack.c.l.b16 %v6760
        %v7076 = vunpack.c.l.b16 %v6761
        %v7077 = vunpack.c.l.b16 %v6762
        %v7078 = vunpack.c.l.b16 %v6763
        %v7079 = vunpack.c.l.b16 %v6764
        %v7080 = vunpack.c.l.b16 %v6765
        %v7081 = vunpack.c.l.b16 %v6766
        %v7082 = vunpack.c.l.b16 %v6767
        %v7083 = vunpack.c.l.b16 %v6768
        %v7084 = vunpack.c.l.b16 %v6769
        %v7085 = vunpack.c.l.b16 %v6770
        %v7086 = vunpack.c.l.b16 %v6771
        %v7087 = vunpack.c.l.b16 %v6772
        %v7088 = vunpack.c.l.b16 %v6773
        %v7089 = vunpack.c.l.b16 %v6774
        %v7090 = vunpack.c.l.b16 %v6775
        %v7091 = vunpack.c.l.b16 %v6776
        %v7092 = vunpack.c.l.b16 %v6777
        %v7093 = vunpack.c.l.b16 %v6778
        %v7094 = vunpack.c.l.b16 %v6779
        %v7095 = vunpack.c.l.b16 %v6780
        %v7096 = vunpack.c.l.b16 %v6781
        %v7097 = vunpack.c.l.b16 %v6782
        %v7098 = vunpack.c.l.b16 %v6783
        %v7099 = vunpack.c.l.b16 %v6784
        %v7100 = vunpack.c.l.b16 %v6785
        %v7101 = vunpack.c.l.b16 %v6786
        %v7102 = vunpack.c.l.b16 %v6787
        %v7103 = vunpack.c.l.b16 %v6788
        %v7104 = vunpack.c.l.b16 %v6789
        %v7105 = vunpack.c.l.b16 %v6790
        %v7106 = vunpack.c.l.b16 %v6791
        %v7107 = vunpack.c.l.b16 %v6792
        %v7108 = vunpack.c.l.b16 %v6793
        %v7109 = vunpack.c.l.b16 %v6794
        %v7110 = vunpack.c.l.b16 %v6795
        %v7111 = vunpack.c.l.b16 %v6796
        %v7112 = vunpack.c.l.b16 %v6797
        %v7113 = vunpack.c.l.b16 %v6798
        %v7114 = vunpack.c.l.b16 %v6799
        %v7115 = vunpack.c.l.b16 %v6800
        %v7116 = vunpack.c.l.b16 %v6801
        %v7117 = vunpack.c.l.b16 %v6802
        %v7118 = vunpack.c.l.b16 %v6803
        %v7119 = vunpack.c.l.b16 %v6804
        %v7120 = vunpack.c.l.b16 %v6805
        %v7121 = vunpack.c.l.b16 %v6806
        %v7122 = vunpack.c.l.b16 %v6807
        %v7123 = vunpack.c.l.b16 %v6808
        %v7124 = vunpack.c.l.b16 %v6809
        %v7125 = vunpack.c.l.b16 %v6810
        %v7126 = vunpack.c.l.b16 %v6811
        %v7127 = vunpack.c.l.b16 %v6812
        %v7128 = vunpack.c.l.b16 %v6813
        %v7129 = vunpack.c.l.b16 %v6814
        %v7130 = vunpack.c.l.b16 %v6815
        %v7131 = vunpack.c.l.b16 %v6816
        %v7132 = vunpack.c.l.b16 %v6817
        %v7133 = vunpack.c.l.b16 %v6818
        %v7134 = vunpack.c.l.b16 %v6819
        %v7135 = vunpack.c.l.b16 %v6820
        %v7136 = vunpack.c.l.b16 %v6821
        %v7137 = vunpack.c.l.b16 %v6822
        %v7138 = vunpack.c.l.b16 %v6823
        %v7139 = vunpack.c.l.b16 %v6824
        %v7140 = vpack.c.b16 %v7013, %v7012
        %v7141 = vpack.c.b16 %v7015, %v7014
        %v7142 = vpack.c.b16 %v7017, %v7016
        %v7143 = vpack.c.b16 %v7019, %v7018
        %v7144 = vpack.c.b16 %v7021, %v7020
        %v7145 = vpack.c.b16 %v7023, %v7022
        %v7146 = vpack.c.b16 %v7025, %v7024
        %v7147 = vpack.c.b16 %v7027, %v7026
        %v7148 = vpack.c.b16 %v7029, %v7028
        %v7149 = vpack.c.b16 %v7031, %v7030
        %v7150 = vpack.c.b16 %v7033, %v7032
        %v7151 = vpack.c.b16 %v7035, %v7034
        %v7152 = vpack.c.b16 %v7037, %v7036
        %v7153 = vpack.c.b16 %v7039, %v7038
        %v7154 = vpack.c.b16 %v7041, %v7040
        %v7155 = vpack.c.b16 %v7043, %v7042
        %v7156 = vpack.c.b16 %v7045, %v7044
        %v7157 = vpack.c.b16 %v7047, %v7046
        %v7158 = vpack.c.b16 %v7049, %v7048
        %v7159 = vpack.c.b16 %v7051, %v7050
        %v7160 = vpack.c.b16 %v7053, %v7052
        %v7161 = vpack.c.b16 %v7055, %v7054
        %v7162 = vpack.c.b16 %v7057, %v7056
        %v7163 = vpack.c.b16 %v7059, %v7058
        %v7164 = vpack.c.b16 %v7061, %v7060
        %v7165 = vpack.c.b16 %v7063, %v7062
        %v7166 = vpack.c.b16 %v7065, %v7064
        %v7167 = vpack.c.b16 %v7067, %v7066
        %v7168 = vpack.c.b16 %v7069, %v7068
        %v7169 = vpack.c.b16 %v7071, %v7070
        %v7170 = vpack.c.b16 %v7073, %v7072
        %v7171 = vpack.c.b16 %v7075, %v7074
        %v7172 = vpack.c.b16 %v7077, %v7076
        %v7173 = vpack.c.b16 %v7079, %v7078
        %v7174 = vpack.c.b16 %v7081, %v7080
        %v7175 = vpack.c.b16 %v7083, %v7082
        %v7176 = vpack.c.b16 %v7085, %v7084
        %v7177 = vpack.c.b16 %v7087, %v7086
        %v7178 = vpack.c.b16 %v7089, %v7088
        %v7179 = vpack.c.b16 %v7091, %v7090
        %v7180 = vpack.c.b16 %v7093, %v7092
        %v7181 = vpack.c.b16 %v7095, %v7094
        %v7182 = vpack.c.b16 %v7097, %v7096
        %v7183 = vpack.c.b16 %v7099, %v7098
        %v7184 = vpack.c.b16 %v7101, %v7100
        %v7185 = vpack.c.b16 %v7103, %v7102
        %v7186 = vpack.c.b16 %v7105, %v7104
        %v7187 = vpack.c.b16 %v7107, %v7106
        %v7188 = vpack.c.b16 %v7109, %v7108
        %v7189 = vpack.c.b16 %v7111, %v7110
        %v7190 = vpack.c.b16 %v7113, %v7112
        %v7191 = vpack.c.b16 %v7115, %v7114
        %v7192 = vpack.c.b16 %v7117, %v7116
        %v7193 = vpack.c.b16 %v7119, %v7118
        %v7194 = vpack.c.b16 %v7121, %v7120
        %v7195 = vpack.c.b16 %v7123, %v7122
        %v7196 = vpack.c.b16 %v7125, %v7124
        %v7197 = vpack.c.b16 %v7127, %v7126
        %v7198 = vpack.c.b16 %v7129, %v7128
        %v7199 = vpack.c.b16 %v7131, %v7130
        %v7200 = vpack.c.b16 %v7133, %v7132
        %v7201 = vpack.c.b16 %v7135, %v7134
        %v7202 = vpack.c.b16 %v7137, %v7136
        %v7203 = vpack.c.b16 %v7139, %v7138
        %7268 = vmatprep.subr.bf16.mxu0 0
        %7269 = vmatpush1.bf16.msra.mxu0 %v7147
        %7270 = vmatprep.subr.bf16.mxu0 0
        %7271 = vmatpush1.bf16.msra.mxu0 %v7146
        %7272 = vmatprep.subr.bf16.mxu0 0
        %7273 = vmatpush1.bf16.msra.mxu0 %v7145
        %7274 = vmatprep.subr.bf16.mxu0 0
        %7275 = vmatpush1.bf16.msra.mxu0 %v7144
        %7276 = vmatprep.subr.bf16.mxu0 0
        %7277 = vmatpush1.bf16.msra.mxu0 %v7143
        %7278 = vmatprep.subr.bf16.mxu0 0
        %7279 = vmatpush1.bf16.msra.mxu0 %v7142
        %7280 = vmatprep.subr.bf16.mxu0 0
        %7281 = vmatpush1.bf16.msra.mxu0 %v7141
        %7282 = vmatprep.subr.bf16.mxu0 0
        %7283 = vmatpush1.bf16.msra.mxu0 %v7140
        %7284 = vmatprep.subr.bf16.mxu0 0
        %7285 = vmatpush2.bf16.msra.mxu0 %v7155
        %7286 = vmatprep.subr.bf16.mxu0 0
        %7287 = vmatpush2.bf16.msra.mxu0 %v7154
        %7288 = vmatprep.subr.bf16.mxu0 0
        %7289 = vmatpush2.bf16.msra.mxu0 %v7153
        %7290 = vmatprep.subr.bf16.mxu0 0
        %7291 = vmatpush2.bf16.msra.mxu0 %v7152
        %7292 = vmatprep.subr.bf16.mxu0 0
        %7293 = vmatpush2.bf16.msra.mxu0 %v7151
        %7294 = vmatprep.subr.bf16.mxu0 0
        %7295 = vmatpush2.bf16.msra.mxu0 %v7150
        %7296 = vmatprep.subr.bf16.mxu0 0
        %7297 = vmatpush2.bf16.msra.mxu0 %v7149
        %7298 = vmatprep.subr.bf16.mxu0 0
        %7299 = vmatpush2.bf16.msra.mxu0 %v7148
        %7300 = vmatprep.mubr.bf16.mxu0 %v6864
        %7301 = vmatmul.mubr.bf16.gmra.mxu0 %v6850
        %v7302 = vpop.f32.mrf.mxu0
        %v7303 = vadd.f32 %v6825, %v7302
        %v7304 = vpop.f32.mrf.mxu0
        %v7305 = vpop.f32.mrf.mxu0
        %v7306 = vpop.f32.mrf.mxu0
        %7307 = vdwg.mxu0
        %7308 = vmatprep.subr.bf16.mxu0 0
        %7309 = vmatpush1.bf16.msra.mxu0 %v7163
        %7310 = vmatprep.subr.bf16.mxu0 0
        %7311 = vmatpush1.bf16.msra.mxu0 %v7162
        %7312 = vmatprep.subr.bf16.mxu0 0
        %7313 = vmatpush1.bf16.msra.mxu0 %v7161
        %7314 = vmatprep.subr.bf16.mxu0 0
        %7315 = vmatpush1.bf16.msra.mxu0 %v7160
        %7316 = vmatprep.subr.bf16.mxu0 0
        %7317 = vmatpush1.bf16.msra.mxu0 %v7159
        %7318 = vmatprep.subr.bf16.mxu0 0
        %7319 = vmatpush1.bf16.msra.mxu0 %v7158
        %7320 = vmatprep.subr.bf16.mxu0 0
        %7321 = vmatpush1.bf16.msra.mxu0 %v7157
        %7322 = vmatprep.subr.bf16.mxu0 0
        %7323 = vmatpush1.bf16.msra.mxu0 %v7156
        %7324 = vmatprep.subr.bf16.mxu0 0
        %7325 = vmatpush2.bf16.msra.mxu0 %v7171
        %7326 = vmatprep.subr.bf16.mxu0 0
        %7327 = vmatpush2.bf16.msra.mxu0 %v7170
        %7328 = vmatprep.subr.bf16.mxu0 0
        %7329 = vmatpush2.bf16.msra.mxu0 %v7169
        %7330 = vmatprep.subr.bf16.mxu0 0
        %7331 = vmatpush2.bf16.msra.mxu0 %v7168
        %7332 = vmatprep.subr.bf16.mxu0 0
        %7333 = vmatpush2.bf16.msra.mxu0 %v7167
        %7334 = vmatprep.subr.bf16.mxu0 0
        %7335 = vmatpush2.bf16.msra.mxu0 %v7166
        %7336 = vmatprep.subr.bf16.mxu0 0
        %7337 = vmatpush2.bf16.msra.mxu0 %v7165
        %7338 = vmatprep.subr.bf16.mxu0 0
        %7339 = vmatpush2.bf16.msra.mxu0 %v7164
        %7340 = vmatprep.mubr.bf16.mxu0 %v6874
        %7341 = vmatmul.mubr.bf16.gmra.mxu0 %v6872
        %v7342 = vpop.f32.mrf.mxu0
        %v7343 = vadd.f32 %v7303, %v7342
        %v7344 = vpop.f32.mrf.mxu0
        %v7345 = vpop.f32.mrf.mxu0
        %v7346 = vpop.f32.mrf.mxu0
        %7347 = vdwg.mxu0
        %7348 = vmatprep.subr.bf16.mxu0 0
        %7349 = vmatpush1.bf16.msra.mxu0 %v7179
        %7350 = vmatprep.subr.bf16.mxu0 0
        %7351 = vmatpush1.bf16.msra.mxu0 %v7178
        %7352 = vmatprep.subr.bf16.mxu0 0
        %7353 = vmatpush1.bf16.msra.mxu0 %v7177
        %7354 = vmatprep.subr.bf16.mxu0 0
        %7355 = vmatpush1.bf16.msra.mxu0 %v7176
        %7356 = vmatprep.subr.bf16.mxu0 0
        %7357 = vmatpush1.bf16.msra.mxu0 %v7175
        %7358 = vmatprep.subr.bf16.mxu0 0
        %7359 = vmatpush1.bf16.msra.mxu0 %v7174
        %7360 = vmatprep.subr.bf16.mxu0 0
        %7361 = vmatpush1.bf16.msra.mxu0 %v7173
        %7362 = vmatprep.subr.bf16.mxu0 0
        %7363 = vmatpush1.bf16.msra.mxu0 %v7172
        %7364 = vmatprep.subr.bf16.mxu0 0
        %7365 = vmatpush2.bf16.msra.mxu0 %v7187
        %7366 = vmatprep.subr.bf16.mxu0 0
        %7367 = vmatpush2.bf16.msra.mxu0 %v7186
        %7368 = vmatprep.subr.bf16.mxu0 0
        %7369 = vmatpush2.bf16.msra.mxu0 %v7185
        %7370 = vmatprep.subr.bf16.mxu0 0
        %7371 = vmatpush2.bf16.msra.mxu0 %v7184
        %7372 = vmatprep.subr.bf16.mxu0 0
        %7373 = vmatpush2.bf16.msra.mxu0 %v7183
        %7374 = vmatprep.subr.bf16.mxu0 0
        %7375 = vmatpush2.bf16.msra.mxu0 %v7182
        %7376 = vmatprep.subr.bf16.mxu0 0
        %7377 = vmatpush2.bf16.msra.mxu0 %v7181
        %7378 = vmatprep.subr.bf16.mxu0 0
        %7379 = vmatpush2.bf16.msra.mxu0 %v7180
        %7380 = vmatprep.mubr.bf16.mxu0 %v6871
        %7381 = vmatmul.mubr.bf16.gmra.mxu0 %v6857
        %v7382 = vpop.f32.mrf.mxu0
        %v7383 = vadd.f32 %v7343, %v7382
        %v7384 = vpop.f32.mrf.mxu0
        %v7385 = vpop.f32.mrf.mxu0
        %v7386 = vpop.f32.mrf.mxu0
        %7387 = vdwg.mxu0
        %7388 = vmatprep.subr.bf16.mxu0 0
        %7389 = vmatpush1.bf16.msra.mxu0 %v7195
        %7390 = vmatprep.subr.bf16.mxu0 0
        %7391 = vmatpush1.bf16.msra.mxu0 %v7194
        %7392 = vmatprep.subr.bf16.mxu0 0
        %7393 = vmatpush1.bf16.msra.mxu0 %v7193
        %7394 = vmatprep.subr.bf16.mxu0 0
        %7395 = vmatpush1.bf16.msra.mxu0 %v7192
        %7396 = vmatprep.subr.bf16.mxu0 0
        %7397 = vmatpush1.bf16.msra.mxu0 %v7191
        %7398 = vmatprep.subr.bf16.mxu0 0
        %7399 = vmatpush1.bf16.msra.mxu0 %v7190
        %7400 = vmatprep.subr.bf16.mxu0 0
        %7401 = vmatpush1.bf16.msra.mxu0 %v7189
        %7402 = vmatprep.subr.bf16.mxu0 0
        %7403 = vmatpush1.bf16.msra.mxu0 %v7188
        %7404 = vmatprep.subr.bf16.mxu0 0
        %7405 = vmatpush2.bf16.msra.mxu0 %v7203
        %7406 = vmatprep.subr.bf16.mxu0 0
        %7407 = vmatpush2.bf16.msra.mxu0 %v7202
        %7408 = vmatprep.subr.bf16.mxu0 0
        %7409 = vmatpush2.bf16.msra.mxu0 %v7201
        %7410 = vmatprep.subr.bf16.mxu0 0
        %7411 = vmatpush2.bf16.msra.mxu0 %v7200
        %7412 = vmatprep.subr.bf16.mxu0 0
        %7413 = vmatpush2.bf16.msra.mxu0 %v7199
        %7414 = vmatprep.subr.bf16.mxu0 0
        %7415 = vmatpush2.bf16.msra.mxu0 %v7198
        %7416 = vmatprep.subr.bf16.mxu0 0
        %7417 = vmatpush2.bf16.msra.mxu0 %v7197
        %7418 = vmatprep.subr.bf16.mxu0 0
        %7419 = vmatpush2.bf16.msra.mxu0 %v7196
        %7420 = vmatprep.mubr.bf16.mxu0 %v6875
        %7421 = vmatmul.mubr.bf16.gmra.mxu0 %v6873
        %v7422 = vpop.f32.mrf.mxu0
        %v7423 = vadd.f32 %v7383, %v7422
        %v7424 = vpop.f32.mrf.mxu0
        %v7425 = vpop.f32.mrf.mxu0
        %v7426 = vpop.f32.mrf.mxu0
        %7427 = vdwg.mxu0
        %v7428 = vmax.f32 %v7423, 0.0
        %v7429 = vpack.c.bf16 %v7428, %v7428
        %v7430 = vld [vmem:[%s7] sm:$0xf]
        %v7431 = vld [vmem:[%s7 + $0x4] sm:$0xf]
        %v7432 = vld [vmem:[%s7 + $0x8] sm:$0xf]
        %v7433 = vld [vmem:[%s7 + $0xc] sm:$0xf]
        %v7434 = vld [vmem:[%s8] sm:$0x1]
        %v7439 = vunpack.c.l.b16 %v7430
        %v7440 = vunpack.c.l.b16 %v7431
        %v7441 = vunpack.c.l.b16 %v7432
        %v7442 = vunpack.c.l.b16 %v7433
        %v7443 = vpack.c.b16 %v7440, %v7439
        %v7444 = vpack.c.b16 %v7442, %v7441
        %v7448 = vsel %vm4714, %v7429, 0
        %7450 = vmatprep.subr.bf16.mxu0 0
        %7451 = vmatpush1.bf16.msra.mxu0 0
        %7452 = vmatprep.subr.bf16.mxu0 0
        %7453 = vmatpush1.bf16.msra.mxu0 0
        %7454 = vmatprep.subr.bf16.mxu0 0
        %7455 = vmatpush1.bf16.msra.mxu0 0
        %7456 = vmatprep.subr.bf16.mxu0 0
        %7457 = vmatpush1.bf16.msra.mxu0 0
        %7458 = vmatprep.subr.bf16.mxu0 0
        %7459 = vmatpush1.bf16.msra.mxu0 0
        %7460 = vmatprep.subr.bf16.mxu0 0
        %7461 = vmatpush1.bf16.msra.mxu0 0
        %7462 = vmatprep.subr.bf16.mxu0 0
        %7463 = vmatpush1.bf16.msra.mxu0 %v7444
        %7464 = vmatprep.subr.bf16.mxu0 0
        %7465 = vmatpush1.bf16.msra.mxu0 %v7443
        %7466 = vmatprep.subr.bf16.mxu0 0
        %7467 = vmatpush2.bf16.msra.mxu0 0
        %7468 = vmatprep.subr.bf16.mxu0 0
        %7469 = vmatpush2.bf16.msra.mxu0 0
        %7470 = vmatprep.subr.bf16.mxu0 0
        %7471 = vmatpush2.bf16.msra.mxu0 0
        %7472 = vmatprep.subr.bf16.mxu0 0
        %7473 = vmatpush2.bf16.msra.mxu0 0
        %7474 = vmatprep.subr.bf16.mxu0 0
        %7475 = vmatpush2.bf16.msra.mxu0 0
        %7476 = vmatprep.subr.bf16.mxu0 0
        %7477 = vmatpush2.bf16.msra.mxu0 0
        %7478 = vmatprep.subr.bf16.mxu0 0
        %7479 = vmatpush2.bf16.msra.mxu0 0
        %7480 = vmatprep.subr.bf16.mxu0 0
        %7481 = vmatpush2.bf16.msra.mxu0 0
        %7482 = vmatprep.mubr.bf16.mxu0 0
        %7483 = vmatmul.mubr.bf16.gmra.mxu0 %v7448
        %v7484 = vpop.f32.mrf.mxu0
        %v7485 = vadd.f32 %v7434, %v7484
        %v7486 = vpop.f32.mrf.mxu0
        %v7487 = vpop.f32.mrf.mxu0
        %v7488 = vpop.f32.mrf.mxu0
        %7489 = vdwg.mxu0
        %vm7490 = vcmask 8192
        %7491 = vst.msk [vmem:[%s324] sm:$0x1] %vm7490, %v7485
        %s7492 = sand.u32 %s225, 1
        %s7493 = scalar_lea.sflag [#allocation8], %s7492
        %s7494 = sand.u32 %s225, 1
        %s7495 = scalar_lea.vmem [#allocation7], %s7494
        // Predicated region
        $region57: #{tpu_custom_call.1} parent=55 // pred_check
          %p7496 = pneg %p235
        $region58: #{tpu_custom_call.1} parent=55 // pred_check_branch
          %7498 = sbr.rel (%p7496) target = $region60
        $region59: #{tpu_custom_call.1} parent=55 // pred_region
          %s7500 = ssub.s32 16, 16
          %7501 = vsyncadd %s7493, %s7500
          %s7502 = smul.addr %s23, 16
          %s7503 = scalar_lea.hbm %s9, %s7502
          %s7505 = sshll.u32 %s7495, 4
          %s7506 = int_to_ptr.vmem [resolvable:$true] %s7505
          %7508 = dma.vmem_to_hbm [thread:$0]  %s7506, 16, %s7503, %s7493
        $region60: #{tpu_custom_call.1} parent=55 // pred_fallthru
          _
      $region56: #{tpu_custom_call.1} parent=5 // pred_fallthru
        _
      %p7509 = scmp.le.s32.totalorder 2, %s18
      // Predicated region
      $region61: #{tpu_custom_call.1} parent=5 // pred_check
        %p7510 = pneg %p7509
      $region62: #{tpu_custom_call.1} parent=5 // pred_check_branch
        %7512 = sbr.rel (%p7510) target = $region64
      $region63: #{tpu_custom_call.1} parent=5 // pred_region
        %s7513 = ssub.s32 %s18, 2
        // Predicated region
        $region65: #{tpu_custom_call.1} parent=63 // pred_check
          %p7514 = pneg %p241
        $region66: #{tpu_custom_call.1} parent=63 // pred_check_branch
          %7516 = sbr.rel (%p7514) target = $region68
        $region67: #{tpu_custom_call.1} parent=63 // pred_region
          %s7517 = sand.u32 %s226, 1
          %s7518 = scalar_lea.sflag [#allocation8], %s7517
          %s7519 = sand.u32 %s226, 1
          %s7520 = scalar_lea.vmem [#allocation7], %s7519
          %7521 = dma.done %s7518, 16
        $region68: #{tpu_custom_call.1} parent=63 // pred_fallthru
          _
      $region64: #{tpu_custom_call.1} parent=5 // pred_fallthru
        _
    $region6: #{tpu_custom_call.1} parent=1 // loop_footer
      %s22 = sadd.s32 1, %s18
    $region7: #{tpu_custom_call.1} parent=1 // loop_footer_branch
      %17 = sbr.rel target = $region3
    $region8: #{tpu_custom_call.1} parent=1 // loop_exit
      _
    %7522 = vsyncpa [#allocation8], 1
    %s7523 = scalar_lea.sflag [#allocation8], 1
    %7524 = vsyncpa %s7523, 1

</llo_original>
